<compile_context>
chip_gen: v5e
topology: v5e:2x2
jax: 0.10.0
libtpu: 0.0.40
codegen_flags: <defaults>
</compile_context>

<pallas_src>
import functools

import jax
import jax.numpy as jnp
from jax import lax
from jax.experimental import pallas as pl
from jax.experimental.pallas import tpu as pltpu


# ----------------------------------------------------------------------------
# Generic grid-parallel dense layer:  out = x @ w + b
# Used for the hoisted input projection and the deferred output projection.
# ----------------------------------------------------------------------------
def dense_bias_kernel(x_ref, w_ref, b_ref, o_ref):
    o_ref[...] = (
        jnp.dot(x_ref[...], w_ref[...], preferred_element_type=jnp.float32)
        + b_ref[...]
    ).astype(o_ref.dtype)


def _pick_tile(dim, candidates):
    for c in candidates:
        if c <= dim and dim % c == 0:
            return c
    return dim


def dense(x, w, b):
    """x: (M, K), w: (K, N), b: (1, N) -> (M, N) float32."""
    M, K = x.shape
    N = w.shape[1]
    tm = _pick_tile(M, (512, 256, 128, 64, 32, 16, 8))
    tn = _pick_tile(N, (2048, 1024, 512, 256, 128))
    return pl.pallas_call(
        dense_bias_kernel,
        out_shape=jax.ShapeDtypeStruct((M, N), jnp.float32),
        grid_spec=pltpu.PrefetchScalarGridSpec(
            num_scalar_prefetch=0,
            grid=(M // tm, N // tn),
            in_specs=[
                pl.BlockSpec((tm, K), lambda i, j: (i, 0)),
                pl.BlockSpec((K, tn), lambda i, j: (0, j)),
                pl.BlockSpec((1, tn), lambda i, j: (0, j)),
            ],
            out_specs=pl.BlockSpec((tm, tn), lambda i, j: (i, j)),
        ),
        compiler_params=pltpu.CompilerParams(
            dimension_semantics=("parallel", "parallel"),
        ),
    )(x, w, b)


# ----------------------------------------------------------------------------
# Sequential LSTM recurrence.  One grid step = Tt timesteps.
# ----------------------------------------------------------------------------
def lstm_recurrent_kernel(gx_ref, whh_ref, h_out_ref, h_sc, c_sc):
    """gx_ref   : (Bp, Tt, 4H)  precomputed x @ W_ih + (b_ih + b_hh)
       whh_ref  : (H, 4H)       hidden->gates weight (transposed)
       h_out_ref: (Bp, Tt, H)   hidden states for these timesteps (batch-major)
       h_sc/c_sc: (Bp, H)       VMEM scratch carrying state across grid steps.
    """
    @pl.when(pl.program_id(0) == 0)
    def _():
        h_sc[...] = jnp.zeros_like(h_sc)
        c_sc[...] = jnp.zeros_like(c_sc)

    H = h_sc.shape[-1]
    Tt = gx_ref.shape[1]

    # Static unroll over the Tt timesteps of this block (all indices static).
    for s in range(Tt):
        gates = gx_ref[:, s, :] + jnp.dot(
            h_sc[...], whh_ref[...], preferred_element_type=jnp.float32
        )  # (Bp, 4H); PyTorch gate order i, f, g, o
        i = jax.nn.sigmoid(gates[:, 0 * H:1 * H])
        f = jax.nn.sigmoid(gates[:, 1 * H:2 * H])
        g = jnp.tanh(gates[:, 2 * H:3 * H])
        o = jax.nn.sigmoid(gates[:, 3 * H:4 * H])
        c = f * c_sc[...] + i * g
        h = o * jnp.tanh(c)
        c_sc[...] = c
        h_sc[...] = h
        h_out_ref[:, s, :] = h.astype(h_out_ref.dtype)


def _pick_time_tile(T):
    for c in (32, 16, 8):
        if T % c == 0:
            return c
    return T  # full-extent block (still legal; just one big step)


# ----------------------------------------------------------------------------
# Full forward:  DecoderRNN.forward(features, captions)
# ----------------------------------------------------------------------------
@jax.jit
def decoder_rnn_forward(features, captions, params):
    """features: (B, E) f32, captions: (B, Tcap) i32 -> (B, Tcap, V) f32."""
    embed_w = params["embed_w"]    # (V, E)
    w_ih_t = params["w_ih_t"]      # (E, 4H)
    w_hh_t = params["w_hh_t"]      # (H, 4H)
    bias = params["bias"]          # (1, 4H) = b_ih + b_hh
    w_out_t = params["w_out_t"]    # (H, V)
    b_out = params["b_out"]        # (1, V)

    B, E = features.shape
    H = w_hh_t.shape[0]
    V = w_out_t.shape[1]

    # Embedding lookup + concat of image features as first timestep (plain JAX glue).
    capt_emb = jnp.take(embed_w, captions[:, :-1], axis=0)           # (B, Tcap-1, E)
    inputs = jnp.concatenate([features[:, None, :], capt_emb], 1)    # (B, T, E)
    T = inputs.shape[1]

    # Pad batch to a multiple of 8 (one sublane tile); padded rows sliced off at end.
    Bp = ((B + 7) // 8) * 8
    if Bp != B:
        inputs = jnp.pad(inputs, ((0, Bp - B), (0, 0), (0, 0)))

    # (1) Hoisted input projection: one large parallel matmul over all Bp*T rows.
    gates_x = dense(inputs.reshape(Bp * T, E), w_ih_t, bias)         # (Bp*T, 4H)
    gates_x = gates_x.reshape(Bp, T, 4 * H)                          # batch-major

    # (2) Sequential recurrence, Tt timesteps per grid step, batch-major output.
    Tt = _pick_time_tile(T)
    h_all = pl.pallas_call(
        lstm_recurrent_kernel,
        out_shape=jax.ShapeDtypeStruct((Bp, T, H), jnp.float32),
        grid_spec=pltpu.PrefetchScalarGridSpec(
            num_scalar_prefetch=0,
            grid=(T // Tt,),
            in_specs=[
                pl.BlockSpec((Bp, Tt, 4 * H), lambda t: (0, t, 0)),
                pl.BlockSpec((H, 4 * H), lambda t: (0, 0)),
            ],
            out_specs=pl.BlockSpec((Bp, Tt, H), lambda t: (0, t, 0)),
            scratch_shapes=[
                pltpu.VMEM((Bp, H), jnp.float32),
                pltpu.VMEM((Bp, H), jnp.float32),
            ],
        ),
        compiler_params=pltpu.CompilerParams(
            # Recurrence => time axis must stay sequential ("arbitrary").
            dimension_semantics=("arbitrary",),
        ),
    )(gates_x, w_hh_t)

    # (3) Deferred output projection: parallel matmul over all Bp*T rows, tiled over V.
    scores = dense(h_all.reshape(Bp * T, H), w_out_t, b_out)         # (Bp*T, V)
    scores = scores.reshape(Bp, T, V)
    return scores[:B]                                                # (B, T, V)


# ----------------------------------------------------------------------------
# Parameters (PyTorch layout, stored transposed for the MXU) + pure-JAX reference.
# ----------------------------------------------------------------------------
def init_params(key, embed_size, hidden_size, vocab_size):
    ks = jax.random.split(key, 7)
    s = 0.1
    embed_w = jax.random.normal(ks[0], (vocab_size, embed_size), jnp.float32) * s
    w_ih = jax.random.normal(ks[1], (4 * hidden_size, embed_size), jnp.float32) * s
    w_hh = jax.random.normal(ks[2], (4 * hidden_size, hidden_size), jnp.float32) * s
    b_ih = jax.random.normal(ks[3], (4 * hidden_size,), jnp.float32) * s
    b_hh = jax.random.normal(ks[4], (4 * hidden_size,), jnp.float32) * s
    w_out = jax.random.normal(ks[5], (vocab_size, hidden_size), jnp.float32) * s
    b_out = jax.random.normal(ks[6], (vocab_size,), jnp.float32) * s
    return {
        "embed_w": embed_w,
        "w_ih_t": jnp.transpose(w_ih),      # (E, 4H)
        "w_hh_t": jnp.transpose(w_hh),      # (H, 4H)
        "bias": (b_ih + b_hh)[None, :],     # (1, 4H)
        "w_out_t": jnp.transpose(w_out),    # (H, V)
        "b_out": b_out[None, :],            # (1, V)
    }


def reference_forward(features, captions, params):
    """Plain-JAX reference (lax.scan LSTM) for correctness checking."""
    embed_w, w_ih_t, w_hh_t = params["embed_w"], params["w_ih_t"], params["w_hh_t"]
    bias, w_out_t, b_out = params["bias"], params["w_out_t"], params["b_out"]
    H = w_hh_t.shape[0]
    hi = jax.lax.Precision.HIGHEST

    capt_emb = jnp.take(embed_w, captions[:, :-1], axis=0)
    inputs = jnp.concatenate([features[:, None, :], capt_emb], 1)    # (B, T, E)
    B = inputs.shape[0]

    def step(carry, x_t):
        h, c = carry
        gates = (jnp.dot(x_t, w_ih_t, precision=hi)
                 + jnp.dot(h, w_hh_t, precision=hi) + bias)
        i = jax.nn.sigmoid(gates[:, 0 * H:1 * H])
        f = jax.nn.sigmoid(gates[:, 1 * H:2 * H])
        g = jnp.tanh(gates[:, 2 * H:3 * H])
        o = jax.nn.sigmoid(gates[:, 3 * H:4 * H])
        c = f * c + i * g
        h = o * jnp.tanh(c)
        return (h, c), h

    init = (jnp.zeros((B, H), jnp.float32), jnp.zeros((B, H), jnp.float32))
    _, hs = lax.scan(step, init, jnp.transpose(inputs, (1, 0, 2)))
    hs = jnp.transpose(hs, (1, 0, 2))                                # (B, T, H)
    return jnp.dot(hs, w_out_t, precision=hi) + b_out


if __name__ == "__main__":
    # Small shapes consistent with the module's forward (H multiple of 128 so
    # gate slices are lane-aligned).
    B, E, H, V, Tcap = 2, 32, 128, 256, 8

    key = jax.random.PRNGKey(0)
    k_feat, k_capt, k_par = jax.random.split(key, 3)

    features = jax.random.normal(k_feat, (B, E), jnp.float32)
    captions = jax.random.randint(k_capt, (B, Tcap), 0, V, dtype=jnp.int32)
    params = init_params(k_par, E, H, V)

    out = decoder_rnn_forward(features, captions, params)
    out = jax.block_until_ready(out)

    assert out.shape == (B, Tcap, V), out.shape
    assert bool(jnp.all(jnp.isfinite(out)))

    ref = jax.block_until_ready(reference_forward(features, captions, params))
    max_err = float(jnp.max(jnp.abs(out - ref)))
    assert max_err < 1e-2, f"mismatch vs reference: {max_err}"

    print("KERNEL_OK")
</pallas_src>

<mosaic_0001>
module attributes {stable_mosaic.version = 11 : i64} {
  func.func @dense_bias_kernel(%arg0: i32, %arg1: i32, %arg2: memref<64x32xf32, #tpu.memory_space<vmem>>, %arg3: memref<32x512xf32, #tpu.memory_space<vmem>>, %arg4: memref<1x512xf32, #tpu.memory_space<vmem>>, %arg5: memref<64x512xf32, #tpu.memory_space<vmem>>) attributes {dimension_semantics = [#tpu.dimension_semantics<parallel>, #tpu.dimension_semantics<parallel>], iteration_bounds = array<i64: 1, 1>, scalar_prefetch = 0 : i64, scratch_operands = 0 : i64, tpu.core_type = #tpu.core_type<tc>, window_params = [{transform_indices = @transform_0, window_bounds = array<i64: 64, 32>}, {transform_indices = @transform_1, window_bounds = array<i64: 32, 512>}, {transform_indices = @transform_2, window_bounds = array<i64: 1, 512>}, {transform_indices = @transform_3, window_bounds = array<i64: 64, 512>}]} {
    %c0 = arith.constant 0 : index
    %c0_0 = arith.constant 0 : index
    %0 = vector.load %arg2[%c0, %c0_0] : memref<64x32xf32, #tpu.memory_space<vmem>>, vector<64x32xf32>
    %c0_1 = arith.constant 0 : index
    %c0_2 = arith.constant 0 : index
    %1 = vector.load %arg3[%c0_1, %c0_2] : memref<32x512xf32, #tpu.memory_space<vmem>>, vector<32x512xf32>
    %cst = arith.constant dense<0.000000e+00> : vector<64x512xf32>
    %2 = tpu.matmul %0, %1, %cst {dimension_numbers = #tpu.dot_dimension_numbers<[1], [0], [0], [1], [0, 0, 1, 1], [], []>} : vector<64x32xf32>, vector<32x512xf32>, vector<64x512xf32> -> vector<64x512xf32>
    %c0_3 = arith.constant 0 : index
    %c0_4 = arith.constant 0 : index
    %3 = vector.load %arg4[%c0_3, %c0_4] : memref<1x512xf32, #tpu.memory_space<vmem>>, vector<1x512xf32>
    %4 = vector.broadcast %3 : vector<1x512xf32> to vector<64x512xf32>
    %5 = arith.addf %2, %4 : vector<64x512xf32>
    %c0_5 = arith.constant 0 : index
    %c0_6 = arith.constant 0 : index
    %6 = vector.load %arg5[%c0_5, %c0_6] : memref<64x512xf32, #tpu.memory_space<vmem>>, vector<64x512xf32>
    tpu.vector_store %arg5[%c0_5, %c0_6], %5 {strides = array<i32>} : memref<64x512xf32, #tpu.memory_space<vmem>>, vector<64x512xf32>,
    return
  }
  func.func @transform_0(%arg0: i32, %arg1: i32) -> (i32, i32) {
    %c0_i32 = arith.constant 0 : i32
    %c0_i32_0 = arith.constant 0 : i32
    return %arg0, %c0_i32 : i32, i32
  }
  func.func @transform_1(%arg0: i32, %arg1: i32) -> (i32, i32) {
    %c0_i32 = arith.constant 0 : i32
    %c0_i32_0 = arith.constant 0 : i32
    return %c0_i32, %arg1 : i32, i32
  }
  func.func @transform_2(%arg0: i32, %arg1: i32) -> (i32, i32) {
    %c0_i32 = arith.constant 0 : i32
    %c0_i32_0 = arith.constant 0 : i32
    return %c0_i32, %arg1 : i32, i32
  }
  func.func @transform_3(%arg0: i32, %arg1: i32) -> (i32, i32) {
    %c0_i32 = arith.constant 0 : i32
    return %arg0, %arg1 : i32, i32
  }
}

module attributes {stable_mosaic.version = 11 : i64} {
  func.func @dense_bias_kernel(%arg0: i32, %arg1: i32, %arg2: memref<64x128xf32, #tpu.memory_space<vmem>>, %arg3: memref<128x256xf32, #tpu.memory_space<vmem>>, %arg4: memref<1x256xf32, #tpu.memory_space<vmem>>, %arg5: memref<64x256xf32, #tpu.memory_space<vmem>>) attributes {dimension_semantics = [#tpu.dimension_semantics<parallel>, #tpu.dimension_semantics<parallel>], iteration_bounds = array<i64: 1, 1>, scalar_prefetch = 0 : i64, scratch_operands = 0 : i64, tpu.core_type = #tpu.core_type<tc>, window_params = [{transform_indices = @transform_0, window_bounds = array<i64: 64, 128>}, {transform_indices = @transform_1, window_bounds = array<i64: 128, 256>}, {transform_indices = @transform_2, window_bounds = array<i64: 1, 256>}, {transform_indices = @transform_3, window_bounds = array<i64: 64, 256>}]} {
    %c0 = arith.constant 0 : index
    %c0_0 = arith.constant 0 : index
    %0 = vector.load %arg2[%c0, %c0_0] : memref<64x128xf32, #tpu.memory_space<vmem>>, vector<64x128xf32>
    %c0_1 = arith.constant 0 : index
    %c0_2 = arith.constant 0 : index
    %1 = vector.load %arg3[%c0_1, %c0_2] : memref<128x256xf32, #tpu.memory_space<vmem>>, vector<128x256xf32>
    %cst = arith.constant dense<0.000000e+00> : vector<64x256xf32>
    %2 = tpu.matmul %0, %1, %cst {dimension_numbers = #tpu.dot_dimension_numbers<[1], [0], [0], [1], [0, 0, 1, 1], [], []>} : vector<64x128xf32>, vector<128x256xf32>, vector<64x256xf32> -> vector<64x256xf32>
    %c0_3 = arith.constant 0 : index
    %c0_4 = arith.constant 0 : index
    %3 = vector.load %arg4[%c0_3, %c0_4] : memref<1x256xf32, #tpu.memory_space<vmem>>, vector<1x256xf32>
    %4 = vector.broadcast %3 : vector<1x256xf32> to vector<64x256xf32>
    %5 = arith.addf %2, %4 : vector<64x256xf32>
    %c0_5 = arith.constant 0 : index
    %c0_6 = arith.constant 0 : index
    %6 = vector.load %arg5[%c0_5, %c0_6] : memref<64x256xf32, #tpu.memory_space<vmem>>, vector<64x256xf32>
    tpu.vector_store %arg5[%c0_5, %c0_6], %5 {strides = array<i32>} : memref<64x256xf32, #tpu.memory_space<vmem>>, vector<64x256xf32>,
    return
  }
  func.func @transform_0(%arg0: i32, %arg1: i32) -> (i32, i32) {
    %c0_i32 = arith.constant 0 : i32
    %c0_i32_0 = arith.constant 0 : i32
    return %arg0, %c0_i32 : i32, i32
  }
  func.func @transform_1(%arg0: i32, %arg1: i32) -> (i32, i32) {
    %c0_i32 = arith.constant 0 : i32
    %c0_i32_0 = arith.constant 0 : i32
    return %c0_i32, %arg1 : i32, i32
  }
  func.func @transform_2(%arg0: i32, %arg1: i32) -> (i32, i32) {
    %c0_i32 = arith.constant 0 : i32
    %c0_i32_0 = arith.constant 0 : i32
    return %c0_i32, %arg1 : i32, i32
  }
  func.func @transform_3(%arg0: i32, %arg1: i32) -> (i32, i32) {
    %c0_i32 = arith.constant 0 : i32
    return %arg0, %arg1 : i32, i32
  }
}

module attributes {stable_mosaic.version = 11 : i64} {
  func.func @lstm_recurrent_kernel(%arg0: i32, %arg1: memref<8x8x512xf32, #tpu.memory_space<vmem>>, %arg2: memref<128x512xf32, #tpu.memory_space<vmem>>, %arg3: memref<8x8x128xf32, #tpu.memory_space<vmem>>, %arg4: memref<8x128xf32, #tpu.memory_space<vmem>>, %arg5: memref<8x128xf32, #tpu.memory_space<vmem>>) attributes {dimension_semantics = [#tpu.dimension_semantics<arbitrary>], iteration_bounds = array<i64: 1>, scalar_prefetch = 0 : i64, scratch_operands = 2 : i64, tpu.core_type = #tpu.core_type<tc>, window_params = [{transform_indices = @transform_0, window_bounds = array<i64: 8, 8, 512>}, {pipeline_mode = #tpu.pipeline_mode<synchronous>, transform_indices = @transform_1, window_bounds = array<i64: 128, 512>}, {transform_indices = @transform_2, window_bounds = array<i64: 8, 8, 128>}]} {
    %c0_i32 = arith.constant 0 : i32
    %0 = arith.cmpi eq, %arg0, %c0_i32 : i32
    %1 = arith.extui %0 : i1 to i32
    %c0_i32_0 = arith.constant 0 : i32
    %2 = arith.cmpi ne, %1, %c0_i32_0 : i32
    scf.if %2 {
      %cst_152 = arith.constant 0.000000e+00 : f32
      %299 = vector.broadcast %cst_152 : f32 to vector<8x128xf32>
      %c0_153 = arith.constant 0 : index
      %c0_154 = arith.constant 0 : index
      %300 = vector.load %arg4[%c0_153, %c0_154] : memref<8x128xf32, #tpu.memory_space<vmem>>, vector<8x128xf32>
      tpu.vector_store %arg4[%c0_153, %c0_154], %299 {strides = array<i32>} : memref<8x128xf32, #tpu.memory_space<vmem>>, vector<8x128xf32>,
      %cst_155 = arith.constant 0.000000e+00 : f32
      %301 = vector.broadcast %cst_155 : f32 to vector<8x128xf32>
      %c0_156 = arith.constant 0 : index
      %c0_157 = arith.constant 0 : index
      %302 = vector.load %arg5[%c0_156, %c0_157] : memref<8x128xf32, #tpu.memory_space<vmem>>, vector<8x128xf32>
      tpu.vector_store %arg5[%c0_156, %c0_157], %301 {strides = array<i32>} : memref<8x128xf32, #tpu.memory_space<vmem>>, vector<8x128xf32>,
    } else {
    }
    %c0 = arith.constant 0 : index
    %c0_1 = arith.constant 0 : index
    %c0_2 = arith.constant 0 : index
    %3 = vector.load %arg1[%c0, %c0_1, %c0_2] : memref<8x8x512xf32, #tpu.memory_space<vmem>>, vector<8x1x512xf32>
    %4 = vector.shape_cast %3 : vector<8x1x512xf32> to vector<8x512xf32>
    %c0_3 = arith.constant 0 : index
    %c0_4 = arith.constant 0 : index
    %5 = vector.load %arg4[%c0_3, %c0_4] : memref<8x128xf32, #tpu.memory_space<vmem>>, vector<8x128xf32>
    %c0_5 = arith.constant 0 : index
    %c0_6 = arith.constant 0 : index
    %6 = vector.load %arg2[%c0_5, %c0_6] : memref<128x512xf32, #tpu.memory_space<vmem>>, vector<128x512xf32>
    %cst = arith.constant dense<0.000000e+00> : vector<8x512xf32>
    %7 = tpu.matmul %5, %6, %cst {dimension_numbers = #tpu.dot_dimension_numbers<[1], [0], [0], [1], [0, 0, 1, 1], [], []>} : vector<8x128xf32>, vector<128x512xf32>, vector<8x512xf32> -> vector<8x512xf32>
    %8 = arith.addf %4, %7 : vector<8x512xf32>
    %9 = vector.extract_strided_slice %8 {offsets = [0, 0], sizes = [8, 128], strides = [1, 1]} : vector<8x512xf32> to vector<8x128xf32>
    %10 = arith.negf %9 : vector<8x128xf32>
    %11 = math.exp %10 : vector<8x128xf32>
    %cst_7 = arith.constant 1.000000e+00 : f32
    %12 = vector.broadcast %cst_7 : f32 to vector<8x128xf32>
    %13 = arith.addf %12, %11 : vector<8x128xf32>
    %14 = arith.divf %12, %13 : vector<8x128xf32>
    %15 = vector.extract_strided_slice %8 {offsets = [0, 128], sizes = [8, 128], strides = [1, 1]} : vector<8x512xf32> to vector<8x128xf32>
    %16 = arith.negf %15 : vector<8x128xf32>
    %17 = math.exp %16 : vector<8x128xf32>
    %cst_8 = arith.constant 1.000000e+00 : f32
    %18 = vector.broadcast %cst_8 : f32 to vector<8x128xf32>
    %19 = arith.addf %18, %17 : vector<8x128xf32>
    %20 = arith.divf %18, %19 : vector<8x128xf32>
    %21 = vector.extract_strided_slice %8 {offsets = [0, 256], sizes = [8, 128], strides = [1, 1]} : vector<8x512xf32> to vector<8x128xf32>
    %22 = math.tanh %21 : vector<8x128xf32>
    %23 = vector.extract_strided_slice %8 {offsets = [0, 384], sizes = [8, 128], strides = [1, 1]} : vector<8x512xf32> to vector<8x128xf32>
    %24 = arith.negf %23 : vector<8x128xf32>
    %25 = math.exp %24 : vector<8x128xf32>
    %cst_9 = arith.constant 1.000000e+00 : f32
    %26 = vector.broadcast %cst_9 : f32 to vector<8x128xf32>
    %27 = arith.addf %26, %25 : vector<8x128xf32>
    %28 = arith.divf %26, %27 : vector<8x128xf32>
    %c0_10 = arith.constant 0 : index
    %c0_11 = arith.constant 0 : index
    %29 = vector.load %arg5[%c0_10, %c0_11] : memref<8x128xf32, #tpu.memory_space<vmem>>, vector<8x128xf32>
    %30 = arith.mulf %20, %29 : vector<8x128xf32>
    %31 = arith.mulf %14, %22 : vector<8x128xf32>
    %32 = arith.addf %30, %31 : vector<8x128xf32>
    %33 = math.tanh %32 : vector<8x128xf32>
    %34 = arith.mulf %28, %33 : vector<8x128xf32>
    %c0_12 = arith.constant 0 : index
    %c0_13 = arith.constant 0 : index
    %35 = vector.load %arg5[%c0_12, %c0_13] : memref<8x128xf32, #tpu.memory_space<vmem>>, vector<8x128xf32>
    tpu.vector_store %arg5[%c0_12, %c0_13], %32 {strides = array<i32>} : memref<8x128xf32, #tpu.memory_space<vmem>>, vector<8x128xf32>,
    %c0_14 = arith.constant 0 : index
    %c0_15 = arith.constant 0 : index
    %36 = vector.load %arg4[%c0_14, %c0_15] : memref<8x128xf32, #tpu.memory_space<vmem>>, vector<8x128xf32>
    tpu.vector_store %arg4[%c0_14, %c0_15], %34 {strides = array<i32>} : memref<8x128xf32, #tpu.memory_space<vmem>>, vector<8x128xf32>,
    %c0_16 = arith.constant 0 : index
    %c0_17 = arith.constant 0 : index
    %c0_18 = arith.constant 0 : index
    %37 = vector.load %arg3[%c0_16, %c0_17, %c0_18] : memref<8x8x128xf32, #tpu.memory_space<vmem>>, vector<8x1x128xf32>
    %38 = vector.shape_cast %37 : vector<8x1x128xf32> to vector<8x128xf32>
    %39 = vector.shape_cast %34 : vector<8x128xf32> to vector<8x1x128xf32>
    tpu.vector_store %arg3[%c0_16, %c0_17, %c0_18], %39 {strides = array<i32>} : memref<8x8x128xf32, #tpu.memory_space<vmem>>, vector<8x1x128xf32>,
    %c0_19 = arith.constant 0 : index
    %c1 = arith.constant 1 : index
    %c0_20 = arith.constant 0 : index
    %40 = vector.load %arg1[%c0_19, %c1, %c0_20] : memref<8x8x512xf32, #tpu.memory_space<vmem>>, vector<8x1x512xf32>
    %41 = vector.shape_cast %40 : vector<8x1x512xf32> to vector<8x512xf32>
    %c0_21 = arith.constant 0 : index
    %c0_22 = arith.constant 0 : index
    %42 = vector.load %arg4[%c0_21, %c0_22] : memref<8x128xf32, #tpu.memory_space<vmem>>, vector<8x128xf32>
    %c0_23 = arith.constant 0 : index
    %c0_24 = arith.constant 0 : index
    %43 = vector.load %arg2[%c0_23, %c0_24] : memref<128x512xf32, #tpu.memory_space<vmem>>, vector<128x512xf32>
    %cst_25 = arith.constant dense<0.000000e+00> : vector<8x512xf32>
    %44 = tpu.matmul %42, %43, %cst_25 {dimension_numbers = #tpu.dot_dimension_numbers<[1], [0], [0], [1], [0, 0, 1, 1], [], []>} : vector<8x128xf32>, vector<128x512xf32>, vector<8x512xf32> -> vector<8x512xf32>
    %45 = arith.addf %41, %44 : vector<8x512xf32>
    %46 = vector.extract_strided_slice %45 {offsets = [0, 0], sizes = [8, 128], strides = [1, 1]} : vector<8x512xf32> to vector<8x128xf32>
    %47 = arith.negf %46 : vector<8x128xf32>
    %48 = math.exp %47 : vector<8x128xf32>
    %cst_26 = arith.constant 1.000000e+00 : f32
    %49 = vector.broadcast %cst_26 : f32 to vector<8x128xf32>
    %50 = arith.addf %49, %48 : vector<8x128xf32>
    %51 = arith.divf %49, %50 : vector<8x128xf32>
    %52 = vector.extract_strided_slice %45 {offsets = [0, 128], sizes = [8, 128], strides = [1, 1]} : vector<8x512xf32> to vector<8x128xf32>
    %53 = arith.negf %52 : vector<8x128xf32>
    %54 = math.exp %53 : vector<8x128xf32>
    %cst_27 = arith.constant 1.000000e+00 : f32
    %55 = vector.broadcast %cst_27 : f32 to vector<8x128xf32>
    %56 = arith.addf %55, %54 : vector<8x128xf32>
    %57 = arith.divf %55, %56 : vector<8x128xf32>
    %58 = vector.extract_strided_slice %45 {offsets = [0, 256], sizes = [8, 128], strides = [1, 1]} : vector<8x512xf32> to vector<8x128xf32>
    %59 = math.tanh %58 : vector<8x128xf32>
    %60 = vector.extract_strided_slice %45 {offsets = [0, 384], sizes = [8, 128], strides = [1, 1]} : vector<8x512xf32> to vector<8x128xf32>
    %61 = arith.negf %60 : vector<8x128xf32>
    %62 = math.exp %61 : vector<8x128xf32>
    %cst_28 = arith.constant 1.000000e+00 : f32
    %63 = vector.broadcast %cst_28 : f32 to vector<8x128xf32>
    %64 = arith.addf %63, %62 : vector<8x128xf32>
    %65 = arith.divf %63, %64 : vector<8x128xf32>
    %c0_29 = arith.constant 0 : index
    %c0_30 = arith.constant 0 : index
    %66 = vector.load %arg5[%c0_29, %c0_30] : memref<8x128xf32, #tpu.memory_space<vmem>>, vector<8x128xf32>
    %67 = arith.mulf %57, %66 : vector<8x128xf32>
    %68 = arith.mulf %51, %59 : vector<8x128xf32>
    %69 = arith.addf %67, %68 : vector<8x128xf32>
    %70 = math.tanh %69 : vector<8x128xf32>
    %71 = arith.mulf %65, %70 : vector<8x128xf32>
    %c0_31 = arith.constant 0 : index
    %c0_32 = arith.constant 0 : index
    %72 = vector.load %arg5[%c0_31, %c0_32] : memref<8x128xf32, #tpu.memory_space<vmem>>, vector<8x128xf32>
    tpu.vector_store %arg5[%c0_31, %c0_32], %69 {strides = array<i32>} : memref<8x128xf32, #tpu.memory_space<vmem>>, vector<8x128xf32>,
    %c0_33 = arith.constant 0 : index
    %c0_34 = arith.constant 0 : index
    %73 = vector.load %arg4[%c0_33, %c0_34] : memref<8x128xf32, #tpu.memory_space<vmem>>, vector<8x128xf32>
    tpu.vector_store %arg4[%c0_33, %c0_34], %71 {strides = array<i32>} : memref<8x128xf32, #tpu.memory_space<vmem>>, vector<8x128xf32>,
    %c0_35 = arith.constant 0 : index
    %c1_36 = arith.constant 1 : index
    %c0_37 = arith.constant 0 : index
    %74 = vector.load %arg3[%c0_35, %c1_36, %c0_37] : memref<8x8x128xf32, #tpu.memory_space<vmem>>, vector<8x1x128xf32>
    %75 = vector.shape_cast %74 : vector<8x1x128xf32> to vector<8x128xf32>
    %76 = vector.shape_cast %71 : vector<8x128xf32> to vector<8x1x128xf32>
    tpu.vector_store %arg3[%c0_35, %c1_36, %c0_37], %76 {strides = array<i32>} : memref<8x8x128xf32, #tpu.memory_space<vmem>>, vector<8x1x128xf32>,
    %c0_38 = arith.constant 0 : index
    %c2 = arith.constant 2 : index
    %c0_39 = arith.constant 0 : index
    %77 = vector.load %arg1[%c0_38, %c2, %c0_39] : memref<8x8x512xf32, #tpu.memory_space<vmem>>, vector<8x1x512xf32>
    %78 = vector.shape_cast %77 : vector<8x1x512xf32> to vector<8x512xf32>
    %c0_40 = arith.constant 0 : index
    %c0_41 = arith.constant 0 : index
    %79 = vector.load %arg4[%c0_40, %c0_41] : memref<8x128xf32, #tpu.memory_space<vmem>>, vector<8x128xf32>
    %c0_42 = arith.constant 0 : index
    %c0_43 = arith.constant 0 : index
    %80 = vector.load %arg2[%c0_42, %c0_43] : memref<128x512xf32, #tpu.memory_space<vmem>>, vector<128x512xf32>
    %cst_44 = arith.constant dense<0.000000e+00> : vector<8x512xf32>
    %81 = tpu.matmul %79, %80, %cst_44 {dimension_numbers = #tpu.dot_dimension_numbers<[1], [0], [0], [1], [0, 0, 1, 1], [], []>} : vector<8x128xf32>, vector<128x512xf32>, vector<8x512xf32> -> vector<8x512xf32>
    %82 = arith.addf %78, %81 : vector<8x512xf32>
    %83 = vector.extract_strided_slice %82 {offsets = [0, 0], sizes = [8, 128], strides = [1, 1]} : vector<8x512xf32> to vector<8x128xf32>
    %84 = arith.negf %83 : vector<8x128xf32>
    %85 = math.exp %84 : vector<8x128xf32>
    %cst_45 = arith.constant 1.000000e+00 : f32
    %86 = vector.broadcast %cst_45 : f32 to vector<8x128xf32>
    %87 = arith.addf %86, %85 : vector<8x128xf32>
    %88 = arith.divf %86, %87 : vector<8x128xf32>
    %89 = vector.extract_strided_slice %82 {offsets = [0, 128], sizes = [8, 128], strides = [1, 1]} : vector<8x512xf32> to vector<8x128xf32>
    %90 = arith.negf %89 : vector<8x128xf32>
    %91 = math.exp %90 : vector<8x128xf32>
    %cst_46 = arith.constant 1.000000e+00 : f32
    %92 = vector.broadcast %cst_46 : f32 to vector<8x128xf32>
    %93 = arith.addf %92, %91 : vector<8x128xf32>
    %94 = arith.divf %92, %93 : vector<8x128xf32>
    %95 = vector.extract_strided_slice %82 {offsets = [0, 256], sizes = [8, 128], strides = [1, 1]} : vector<8x512xf32> to vector<8x128xf32>
    %96 = math.tanh %95 : vector<8x128xf32>
    %97 = vector.extract_strided_slice %82 {offsets = [0, 384], sizes = [8, 128], strides = [1, 1]} : vector<8x512xf32> to vector<8x128xf32>
    %98 = arith.negf %97 : vector<8x128xf32>
    %99 = math.exp %98 : vector<8x128xf32>
    %cst_47 = arith.constant 1.000000e+00 : f32
    %100 = vector.broadcast %cst_47 : f32 to vector<8x128xf32>
    %101 = arith.addf %100, %99 : vector<8x128xf32>
    %102 = arith.divf %100, %101 : vector<8x128xf32>
    %c0_48 = arith.constant 0 : index
    %c0_49 = arith.constant 0 : index
    %103 = vector.load %arg5[%c0_48, %c0_49] : memref<8x128xf32, #tpu.memory_space<vmem>>, vector<8x128xf32>
    %104 = arith.mulf %94, %103 : vector<8x128xf32>
    %105 = arith.mulf %88, %96 : vector<8x128xf32>
    %106 = arith.addf %104, %105 : vector<8x128xf32>
    %107 = math.tanh %106 : vector<8x128xf32>
    %108 = arith.mulf %102, %107 : vector<8x128xf32>
    %c0_50 = arith.constant 0 : index
    %c0_51 = arith.constant 0 : index
    %109 = vector.load %arg5[%c0_50, %c0_51] : memref<8x128xf32, #tpu.memory_space<vmem>>, vector<8x128xf32>
    tpu.vector_store %arg5[%c0_50, %c0_51], %106 {strides = array<i32>} : memref<8x128xf32, #tpu.memory_space<vmem>>, vector<8x128xf32>,
    %c0_52 = arith.constant 0 : index
    %c0_53 = arith.constant 0 : index
    %110 = vector.load %arg4[%c0_52, %c0_53] : memref<8x128xf32, #tpu.memory_space<vmem>>, vector<8x128xf32>
    tpu.vector_store %arg4[%c0_52, %c0_53], %108 {strides = array<i32>} : memref<8x128xf32, #tpu.memory_space<vmem>>, vector<8x128xf32>,
    %c0_54 = arith.constant 0 : index
    %c2_55 = arith.constant 2 : index
    %c0_56 = arith.constant 0 : index
    %111 = vector.load %arg3[%c0_54, %c2_55, %c0_56] : memref<8x8x128xf32, #tpu.memory_space<vmem>>, vector<8x1x128xf32>
    %112 = vector.shape_cast %111 : vector<8x1x128xf32> to vector<8x128xf32>
    %113 = vector.shape_cast %108 : vector<8x128xf32> to vector<8x1x128xf32>
    tpu.vector_store %arg3[%c0_54, %c2_55, %c0_56], %113 {strides = array<i32>} : memref<8x8x128xf32, #tpu.memory_space<vmem>>, vector<8x1x128xf32>,
    %c0_57 = arith.constant 0 : index
    %c3 = arith.constant 3 : index
    %c0_58 = arith.constant 0 : index
    %114 = vector.load %arg1[%c0_57, %c3, %c0_58] : memref<8x8x512xf32, #tpu.memory_space<vmem>>, vector<8x1x512xf32>
    %115 = vector.shape_cast %114 : vector<8x1x512xf32> to vector<8x512xf32>
    %c0_59 = arith.constant 0 : index
    %c0_60 = arith.constant 0 : index
    %116 = vector.load %arg4[%c0_59, %c0_60] : memref<8x128xf32, #tpu.memory_space<vmem>>, vector<8x128xf32>
    %c0_61 = arith.constant 0 : index
    %c0_62 = arith.constant 0 : index
    %117 = vector.load %arg2[%c0_61, %c0_62] : memref<128x512xf32, #tpu.memory_space<vmem>>, vector<128x512xf32>
    %cst_63 = arith.constant dense<0.000000e+00> : vector<8x512xf32>
    %118 = tpu.matmul %116, %117, %cst_63 {dimension_numbers = #tpu.dot_dimension_numbers<[1], [0], [0], [1], [0, 0, 1, 1], [], []>} : vector<8x128xf32>, vector<128x512xf32>, vector<8x512xf32> -> vector<8x512xf32>
    %119 = arith.addf %115, %118 : vector<8x512xf32>
    %120 = vector.extract_strided_slice %119 {offsets = [0, 0], sizes = [8, 128], strides = [1, 1]} : vector<8x512xf32> to vector<8x128xf32>
    %121 = arith.negf %120 : vector<8x128xf32>
    %122 = math.exp %121 : vector<8x128xf32>
    %cst_64 = arith.constant 1.000000e+00 : f32
    %123 = vector.broadcast %cst_64 : f32 to vector<8x128xf32>
    %124 = arith.addf %123, %122 : vector<8x128xf32>
    %125 = arith.divf %123, %124 : vector<8x128xf32>
    %126 = vector.extract_strided_slice %119 {offsets = [0, 128], sizes = [8, 128], strides = [1, 1]} : vector<8x512xf32> to vector<8x128xf32>
    %127 = arith.negf %126 : vector<8x128xf32>
    %128 = math.exp %127 : vector<8x128xf32>
    %cst_65 = arith.constant 1.000000e+00 : f32
    %129 = vector.broadcast %cst_65 : f32 to vector<8x128xf32>
    %130 = arith.addf %129, %128 : vector<8x128xf32>
    %131 = arith.divf %129, %130 : vector<8x128xf32>
    %132 = vector.extract_strided_slice %119 {offsets = [0, 256], sizes = [8, 128], strides = [1, 1]} : vector<8x512xf32> to vector<8x128xf32>
    %133 = math.tanh %132 : vector<8x128xf32>
    %134 = vector.extract_strided_slice %119 {offsets = [0, 384], sizes = [8, 128], strides = [1, 1]} : vector<8x512xf32> to vector<8x128xf32>
    %135 = arith.negf %134 : vector<8x128xf32>
    %136 = math.exp %135 : vector<8x128xf32>
    %cst_66 = arith.constant 1.000000e+00 : f32
    %137 = vector.broadcast %cst_66 : f32 to vector<8x128xf32>
    %138 = arith.addf %137, %136 : vector<8x128xf32>
    %139 = arith.divf %137, %138 : vector<8x128xf32>
    %c0_67 = arith.constant 0 : index
    %c0_68 = arith.constant 0 : index
    %140 = vector.load %arg5[%c0_67, %c0_68] : memref<8x128xf32, #tpu.memory_space<vmem>>, vector<8x128xf32>
    %141 = arith.mulf %131, %140 : vector<8x128xf32>
    %142 = arith.mulf %125, %133 : vector<8x128xf32>
    %143 = arith.addf %141, %142 : vector<8x128xf32>
    %144 = math.tanh %143 : vector<8x128xf32>
    %145 = arith.mulf %139, %144 : vector<8x128xf32>
    %c0_69 = arith.constant 0 : index
    %c0_70 = arith.constant 0 : index
    %146 = vector.load %arg5[%c0_69, %c0_70] : memref<8x128xf32, #tpu.memory_space<vmem>>, vector<8x128xf32>
    tpu.vector_store %arg5[%c0_69, %c0_70], %143 {strides = array<i32>} : memref<8x128xf32, #tpu.memory_space<vmem>>, vector<8x128xf32>,
    %c0_71 = arith.constant 0 : index
    %c0_72 = arith.constant 0 : index
    %147 = vector.load %arg4[%c0_71, %c0_72] : memref<8x128xf32, #tpu.memory_space<vmem>>, vector<8x128xf32>
    tpu.vector_store %arg4[%c0_71, %c0_72], %145 {strides = array<i32>} : memref<8x128xf32, #tpu.memory_space<vmem>>, vector<8x128xf32>,
    %c0_73 = arith.constant 0 : index
    %c3_74 = arith.constant 3 : index
    %c0_75 = arith.constant 0 : index
    %148 = vector.load %arg3[%c0_73, %c3_74, %c0_75] : memref<8x8x128xf32, #tpu.memory_space<vmem>>, vector<8x1x128xf32>
    %149 = vector.shape_cast %148 : vector<8x1x128xf32> to vector<8x128xf32>
    %150 = vector.shape_cast %145 : vector<8x128xf32> to vector<8x1x128xf32>
    tpu.vector_store %arg3[%c0_73, %c3_74, %c0_75], %150 {strides = array<i32>} : memref<8x8x128xf32, #tpu.memory_space<vmem>>, vector<8x1x128xf32>,
    %c0_76 = arith.constant 0 : index
    %c4 = arith.constant 4 : index
    %c0_77 = arith.constant 0 : index
    %151 = vector.load %arg1[%c0_76, %c4, %c0_77] : memref<8x8x512xf32, #tpu.memory_space<vmem>>, vector<8x1x512xf32>
    %152 = vector.shape_cast %151 : vector<8x1x512xf32> to vector<8x512xf32>
    %c0_78 = arith.constant 0 : index
    %c0_79 = arith.constant 0 : index
    %153 = vector.load %arg4[%c0_78, %c0_79] : memref<8x128xf32, #tpu.memory_space<vmem>>, vector<8x128xf32>
    %c0_80 = arith.constant 0 : index
    %c0_81 = arith.constant 0 : index
    %154 = vector.load %arg2[%c0_80, %c0_81] : memref<128x512xf32, #tpu.memory_space<vmem>>, vector<128x512xf32>
    %cst_82 = arith.constant dense<0.000000e+00> : vector<8x512xf32>
    %155 = tpu.matmul %153, %154, %cst_82 {dimension_numbers = #tpu.dot_dimension_numbers<[1], [0], [0], [1], [0, 0, 1, 1], [], []>} : vector<8x128xf32>, vector<128x512xf32>, vector<8x512xf32> -> vector<8x512xf32>
    %156 = arith.addf %152, %155 : vector<8x512xf32>
    %157 = vector.extract_strided_slice %156 {offsets = [0, 0], sizes = [8, 128], strides = [1, 1]} : vector<8x512xf32> to vector<8x128xf32>
    %158 = arith.negf %157 : vector<8x128xf32>
    %159 = math.exp %158 : vector<8x128xf32>
    %cst_83 = arith.constant 1.000000e+00 : f32
    %160 = vector.broadcast %cst_83 : f32 to vector<8x128xf32>
    %161 = arith.addf %160, %159 : vector<8x128xf32>
    %162 = arith.divf %160, %161 : vector<8x128xf32>
    %163 = vector.extract_strided_slice %156 {offsets = [0, 128], sizes = [8, 128], strides = [1, 1]} : vector<8x512xf32> to vector<8x128xf32>
    %164 = arith.negf %163 : vector<8x128xf32>
    %165 = math.exp %164 : vector<8x128xf32>
    %cst_84 = arith.constant 1.000000e+00 : f32
    %166 = vector.broadcast %cst_84 : f32 to vector<8x128xf32>
    %167 = arith.addf %166, %165 : vector<8x128xf32>
    %168 = arith.divf %166, %167 : vector<8x128xf32>
    %169 = vector.extract_strided_slice %156 {offsets = [0, 256], sizes = [8, 128], strides = [1, 1]} : vector<8x512xf32> to vector<8x128xf32>
    %170 = math.tanh %169 : vector<8x128xf32>
    %171 = vector.extract_strided_slice %156 {offsets = [0, 384], sizes = [8, 128], strides = [1, 1]} : vector<8x512xf32> to vector<8x128xf32>
    %172 = arith.negf %171 : vector<8x128xf32>
    %173 = math.exp %172 : vector<8x128xf32>
    %cst_85 = arith.constant 1.000000e+00 : f32
    %174 = vector.broadcast %cst_85 : f32 to vector<8x128xf32>
    %175 = arith.addf %174, %173 : vector<8x128xf32>
    %176 = arith.divf %174, %175 : vector<8x128xf32>
    %c0_86 = arith.constant 0 : index
    %c0_87 = arith.constant 0 : index
    %177 = vector.load %arg5[%c0_86, %c0_87] : memref<8x128xf32, #tpu.memory_space<vmem>>, vector<8x128xf32>
    %178 = arith.mulf %168, %177 : vector<8x128xf32>
    %179 = arith.mulf %162, %170 : vector<8x128xf32>
    %180 = arith.addf %178, %179 : vector<8x128xf32>
    %181 = math.tanh %180 : vector<8x128xf32>
    %182 = arith.mulf %176, %181 : vector<8x128xf32>
    %c0_88 = arith.constant 0 : index
    %c0_89 = arith.constant 0 : index
    %183 = vector.load %arg5[%c0_88, %c0_89] : memref<8x128xf32, #tpu.memory_space<vmem>>, vector<8x128xf32>
    tpu.vector_store %arg5[%c0_88, %c0_89], %180 {strides = array<i32>} : memref<8x128xf32, #tpu.memory_space<vmem>>, vector<8x128xf32>,
    %c0_90 = arith.constant 0 : index
    %c0_91 = arith.constant 0 : index
    %184 = vector.load %arg4[%c0_90, %c0_91] : memref<8x128xf32, #tpu.memory_space<vmem>>, vector<8x128xf32>
    tpu.vector_store %arg4[%c0_90, %c0_91], %182 {strides = array<i32>} : memref<8x128xf32, #tpu.memory_space<vmem>>, vector<8x128xf32>,
    %c0_92 = arith.constant 0 : index
    %c4_93 = arith.constant 4 : index
    %c0_94 = arith.constant 0 : index
    %185 = vector.load %arg3[%c0_92, %c4_93, %c0_94] : memref<8x8x128xf32, #tpu.memory_space<vmem>>, vector<8x1x128xf32>
    %186 = vector.shape_cast %185 : vector<8x1x128xf32> to vector<8x128xf32>
    %187 = vector.shape_cast %182 : vector<8x128xf32> to vector<8x1x128xf32>
    tpu.vector_store %arg3[%c0_92, %c4_93, %c0_94], %187 {strides = array<i32>} : memref<8x8x128xf32, #tpu.memory_space<vmem>>, vector<8x1x128xf32>,
    %c0_95 = arith.constant 0 : index
    %c5 = arith.constant 5 : index
    %c0_96 = arith.constant 0 : index
    %188 = vector.load %arg1[%c0_95, %c5, %c0_96] : memref<8x8x512xf32, #tpu.memory_space<vmem>>, vector<8x1x512xf32>
    %189 = vector.shape_cast %188 : vector<8x1x512xf32> to vector<8x512xf32>
    %c0_97 = arith.constant 0 : index
    %c0_98 = arith.constant 0 : index
    %190 = vector.load %arg4[%c0_97, %c0_98] : memref<8x128xf32, #tpu.memory_space<vmem>>, vector<8x128xf32>
    %c0_99 = arith.constant 0 : index
    %c0_100 = arith.constant 0 : index
    %191 = vector.load %arg2[%c0_99, %c0_100] : memref<128x512xf32, #tpu.memory_space<vmem>>, vector<128x512xf32>
    %cst_101 = arith.constant dense<0.000000e+00> : vector<8x512xf32>
    %192 = tpu.matmul %190, %191, %cst_101 {dimension_numbers = #tpu.dot_dimension_numbers<[1], [0], [0], [1], [0, 0, 1, 1], [], []>} : vector<8x128xf32>, vector<128x512xf32>, vector<8x512xf32> -> vector<8x512xf32>
    %193 = arith.addf %189, %192 : vector<8x512xf32>
    %194 = vector.extract_strided_slice %193 {offsets = [0, 0], sizes = [8, 128], strides = [1, 1]} : vector<8x512xf32> to vector<8x128xf32>
    %195 = arith.negf %194 : vector<8x128xf32>
    %196 = math.exp %195 : vector<8x128xf32>
    %cst_102 = arith.constant 1.000000e+00 : f32
    %197 = vector.broadcast %cst_102 : f32 to vector<8x128xf32>
    %198 = arith.addf %197, %196 : vector<8x128xf32>
    %199 = arith.divf %197, %198 : vector<8x128xf32>
    %200 = vector.extract_strided_slice %193 {offsets = [0, 128], sizes = [8, 128], strides = [1, 1]} : vector<8x512xf32> to vector<8x128xf32>
    %201 = arith.negf %200 : vector<8x128xf32>
    %202 = math.exp %201 : vector<8x128xf32>
    %cst_103 = arith.constant 1.000000e+00 : f32
    %203 = vector.broadcast %cst_103 : f32 to vector<8x128xf32>
    %204 = arith.addf %203, %202 : vector<8x128xf32>
    %205 = arith.divf %203, %204 : vector<8x128xf32>
    %206 = vector.extract_strided_slice %193 {offsets = [0, 256], sizes = [8, 128], strides = [1, 1]} : vector<8x512xf32> to vector<8x128xf32>
    %207 = math.tanh %206 : vector<8x128xf32>
    %208 = vector.extract_strided_slice %193 {offsets = [0, 384], sizes = [8, 128], strides = [1, 1]} : vector<8x512xf32> to vector<8x128xf32>
    %209 = arith.negf %208 : vector<8x128xf32>
    %210 = math.exp %209 : vector<8x128xf32>
    %cst_104 = arith.constant 1.000000e+00 : f32
    %211 = vector.broadcast %cst_104 : f32 to vector<8x128xf32>
    %212 = arith.addf %211, %210 : vector<8x128xf32>
    %213 = arith.divf %211, %212 : vector<8x128xf32>
    %c0_105 = arith.constant 0 : index
    %c0_106 = arith.constant 0 : index
    %214 = vector.load %arg5[%c0_105, %c0_106] : memref<8x128xf32, #tpu.memory_space<vmem>>, vector<8x128xf32>
    %215 = arith.mulf %205, %214 : vector<8x128xf32>
    %216 = arith.mulf %199, %207 : vector<8x128xf32>
    %217 = arith.addf %215, %216 : vector<8x128xf32>
    %218 = math.tanh %217 : vector<8x128xf32>
    %219 = arith.mulf %213, %218 : vector<8x128xf32>
    %c0_107 = arith.constant 0 : index
    %c0_108 = arith.constant 0 : index
    %220 = vector.load %arg5[%c0_107, %c0_108] : memref<8x128xf32, #tpu.memory_space<vmem>>, vector<8x128xf32>
    tpu.vector_store %arg5[%c0_107, %c0_108], %217 {strides = array<i32>} : memref<8x128xf32, #tpu.memory_space<vmem>>, vector<8x128xf32>,
    %c0_109 = arith.constant 0 : index
    %c0_110 = arith.constant 0 : index
    %221 = vector.load %arg4[%c0_109, %c0_110] : memref<8x128xf32, #tpu.memory_space<vmem>>, vector<8x128xf32>
    tpu.vector_store %arg4[%c0_109, %c0_110], %219 {strides = array<i32>} : memref<8x128xf32, #tpu.memory_space<vmem>>, vector<8x128xf32>,
    %c0_111 = arith.constant 0 : index
    %c5_112 = arith.constant 5 : index
    %c0_113 = arith.constant 0 : index
    %222 = vector.load %arg3[%c0_111, %c5_112, %c0_113] : memref<8x8x128xf32, #tpu.memory_space<vmem>>, vector<8x1x128xf32>
    %223 = vector.shape_cast %222 : vector<8x1x128xf32> to vector<8x128xf32>
    %224 = vector.shape_cast %219 : vector<8x128xf32> to vector<8x1x128xf32>
    tpu.vector_store %arg3[%c0_111, %c5_112, %c0_113], %224 {strides = array<i32>} : memref<8x8x128xf32, #tpu.memory_space<vmem>>, vector<8x1x128xf32>,
    %c0_114 = arith.constant 0 : index
    %c6 = arith.constant 6 : index
    %c0_115 = arith.constant 0 : index
    %225 = vector.load %arg1[%c0_114, %c6, %c0_115] : memref<8x8x512xf32, #tpu.memory_space<vmem>>, vector<8x1x512xf32>
    %226 = vector.shape_cast %225 : vector<8x1x512xf32> to vector<8x512xf32>
    %c0_116 = arith.constant 0 : index
    %c0_117 = arith.constant 0 : index
    %227 = vector.load %arg4[%c0_116, %c0_117] : memref<8x128xf32, #tpu.memory_space<vmem>>, vector<8x128xf32>
    %c0_118 = arith.constant 0 : index
    %c0_119 = arith.constant 0 : index
    %228 = vector.load %arg2[%c0_118, %c0_119] : memref<128x512xf32, #tpu.memory_space<vmem>>, vector<128x512xf32>
    %cst_120 = arith.constant dense<0.000000e+00> : vector<8x512xf32>
    %229 = tpu.matmul %227, %228, %cst_120 {dimension_numbers = #tpu.dot_dimension_numbers<[1], [0], [0], [1], [0, 0, 1, 1], [], []>} : vector<8x128xf32>, vector<128x512xf32>, vector<8x512xf32> -> vector<8x512xf32>
    %230 = arith.addf %226, %229 : vector<8x512xf32>
    %231 = vector.extract_strided_slice %230 {offsets = [0, 0], sizes = [8, 128], strides = [1, 1]} : vector<8x512xf32> to vector<8x128xf32>
    %232 = arith.negf %231 : vector<8x128xf32>
    %233 = math.exp %232 : vector<8x128xf32>
    %cst_121 = arith.constant 1.000000e+00 : f32
    %234 = vector.broadcast %cst_121 : f32 to vector<8x128xf32>
    %235 = arith.addf %234, %233 : vector<8x128xf32>
    %236 = arith.divf %234, %235 : vector<8x128xf32>
    %237 = vector.extract_strided_slice %230 {offsets = [0, 128], sizes = [8, 128], strides = [1, 1]} : vector<8x512xf32> to vector<8x128xf32>
    %238 = arith.negf %237 : vector<8x128xf32>
    %239 = math.exp %238 : vector<8x128xf32>
    %cst_122 = arith.constant 1.000000e+00 : f32
    %240 = vector.broadcast %cst_122 : f32 to vector<8x128xf32>
    %241 = arith.addf %240, %239 : vector<8x128xf32>
    %242 = arith.divf %240, %241 : vector<8x128xf32>
    %243 = vector.extract_strided_slice %230 {offsets = [0, 256], sizes = [8, 128], strides = [1, 1]} : vector<8x512xf32> to vector<8x128xf32>
    %244 = math.tanh %243 : vector<8x128xf32>
    %245 = vector.extract_strided_slice %230 {offsets = [0, 384], sizes = [8, 128], strides = [1, 1]} : vector<8x512xf32> to vector<8x128xf32>
    %246 = arith.negf %245 : vector<8x128xf32>
    %247 = math.exp %246 : vector<8x128xf32>
    %cst_123 = arith.constant 1.000000e+00 : f32
    %248 = vector.broadcast %cst_123 : f32 to vector<8x128xf32>
    %249 = arith.addf %248, %247 : vector<8x128xf32>
    %250 = arith.divf %248, %249 : vector<8x128xf32>
    %c0_124 = arith.constant 0 : index
    %c0_125 = arith.constant 0 : index
    %251 = vector.load %arg5[%c0_124, %c0_125] : memref<8x128xf32, #tpu.memory_space<vmem>>, vector<8x128xf32>
    %252 = arith.mulf %242, %251 : vector<8x128xf32>
    %253 = arith.mulf %236, %244 : vector<8x128xf32>
    %254 = arith.addf %252, %253 : vector<8x128xf32>
    %255 = math.tanh %254 : vector<8x128xf32>
    %256 = arith.mulf %250, %255 : vector<8x128xf32>
    %c0_126 = arith.constant 0 : index
    %c0_127 = arith.constant 0 : index
    %257 = vector.load %arg5[%c0_126, %c0_127] : memref<8x128xf32, #tpu.memory_space<vmem>>, vector<8x128xf32>
    tpu.vector_store %arg5[%c0_126, %c0_127], %254 {strides = array<i32>} : memref<8x128xf32, #tpu.memory_space<vmem>>, vector<8x128xf32>,
    %c0_128 = arith.constant 0 : index
    %c0_129 = arith.constant 0 : index
    %258 = vector.load %arg4[%c0_128, %c0_129] : memref<8x128xf32, #tpu.memory_space<vmem>>, vector<8x128xf32>
    tpu.vector_store %arg4[%c0_128, %c0_129], %256 {strides = array<i32>} : memref<8x128xf32, #tpu.memory_space<vmem>>, vector<8x128xf32>,
    %c0_130 = arith.constant 0 : index
    %c6_131 = arith.constant 6 : index
    %c0_132 = arith.constant 0 : index
    %259 = vector.load %arg3[%c0_130, %c6_131, %c0_132] : memref<8x8x128xf32, #tpu.memory_space<vmem>>, vector<8x1x128xf32>
    %260 = vector.shape_cast %259 : vector<8x1x128xf32> to vector<8x128xf32>
    %261 = vector.shape_cast %256 : vector<8x128xf32> to vector<8x1x128xf32>
    tpu.vector_store %arg3[%c0_130, %c6_131, %c0_132], %261 {strides = array<i32>} : memref<8x8x128xf32, #tpu.memory_space<vmem>>, vector<8x1x128xf32>,
    %c0_133 = arith.constant 0 : index
    %c7 = arith.constant 7 : index
    %c0_134 = arith.constant 0 : index
    %262 = vector.load %arg1[%c0_133, %c7, %c0_134] : memref<8x8x512xf32, #tpu.memory_space<vmem>>, vector<8x1x512xf32>
    %263 = vector.shape_cast %262 : vector<8x1x512xf32> to vector<8x512xf32>
    %c0_135 = arith.constant 0 : index
    %c0_136 = arith.constant 0 : index
    %264 = vector.load %arg4[%c0_135, %c0_136] : memref<8x128xf32, #tpu.memory_space<vmem>>, vector<8x128xf32>
    %c0_137 = arith.constant 0 : index
    %c0_138 = arith.constant 0 : index
    %265 = vector.load %arg2[%c0_137, %c0_138] : memref<128x512xf32, #tpu.memory_space<vmem>>, vector<128x512xf32>
    %cst_139 = arith.constant dense<0.000000e+00> : vector<8x512xf32>
    %266 = tpu.matmul %264, %265, %cst_139 {dimension_numbers = #tpu.dot_dimension_numbers<[1], [0], [0], [1], [0, 0, 1, 1], [], []>} : vector<8x128xf32>, vector<128x512xf32>, vector<8x512xf32> -> vector<8x512xf32>
    %267 = arith.addf %263, %266 : vector<8x512xf32>
    %268 = vector.extract_strided_slice %267 {offsets = [0, 0], sizes = [8, 128], strides = [1, 1]} : vector<8x512xf32> to vector<8x128xf32>
    %269 = arith.negf %268 : vector<8x128xf32>
    %270 = math.exp %269 : vector<8x128xf32>
    %cst_140 = arith.constant 1.000000e+00 : f32
    %271 = vector.broadcast %cst_140 : f32 to vector<8x128xf32>
    %272 = arith.addf %271, %270 : vector<8x128xf32>
    %273 = arith.divf %271, %272 : vector<8x128xf32>
    %274 = vector.extract_strided_slice %267 {offsets = [0, 128], sizes = [8, 128], strides = [1, 1]} : vector<8x512xf32> to vector<8x128xf32>
    %275 = arith.negf %274 : vector<8x128xf32>
    %276 = math.exp %275 : vector<8x128xf32>
    %cst_141 = arith.constant 1.000000e+00 : f32
    %277 = vector.broadcast %cst_141 : f32 to vector<8x128xf32>
    %278 = arith.addf %277, %276 : vector<8x128xf32>
    %279 = arith.divf %277, %278 : vector<8x128xf32>
    %280 = vector.extract_strided_slice %267 {offsets = [0, 256], sizes = [8, 128], strides = [1, 1]} : vector<8x512xf32> to vector<8x128xf32>
    %281 = math.tanh %280 : vector<8x128xf32>
    %282 = vector.extract_strided_slice %267 {offsets = [0, 384], sizes = [8, 128], strides = [1, 1]} : vector<8x512xf32> to vector<8x128xf32>
    %283 = arith.negf %282 : vector<8x128xf32>
    %284 = math.exp %283 : vector<8x128xf32>
    %cst_142 = arith.constant 1.000000e+00 : f32
    %285 = vector.broadcast %cst_142 : f32 to vector<8x128xf32>
    %286 = arith.addf %285, %284 : vector<8x128xf32>
    %287 = arith.divf %285, %286 : vector<8x128xf32>
    %c0_143 = arith.constant 0 : index
    %c0_144 = arith.constant 0 : index
    %288 = vector.load %arg5[%c0_143, %c0_144] : memref<8x128xf32, #tpu.memory_space<vmem>>, vector<8x128xf32>
    %289 = arith.mulf %279, %288 : vector<8x128xf32>
    %290 = arith.mulf %273, %281 : vector<8x128xf32>
    %291 = arith.addf %289, %290 : vector<8x128xf32>
    %292 = math.tanh %291 : vector<8x128xf32>
    %293 = arith.mulf %287, %292 : vector<8x128xf32>
    %c0_145 = arith.constant 0 : index
    %c0_146 = arith.constant 0 : index
    %294 = vector.load %arg5[%c0_145, %c0_146] : memref<8x128xf32, #tpu.memory_space<vmem>>, vector<8x128xf32>
    tpu.vector_store %arg5[%c0_145, %c0_146], %291 {strides = array<i32>} : memref<8x128xf32, #tpu.memory_space<vmem>>, vector<8x128xf32>,
    %c0_147 = arith.constant 0 : index
    %c0_148 = arith.constant 0 : index
    %295 = vector.load %arg4[%c0_147, %c0_148] : memref<8x128xf32, #tpu.memory_space<vmem>>, vector<8x128xf32>
    tpu.vector_store %arg4[%c0_147, %c0_148], %293 {strides = array<i32>} : memref<8x128xf32, #tpu.memory_space<vmem>>, vector<8x128xf32>,
    %c0_149 = arith.constant 0 : index
    %c7_150 = arith.constant 7 : index
    %c0_151 = arith.constant 0 : index
    %296 = vector.load %arg3[%c0_149, %c7_150, %c0_151] : memref<8x8x128xf32, #tpu.memory_space<vmem>>, vector<8x1x128xf32>
    %297 = vector.shape_cast %296 : vector<8x1x128xf32> to vector<8x128xf32>
    %298 = vector.shape_cast %293 : vector<8x128xf32> to vector<8x1x128xf32>
    tpu.vector_store %arg3[%c0_149, %c7_150, %c0_151], %298 {strides = array<i32>} : memref<8x8x128xf32, #tpu.memory_space<vmem>>, vector<8x1x128xf32>,
    return
  }
  func.func @transform_0(%arg0: i32) -> (i32, i32, i32) {
    %c0_i32 = arith.constant 0 : i32
    %c0_i32_0 = arith.constant 0 : i32
    %c0_i32_1 = arith.constant 0 : i32
    return %c0_i32, %arg0, %c0_i32_0 : i32, i32, i32
  }
  func.func @transform_1(%arg0: i32) -> (i32, i32) {
    %c0_i32 = arith.constant 0 : i32
    %c0_i32_0 = arith.constant 0 : i32
    %c0_i32_1 = arith.constant 0 : i32
    return %c0_i32, %c0_i32_0 : i32, i32
  }
  func.func @transform_2(%arg0: i32) -> (i32, i32, i32) {
    %c0_i32 = arith.constant 0 : i32
    %c0_i32_0 = arith.constant 0 : i32
    %c0_i32_1 = arith.constant 0 : i32
    return %c0_i32, %arg0, %c0_i32_0 : i32, i32, i32
  }
}

</mosaic_0001>

<llo_original>
// kernel: decoder_rnn_forward.3
$region0: #{decoder_rnn_forward.3}
  #allocation0 [shape = 'u32[]', space=smem, size = 0x4, offset = 0x4, fixed_abs, tag = 'smem constant byte address 0x4 - core index']
  #allocation1 [shape = 'u32[72,128]{1,0:T(1,128)}', space=vmem, size = 0x9000, scoped, tag = 'internal scratch']
  %s0 = inlined_call_operand.vmem [shape: f32[64,32], index: 0, kind: input, shape index: {}]
  %s1 = inlined_call_operand.hbm [shape: f32[32,512], index: 1, kind: input, shape index: {}]
  %s2 = inlined_call_operand.vmem [shape: f32[1,512], index: 2, kind: input, shape index: {}]
  %s3 = inlined_call_operand.vmem [shape: f32[64,512], index: 3, kind: output, shape index: {}]
  %s4 = sld [smem:[#allocation0]]
  $region26: #{decoder_rnn_forward.3} parent=0
    _
  %s6 = ssub.s32 1, %s4
  %s7 = scalar_select 0, %s6, %s4
  $region1: #{decoder_rnn_forward.3} parent=0
    #allocation2 [shape = 'u8[65536]{0}', space=vmem, size = 0x10000, scoped, tag = 'input window, operand 1, single buffered']
    #allocation3 [shape = 's32[1]{0}', space=sflag, size = 0x4, scoped, tag = 'scoped memory for decoder_rnn_forward.3']
    %8 = vsyncpa [#allocation3], 0
    // Predicated region
    $region2: #{decoder_rnn_forward.3} parent=1 // pred_check
      _
    $region3: #{decoder_rnn_forward.3} parent=1 // pred_check_branch
      %10 = sbr.rel (0) target = $region5
    $region4: #{decoder_rnn_forward.3} parent=1 // pred_region
      _
    $region5: #{decoder_rnn_forward.3} parent=1 // pred_fallthru
      _
    // Predicated region
    $region6: #{decoder_rnn_forward.3} parent=1 // pred_check
      _
    $region7: #{decoder_rnn_forward.3} parent=1 // pred_check_branch
      %12 = sbr.rel (0) target = $region9
    $region8: #{decoder_rnn_forward.3} parent=1 // pred_region
      %14 = vsyncadd [#allocation3], 0
      %s15 = sshll.u32 %s1, 4
      %s16 = int_to_ptr.hbm [resolvable:$true] %s15
      %s17 = sshll.u32 [#allocation2], 4
      %s18 = int_to_ptr.vmem [resolvable:$true] %s17
      %23 = dma.hbm_to_vmem [thread:$0]  %s16, 2048, %s18, [#allocation3], 512, 512, 32
    $region9: #{decoder_rnn_forward.3} parent=1 // pred_fallthru
      _
    // Predicated region
    $region10: #{decoder_rnn_forward.3} parent=1 // pred_check
      _
    $region11: #{decoder_rnn_forward.3} parent=1 // pred_check_branch
      %25 = sbr.rel (0) target = $region13
    $region12: #{decoder_rnn_forward.3} parent=1 // pred_region
      _
    $region13: #{decoder_rnn_forward.3} parent=1 // pred_fallthru
      _
    // Predicated region
    $region14: #{decoder_rnn_forward.3} parent=1 // pred_check
      _
    $region15: #{decoder_rnn_forward.3} parent=1 // pred_check_branch
      %27 = sbr.rel (0) target = $region17
    $region16: #{decoder_rnn_forward.3} parent=1 // pred_region
      %29 = dma.done [#allocation3], 2048
    $region17: #{decoder_rnn_forward.3} parent=1 // pred_fallthru
      _
    %v30 = vld [vmem:[%s0] sm:$0xff]
    %v31 = vld [vmem:[%s0 + $0x8] sm:$0xff]
    %v32 = vld [vmem:[%s0 + $0x10] sm:$0xff]
    %v33 = vld [vmem:[%s0 + $0x18] sm:$0xff]
    %v34 = vld [vmem:[%s0 + $0x20] sm:$0xff]
    %v35 = vld [vmem:[%s0 + $0x28] sm:$0xff]
    %v36 = vld [vmem:[%s0 + $0x30] sm:$0xff]
    %v37 = vld [vmem:[%s0 + $0x38] sm:$0xff]
    %v38 = vld [vmem:[#allocation2] sm:$0xff]
    %v39 = vld [vmem:[#allocation2 + $0x8] sm:$0xff]
    %v40 = vld [vmem:[#allocation2 + $0x10] sm:$0xff]
    %v41 = vld [vmem:[#allocation2 + $0x18] sm:$0xff]
    %v42 = vld [vmem:[#allocation2 + $0x20] sm:$0xff]
    %v43 = vld [vmem:[#allocation2 + $0x28] sm:$0xff]
    %v44 = vld [vmem:[#allocation2 + $0x30] sm:$0xff]
    %v45 = vld [vmem:[#allocation2 + $0x38] sm:$0xff]
    %v46 = vld [vmem:[#allocation2 + $0x40] sm:$0xff]
    %v47 = vld [vmem:[#allocation2 + $0x48] sm:$0xff]
    %v48 = vld [vmem:[#allocation2 + $0x50] sm:$0xff]
    %v49 = vld [vmem:[#allocation2 + $0x58] sm:$0xff]
    %v50 = vld [vmem:[#allocation2 + $0x60] sm:$0xff]
    %v51 = vld [vmem:[#allocation2 + $0x68] sm:$0xff]
    %v52 = vld [vmem:[#allocation2 + $0x70] sm:$0xff]
    %v53 = vld [vmem:[#allocation2 + $0x78] sm:$0xff]
    %v54 = vld [vmem:[%s2] sm:$0xf]
    %v56 = vperm.slane %v54, 0
    %v57 = vperm.slane %v54, 1
    %v58 = vperm.slane %v54, 2
    %v59 = vperm.slane %v54, 3
    %vm64 = vcmask 261120
    %v66 = vsel %vm64, %v30, 0
    %v69 = vsel %vm64, %v31, 0
    %v72 = vsel %vm64, %v32, 0
    %v75 = vsel %vm64, %v33, 0
    %v78 = vsel %vm64, %v34, 0
    %v81 = vsel %vm64, %v35, 0
    %v84 = vsel %vm64, %v36, 0
    %v87 = vsel %vm64, %v37, 0
    %89 = vmatpush.msra.mxu0 0.0
    %90 = vmatpush.msra.mxu0 0.0
    %91 = vmatpush.msra.mxu0 0.0
    %92 = vmatpush.msra.mxu0 0.0
    %93 = vmatpush.msra.mxu0 0.0
    %94 = vmatpush.msra.mxu0 0.0
    %95 = vmatpush.msra.mxu0 0.0
    %96 = vmatpush.msra.mxu0 0.0
    %97 = vmatpush.msra.mxu0 0.0
    %98 = vmatpush.msra.mxu0 0.0
    %99 = vmatpush.msra.mxu0 0.0
    %100 = vmatpush.msra.mxu0 0.0
    %101 = vmatpush.msra.mxu0 %v50
    %102 = vmatpush.msra.mxu0 %v46
    %103 = vmatpush.msra.mxu0 %v42
    %104 = vmatpush.msra.mxu0 %v38
    %105 = vmatmul.f32.gmra.mxu0 %v66
    %v106 = vpop.f32.mrf.mxu0
    %v107 = vadd.f32 %v56, %v106
    %108 = vmatmul.f32.gmra.mxu0 %v69
    %v109 = vpop.f32.mrf.mxu0
    %v110 = vadd.f32 %v56, %v109
    %111 = vmatmul.f32.gmra.mxu0 %v72
    %v112 = vpop.f32.mrf.mxu0
    %v113 = vadd.f32 %v56, %v112
    %114 = vmatmul.f32.gmra.mxu0 %v75
    %v115 = vpop.f32.mrf.mxu0
    %v116 = vadd.f32 %v56, %v115
    %117 = vmatmul.f32.gmra.mxu0 %v78
    %v118 = vpop.f32.mrf.mxu0
    %v119 = vadd.f32 %v56, %v118
    %120 = vmatmul.f32.gmra.mxu0 %v81
    %v121 = vpop.f32.mrf.mxu0
    %v122 = vadd.f32 %v56, %v121
    %123 = vmatmul.f32.gmra.mxu0 %v84
    %v124 = vpop.f32.mrf.mxu0
    %v125 = vadd.f32 %v56, %v124
    %126 = vmatmul.f32.gmra.mxu0 %v87
    %v127 = vpop.f32.mrf.mxu0
    %v128 = vadd.f32 %v56, %v127
    %129 = vdwg.mxu0
    %130 = vmatpush.msra.mxu0 0.0
    %131 = vmatpush.msra.mxu0 0.0
    %132 = vmatpush.msra.mxu0 0.0
    %133 = vmatpush.msra.mxu0 0.0
    %134 = vmatpush.msra.mxu0 0.0
    %135 = vmatpush.msra.mxu0 0.0
    %136 = vmatpush.msra.mxu0 0.0
    %137 = vmatpush.msra.mxu0 0.0
    %138 = vmatpush.msra.mxu0 0.0
    %139 = vmatpush.msra.mxu0 0.0
    %140 = vmatpush.msra.mxu0 0.0
    %141 = vmatpush.msra.mxu0 0.0
    %142 = vmatpush.msra.mxu0 %v51
    %143 = vmatpush.msra.mxu0 %v47
    %144 = vmatpush.msra.mxu0 %v43
    %145 = vmatpush.msra.mxu0 %v39
    %146 = vmatmul.f32.gmra.mxu0 %v66
    %v147 = vpop.f32.mrf.mxu0
    %v148 = vadd.f32 %v57, %v147
    %149 = vmatmul.f32.gmra.mxu0 %v69
    %v150 = vpop.f32.mrf.mxu0
    %v151 = vadd.f32 %v57, %v150
    %152 = vmatmul.f32.gmra.mxu0 %v72
    %v153 = vpop.f32.mrf.mxu0
    %v154 = vadd.f32 %v57, %v153
    %155 = vmatmul.f32.gmra.mxu0 %v75
    %v156 = vpop.f32.mrf.mxu0
    %v157 = vadd.f32 %v57, %v156
    %158 = vmatmul.f32.gmra.mxu0 %v78
    %v159 = vpop.f32.mrf.mxu0
    %v160 = vadd.f32 %v57, %v159
    %161 = vmatmul.f32.gmra.mxu0 %v81
    %v162 = vpop.f32.mrf.mxu0
    %v163 = vadd.f32 %v57, %v162
    %164 = vmatmul.f32.gmra.mxu0 %v84
    %v165 = vpop.f32.mrf.mxu0
    %v166 = vadd.f32 %v57, %v165
    %167 = vmatmul.f32.gmra.mxu0 %v87
    %v168 = vpop.f32.mrf.mxu0
    %v169 = vadd.f32 %v57, %v168
    %170 = vdwg.mxu0
    %171 = vmatpush.msra.mxu0 0.0
    %172 = vmatpush.msra.mxu0 0.0
    %173 = vmatpush.msra.mxu0 0.0
    %174 = vmatpush.msra.mxu0 0.0
    %175 = vmatpush.msra.mxu0 0.0
    %176 = vmatpush.msra.mxu0 0.0
    %177 = vmatpush.msra.mxu0 0.0
    %178 = vmatpush.msra.mxu0 0.0
    %179 = vmatpush.msra.mxu0 0.0
    %180 = vmatpush.msra.mxu0 0.0
    %181 = vmatpush.msra.mxu0 0.0
    %182 = vmatpush.msra.mxu0 0.0
    %183 = vmatpush.msra.mxu0 %v52
    %184 = vmatpush.msra.mxu0 %v48
    %185 = vmatpush.msra.mxu0 %v44
    %186 = vmatpush.msra.mxu0 %v40
    %187 = vmatmul.f32.gmra.mxu0 %v66
    %v188 = vpop.f32.mrf.mxu0
    %v189 = vadd.f32 %v58, %v188
    %190 = vmatmul.f32.gmra.mxu0 %v69
    %v191 = vpop.f32.mrf.mxu0
    %v192 = vadd.f32 %v58, %v191
    %193 = vmatmul.f32.gmra.mxu0 %v72
    %v194 = vpop.f32.mrf.mxu0
    %v195 = vadd.f32 %v58, %v194
    %196 = vmatmul.f32.gmra.mxu0 %v75
    %v197 = vpop.f32.mrf.mxu0
    %v198 = vadd.f32 %v58, %v197
    %199 = vmatmul.f32.gmra.mxu0 %v78
    %v200 = vpop.f32.mrf.mxu0
    %v201 = vadd.f32 %v58, %v200
    %202 = vmatmul.f32.gmra.mxu0 %v81
    %v203 = vpop.f32.mrf.mxu0
    %v204 = vadd.f32 %v58, %v203
    %205 = vmatmul.f32.gmra.mxu0 %v84
    %v206 = vpop.f32.mrf.mxu0
    %v207 = vadd.f32 %v58, %v206
    %208 = vmatmul.f32.gmra.mxu0 %v87
    %v209 = vpop.f32.mrf.mxu0
    %v210 = vadd.f32 %v58, %v209
    %211 = vdwg.mxu0
    %212 = vmatpush.msra.mxu0 0.0
    %213 = vmatpush.msra.mxu0 0.0
    %214 = vmatpush.msra.mxu0 0.0
    %215 = vmatpush.msra.mxu0 0.0
    %216 = vmatpush.msra.mxu0 0.0
    %217 = vmatpush.msra.mxu0 0.0
    %218 = vmatpush.msra.mxu0 0.0
    %219 = vmatpush.msra.mxu0 0.0
    %220 = vmatpush.msra.mxu0 0.0
    %221 = vmatpush.msra.mxu0 0.0
    %222 = vmatpush.msra.mxu0 0.0
    %223 = vmatpush.msra.mxu0 0.0
    %224 = vmatpush.msra.mxu0 %v53
    %225 = vmatpush.msra.mxu0 %v49
    %226 = vmatpush.msra.mxu0 %v45
    %227 = vmatpush.msra.mxu0 %v41
    %228 = vmatmul.f32.gmra.mxu0 %v66
    %v229 = vpop.f32.mrf.mxu0
    %v230 = vadd.f32 %v59, %v229
    %231 = vmatmul.f32.gmra.mxu0 %v69
    %v232 = vpop.f32.mrf.mxu0
    %v233 = vadd.f32 %v59, %v232
    %234 = vmatmul.f32.gmra.mxu0 %v72
    %v235 = vpop.f32.mrf.mxu0
    %v236 = vadd.f32 %v59, %v235
    %237 = vmatmul.f32.gmra.mxu0 %v75
    %v238 = vpop.f32.mrf.mxu0
    %v239 = vadd.f32 %v59, %v238
    %240 = vmatmul.f32.gmra.mxu0 %v78
    %v241 = vpop.f32.mrf.mxu0
    %v242 = vadd.f32 %v59, %v241
    %243 = vmatmul.f32.gmra.mxu0 %v81
    %v244 = vpop.f32.mrf.mxu0
    %v245 = vadd.f32 %v59, %v244
    %246 = vmatmul.f32.gmra.mxu0 %v84
    %v247 = vpop.f32.mrf.mxu0
    %v248 = vadd.f32 %v59, %v247
    %249 = vmatmul.f32.gmra.mxu0 %v87
    %v250 = vpop.f32.mrf.mxu0
    %v251 = vadd.f32 %v59, %v250
    %252 = vdwg.mxu0
    %253 = vst [vmem:[%s3] sm:$0xff] %v107
    %254 = vst [vmem:[%s3 + $0x8] sm:$0xff] %v148
    %255 = vst [vmem:[%s3 + $0x10] sm:$0xff] %v189
    %256 = vst [vmem:[%s3 + $0x18] sm:$0xff] %v230
    %257 = vst [vmem:[%s3 + $0x20] sm:$0xff] %v110
    %258 = vst [vmem:[%s3 + $0x28] sm:$0xff] %v151
    %259 = vst [vmem:[%s3 + $0x30] sm:$0xff] %v192
    %260 = vst [vmem:[%s3 + $0x38] sm:$0xff] %v233
    %261 = vst [vmem:[%s3 + $0x40] sm:$0xff] %v113
    %262 = vst [vmem:[%s3 + $0x48] sm:$0xff] %v154
    %263 = vst [vmem:[%s3 + $0x50] sm:$0xff] %v195
    %264 = vst [vmem:[%s3 + $0x58] sm:$0xff] %v236
    %265 = vst [vmem:[%s3 + $0x60] sm:$0xff] %v116
    %266 = vst [vmem:[%s3 + $0x68] sm:$0xff] %v157
    %267 = vst [vmem:[%s3 + $0x70] sm:$0xff] %v198
    %268 = vst [vmem:[%s3 + $0x78] sm:$0xff] %v239
    %269 = vst [vmem:[%s3 + $0x80] sm:$0xff] %v119
    %270 = vst [vmem:[%s3 + $0x88] sm:$0xff] %v160
    %271 = vst [vmem:[%s3 + $0x90] sm:$0xff] %v201
    %272 = vst [vmem:[%s3 + $0x98] sm:$0xff] %v242
    %273 = vst [vmem:[%s3 + $0xa0] sm:$0xff] %v122
    %274 = vst [vmem:[%s3 + $0xa8] sm:$0xff] %v163
    %275 = vst [vmem:[%s3 + $0xb0] sm:$0xff] %v204
    %276 = vst [vmem:[%s3 + $0xb8] sm:$0xff] %v245
    %277 = vst [vmem:[%s3 + $0xc0] sm:$0xff] %v125
    %278 = vst [vmem:[%s3 + $0xc8] sm:$0xff] %v166
    %279 = vst [vmem:[%s3 + $0xd0] sm:$0xff] %v207
    %280 = vst [vmem:[%s3 + $0xd8] sm:$0xff] %v248
    %281 = vst [vmem:[%s3 + $0xe0] sm:$0xff] %v128
    %282 = vst [vmem:[%s3 + $0xe8] sm:$0xff] %v169
    %283 = vst [vmem:[%s3 + $0xf0] sm:$0xff] %v210
    %284 = vst [vmem:[%s3 + $0xf8] sm:$0xff] %v251
    // Predicated region
    $region18: #{decoder_rnn_forward.3} parent=1 // pred_check
      _
    $region19: #{decoder_rnn_forward.3} parent=1 // pred_check_branch
      %286 = sbr.rel (0) target = $region21
    $region20: #{decoder_rnn_forward.3} parent=1 // pred_region
      _
    $region21: #{decoder_rnn_forward.3} parent=1 // pred_fallthru
      _
    // Predicated region
    $region22: #{decoder_rnn_forward.3} parent=1 // pred_check
      _
    $region23: #{decoder_rnn_forward.3} parent=1 // pred_check_branch
      %288 = sbr.rel (0) target = $region25
    $region24: #{decoder_rnn_forward.3} parent=1 // pred_region
      _
    $region25: #{decoder_rnn_forward.3} parent=1 // pred_fallthru
      _
    %289 = vsyncpa [#allocation3], 1

// kernel: decoder_rnn_forward.5
$region0: #{decoder_rnn_forward.5}
  #allocation0 [shape = 'u32[]', space=smem, size = 0x4, offset = 0x4, fixed_abs, tag = 'smem constant byte address 0x4 - core index']
  #allocation1 [shape = 'u32[72,128]{1,0:T(1,128)}', space=vmem, size = 0x9000, scoped, tag = 'internal scratch']
  %s0 = inlined_call_operand.vmem [shape: f32[64,128], index: 0, kind: input, shape index: {}]
  %s1 = inlined_call_operand.hbm [shape: f32[128,256], index: 1, kind: input, shape index: {}]
  %s2 = inlined_call_operand.vmem [shape: f32[1,256], index: 2, kind: input, shape index: {}]
  %s3 = inlined_call_operand.vmem [shape: f32[64,256], index: 3, kind: output, shape index: {}]
  %s4 = sld [smem:[#allocation0]]
  $region26: #{decoder_rnn_forward.5} parent=0
    _
  %s6 = ssub.s32 1, %s4
  %s7 = scalar_select 0, %s6, %s4
  $region1: #{decoder_rnn_forward.5} parent=0
    #allocation2 [shape = 'u8[131072]{0}', space=vmem, size = 0x20000, scoped, tag = 'input window, operand 1, single buffered']
    #allocation3 [shape = 's32[1]{0}', space=sflag, size = 0x4, scoped, tag = 'scoped memory for decoder_rnn_forward.5']
    %8 = vsyncpa [#allocation3], 0
    // Predicated region
    $region2: #{decoder_rnn_forward.5} parent=1 // pred_check
      _
    $region3: #{decoder_rnn_forward.5} parent=1 // pred_check_branch
      %10 = sbr.rel (0) target = $region5
    $region4: #{decoder_rnn_forward.5} parent=1 // pred_region
      _
    $region5: #{decoder_rnn_forward.5} parent=1 // pred_fallthru
      _
    // Predicated region
    $region6: #{decoder_rnn_forward.5} parent=1 // pred_check
      _
    $region7: #{decoder_rnn_forward.5} parent=1 // pred_check_branch
      %12 = sbr.rel (0) target = $region9
    $region8: #{decoder_rnn_forward.5} parent=1 // pred_region
      %14 = vsyncadd [#allocation3], 0
      %s15 = sshll.u32 %s1, 4
      %s16 = int_to_ptr.hbm [resolvable:$true] %s15
      %s17 = sshll.u32 [#allocation2], 4
      %s18 = int_to_ptr.vmem [resolvable:$true] %s17
      %23 = dma.hbm_to_vmem [thread:$0]  %s16, 4096, %s18, [#allocation3], 256, 256, 16
    $region9: #{decoder_rnn_forward.5} parent=1 // pred_fallthru
      _
    // Predicated region
    $region10: #{decoder_rnn_forward.5} parent=1 // pred_check
      _
    $region11: #{decoder_rnn_forward.5} parent=1 // pred_check_branch
      %25 = sbr.rel (0) target = $region13
    $region12: #{decoder_rnn_forward.5} parent=1 // pred_region
      _
    $region13: #{decoder_rnn_forward.5} parent=1 // pred_fallthru
      _
    // Predicated region
    $region14: #{decoder_rnn_forward.5} parent=1 // pred_check
      _
    $region15: #{decoder_rnn_forward.5} parent=1 // pred_check_branch
      %27 = sbr.rel (0) target = $region17
    $region16: #{decoder_rnn_forward.5} parent=1 // pred_region
      %29 = dma.done [#allocation3], 4096
    $region17: #{decoder_rnn_forward.5} parent=1 // pred_fallthru
      _
    %v30 = vld [vmem:[%s0] sm:$0xff]
    %v31 = vld [vmem:[%s0 + $0x8] sm:$0xff]
    %v32 = vld [vmem:[%s0 + $0x10] sm:$0xff]
    %v33 = vld [vmem:[%s0 + $0x18] sm:$0xff]
    %v34 = vld [vmem:[%s0 + $0x20] sm:$0xff]
    %v35 = vld [vmem:[%s0 + $0x28] sm:$0xff]
    %v36 = vld [vmem:[%s0 + $0x30] sm:$0xff]
    %v37 = vld [vmem:[%s0 + $0x38] sm:$0xff]
    %v38 = vld [vmem:[#allocation2] sm:$0xff]
    %v39 = vld [vmem:[#allocation2 + $0x8] sm:$0xff]
    %v40 = vld [vmem:[#allocation2 + $0x10] sm:$0xff]
    %v41 = vld [vmem:[#allocation2 + $0x18] sm:$0xff]
    %v42 = vld [vmem:[#allocation2 + $0x20] sm:$0xff]
    %v43 = vld [vmem:[#allocation2 + $0x28] sm:$0xff]
    %v44 = vld [vmem:[#allocation2 + $0x30] sm:$0xff]
    %v45 = vld [vmem:[#allocation2 + $0x38] sm:$0xff]
    %v46 = vld [vmem:[#allocation2 + $0x40] sm:$0xff]
    %v47 = vld [vmem:[#allocation2 + $0x48] sm:$0xff]
    %v48 = vld [vmem:[#allocation2 + $0x50] sm:$0xff]
    %v49 = vld [vmem:[#allocation2 + $0x58] sm:$0xff]
    %v50 = vld [vmem:[#allocation2 + $0x60] sm:$0xff]
    %v51 = vld [vmem:[#allocation2 + $0x68] sm:$0xff]
    %v52 = vld [vmem:[#allocation2 + $0x70] sm:$0xff]
    %v53 = vld [vmem:[#allocation2 + $0x78] sm:$0xff]
    %v54 = vld [vmem:[#allocation2 + $0x80] sm:$0xff]
    %v55 = vld [vmem:[#allocation2 + $0x88] sm:$0xff]
    %v56 = vld [vmem:[#allocation2 + $0x90] sm:$0xff]
    %v57 = vld [vmem:[#allocation2 + $0x98] sm:$0xff]
    %v58 = vld [vmem:[#allocation2 + $0xa0] sm:$0xff]
    %v59 = vld [vmem:[#allocation2 + $0xa8] sm:$0xff]
    %v60 = vld [vmem:[#allocation2 + $0xb0] sm:$0xff]
    %v61 = vld [vmem:[#allocation2 + $0xb8] sm:$0xff]
    %v62 = vld [vmem:[#allocation2 + $0xc0] sm:$0xff]
    %v63 = vld [vmem:[#allocation2 + $0xc8] sm:$0xff]
    %v64 = vld [vmem:[#allocation2 + $0xd0] sm:$0xff]
    %v65 = vld [vmem:[#allocation2 + $0xd8] sm:$0xff]
    %v66 = vld [vmem:[#allocation2 + $0xe0] sm:$0xff]
    %v67 = vld [vmem:[#allocation2 + $0xe8] sm:$0xff]
    %v68 = vld [vmem:[#allocation2 + $0xf0] sm:$0xff]
    %v69 = vld [vmem:[#allocation2 + $0xf8] sm:$0xff]
    %v70 = vld [vmem:[%s2] sm:$0x3]
    %v72 = vperm.slane %v70, 0
    %v73 = vperm.slane %v70, 1
    %76 = vmatpush.msra.mxu0 %v68
    %77 = vmatpush.msra.mxu0 %v66
    %78 = vmatpush.msra.mxu0 %v64
    %79 = vmatpush.msra.mxu0 %v62
    %80 = vmatpush.msra.mxu0 %v60
    %81 = vmatpush.msra.mxu0 %v58
    %82 = vmatpush.msra.mxu0 %v56
    %83 = vmatpush.msra.mxu0 %v54
    %84 = vmatpush.msra.mxu0 %v52
    %85 = vmatpush.msra.mxu0 %v50
    %86 = vmatpush.msra.mxu0 %v48
    %87 = vmatpush.msra.mxu0 %v46
    %88 = vmatpush.msra.mxu0 %v44
    %89 = vmatpush.msra.mxu0 %v42
    %90 = vmatpush.msra.mxu0 %v40
    %91 = vmatpush.msra.mxu0 %v38
    %92 = vmatmul.f32.gmra.mxu0 %v30
    %v93 = vpop.f32.mrf.mxu0
    %v94 = vadd.f32 %v72, %v93
    %95 = vmatmul.f32.gmra.mxu0 %v31
    %v96 = vpop.f32.mrf.mxu0
    %v97 = vadd.f32 %v72, %v96
    %98 = vmatmul.f32.gmra.mxu0 %v32
    %v99 = vpop.f32.mrf.mxu0
    %v100 = vadd.f32 %v72, %v99
    %101 = vmatmul.f32.gmra.mxu0 %v33
    %v102 = vpop.f32.mrf.mxu0
    %v103 = vadd.f32 %v72, %v102
    %104 = vmatmul.f32.gmra.mxu0 %v34
    %v105 = vpop.f32.mrf.mxu0
    %v106 = vadd.f32 %v72, %v105
    %107 = vmatmul.f32.gmra.mxu0 %v35
    %v108 = vpop.f32.mrf.mxu0
    %v109 = vadd.f32 %v72, %v108
    %110 = vmatmul.f32.gmra.mxu0 %v36
    %v111 = vpop.f32.mrf.mxu0
    %v112 = vadd.f32 %v72, %v111
    %113 = vmatmul.f32.gmra.mxu0 %v37
    %v114 = vpop.f32.mrf.mxu0
    %v115 = vadd.f32 %v72, %v114
    %116 = vdwg.mxu0
    %117 = vmatpush.msra.mxu0 %v69
    %118 = vmatpush.msra.mxu0 %v67
    %119 = vmatpush.msra.mxu0 %v65
    %120 = vmatpush.msra.mxu0 %v63
    %121 = vmatpush.msra.mxu0 %v61
    %122 = vmatpush.msra.mxu0 %v59
    %123 = vmatpush.msra.mxu0 %v57
    %124 = vmatpush.msra.mxu0 %v55
    %125 = vmatpush.msra.mxu0 %v53
    %126 = vmatpush.msra.mxu0 %v51
    %127 = vmatpush.msra.mxu0 %v49
    %128 = vmatpush.msra.mxu0 %v47
    %129 = vmatpush.msra.mxu0 %v45
    %130 = vmatpush.msra.mxu0 %v43
    %131 = vmatpush.msra.mxu0 %v41
    %132 = vmatpush.msra.mxu0 %v39
    %133 = vmatmul.f32.gmra.mxu0 %v30
    %v134 = vpop.f32.mrf.mxu0
    %v135 = vadd.f32 %v73, %v134
    %136 = vmatmul.f32.gmra.mxu0 %v31
    %v137 = vpop.f32.mrf.mxu0
    %v138 = vadd.f32 %v73, %v137
    %139 = vmatmul.f32.gmra.mxu0 %v32
    %v140 = vpop.f32.mrf.mxu0
    %v141 = vadd.f32 %v73, %v140
    %142 = vmatmul.f32.gmra.mxu0 %v33
    %v143 = vpop.f32.mrf.mxu0
    %v144 = vadd.f32 %v73, %v143
    %145 = vmatmul.f32.gmra.mxu0 %v34
    %v146 = vpop.f32.mrf.mxu0
    %v147 = vadd.f32 %v73, %v146
    %148 = vmatmul.f32.gmra.mxu0 %v35
    %v149 = vpop.f32.mrf.mxu0
    %v150 = vadd.f32 %v73, %v149
    %151 = vmatmul.f32.gmra.mxu0 %v36
    %v152 = vpop.f32.mrf.mxu0
    %v153 = vadd.f32 %v73, %v152
    %154 = vmatmul.f32.gmra.mxu0 %v37
    %v155 = vpop.f32.mrf.mxu0
    %v156 = vadd.f32 %v73, %v155
    %157 = vdwg.mxu0
    %158 = vst [vmem:[%s3] sm:$0xff] %v94
    %159 = vst [vmem:[%s3 + $0x8] sm:$0xff] %v135
    %160 = vst [vmem:[%s3 + $0x10] sm:$0xff] %v97
    %161 = vst [vmem:[%s3 + $0x18] sm:$0xff] %v138
    %162 = vst [vmem:[%s3 + $0x20] sm:$0xff] %v100
    %163 = vst [vmem:[%s3 + $0x28] sm:$0xff] %v141
    %164 = vst [vmem:[%s3 + $0x30] sm:$0xff] %v103
    %165 = vst [vmem:[%s3 + $0x38] sm:$0xff] %v144
    %166 = vst [vmem:[%s3 + $0x40] sm:$0xff] %v106
    %167 = vst [vmem:[%s3 + $0x48] sm:$0xff] %v147
    %168 = vst [vmem:[%s3 + $0x50] sm:$0xff] %v109
    %169 = vst [vmem:[%s3 + $0x58] sm:$0xff] %v150
    %170 = vst [vmem:[%s3 + $0x60] sm:$0xff] %v112
    %171 = vst [vmem:[%s3 + $0x68] sm:$0xff] %v153
    %172 = vst [vmem:[%s3 + $0x70] sm:$0xff] %v115
    %173 = vst [vmem:[%s3 + $0x78] sm:$0xff] %v156
    // Predicated region
    $region18: #{decoder_rnn_forward.5} parent=1 // pred_check
      _
    $region19: #{decoder_rnn_forward.5} parent=1 // pred_check_branch
      %175 = sbr.rel (0) target = $region21
    $region20: #{decoder_rnn_forward.5} parent=1 // pred_region
      _
    $region21: #{decoder_rnn_forward.5} parent=1 // pred_fallthru
      _
    // Predicated region
    $region22: #{decoder_rnn_forward.5} parent=1 // pred_check
      _
    $region23: #{decoder_rnn_forward.5} parent=1 // pred_check_branch
      %177 = sbr.rel (0) target = $region25
    $region24: #{decoder_rnn_forward.5} parent=1 // pred_region
      _
    $region25: #{decoder_rnn_forward.5} parent=1 // pred_fallthru
      _
    %178 = vsyncpa [#allocation3], 1

// kernel: decoder_rnn_forward.4
$region0: #{decoder_rnn_forward.4}
  #allocation0 [shape = 'u32[]', space=smem, size = 0x4, offset = 0x4, fixed_abs, tag = 'smem constant byte address 0x4 - core index']
  #allocation1 [shape = 'u32[72,128]{1,0:T(1,128)}', space=vmem, size = 0x9000, scoped, tag = 'internal scratch']
  #allocation2 [shape = 'f32[8,128]{1,0:T(8,128)}', space=vmem, size = 0x1000, scoped, tag = 'scratch operand']
  #allocation3 [shape = 'f32[8,128]{1,0:T(8,128)}', space=vmem, size = 0x1000, scoped, tag = 'scratch operand']
  %s0 = inlined_call_operand.vmem [shape: f32[8,8,512], index: 0, kind: input, shape index: {}]
  %s1 = inlined_call_operand.vmem [shape: f32[128,512], index: 1, kind: input, shape index: {}]
  %s2 = inlined_call_operand.vmem [shape: f32[8,8,128], index: 2, kind: output, shape index: {}]
  %s3 = sld [smem:[#allocation0]]
  $region22: #{decoder_rnn_forward.4} parent=0
    _
  %s5 = ssub.s32 1, %s3
  %s6 = scalar_select 0, %s5, %s3
  // Predicated region
  $region2: #{decoder_rnn_forward.4} parent=0 // pred_check
    _
  $region3: #{decoder_rnn_forward.4} parent=0 // pred_check_branch
    %8 = sbr.rel (0) target = $region5
  $region4: #{decoder_rnn_forward.4} parent=0 // pred_region
    _
  $region5: #{decoder_rnn_forward.4} parent=0 // pred_fallthru
    _
  // Predicated region
  $region6: #{decoder_rnn_forward.4} parent=0 // pred_check
    _
  $region7: #{decoder_rnn_forward.4} parent=0 // pred_check_branch
    %10 = sbr.rel (0) target = $region9
  $region8: #{decoder_rnn_forward.4} parent=0 // pred_region
    _
  $region9: #{decoder_rnn_forward.4} parent=0 // pred_fallthru
    _
  %p11 = scmp.eq.s32.totalorder 0, 0
  // Predicated region
  $region10: #{decoder_rnn_forward.4} parent=0 // pred_check
    %p12 = pneg %p11
  $region11: #{decoder_rnn_forward.4} parent=0 // pred_check_branch
    %14 = sbr.rel (%p12) target = $region13
  $region12: #{decoder_rnn_forward.4} parent=0 // pred_region
    %15 = vst [vmem:[#allocation2] sm:$0xff] 0.0
    %16 = vst [vmem:[#allocation3] sm:$0xff] 0.0
  $region13: #{decoder_rnn_forward.4} parent=0 // pred_fallthru
    _
  %v17 = vld [vmem:[%s0] ss:$8 sm:$0xf]
  %s18 = scalar_lea.vmem %s0, 32
  %v19 = vld [vmem:[%s18] ss:$8 sm:$0xf]
  %s20 = scalar_lea.vmem %s0, 64
  %v21 = vld [vmem:[%s20] ss:$8 sm:$0xf]
  %s22 = scalar_lea.vmem %s0, 96
  %v23 = vld [vmem:[%s22] ss:$8 sm:$0xf]
  %s24 = scalar_lea.vmem %s0, 128
  %v25 = vld [vmem:[%s24] ss:$8 sm:$0xf]
  %s26 = scalar_lea.vmem %s0, 160
  %v27 = vld [vmem:[%s26] ss:$8 sm:$0xf]
  %s28 = scalar_lea.vmem %s0, 192
  %v29 = vld [vmem:[%s28] ss:$8 sm:$0xf]
  %s30 = scalar_lea.vmem %s0, 224
  %v31 = vld [vmem:[%s30] ss:$8 sm:$0xf]
  %v32 = vld [vmem:[#allocation2] sm:$0xff]
  %v33 = vld [vmem:[%s1] sm:$0xff]
  %v34 = vld [vmem:[%s1 + $0x8] sm:$0xff]
  %v35 = vld [vmem:[%s1 + $0x10] sm:$0xff]
  %v36 = vld [vmem:[%s1 + $0x18] sm:$0xff]
  %v37 = vld [vmem:[%s1 + $0x20] sm:$0xff]
  %v38 = vld [vmem:[%s1 + $0x28] sm:$0xff]
  %v39 = vld [vmem:[%s1 + $0x30] sm:$0xff]
  %v40 = vld [vmem:[%s1 + $0x38] sm:$0xff]
  %v41 = vld [vmem:[%s1 + $0x40] sm:$0xff]
  %v42 = vld [vmem:[%s1 + $0x48] sm:$0xff]
  %v43 = vld [vmem:[%s1 + $0x50] sm:$0xff]
  %v44 = vld [vmem:[%s1 + $0x58] sm:$0xff]
  %v45 = vld [vmem:[%s1 + $0x60] sm:$0xff]
  %v46 = vld [vmem:[%s1 + $0x68] sm:$0xff]
  %v47 = vld [vmem:[%s1 + $0x70] sm:$0xff]
  %v48 = vld [vmem:[%s1 + $0x78] sm:$0xff]
  %v49 = vld [vmem:[%s1 + $0x80] sm:$0xff]
  %v50 = vld [vmem:[%s1 + $0x88] sm:$0xff]
  %v51 = vld [vmem:[%s1 + $0x90] sm:$0xff]
  %v52 = vld [vmem:[%s1 + $0x98] sm:$0xff]
  %v53 = vld [vmem:[%s1 + $0xa0] sm:$0xff]
  %v54 = vld [vmem:[%s1 + $0xa8] sm:$0xff]
  %v55 = vld [vmem:[%s1 + $0xb0] sm:$0xff]
  %v56 = vld [vmem:[%s1 + $0xb8] sm:$0xff]
  %v57 = vld [vmem:[%s1 + $0xc0] sm:$0xff]
  %v58 = vld [vmem:[%s1 + $0xc8] sm:$0xff]
  %v59 = vld [vmem:[%s1 + $0xd0] sm:$0xff]
  %v60 = vld [vmem:[%s1 + $0xd8] sm:$0xff]
  %v61 = vld [vmem:[%s1 + $0xe0] sm:$0xff]
  %v62 = vld [vmem:[%s1 + $0xe8] sm:$0xff]
  %v63 = vld [vmem:[%s1 + $0xf0] sm:$0xff]
  %v64 = vld [vmem:[%s1 + $0xf8] sm:$0xff]
  %v65 = vld [vmem:[%s1 + $0x100] sm:$0xff]
  %v66 = vld [vmem:[%s1 + $0x108] sm:$0xff]
  %v67 = vld [vmem:[%s1 + $0x110] sm:$0xff]
  %v68 = vld [vmem:[%s1 + $0x118] sm:$0xff]
  %v69 = vld [vmem:[%s1 + $0x120] sm:$0xff]
  %v70 = vld [vmem:[%s1 + $0x128] sm:$0xff]
  %v71 = vld [vmem:[%s1 + $0x130] sm:$0xff]
  %v72 = vld [vmem:[%s1 + $0x138] sm:$0xff]
  %v73 = vld [vmem:[%s1 + $0x140] sm:$0xff]
  %v74 = vld [vmem:[%s1 + $0x148] sm:$0xff]
  %v75 = vld [vmem:[%s1 + $0x150] sm:$0xff]
  %v76 = vld [vmem:[%s1 + $0x158] sm:$0xff]
  %v77 = vld [vmem:[%s1 + $0x160] sm:$0xff]
  %v78 = vld [vmem:[%s1 + $0x168] sm:$0xff]
  %v79 = vld [vmem:[%s1 + $0x170] sm:$0xff]
  %v80 = vld [vmem:[%s1 + $0x178] sm:$0xff]
  %v81 = vld [vmem:[%s1 + $0x180] sm:$0xff]
  %v82 = vld [vmem:[%s1 + $0x188] sm:$0xff]
  %v83 = vld [vmem:[%s1 + $0x190] sm:$0xff]
  %v84 = vld [vmem:[%s1 + $0x198] sm:$0xff]
  %v85 = vld [vmem:[%s1 + $0x1a0] sm:$0xff]
  %v86 = vld [vmem:[%s1 + $0x1a8] sm:$0xff]
  %v87 = vld [vmem:[%s1 + $0x1b0] sm:$0xff]
  %v88 = vld [vmem:[%s1 + $0x1b8] sm:$0xff]
  %v89 = vld [vmem:[%s1 + $0x1c0] sm:$0xff]
  %v90 = vld [vmem:[%s1 + $0x1c8] sm:$0xff]
  %v91 = vld [vmem:[%s1 + $0x1d0] sm:$0xff]
  %v92 = vld [vmem:[%s1 + $0x1d8] sm:$0xff]
  %v93 = vld [vmem:[%s1 + $0x1e0] sm:$0xff]
  %v94 = vld [vmem:[%s1 + $0x1e8] sm:$0xff]
  %v95 = vld [vmem:[%s1 + $0x1f0] sm:$0xff]
  %v96 = vld [vmem:[%s1 + $0x1f8] sm:$0xff]
  %97 = vmatpush.msra.mxu0 %v93
  %98 = vmatpush.msra.mxu0 %v89
  %99 = vmatpush.msra.mxu0 %v85
  %100 = vmatpush.msra.mxu0 %v81
  %101 = vmatpush.msra.mxu0 %v77
  %102 = vmatpush.msra.mxu0 %v73
  %103 = vmatpush.msra.mxu0 %v69
  %104 = vmatpush.msra.mxu0 %v65
  %105 = vmatpush.msra.mxu0 %v61
  %106 = vmatpush.msra.mxu0 %v57
  %107 = vmatpush.msra.mxu0 %v53
  %108 = vmatpush.msra.mxu0 %v49
  %109 = vmatpush.msra.mxu0 %v45
  %110 = vmatpush.msra.mxu0 %v41
  %111 = vmatpush.msra.mxu0 %v37
  %112 = vmatpush.msra.mxu0 %v33
  %113 = vmatmul.f32.gmra.mxu0 %v32
  %v114 = vpop.f32.mrf.mxu0
  %v115 = vadd.f32 0.0, %v114
  %116 = vdwg.mxu0
  %117 = vmatpush.msra.mxu0 %v94
  %118 = vmatpush.msra.mxu0 %v90
  %119 = vmatpush.msra.mxu0 %v86
  %120 = vmatpush.msra.mxu0 %v82
  %121 = vmatpush.msra.mxu0 %v78
  %122 = vmatpush.msra.mxu0 %v74
  %123 = vmatpush.msra.mxu0 %v70
  %124 = vmatpush.msra.mxu0 %v66
  %125 = vmatpush.msra.mxu0 %v62
  %126 = vmatpush.msra.mxu0 %v58
  %127 = vmatpush.msra.mxu0 %v54
  %128 = vmatpush.msra.mxu0 %v50
  %129 = vmatpush.msra.mxu0 %v46
  %130 = vmatpush.msra.mxu0 %v42
  %131 = vmatpush.msra.mxu0 %v38
  %132 = vmatpush.msra.mxu0 %v34
  %133 = vmatmul.f32.gmra.mxu0 %v32
  %v134 = vpop.f32.mrf.mxu0
  %v135 = vadd.f32 0.0, %v134
  %136 = vdwg.mxu0
  %137 = vmatpush.msra.mxu0 %v95
  %138 = vmatpush.msra.mxu0 %v91
  %139 = vmatpush.msra.mxu0 %v87
  %140 = vmatpush.msra.mxu0 %v83
  %141 = vmatpush.msra.mxu0 %v79
  %142 = vmatpush.msra.mxu0 %v75
  %143 = vmatpush.msra.mxu0 %v71
  %144 = vmatpush.msra.mxu0 %v67
  %145 = vmatpush.msra.mxu0 %v63
  %146 = vmatpush.msra.mxu0 %v59
  %147 = vmatpush.msra.mxu0 %v55
  %148 = vmatpush.msra.mxu0 %v51
  %149 = vmatpush.msra.mxu0 %v47
  %150 = vmatpush.msra.mxu0 %v43
  %151 = vmatpush.msra.mxu0 %v39
  %152 = vmatpush.msra.mxu0 %v35
  %153 = vmatmul.f32.gmra.mxu0 %v32
  %v154 = vpop.f32.mrf.mxu0
  %v155 = vadd.f32 0.0, %v154
  %156 = vdwg.mxu0
  %157 = vmatpush.msra.mxu0 %v96
  %158 = vmatpush.msra.mxu0 %v92
  %159 = vmatpush.msra.mxu0 %v88
  %160 = vmatpush.msra.mxu0 %v84
  %161 = vmatpush.msra.mxu0 %v80
  %162 = vmatpush.msra.mxu0 %v76
  %163 = vmatpush.msra.mxu0 %v72
  %164 = vmatpush.msra.mxu0 %v68
  %165 = vmatpush.msra.mxu0 %v64
  %166 = vmatpush.msra.mxu0 %v60
  %167 = vmatpush.msra.mxu0 %v56
  %168 = vmatpush.msra.mxu0 %v52
  %169 = vmatpush.msra.mxu0 %v48
  %170 = vmatpush.msra.mxu0 %v44
  %171 = vmatpush.msra.mxu0 %v40
  %172 = vmatpush.msra.mxu0 %v36
  %173 = vmatmul.f32.gmra.mxu0 %v32
  %v174 = vpop.f32.mrf.mxu0
  %v175 = vadd.f32 0.0, %v174
  %176 = vdwg.mxu0
  %v181 = vrot.slane %v135, 7
  %v182 = vrot.slane %v155, 6
  %v183 = vrot.slane %v175, 5
  %vm184 = vcmask 1040384
  %v185 = vsel %vm184, %v115, %v181
  %vm186 = vcmask 1042434
  %v187 = vsel %vm186, %v182, %v183
  %vm188 = vcmask 1041408
  %v189 = vsel %vm188, %v185, %v187
  %vm190 = vcmask 1041409
  %v191 = vsel %vm190, %v115, %v181
  %vm192 = vcmask 1043459
  %v193 = vsel %vm192, %v182, %v183
  %vm194 = vcmask 1042433
  %v195 = vsel %vm194, %v191, %v193
  %v196 = vrot.slane %v195, 1
  %v197 = vsel %vm186, %v115, %v181
  %vm198 = vcmask 1044484
  %v199 = vsel %vm198, %v182, %v183
  %vm200 = vcmask 1043458
  %v201 = vsel %vm200, %v197, %v199
  %v202 = vrot.slane %v201, 2
  %v203 = vsel %vm192, %v115, %v181
  %vm204 = vcmask 1045509
  %v205 = vsel %vm204, %v182, %v183
  %vm206 = vcmask 1044483
  %v207 = vsel %vm206, %v203, %v205
  %v208 = vrot.slane %v207, 3
  %v209 = vsel %vm198, %v115, %v181
  %vm210 = vcmask 1046534
  %v211 = vsel %vm210, %v182, %v183
  %vm212 = vcmask 1045508
  %v213 = vsel %vm212, %v209, %v211
  %v214 = vrot.slane %v213, 4
  %v215 = vsel %vm204, %v115, %v181
  %vm216 = vcmask 1046528
  %v217 = vsel %vm216, %v183, %v182
  %vm218 = vcmask 1046533
  %v219 = vsel %vm218, %v215, %v217
  %v220 = vrot.slane %v219, 5
  %v221 = vsel %vm210, %v115, %v181
  %v222 = vsel %vm184, %v182, %v183
  %vm223 = vcmask 1045504
  %v224 = vsel %vm223, %v222, %v221
  %v225 = vrot.slane %v224, 6
  %v226 = vsel %vm216, %v181, %v115
  %v227 = vsel %vm190, %v182, %v183
  %vm228 = vcmask 1046529
  %v229 = vsel %vm228, %v227, %v226
  %v230 = vrot.slane %v229, 7
  %v239 = vadd.f32 %v17, %v189
  %v240 = vadd.f32 %v19, %v196
  %v241 = vadd.f32 %v21, %v202
  %v242 = vadd.f32 %v23, %v208
  %v243 = vadd.f32 %v25, %v214
  %v244 = vadd.f32 %v27, %v220
  %v245 = vadd.f32 %v29, %v225
  %v246 = vadd.f32 %v31, %v230
  %v247 = vxor.u32 %v239, 2147483648
  %v248 = vxor.u32 %v240, 2147483648
  %v249 = vxor.u32 %v241, 2147483648
  %v250 = vxor.u32 %v242, 2147483648
  %v251 = vxor.u32 %v243, 2147483648
  %v252 = vxor.u32 %v244, 2147483648
  %v253 = vxor.u32 %v245, 2147483648
  %v254 = vxor.u32 %v246, 2147483648
  %v255 = vmul.f32 %v247, 1.442695
  %v256 = vpow.pop %v255
  %v257 = vmul.f32 %v248, 1.442695
  %v258 = vpow.pop %v257
  %v259 = vmul.f32 %v249, 1.442695
  %v260 = vpow.pop %v259
  %v261 = vmul.f32 %v250, 1.442695
  %v262 = vpow.pop %v261
  %v263 = vmul.f32 %v251, 1.442695
  %v264 = vpow.pop %v263
  %v265 = vmul.f32 %v252, 1.442695
  %v266 = vpow.pop %v265
  %v267 = vmul.f32 %v253, 1.442695
  %v268 = vpow.pop %v267
  %v269 = vmul.f32 %v254, 1.442695
  %v270 = vpow.pop %v269
  %v271 = vadd.f32 %v256, 1.0
  %v272 = vadd.f32 %v258, 1.0
  %v273 = vadd.f32 %v260, 1.0
  %v274 = vadd.f32 %v262, 1.0
  %v275 = vadd.f32 %v264, 1.0
  %v276 = vadd.f32 %v266, 1.0
  %v277 = vadd.f32 %v268, 1.0
  %v278 = vadd.f32 %v270, 1.0
  %v279 = vrcp.pop %v271
  %v280 = vmul.f32 %v271, %v279
  %v281 = vsub.f32 1.0, %v280
  %v282 = vmul.f32 %v279, %v281
  %v283 = vadd.f32 %v279, %v282
  %vm284 = vweird.f32 %v271
  %vm285 = vweird.f32 %v279
  %vm286 = vmor %vm284, %vm285
  %v287 = vsel %vm286, %v279, %v283
  %v288 = vand.u32 2147483647, %v271
  %vm289 = vcmp.eq.f32.partialorder %v288, 8.507059e+37
  %v290 = vand.u32 %v271, 2147483648
  %v291 = vor.u32 1.1754944e-38, %v290
  %v292 = vsel %vm289, %v291, %v287
  %v293 = vmul.f32 1.0, %v292
  %v294 = vrcp.pop %v272
  %v295 = vmul.f32 %v272, %v294
  %v296 = vsub.f32 1.0, %v295
  %v297 = vmul.f32 %v294, %v296
  %v298 = vadd.f32 %v294, %v297
  %vm299 = vweird.f32 %v272
  %vm300 = vweird.f32 %v294
  %vm301 = vmor %vm299, %vm300
  %v302 = vsel %vm301, %v294, %v298
  %v303 = vand.u32 2147483647, %v272
  %vm304 = vcmp.eq.f32.partialorder %v303, 8.507059e+37
  %v305 = vand.u32 %v272, 2147483648
  %v306 = vor.u32 1.1754944e-38, %v305
  %v307 = vsel %vm304, %v306, %v302
  %v308 = vmul.f32 1.0, %v307
  %v309 = vrcp.pop %v273
  %v310 = vmul.f32 %v273, %v309
  %v311 = vsub.f32 1.0, %v310
  %v312 = vmul.f32 %v309, %v311
  %v313 = vadd.f32 %v309, %v312
  %vm314 = vweird.f32 %v273
  %vm315 = vweird.f32 %v309
  %vm316 = vmor %vm314, %vm315
  %v317 = vsel %vm316, %v309, %v313
  %v318 = vand.u32 2147483647, %v273
  %vm319 = vcmp.eq.f32.partialorder %v318, 8.507059e+37
  %v320 = vand.u32 %v273, 2147483648
  %v321 = vor.u32 1.1754944e-38, %v320
  %v322 = vsel %vm319, %v321, %v317
  %v323 = vmul.f32 1.0, %v322
  %v324 = vrcp.pop %v274
  %v325 = vmul.f32 %v274, %v324
  %v326 = vsub.f32 1.0, %v325
  %v327 = vmul.f32 %v324, %v326
  %v328 = vadd.f32 %v324, %v327
  %vm329 = vweird.f32 %v274
  %vm330 = vweird.f32 %v324
  %vm331 = vmor %vm329, %vm330
  %v332 = vsel %vm331, %v324, %v328
  %v333 = vand.u32 2147483647, %v274
  %vm334 = vcmp.eq.f32.partialorder %v333, 8.507059e+37
  %v335 = vand.u32 %v274, 2147483648
  %v336 = vor.u32 1.1754944e-38, %v335
  %v337 = vsel %vm334, %v336, %v332
  %v338 = vmul.f32 1.0, %v337
  %v339 = vrcp.pop %v275
  %v340 = vmul.f32 %v275, %v339
  %v341 = vsub.f32 1.0, %v340
  %v342 = vmul.f32 %v339, %v341
  %v343 = vadd.f32 %v339, %v342
  %vm344 = vweird.f32 %v275
  %vm345 = vweird.f32 %v339
  %vm346 = vmor %vm344, %vm345
  %v347 = vsel %vm346, %v339, %v343
  %v348 = vand.u32 2147483647, %v275
  %vm349 = vcmp.eq.f32.partialorder %v348, 8.507059e+37
  %v350 = vand.u32 %v275, 2147483648
  %v351 = vor.u32 1.1754944e-38, %v350
  %v352 = vsel %vm349, %v351, %v347
  %v353 = vmul.f32 1.0, %v352
  %v354 = vrcp.pop %v276
  %v355 = vmul.f32 %v276, %v354
  %v356 = vsub.f32 1.0, %v355
  %v357 = vmul.f32 %v354, %v356
  %v358 = vadd.f32 %v354, %v357
  %vm359 = vweird.f32 %v276
  %vm360 = vweird.f32 %v354
  %vm361 = vmor %vm359, %vm360
  %v362 = vsel %vm361, %v354, %v358
  %v363 = vand.u32 2147483647, %v276
  %vm364 = vcmp.eq.f32.partialorder %v363, 8.507059e+37
  %v365 = vand.u32 %v276, 2147483648
  %v366 = vor.u32 1.1754944e-38, %v365
  %v367 = vsel %vm364, %v366, %v362
  %v368 = vmul.f32 1.0, %v367
  %v369 = vrcp.pop %v277
  %v370 = vmul.f32 %v277, %v369
  %v371 = vsub.f32 1.0, %v370
  %v372 = vmul.f32 %v369, %v371
  %v373 = vadd.f32 %v369, %v372
  %vm374 = vweird.f32 %v277
  %vm375 = vweird.f32 %v369
  %vm376 = vmor %vm374, %vm375
  %v377 = vsel %vm376, %v369, %v373
  %v378 = vand.u32 2147483647, %v277
  %vm379 = vcmp.eq.f32.partialorder %v378, 8.507059e+37
  %v380 = vand.u32 %v277, 2147483648
  %v381 = vor.u32 1.1754944e-38, %v380
  %v382 = vsel %vm379, %v381, %v377
  %v383 = vmul.f32 1.0, %v382
  %v384 = vrcp.pop %v278
  %v385 = vmul.f32 %v278, %v384
  %v386 = vsub.f32 1.0, %v385
  %v387 = vmul.f32 %v384, %v386
  %v388 = vadd.f32 %v384, %v387
  %vm389 = vweird.f32 %v278
  %vm390 = vweird.f32 %v384
  %vm391 = vmor %vm389, %vm390
  %v392 = vsel %vm391, %v384, %v388
  %v393 = vand.u32 2147483647, %v278
  %vm394 = vcmp.eq.f32.partialorder %v393, 8.507059e+37
  %v395 = vand.u32 %v278, 2147483648
  %v396 = vor.u32 1.1754944e-38, %v395
  %v397 = vsel %vm394, %v396, %v392
  %v398 = vmul.f32 1.0, %v397
  %v407 = vrot.slane %v239, 1
  %v408 = vrot.slane %v240, 1
  %v409 = vrot.slane %v241, 1
  %v410 = vrot.slane %v242, 1
  %v411 = vrot.slane %v243, 1
  %v412 = vrot.slane %v244, 1
  %v413 = vrot.slane %v245, 1
  %v414 = vrot.slane %v246, 1
  %v423 = vxor.u32 %v407, 2147483648
  %v424 = vxor.u32 %v408, 2147483648
  %v425 = vxor.u32 %v409, 2147483648
  %v426 = vxor.u32 %v410, 2147483648
  %v427 = vxor.u32 %v411, 2147483648
  %v428 = vxor.u32 %v412, 2147483648
  %v429 = vxor.u32 %v413, 2147483648
  %v430 = vxor.u32 %v414, 2147483648
  %v431 = vmul.f32 %v423, 1.442695
  %v432 = vpow.pop %v431
  %v433 = vmul.f32 %v424, 1.442695
  %v434 = vpow.pop %v433
  %v435 = vmul.f32 %v425, 1.442695
  %v436 = vpow.pop %v435
  %v437 = vmul.f32 %v426, 1.442695
  %v438 = vpow.pop %v437
  %v439 = vmul.f32 %v427, 1.442695
  %v440 = vpow.pop %v439
  %v441 = vmul.f32 %v428, 1.442695
  %v442 = vpow.pop %v441
  %v443 = vmul.f32 %v429, 1.442695
  %v444 = vpow.pop %v443
  %v445 = vmul.f32 %v430, 1.442695
  %v446 = vpow.pop %v445
  %v447 = vadd.f32 %v432, 1.0
  %v448 = vadd.f32 %v434, 1.0
  %v449 = vadd.f32 %v436, 1.0
  %v450 = vadd.f32 %v438, 1.0
  %v451 = vadd.f32 %v440, 1.0
  %v452 = vadd.f32 %v442, 1.0
  %v453 = vadd.f32 %v444, 1.0
  %v454 = vadd.f32 %v446, 1.0
  %v455 = vrcp.pop %v447
  %v456 = vmul.f32 %v447, %v455
  %v457 = vsub.f32 1.0, %v456
  %v458 = vmul.f32 %v455, %v457
  %v459 = vadd.f32 %v455, %v458
  %vm460 = vweird.f32 %v447
  %vm461 = vweird.f32 %v455
  %vm462 = vmor %vm460, %vm461
  %v463 = vsel %vm462, %v455, %v459
  %v464 = vand.u32 2147483647, %v447
  %vm465 = vcmp.eq.f32.partialorder %v464, 8.507059e+37
  %v466 = vand.u32 %v447, 2147483648
  %v467 = vor.u32 1.1754944e-38, %v466
  %v468 = vsel %vm465, %v467, %v463
  %v469 = vmul.f32 1.0, %v468
  %v470 = vrcp.pop %v448
  %v471 = vmul.f32 %v448, %v470
  %v472 = vsub.f32 1.0, %v471
  %v473 = vmul.f32 %v470, %v472
  %v474 = vadd.f32 %v470, %v473
  %vm475 = vweird.f32 %v448
  %vm476 = vweird.f32 %v470
  %vm477 = vmor %vm475, %vm476
  %v478 = vsel %vm477, %v470, %v474
  %v479 = vand.u32 2147483647, %v448
  %vm480 = vcmp.eq.f32.partialorder %v479, 8.507059e+37
  %v481 = vand.u32 %v448, 2147483648
  %v482 = vor.u32 1.1754944e-38, %v481
  %v483 = vsel %vm480, %v482, %v478
  %v484 = vmul.f32 1.0, %v483
  %v485 = vrcp.pop %v449
  %v486 = vmul.f32 %v449, %v485
  %v487 = vsub.f32 1.0, %v486
  %v488 = vmul.f32 %v485, %v487
  %v489 = vadd.f32 %v485, %v488
  %vm490 = vweird.f32 %v449
  %vm491 = vweird.f32 %v485
  %vm492 = vmor %vm490, %vm491
  %v493 = vsel %vm492, %v485, %v489
  %v494 = vand.u32 2147483647, %v449
  %vm495 = vcmp.eq.f32.partialorder %v494, 8.507059e+37
  %v496 = vand.u32 %v449, 2147483648
  %v497 = vor.u32 1.1754944e-38, %v496
  %v498 = vsel %vm495, %v497, %v493
  %v499 = vmul.f32 1.0, %v498
  %v500 = vrcp.pop %v450
  %v501 = vmul.f32 %v450, %v500
  %v502 = vsub.f32 1.0, %v501
  %v503 = vmul.f32 %v500, %v502
  %v504 = vadd.f32 %v500, %v503
  %vm505 = vweird.f32 %v450
  %vm506 = vweird.f32 %v500
  %vm507 = vmor %vm505, %vm506
  %v508 = vsel %vm507, %v500, %v504
  %v509 = vand.u32 2147483647, %v450
  %vm510 = vcmp.eq.f32.partialorder %v509, 8.507059e+37
  %v511 = vand.u32 %v450, 2147483648
  %v512 = vor.u32 1.1754944e-38, %v511
  %v513 = vsel %vm510, %v512, %v508
  %v514 = vmul.f32 1.0, %v513
  %v515 = vrcp.pop %v451
  %v516 = vmul.f32 %v451, %v515
  %v517 = vsub.f32 1.0, %v516
  %v518 = vmul.f32 %v515, %v517
  %v519 = vadd.f32 %v515, %v518
  %vm520 = vweird.f32 %v451
  %vm521 = vweird.f32 %v515
  %vm522 = vmor %vm520, %vm521
  %v523 = vsel %vm522, %v515, %v519
  %v524 = vand.u32 2147483647, %v451
  %vm525 = vcmp.eq.f32.partialorder %v524, 8.507059e+37
  %v526 = vand.u32 %v451, 2147483648
  %v527 = vor.u32 1.1754944e-38, %v526
  %v528 = vsel %vm525, %v527, %v523
  %v529 = vmul.f32 1.0, %v528
  %v530 = vrcp.pop %v452
  %v531 = vmul.f32 %v452, %v530
  %v532 = vsub.f32 1.0, %v531
  %v533 = vmul.f32 %v530, %v532
  %v534 = vadd.f32 %v530, %v533
  %vm535 = vweird.f32 %v452
  %vm536 = vweird.f32 %v530
  %vm537 = vmor %vm535, %vm536
  %v538 = vsel %vm537, %v530, %v534
  %v539 = vand.u32 2147483647, %v452
  %vm540 = vcmp.eq.f32.partialorder %v539, 8.507059e+37
  %v541 = vand.u32 %v452, 2147483648
  %v542 = vor.u32 1.1754944e-38, %v541
  %v543 = vsel %vm540, %v542, %v538
  %v544 = vmul.f32 1.0, %v543
  %v545 = vrcp.pop %v453
  %v546 = vmul.f32 %v453, %v545
  %v547 = vsub.f32 1.0, %v546
  %v548 = vmul.f32 %v545, %v547
  %v549 = vadd.f32 %v545, %v548
  %vm550 = vweird.f32 %v453
  %vm551 = vweird.f32 %v545
  %vm552 = vmor %vm550, %vm551
  %v553 = vsel %vm552, %v545, %v549
  %v554 = vand.u32 2147483647, %v453
  %vm555 = vcmp.eq.f32.partialorder %v554, 8.507059e+37
  %v556 = vand.u32 %v453, 2147483648
  %v557 = vor.u32 1.1754944e-38, %v556
  %v558 = vsel %vm555, %v557, %v553
  %v559 = vmul.f32 1.0, %v558
  %v560 = vrcp.pop %v454
  %v561 = vmul.f32 %v454, %v560
  %v562 = vsub.f32 1.0, %v561
  %v563 = vmul.f32 %v560, %v562
  %v564 = vadd.f32 %v560, %v563
  %vm565 = vweird.f32 %v454
  %vm566 = vweird.f32 %v560
  %vm567 = vmor %vm565, %vm566
  %v568 = vsel %vm567, %v560, %v564
  %v569 = vand.u32 2147483647, %v454
  %vm570 = vcmp.eq.f32.partialorder %v569, 8.507059e+37
  %v571 = vand.u32 %v454, 2147483648
  %v572 = vor.u32 1.1754944e-38, %v571
  %v573 = vsel %vm570, %v572, %v568
  %v574 = vmul.f32 1.0, %v573
  %v575 = vrot.slane %v239, 2
  %v576 = vrot.slane %v240, 2
  %v577 = vrot.slane %v241, 2
  %v578 = vrot.slane %v242, 2
  %v579 = vrot.slane %v243, 2
  %v580 = vrot.slane %v244, 2
  %v581 = vrot.slane %v245, 2
  %v582 = vrot.slane %v246, 2
  %v591 = vtanh.pop %v575
  %v592 = vtanh.pop %v576
  %v593 = vtanh.pop %v577
  %v594 = vtanh.pop %v578
  %v595 = vtanh.pop %v579
  %v596 = vtanh.pop %v580
  %v597 = vtanh.pop %v581
  %v598 = vtanh.pop %v582
  %v599 = vrot.slane %v239, 3
  %v600 = vrot.slane %v240, 3
  %v601 = vrot.slane %v241, 3
  %v602 = vrot.slane %v242, 3
  %v603 = vrot.slane %v243, 3
  %v604 = vrot.slane %v244, 3
  %v605 = vrot.slane %v245, 3
  %v606 = vrot.slane %v246, 3
  %v615 = vxor.u32 %v599, 2147483648
  %v616 = vxor.u32 %v600, 2147483648
  %v617 = vxor.u32 %v601, 2147483648
  %v618 = vxor.u32 %v602, 2147483648
  %v619 = vxor.u32 %v603, 2147483648
  %v620 = vxor.u32 %v604, 2147483648
  %v621 = vxor.u32 %v605, 2147483648
  %v622 = vxor.u32 %v606, 2147483648
  %v623 = vmul.f32 %v615, 1.442695
  %v624 = vpow.pop %v623
  %v625 = vmul.f32 %v616, 1.442695
  %v626 = vpow.pop %v625
  %v627 = vmul.f32 %v617, 1.442695
  %v628 = vpow.pop %v627
  %v629 = vmul.f32 %v618, 1.442695
  %v630 = vpow.pop %v629
  %v631 = vmul.f32 %v619, 1.442695
  %v632 = vpow.pop %v631
  %v633 = vmul.f32 %v620, 1.442695
  %v634 = vpow.pop %v633
  %v635 = vmul.f32 %v621, 1.442695
  %v636 = vpow.pop %v635
  %v637 = vmul.f32 %v622, 1.442695
  %v638 = vpow.pop %v637
  %v639 = vadd.f32 %v624, 1.0
  %v640 = vadd.f32 %v626, 1.0
  %v641 = vadd.f32 %v628, 1.0
  %v642 = vadd.f32 %v630, 1.0
  %v643 = vadd.f32 %v632, 1.0
  %v644 = vadd.f32 %v634, 1.0
  %v645 = vadd.f32 %v636, 1.0
  %v646 = vadd.f32 %v638, 1.0
  %v647 = vrcp.pop %v639
  %v648 = vmul.f32 %v639, %v647
  %v649 = vsub.f32 1.0, %v648
  %v650 = vmul.f32 %v647, %v649
  %v651 = vadd.f32 %v647, %v650
  %vm652 = vweird.f32 %v639
  %vm653 = vweird.f32 %v647
  %vm654 = vmor %vm652, %vm653
  %v655 = vsel %vm654, %v647, %v651
  %v656 = vand.u32 2147483647, %v639
  %vm657 = vcmp.eq.f32.partialorder %v656, 8.507059e+37
  %v658 = vand.u32 %v639, 2147483648
  %v659 = vor.u32 1.1754944e-38, %v658
  %v660 = vsel %vm657, %v659, %v655
  %v661 = vmul.f32 1.0, %v660
  %v662 = vrcp.pop %v640
  %v663 = vmul.f32 %v640, %v662
  %v664 = vsub.f32 1.0, %v663
  %v665 = vmul.f32 %v662, %v664
  %v666 = vadd.f32 %v662, %v665
  %vm667 = vweird.f32 %v640
  %vm668 = vweird.f32 %v662
  %vm669 = vmor %vm667, %vm668
  %v670 = vsel %vm669, %v662, %v666
  %v671 = vand.u32 2147483647, %v640
  %vm672 = vcmp.eq.f32.partialorder %v671, 8.507059e+37
  %v673 = vand.u32 %v640, 2147483648
  %v674 = vor.u32 1.1754944e-38, %v673
  %v675 = vsel %vm672, %v674, %v670
  %v676 = vmul.f32 1.0, %v675
  %v677 = vrcp.pop %v641
  %v678 = vmul.f32 %v641, %v677
  %v679 = vsub.f32 1.0, %v678
  %v680 = vmul.f32 %v677, %v679
  %v681 = vadd.f32 %v677, %v680
  %vm682 = vweird.f32 %v641
  %vm683 = vweird.f32 %v677
  %vm684 = vmor %vm682, %vm683
  %v685 = vsel %vm684, %v677, %v681
  %v686 = vand.u32 2147483647, %v641
  %vm687 = vcmp.eq.f32.partialorder %v686, 8.507059e+37
  %v688 = vand.u32 %v641, 2147483648
  %v689 = vor.u32 1.1754944e-38, %v688
  %v690 = vsel %vm687, %v689, %v685
  %v691 = vmul.f32 1.0, %v690
  %v692 = vrcp.pop %v642
  %v693 = vmul.f32 %v642, %v692
  %v694 = vsub.f32 1.0, %v693
  %v695 = vmul.f32 %v692, %v694
  %v696 = vadd.f32 %v692, %v695
  %vm697 = vweird.f32 %v642
  %vm698 = vweird.f32 %v692
  %vm699 = vmor %vm697, %vm698
  %v700 = vsel %vm699, %v692, %v696
  %v701 = vand.u32 2147483647, %v642
  %vm702 = vcmp.eq.f32.partialorder %v701, 8.507059e+37
  %v703 = vand.u32 %v642, 2147483648
  %v704 = vor.u32 1.1754944e-38, %v703
  %v705 = vsel %vm702, %v704, %v700
  %v706 = vmul.f32 1.0, %v705
  %v707 = vrcp.pop %v643
  %v708 = vmul.f32 %v643, %v707
  %v709 = vsub.f32 1.0, %v708
  %v710 = vmul.f32 %v707, %v709
  %v711 = vadd.f32 %v707, %v710
  %vm712 = vweird.f32 %v643
  %vm713 = vweird.f32 %v707
  %vm714 = vmor %vm712, %vm713
  %v715 = vsel %vm714, %v707, %v711
  %v716 = vand.u32 2147483647, %v643
  %vm717 = vcmp.eq.f32.partialorder %v716, 8.507059e+37
  %v718 = vand.u32 %v643, 2147483648
  %v719 = vor.u32 1.1754944e-38, %v718
  %v720 = vsel %vm717, %v719, %v715
  %v721 = vmul.f32 1.0, %v720
  %v722 = vrcp.pop %v644
  %v723 = vmul.f32 %v644, %v722
  %v724 = vsub.f32 1.0, %v723
  %v725 = vmul.f32 %v722, %v724
  %v726 = vadd.f32 %v722, %v725
  %vm727 = vweird.f32 %v644
  %vm728 = vweird.f32 %v722
  %vm729 = vmor %vm727, %vm728
  %v730 = vsel %vm729, %v722, %v726
  %v731 = vand.u32 2147483647, %v644
  %vm732 = vcmp.eq.f32.partialorder %v731, 8.507059e+37
  %v733 = vand.u32 %v644, 2147483648
  %v734 = vor.u32 1.1754944e-38, %v733
  %v735 = vsel %vm732, %v734, %v730
  %v736 = vmul.f32 1.0, %v735
  %v737 = vrcp.pop %v645
  %v738 = vmul.f32 %v645, %v737
  %v739 = vsub.f32 1.0, %v738
  %v740 = vmul.f32 %v737, %v739
  %v741 = vadd.f32 %v737, %v740
  %vm742 = vweird.f32 %v645
  %vm743 = vweird.f32 %v737
  %vm744 = vmor %vm742, %vm743
  %v745 = vsel %vm744, %v737, %v741
  %v746 = vand.u32 2147483647, %v645
  %vm747 = vcmp.eq.f32.partialorder %v746, 8.507059e+37
  %v748 = vand.u32 %v645, 2147483648
  %v749 = vor.u32 1.1754944e-38, %v748
  %v750 = vsel %vm747, %v749, %v745
  %v751 = vmul.f32 1.0, %v750
  %v752 = vrcp.pop %v646
  %v753 = vmul.f32 %v646, %v752
  %v754 = vsub.f32 1.0, %v753
  %v755 = vmul.f32 %v752, %v754
  %v756 = vadd.f32 %v752, %v755
  %vm757 = vweird.f32 %v646
  %vm758 = vweird.f32 %v752
  %vm759 = vmor %vm757, %vm758
  %v760 = vsel %vm759, %v752, %v756
  %v761 = vand.u32 2147483647, %v646
  %vm762 = vcmp.eq.f32.partialorder %v761, 8.507059e+37
  %v763 = vand.u32 %v646, 2147483648
  %v764 = vor.u32 1.1754944e-38, %v763
  %v765 = vsel %vm762, %v764, %v760
  %v766 = vmul.f32 1.0, %v765
  %v767 = vld [vmem:[#allocation3] sm:$0xff]
  %v769 = vrot.slane %v767, 1
  %v770 = vrot.slane %v767, 2
  %v771 = vrot.slane %v767, 3
  %v772 = vrot.slane %v767, 4
  %v773 = vrot.slane %v767, 5
  %v774 = vrot.slane %v767, 6
  %v775 = vrot.slane %v767, 7
  %v783 = vmul.f32 %v469, %v767
  %v784 = vmul.f32 %v484, %v769
  %v785 = vmul.f32 %v499, %v770
  %v786 = vmul.f32 %v514, %v771
  %v787 = vmul.f32 %v529, %v772
  %v788 = vmul.f32 %v544, %v773
  %v789 = vmul.f32 %v559, %v774
  %v790 = vmul.f32 %v574, %v775
  %v791 = vmul.f32 %v293, %v591
  %v792 = vmul.f32 %v308, %v592
  %v793 = vmul.f32 %v323, %v593
  %v794 = vmul.f32 %v338, %v594
  %v795 = vmul.f32 %v353, %v595
  %v796 = vmul.f32 %v368, %v596
  %v797 = vmul.f32 %v383, %v597
  %v798 = vmul.f32 %v398, %v598
  %v799 = vadd.f32 %v783, %v791
  %v800 = vadd.f32 %v784, %v792
  %v801 = vadd.f32 %v785, %v793
  %v802 = vadd.f32 %v786, %v794
  %v803 = vadd.f32 %v787, %v795
  %v804 = vadd.f32 %v788, %v796
  %v805 = vadd.f32 %v789, %v797
  %v806 = vadd.f32 %v790, %v798
  %v807 = vtanh.pop %v799
  %v808 = vtanh.pop %v800
  %v809 = vtanh.pop %v801
  %v810 = vtanh.pop %v802
  %v811 = vtanh.pop %v803
  %v812 = vtanh.pop %v804
  %v813 = vtanh.pop %v805
  %v814 = vtanh.pop %v806
  %v815 = vmul.f32 %v661, %v807
  %v816 = vmul.f32 %v676, %v808
  %v817 = vmul.f32 %v691, %v809
  %v818 = vmul.f32 %v706, %v810
  %v819 = vmul.f32 %v721, %v811
  %v820 = vmul.f32 %v736, %v812
  %v821 = vmul.f32 %v751, %v813
  %v822 = vmul.f32 %v766, %v814
  %831 = vst [vmem:[#allocation1] ss:$9 sm:$0xff] %v799
  %s832 = scalar_lea.vmem [#allocation1], 1
  %833 = vst [vmem:[%s832] ss:$9 sm:$0xff] %v800
  %s834 = scalar_lea.vmem [#allocation1], 2
  %835 = vst [vmem:[%s834] ss:$9 sm:$0xff] %v801
  %s836 = scalar_lea.vmem [#allocation1], 3
  %837 = vst [vmem:[%s836] ss:$9 sm:$0xff] %v802
  %s838 = scalar_lea.vmem [#allocation1], 4
  %839 = vst [vmem:[%s838] ss:$9 sm:$0xff] %v803
  %s840 = scalar_lea.vmem [#allocation1], 5
  %841 = vst [vmem:[%s840] ss:$9 sm:$0xff] %v804
  %s842 = scalar_lea.vmem [#allocation1], 6
  %843 = vst [vmem:[%s842] ss:$9 sm:$0xff] %v805
  %s844 = scalar_lea.vmem [#allocation1], 7
  %845 = vst [vmem:[%s844] ss:$9 sm:$0xff] %v806
  %v846 = vld [vmem:[#allocation1] sm:$0xff]
  %848 = vst [vmem:[#allocation3] sm:$0xff] %v846
  %857 = vst [vmem:[#allocation1] ss:$9 sm:$0xff] %v815
  %s858 = scalar_lea.vmem [#allocation1], 1
  %859 = vst [vmem:[%s858] ss:$9 sm:$0xff] %v816
  %s860 = scalar_lea.vmem [#allocation1], 2
  %861 = vst [vmem:[%s860] ss:$9 sm:$0xff] %v817
  %s862 = scalar_lea.vmem [#allocation1], 3
  %863 = vst [vmem:[%s862] ss:$9 sm:$0xff] %v818
  %s864 = scalar_lea.vmem [#allocation1], 4
  %865 = vst [vmem:[%s864] ss:$9 sm:$0xff] %v819
  %s866 = scalar_lea.vmem [#allocation1], 5
  %867 = vst [vmem:[%s866] ss:$9 sm:$0xff] %v820
  %s868 = scalar_lea.vmem [#allocation1], 6
  %869 = vst [vmem:[%s868] ss:$9 sm:$0xff] %v821
  %s870 = scalar_lea.vmem [#allocation1], 7
  %871 = vst [vmem:[%s870] ss:$9 sm:$0xff] %v822
  %v872 = vld [vmem:[#allocation1] sm:$0xff]
  %874 = vst [vmem:[#allocation2] sm:$0xff] %v872
  %875 = vst [vmem:[%s2] sm:$0x1] %v815
  %876 = vst [vmem:[%s2 + $0x8] sm:$0x1] %v816
  %877 = vst [vmem:[%s2 + $0x10] sm:$0x1] %v817
  %878 = vst [vmem:[%s2 + $0x18] sm:$0x1] %v818
  %879 = vst [vmem:[%s2 + $0x20] sm:$0x1] %v819
  %880 = vst [vmem:[%s2 + $0x28] sm:$0x1] %v820
  %881 = vst [vmem:[%s2 + $0x30] sm:$0x1] %v821
  %882 = vst [vmem:[%s2 + $0x38] sm:$0x1] %v822
  %s883 = scalar_lea.vmem %s0, 1
  %v884 = vld [vmem:[%s883] ss:$8 sm:$0xf]
  %s885 = scalar_lea.vmem %s0, 33
  %v886 = vld [vmem:[%s885] ss:$8 sm:$0xf]
  %s887 = scalar_lea.vmem %s0, 65
  %v888 = vld [vmem:[%s887] ss:$8 sm:$0xf]
  %s889 = scalar_lea.vmem %s0, 97
  %v890 = vld [vmem:[%s889] ss:$8 sm:$0xf]
  %s891 = scalar_lea.vmem %s0, 129
  %v892 = vld [vmem:[%s891] ss:$8 sm:$0xf]
  %s893 = scalar_lea.vmem %s0, 161
  %v894 = vld [vmem:[%s893] ss:$8 sm:$0xf]
  %s895 = scalar_lea.vmem %s0, 193
  %v896 = vld [vmem:[%s895] ss:$8 sm:$0xf]
  %s897 = scalar_lea.vmem %s0, 225
  %v898 = vld [vmem:[%s897] ss:$8 sm:$0xf]
  %v899 = vld [vmem:[#allocation2] sm:$0xff]
  %v900 = vld [vmem:[%s1] sm:$0xff]
  %v901 = vld [vmem:[%s1 + $0x8] sm:$0xff]
  %v902 = vld [vmem:[%s1 + $0x10] sm:$0xff]
  %v903 = vld [vmem:[%s1 + $0x18] sm:$0xff]
  %v904 = vld [vmem:[%s1 + $0x20] sm:$0xff]
  %v905 = vld [vmem:[%s1 + $0x28] sm:$0xff]
  %v906 = vld [vmem:[%s1 + $0x30] sm:$0xff]
  %v907 = vld [vmem:[%s1 + $0x38] sm:$0xff]
  %v908 = vld [vmem:[%s1 + $0x40] sm:$0xff]
  %v909 = vld [vmem:[%s1 + $0x48] sm:$0xff]
  %v910 = vld [vmem:[%s1 + $0x50] sm:$0xff]
  %v911 = vld [vmem:[%s1 + $0x58] sm:$0xff]
  %v912 = vld [vmem:[%s1 + $0x60] sm:$0xff]
  %v913 = vld [vmem:[%s1 + $0x68] sm:$0xff]
  %v914 = vld [vmem:[%s1 + $0x70] sm:$0xff]
  %v915 = vld [vmem:[%s1 + $0x78] sm:$0xff]
  %v916 = vld [vmem:[%s1 + $0x80] sm:$0xff]
  %v917 = vld [vmem:[%s1 + $0x88] sm:$0xff]
  %v918 = vld [vmem:[%s1 + $0x90] sm:$0xff]
  %v919 = vld [vmem:[%s1 + $0x98] sm:$0xff]
  %v920 = vld [vmem:[%s1 + $0xa0] sm:$0xff]
  %v921 = vld [vmem:[%s1 + $0xa8] sm:$0xff]
  %v922 = vld [vmem:[%s1 + $0xb0] sm:$0xff]
  %v923 = vld [vmem:[%s1 + $0xb8] sm:$0xff]
  %v924 = vld [vmem:[%s1 + $0xc0] sm:$0xff]
  %v925 = vld [vmem:[%s1 + $0xc8] sm:$0xff]
  %v926 = vld [vmem:[%s1 + $0xd0] sm:$0xff]
  %v927 = vld [vmem:[%s1 + $0xd8] sm:$0xff]
  %v928 = vld [vmem:[%s1 + $0xe0] sm:$0xff]
  %v929 = vld [vmem:[%s1 + $0xe8] sm:$0xff]
  %v930 = vld [vmem:[%s1 + $0xf0] sm:$0xff]
  %v931 = vld [vmem:[%s1 + $0xf8] sm:$0xff]
  %v932 = vld [vmem:[%s1 + $0x100] sm:$0xff]
  %v933 = vld [vmem:[%s1 + $0x108] sm:$0xff]
  %v934 = vld [vmem:[%s1 + $0x110] sm:$0xff]
  %v935 = vld [vmem:[%s1 + $0x118] sm:$0xff]
  %v936 = vld [vmem:[%s1 + $0x120] sm:$0xff]
  %v937 = vld [vmem:[%s1 + $0x128] sm:$0xff]
  %v938 = vld [vmem:[%s1 + $0x130] sm:$0xff]
  %v939 = vld [vmem:[%s1 + $0x138] sm:$0xff]
  %v940 = vld [vmem:[%s1 + $0x140] sm:$0xff]
  %v941 = vld [vmem:[%s1 + $0x148] sm:$0xff]
  %v942 = vld [vmem:[%s1 + $0x150] sm:$0xff]
  %v943 = vld [vmem:[%s1 + $0x158] sm:$0xff]
  %v944 = vld [vmem:[%s1 + $0x160] sm:$0xff]
  %v945 = vld [vmem:[%s1 + $0x168] sm:$0xff]
  %v946 = vld [vmem:[%s1 + $0x170] sm:$0xff]
  %v947 = vld [vmem:[%s1 + $0x178] sm:$0xff]
  %v948 = vld [vmem:[%s1 + $0x180] sm:$0xff]
  %v949 = vld [vmem:[%s1 + $0x188] sm:$0xff]
  %v950 = vld [vmem:[%s1 + $0x190] sm:$0xff]
  %v951 = vld [vmem:[%s1 + $0x198] sm:$0xff]
  %v952 = vld [vmem:[%s1 + $0x1a0] sm:$0xff]
  %v953 = vld [vmem:[%s1 + $0x1a8] sm:$0xff]
  %v954 = vld [vmem:[%s1 + $0x1b0] sm:$0xff]
  %v955 = vld [vmem:[%s1 + $0x1b8] sm:$0xff]
  %v956 = vld [vmem:[%s1 + $0x1c0] sm:$0xff]
  %v957 = vld [vmem:[%s1 + $0x1c8] sm:$0xff]
  %v958 = vld [vmem:[%s1 + $0x1d0] sm:$0xff]
  %v959 = vld [vmem:[%s1 + $0x1d8] sm:$0xff]
  %v960 = vld [vmem:[%s1 + $0x1e0] sm:$0xff]
  %v961 = vld [vmem:[%s1 + $0x1e8] sm:$0xff]
  %v962 = vld [vmem:[%s1 + $0x1f0] sm:$0xff]
  %v963 = vld [vmem:[%s1 + $0x1f8] sm:$0xff]
  %964 = vmatpush.msra.mxu0 %v960
  %965 = vmatpush.msra.mxu0 %v956
  %966 = vmatpush.msra.mxu0 %v952
  %967 = vmatpush.msra.mxu0 %v948
  %968 = vmatpush.msra.mxu0 %v944
  %969 = vmatpush.msra.mxu0 %v940
  %970 = vmatpush.msra.mxu0 %v936
  %971 = vmatpush.msra.mxu0 %v932
  %972 = vmatpush.msra.mxu0 %v928
  %973 = vmatpush.msra.mxu0 %v924
  %974 = vmatpush.msra.mxu0 %v920
  %975 = vmatpush.msra.mxu0 %v916
  %976 = vmatpush.msra.mxu0 %v912
  %977 = vmatpush.msra.mxu0 %v908
  %978 = vmatpush.msra.mxu0 %v904
  %979 = vmatpush.msra.mxu0 %v900
  %980 = vmatmul.f32.gmra.mxu0 %v899
  %v981 = vpop.f32.mrf.mxu0
  %v982 = vadd.f32 0.0, %v981
  %983 = vdwg.mxu0
  %984 = vmatpush.msra.mxu0 %v961
  %985 = vmatpush.msra.mxu0 %v957
  %986 = vmatpush.msra.mxu0 %v953
  %987 = vmatpush.msra.mxu0 %v949
  %988 = vmatpush.msra.mxu0 %v945
  %989 = vmatpush.msra.mxu0 %v941
  %990 = vmatpush.msra.mxu0 %v937
  %991 = vmatpush.msra.mxu0 %v933
  %992 = vmatpush.msra.mxu0 %v929
  %993 = vmatpush.msra.mxu0 %v925
  %994 = vmatpush.msra.mxu0 %v921
  %995 = vmatpush.msra.mxu0 %v917
  %996 = vmatpush.msra.mxu0 %v913
  %997 = vmatpush.msra.mxu0 %v909
  %998 = vmatpush.msra.mxu0 %v905
  %999 = vmatpush.msra.mxu0 %v901
  %1000 = vmatmul.f32.gmra.mxu0 %v899
  %v1001 = vpop.f32.mrf.mxu0
  %v1002 = vadd.f32 0.0, %v1001
  %1003 = vdwg.mxu0
  %1004 = vmatpush.msra.mxu0 %v962
  %1005 = vmatpush.msra.mxu0 %v958
  %1006 = vmatpush.msra.mxu0 %v954
  %1007 = vmatpush.msra.mxu0 %v950
  %1008 = vmatpush.msra.mxu0 %v946
  %1009 = vmatpush.msra.mxu0 %v942
  %1010 = vmatpush.msra.mxu0 %v938
  %1011 = vmatpush.msra.mxu0 %v934
  %1012 = vmatpush.msra.mxu0 %v930
  %1013 = vmatpush.msra.mxu0 %v926
  %1014 = vmatpush.msra.mxu0 %v922
  %1015 = vmatpush.msra.mxu0 %v918
  %1016 = vmatpush.msra.mxu0 %v914
  %1017 = vmatpush.msra.mxu0 %v910
  %1018 = vmatpush.msra.mxu0 %v906
  %1019 = vmatpush.msra.mxu0 %v902
  %1020 = vmatmul.f32.gmra.mxu0 %v899
  %v1021 = vpop.f32.mrf.mxu0
  %v1022 = vadd.f32 0.0, %v1021
  %1023 = vdwg.mxu0
  %1024 = vmatpush.msra.mxu0 %v963
  %1025 = vmatpush.msra.mxu0 %v959
  %1026 = vmatpush.msra.mxu0 %v955
  %1027 = vmatpush.msra.mxu0 %v951
  %1028 = vmatpush.msra.mxu0 %v947
  %1029 = vmatpush.msra.mxu0 %v943
  %1030 = vmatpush.msra.mxu0 %v939
  %1031 = vmatpush.msra.mxu0 %v935
  %1032 = vmatpush.msra.mxu0 %v931
  %1033 = vmatpush.msra.mxu0 %v927
  %1034 = vmatpush.msra.mxu0 %v923
  %1035 = vmatpush.msra.mxu0 %v919
  %1036 = vmatpush.msra.mxu0 %v915
  %1037 = vmatpush.msra.mxu0 %v911
  %1038 = vmatpush.msra.mxu0 %v907
  %1039 = vmatpush.msra.mxu0 %v903
  %1040 = vmatmul.f32.gmra.mxu0 %v899
  %v1041 = vpop.f32.mrf.mxu0
  %v1042 = vadd.f32 0.0, %v1041
  %1043 = vdwg.mxu0
  %v1048 = vrot.slane %v1002, 7
  %v1049 = vrot.slane %v1022, 6
  %v1050 = vrot.slane %v1042, 5
  %v1051 = vsel %vm184, %v982, %v1048
  %v1052 = vsel %vm186, %v1049, %v1050
  %v1053 = vsel %vm188, %v1051, %v1052
  %v1054 = vsel %vm190, %v982, %v1048
  %v1055 = vsel %vm192, %v1049, %v1050
  %v1056 = vsel %vm194, %v1054, %v1055
  %v1057 = vrot.slane %v1056, 1
  %v1058 = vsel %vm186, %v982, %v1048
  %v1059 = vsel %vm198, %v1049, %v1050
  %v1060 = vsel %vm200, %v1058, %v1059
  %v1061 = vrot.slane %v1060, 2
  %v1062 = vsel %vm192, %v982, %v1048
  %v1063 = vsel %vm204, %v1049, %v1050
  %v1064 = vsel %vm206, %v1062, %v1063
  %v1065 = vrot.slane %v1064, 3
  %v1066 = vsel %vm198, %v982, %v1048
  %v1067 = vsel %vm210, %v1049, %v1050
  %v1068 = vsel %vm212, %v1066, %v1067
  %v1069 = vrot.slane %v1068, 4
  %v1070 = vsel %vm204, %v982, %v1048
  %v1071 = vsel %vm216, %v1050, %v1049
  %v1072 = vsel %vm218, %v1070, %v1071
  %v1073 = vrot.slane %v1072, 5
  %v1074 = vsel %vm210, %v982, %v1048
  %v1075 = vsel %vm184, %v1049, %v1050
  %v1076 = vsel %vm223, %v1075, %v1074
  %v1077 = vrot.slane %v1076, 6
  %v1078 = vsel %vm216, %v1048, %v982
  %v1079 = vsel %vm190, %v1049, %v1050
  %v1080 = vsel %vm228, %v1079, %v1078
  %v1081 = vrot.slane %v1080, 7
  %v1090 = vadd.f32 %v884, %v1053
  %v1091 = vadd.f32 %v886, %v1057
  %v1092 = vadd.f32 %v888, %v1061
  %v1093 = vadd.f32 %v890, %v1065
  %v1094 = vadd.f32 %v892, %v1069
  %v1095 = vadd.f32 %v894, %v1073
  %v1096 = vadd.f32 %v896, %v1077
  %v1097 = vadd.f32 %v898, %v1081
  %v1098 = vxor.u32 %v1090, 2147483648
  %v1099 = vxor.u32 %v1091, 2147483648
  %v1100 = vxor.u32 %v1092, 2147483648
  %v1101 = vxor.u32 %v1093, 2147483648
  %v1102 = vxor.u32 %v1094, 2147483648
  %v1103 = vxor.u32 %v1095, 2147483648
  %v1104 = vxor.u32 %v1096, 2147483648
  %v1105 = vxor.u32 %v1097, 2147483648
  %v1106 = vmul.f32 %v1098, 1.442695
  %v1107 = vpow.pop %v1106
  %v1108 = vmul.f32 %v1099, 1.442695
  %v1109 = vpow.pop %v1108
  %v1110 = vmul.f32 %v1100, 1.442695
  %v1111 = vpow.pop %v1110
  %v1112 = vmul.f32 %v1101, 1.442695
  %v1113 = vpow.pop %v1112
  %v1114 = vmul.f32 %v1102, 1.442695
  %v1115 = vpow.pop %v1114
  %v1116 = vmul.f32 %v1103, 1.442695
  %v1117 = vpow.pop %v1116
  %v1118 = vmul.f32 %v1104, 1.442695
  %v1119 = vpow.pop %v1118
  %v1120 = vmul.f32 %v1105, 1.442695
  %v1121 = vpow.pop %v1120
  %v1122 = vadd.f32 %v1107, 1.0
  %v1123 = vadd.f32 %v1109, 1.0
  %v1124 = vadd.f32 %v1111, 1.0
  %v1125 = vadd.f32 %v1113, 1.0
  %v1126 = vadd.f32 %v1115, 1.0
  %v1127 = vadd.f32 %v1117, 1.0
  %v1128 = vadd.f32 %v1119, 1.0
  %v1129 = vadd.f32 %v1121, 1.0
  %v1130 = vrcp.pop %v1122
  %v1131 = vmul.f32 %v1122, %v1130
  %v1132 = vsub.f32 1.0, %v1131
  %v1133 = vmul.f32 %v1130, %v1132
  %v1134 = vadd.f32 %v1130, %v1133
  %vm1135 = vweird.f32 %v1122
  %vm1136 = vweird.f32 %v1130
  %vm1137 = vmor %vm1135, %vm1136
  %v1138 = vsel %vm1137, %v1130, %v1134
  %v1139 = vand.u32 2147483647, %v1122
  %vm1140 = vcmp.eq.f32.partialorder %v1139, 8.507059e+37
  %v1141 = vand.u32 %v1122, 2147483648
  %v1142 = vor.u32 1.1754944e-38, %v1141
  %v1143 = vsel %vm1140, %v1142, %v1138
  %v1144 = vmul.f32 1.0, %v1143
  %v1145 = vrcp.pop %v1123
  %v1146 = vmul.f32 %v1123, %v1145
  %v1147 = vsub.f32 1.0, %v1146
  %v1148 = vmul.f32 %v1145, %v1147
  %v1149 = vadd.f32 %v1145, %v1148
  %vm1150 = vweird.f32 %v1123
  %vm1151 = vweird.f32 %v1145
  %vm1152 = vmor %vm1150, %vm1151
  %v1153 = vsel %vm1152, %v1145, %v1149
  %v1154 = vand.u32 2147483647, %v1123
  %vm1155 = vcmp.eq.f32.partialorder %v1154, 8.507059e+37
  %v1156 = vand.u32 %v1123, 2147483648
  %v1157 = vor.u32 1.1754944e-38, %v1156
  %v1158 = vsel %vm1155, %v1157, %v1153
  %v1159 = vmul.f32 1.0, %v1158
  %v1160 = vrcp.pop %v1124
  %v1161 = vmul.f32 %v1124, %v1160
  %v1162 = vsub.f32 1.0, %v1161
  %v1163 = vmul.f32 %v1160, %v1162
  %v1164 = vadd.f32 %v1160, %v1163
  %vm1165 = vweird.f32 %v1124
  %vm1166 = vweird.f32 %v1160
  %vm1167 = vmor %vm1165, %vm1166
  %v1168 = vsel %vm1167, %v1160, %v1164
  %v1169 = vand.u32 2147483647, %v1124
  %vm1170 = vcmp.eq.f32.partialorder %v1169, 8.507059e+37
  %v1171 = vand.u32 %v1124, 2147483648
  %v1172 = vor.u32 1.1754944e-38, %v1171
  %v1173 = vsel %vm1170, %v1172, %v1168
  %v1174 = vmul.f32 1.0, %v1173
  %v1175 = vrcp.pop %v1125
  %v1176 = vmul.f32 %v1125, %v1175
  %v1177 = vsub.f32 1.0, %v1176
  %v1178 = vmul.f32 %v1175, %v1177
  %v1179 = vadd.f32 %v1175, %v1178
  %vm1180 = vweird.f32 %v1125
  %vm1181 = vweird.f32 %v1175
  %vm1182 = vmor %vm1180, %vm1181
  %v1183 = vsel %vm1182, %v1175, %v1179
  %v1184 = vand.u32 2147483647, %v1125
  %vm1185 = vcmp.eq.f32.partialorder %v1184, 8.507059e+37
  %v1186 = vand.u32 %v1125, 2147483648
  %v1187 = vor.u32 1.1754944e-38, %v1186
  %v1188 = vsel %vm1185, %v1187, %v1183
  %v1189 = vmul.f32 1.0, %v1188
  %v1190 = vrcp.pop %v1126
  %v1191 = vmul.f32 %v1126, %v1190
  %v1192 = vsub.f32 1.0, %v1191
  %v1193 = vmul.f32 %v1190, %v1192
  %v1194 = vadd.f32 %v1190, %v1193
  %vm1195 = vweird.f32 %v1126
  %vm1196 = vweird.f32 %v1190
  %vm1197 = vmor %vm1195, %vm1196
  %v1198 = vsel %vm1197, %v1190, %v1194
  %v1199 = vand.u32 2147483647, %v1126
  %vm1200 = vcmp.eq.f32.partialorder %v1199, 8.507059e+37
  %v1201 = vand.u32 %v1126, 2147483648
  %v1202 = vor.u32 1.1754944e-38, %v1201
  %v1203 = vsel %vm1200, %v1202, %v1198
  %v1204 = vmul.f32 1.0, %v1203
  %v1205 = vrcp.pop %v1127
  %v1206 = vmul.f32 %v1127, %v1205
  %v1207 = vsub.f32 1.0, %v1206
  %v1208 = vmul.f32 %v1205, %v1207
  %v1209 = vadd.f32 %v1205, %v1208
  %vm1210 = vweird.f32 %v1127
  %vm1211 = vweird.f32 %v1205
  %vm1212 = vmor %vm1210, %vm1211
  %v1213 = vsel %vm1212, %v1205, %v1209
  %v1214 = vand.u32 2147483647, %v1127
  %vm1215 = vcmp.eq.f32.partialorder %v1214, 8.507059e+37
  %v1216 = vand.u32 %v1127, 2147483648
  %v1217 = vor.u32 1.1754944e-38, %v1216
  %v1218 = vsel %vm1215, %v1217, %v1213
  %v1219 = vmul.f32 1.0, %v1218
  %v1220 = vrcp.pop %v1128
  %v1221 = vmul.f32 %v1128, %v1220
  %v1222 = vsub.f32 1.0, %v1221
  %v1223 = vmul.f32 %v1220, %v1222
  %v1224 = vadd.f32 %v1220, %v1223
  %vm1225 = vweird.f32 %v1128
  %vm1226 = vweird.f32 %v1220
  %vm1227 = vmor %vm1225, %vm1226
  %v1228 = vsel %vm1227, %v1220, %v1224
  %v1229 = vand.u32 2147483647, %v1128
  %vm1230 = vcmp.eq.f32.partialorder %v1229, 8.507059e+37
  %v1231 = vand.u32 %v1128, 2147483648
  %v1232 = vor.u32 1.1754944e-38, %v1231
  %v1233 = vsel %vm1230, %v1232, %v1228
  %v1234 = vmul.f32 1.0, %v1233
  %v1235 = vrcp.pop %v1129
  %v1236 = vmul.f32 %v1129, %v1235
  %v1237 = vsub.f32 1.0, %v1236
  %v1238 = vmul.f32 %v1235, %v1237
  %v1239 = vadd.f32 %v1235, %v1238
  %vm1240 = vweird.f32 %v1129
  %vm1241 = vweird.f32 %v1235
  %vm1242 = vmor %vm1240, %vm1241
  %v1243 = vsel %vm1242, %v1235, %v1239
  %v1244 = vand.u32 2147483647, %v1129
  %vm1245 = vcmp.eq.f32.partialorder %v1244, 8.507059e+37
  %v1246 = vand.u32 %v1129, 2147483648
  %v1247 = vor.u32 1.1754944e-38, %v1246
  %v1248 = vsel %vm1245, %v1247, %v1243
  %v1249 = vmul.f32 1.0, %v1248
  %v1258 = vrot.slane %v1090, 1
  %v1259 = vrot.slane %v1091, 1
  %v1260 = vrot.slane %v1092, 1
  %v1261 = vrot.slane %v1093, 1
  %v1262 = vrot.slane %v1094, 1
  %v1263 = vrot.slane %v1095, 1
  %v1264 = vrot.slane %v1096, 1
  %v1265 = vrot.slane %v1097, 1
  %v1274 = vxor.u32 %v1258, 2147483648
  %v1275 = vxor.u32 %v1259, 2147483648
  %v1276 = vxor.u32 %v1260, 2147483648
  %v1277 = vxor.u32 %v1261, 2147483648
  %v1278 = vxor.u32 %v1262, 2147483648
  %v1279 = vxor.u32 %v1263, 2147483648
  %v1280 = vxor.u32 %v1264, 2147483648
  %v1281 = vxor.u32 %v1265, 2147483648
  %v1282 = vmul.f32 %v1274, 1.442695
  %v1283 = vpow.pop %v1282
  %v1284 = vmul.f32 %v1275, 1.442695
  %v1285 = vpow.pop %v1284
  %v1286 = vmul.f32 %v1276, 1.442695
  %v1287 = vpow.pop %v1286
  %v1288 = vmul.f32 %v1277, 1.442695
  %v1289 = vpow.pop %v1288
  %v1290 = vmul.f32 %v1278, 1.442695
  %v1291 = vpow.pop %v1290
  %v1292 = vmul.f32 %v1279, 1.442695
  %v1293 = vpow.pop %v1292
  %v1294 = vmul.f32 %v1280, 1.442695
  %v1295 = vpow.pop %v1294
  %v1296 = vmul.f32 %v1281, 1.442695
  %v1297 = vpow.pop %v1296
  %v1298 = vadd.f32 %v1283, 1.0
  %v1299 = vadd.f32 %v1285, 1.0
  %v1300 = vadd.f32 %v1287, 1.0
  %v1301 = vadd.f32 %v1289, 1.0
  %v1302 = vadd.f32 %v1291, 1.0
  %v1303 = vadd.f32 %v1293, 1.0
  %v1304 = vadd.f32 %v1295, 1.0
  %v1305 = vadd.f32 %v1297, 1.0
  %v1306 = vrcp.pop %v1298
  %v1307 = vmul.f32 %v1298, %v1306
  %v1308 = vsub.f32 1.0, %v1307
  %v1309 = vmul.f32 %v1306, %v1308
  %v1310 = vadd.f32 %v1306, %v1309
  %vm1311 = vweird.f32 %v1298
  %vm1312 = vweird.f32 %v1306
  %vm1313 = vmor %vm1311, %vm1312
  %v1314 = vsel %vm1313, %v1306, %v1310
  %v1315 = vand.u32 2147483647, %v1298
  %vm1316 = vcmp.eq.f32.partialorder %v1315, 8.507059e+37
  %v1317 = vand.u32 %v1298, 2147483648
  %v1318 = vor.u32 1.1754944e-38, %v1317
  %v1319 = vsel %vm1316, %v1318, %v1314
  %v1320 = vmul.f32 1.0, %v1319
  %v1321 = vrcp.pop %v1299
  %v1322 = vmul.f32 %v1299, %v1321
  %v1323 = vsub.f32 1.0, %v1322
  %v1324 = vmul.f32 %v1321, %v1323
  %v1325 = vadd.f32 %v1321, %v1324
  %vm1326 = vweird.f32 %v1299
  %vm1327 = vweird.f32 %v1321
  %vm1328 = vmor %vm1326, %vm1327
  %v1329 = vsel %vm1328, %v1321, %v1325
  %v1330 = vand.u32 2147483647, %v1299
  %vm1331 = vcmp.eq.f32.partialorder %v1330, 8.507059e+37
  %v1332 = vand.u32 %v1299, 2147483648
  %v1333 = vor.u32 1.1754944e-38, %v1332
  %v1334 = vsel %vm1331, %v1333, %v1329
  %v1335 = vmul.f32 1.0, %v1334
  %v1336 = vrcp.pop %v1300
  %v1337 = vmul.f32 %v1300, %v1336
  %v1338 = vsub.f32 1.0, %v1337
  %v1339 = vmul.f32 %v1336, %v1338
  %v1340 = vadd.f32 %v1336, %v1339
  %vm1341 = vweird.f32 %v1300
  %vm1342 = vweird.f32 %v1336
  %vm1343 = vmor %vm1341, %vm1342
  %v1344 = vsel %vm1343, %v1336, %v1340
  %v1345 = vand.u32 2147483647, %v1300
  %vm1346 = vcmp.eq.f32.partialorder %v1345, 8.507059e+37
  %v1347 = vand.u32 %v1300, 2147483648
  %v1348 = vor.u32 1.1754944e-38, %v1347
  %v1349 = vsel %vm1346, %v1348, %v1344
  %v1350 = vmul.f32 1.0, %v1349
  %v1351 = vrcp.pop %v1301
  %v1352 = vmul.f32 %v1301, %v1351
  %v1353 = vsub.f32 1.0, %v1352
  %v1354 = vmul.f32 %v1351, %v1353
  %v1355 = vadd.f32 %v1351, %v1354
  %vm1356 = vweird.f32 %v1301
  %vm1357 = vweird.f32 %v1351
  %vm1358 = vmor %vm1356, %vm1357
  %v1359 = vsel %vm1358, %v1351, %v1355
  %v1360 = vand.u32 2147483647, %v1301
  %vm1361 = vcmp.eq.f32.partialorder %v1360, 8.507059e+37
  %v1362 = vand.u32 %v1301, 2147483648
  %v1363 = vor.u32 1.1754944e-38, %v1362
  %v1364 = vsel %vm1361, %v1363, %v1359
  %v1365 = vmul.f32 1.0, %v1364
  %v1366 = vrcp.pop %v1302
  %v1367 = vmul.f32 %v1302, %v1366
  %v1368 = vsub.f32 1.0, %v1367
  %v1369 = vmul.f32 %v1366, %v1368
  %v1370 = vadd.f32 %v1366, %v1369
  %vm1371 = vweird.f32 %v1302
  %vm1372 = vweird.f32 %v1366
  %vm1373 = vmor %vm1371, %vm1372
  %v1374 = vsel %vm1373, %v1366, %v1370
  %v1375 = vand.u32 2147483647, %v1302
  %vm1376 = vcmp.eq.f32.partialorder %v1375, 8.507059e+37
  %v1377 = vand.u32 %v1302, 2147483648
  %v1378 = vor.u32 1.1754944e-38, %v1377
  %v1379 = vsel %vm1376, %v1378, %v1374
  %v1380 = vmul.f32 1.0, %v1379
  %v1381 = vrcp.pop %v1303
  %v1382 = vmul.f32 %v1303, %v1381
  %v1383 = vsub.f32 1.0, %v1382
  %v1384 = vmul.f32 %v1381, %v1383
  %v1385 = vadd.f32 %v1381, %v1384
  %vm1386 = vweird.f32 %v1303
  %vm1387 = vweird.f32 %v1381
  %vm1388 = vmor %vm1386, %vm1387
  %v1389 = vsel %vm1388, %v1381, %v1385
  %v1390 = vand.u32 2147483647, %v1303
  %vm1391 = vcmp.eq.f32.partialorder %v1390, 8.507059e+37
  %v1392 = vand.u32 %v1303, 2147483648
  %v1393 = vor.u32 1.1754944e-38, %v1392
  %v1394 = vsel %vm1391, %v1393, %v1389
  %v1395 = vmul.f32 1.0, %v1394
  %v1396 = vrcp.pop %v1304
  %v1397 = vmul.f32 %v1304, %v1396
  %v1398 = vsub.f32 1.0, %v1397
  %v1399 = vmul.f32 %v1396, %v1398
  %v1400 = vadd.f32 %v1396, %v1399
  %vm1401 = vweird.f32 %v1304
  %vm1402 = vweird.f32 %v1396
  %vm1403 = vmor %vm1401, %vm1402
  %v1404 = vsel %vm1403, %v1396, %v1400
  %v1405 = vand.u32 2147483647, %v1304
  %vm1406 = vcmp.eq.f32.partialorder %v1405, 8.507059e+37
  %v1407 = vand.u32 %v1304, 2147483648
  %v1408 = vor.u32 1.1754944e-38, %v1407
  %v1409 = vsel %vm1406, %v1408, %v1404
  %v1410 = vmul.f32 1.0, %v1409
  %v1411 = vrcp.pop %v1305
  %v1412 = vmul.f32 %v1305, %v1411
  %v1413 = vsub.f32 1.0, %v1412
  %v1414 = vmul.f32 %v1411, %v1413
  %v1415 = vadd.f32 %v1411, %v1414
  %vm1416 = vweird.f32 %v1305
  %vm1417 = vweird.f32 %v1411
  %vm1418 = vmor %vm1416, %vm1417
  %v1419 = vsel %vm1418, %v1411, %v1415
  %v1420 = vand.u32 2147483647, %v1305
  %vm1421 = vcmp.eq.f32.partialorder %v1420, 8.507059e+37
  %v1422 = vand.u32 %v1305, 2147483648
  %v1423 = vor.u32 1.1754944e-38, %v1422
  %v1424 = vsel %vm1421, %v1423, %v1419
  %v1425 = vmul.f32 1.0, %v1424
  %v1426 = vrot.slane %v1090, 2
  %v1427 = vrot.slane %v1091, 2
  %v1428 = vrot.slane %v1092, 2
  %v1429 = vrot.slane %v1093, 2
  %v1430 = vrot.slane %v1094, 2
  %v1431 = vrot.slane %v1095, 2
  %v1432 = vrot.slane %v1096, 2
  %v1433 = vrot.slane %v1097, 2
  %v1442 = vtanh.pop %v1426
  %v1443 = vtanh.pop %v1427
  %v1444 = vtanh.pop %v1428
  %v1445 = vtanh.pop %v1429
  %v1446 = vtanh.pop %v1430
  %v1447 = vtanh.pop %v1431
  %v1448 = vtanh.pop %v1432
  %v1449 = vtanh.pop %v1433
  %v1450 = vrot.slane %v1090, 3
  %v1451 = vrot.slane %v1091, 3
  %v1452 = vrot.slane %v1092, 3
  %v1453 = vrot.slane %v1093, 3
  %v1454 = vrot.slane %v1094, 3
  %v1455 = vrot.slane %v1095, 3
  %v1456 = vrot.slane %v1096, 3
  %v1457 = vrot.slane %v1097, 3
  %v1466 = vxor.u32 %v1450, 2147483648
  %v1467 = vxor.u32 %v1451, 2147483648
  %v1468 = vxor.u32 %v1452, 2147483648
  %v1469 = vxor.u32 %v1453, 2147483648
  %v1470 = vxor.u32 %v1454, 2147483648
  %v1471 = vxor.u32 %v1455, 2147483648
  %v1472 = vxor.u32 %v1456, 2147483648
  %v1473 = vxor.u32 %v1457, 2147483648
  %v1474 = vmul.f32 %v1466, 1.442695
  %v1475 = vpow.pop %v1474
  %v1476 = vmul.f32 %v1467, 1.442695
  %v1477 = vpow.pop %v1476
  %v1478 = vmul.f32 %v1468, 1.442695
  %v1479 = vpow.pop %v1478
  %v1480 = vmul.f32 %v1469, 1.442695
  %v1481 = vpow.pop %v1480
  %v1482 = vmul.f32 %v1470, 1.442695
  %v1483 = vpow.pop %v1482
  %v1484 = vmul.f32 %v1471, 1.442695
  %v1485 = vpow.pop %v1484
  %v1486 = vmul.f32 %v1472, 1.442695
  %v1487 = vpow.pop %v1486
  %v1488 = vmul.f32 %v1473, 1.442695
  %v1489 = vpow.pop %v1488
  %v1490 = vadd.f32 %v1475, 1.0
  %v1491 = vadd.f32 %v1477, 1.0
  %v1492 = vadd.f32 %v1479, 1.0
  %v1493 = vadd.f32 %v1481, 1.0
  %v1494 = vadd.f32 %v1483, 1.0
  %v1495 = vadd.f32 %v1485, 1.0
  %v1496 = vadd.f32 %v1487, 1.0
  %v1497 = vadd.f32 %v1489, 1.0
  %v1498 = vrcp.pop %v1490
  %v1499 = vmul.f32 %v1490, %v1498
  %v1500 = vsub.f32 1.0, %v1499
  %v1501 = vmul.f32 %v1498, %v1500
  %v1502 = vadd.f32 %v1498, %v1501
  %vm1503 = vweird.f32 %v1490
  %vm1504 = vweird.f32 %v1498
  %vm1505 = vmor %vm1503, %vm1504
  %v1506 = vsel %vm1505, %v1498, %v1502
  %v1507 = vand.u32 2147483647, %v1490
  %vm1508 = vcmp.eq.f32.partialorder %v1507, 8.507059e+37
  %v1509 = vand.u32 %v1490, 2147483648
  %v1510 = vor.u32 1.1754944e-38, %v1509
  %v1511 = vsel %vm1508, %v1510, %v1506
  %v1512 = vmul.f32 1.0, %v1511
  %v1513 = vrcp.pop %v1491
  %v1514 = vmul.f32 %v1491, %v1513
  %v1515 = vsub.f32 1.0, %v1514
  %v1516 = vmul.f32 %v1513, %v1515
  %v1517 = vadd.f32 %v1513, %v1516
  %vm1518 = vweird.f32 %v1491
  %vm1519 = vweird.f32 %v1513
  %vm1520 = vmor %vm1518, %vm1519
  %v1521 = vsel %vm1520, %v1513, %v1517
  %v1522 = vand.u32 2147483647, %v1491
  %vm1523 = vcmp.eq.f32.partialorder %v1522, 8.507059e+37
  %v1524 = vand.u32 %v1491, 2147483648
  %v1525 = vor.u32 1.1754944e-38, %v1524
  %v1526 = vsel %vm1523, %v1525, %v1521
  %v1527 = vmul.f32 1.0, %v1526
  %v1528 = vrcp.pop %v1492
  %v1529 = vmul.f32 %v1492, %v1528
  %v1530 = vsub.f32 1.0, %v1529
  %v1531 = vmul.f32 %v1528, %v1530
  %v1532 = vadd.f32 %v1528, %v1531
  %vm1533 = vweird.f32 %v1492
  %vm1534 = vweird.f32 %v1528
  %vm1535 = vmor %vm1533, %vm1534
  %v1536 = vsel %vm1535, %v1528, %v1532
  %v1537 = vand.u32 2147483647, %v1492
  %vm1538 = vcmp.eq.f32.partialorder %v1537, 8.507059e+37
  %v1539 = vand.u32 %v1492, 2147483648
  %v1540 = vor.u32 1.1754944e-38, %v1539
  %v1541 = vsel %vm1538, %v1540, %v1536
  %v1542 = vmul.f32 1.0, %v1541
  %v1543 = vrcp.pop %v1493
  %v1544 = vmul.f32 %v1493, %v1543
  %v1545 = vsub.f32 1.0, %v1544
  %v1546 = vmul.f32 %v1543, %v1545
  %v1547 = vadd.f32 %v1543, %v1546
  %vm1548 = vweird.f32 %v1493
  %vm1549 = vweird.f32 %v1543
  %vm1550 = vmor %vm1548, %vm1549
  %v1551 = vsel %vm1550, %v1543, %v1547
  %v1552 = vand.u32 2147483647, %v1493
  %vm1553 = vcmp.eq.f32.partialorder %v1552, 8.507059e+37
  %v1554 = vand.u32 %v1493, 2147483648
  %v1555 = vor.u32 1.1754944e-38, %v1554
  %v1556 = vsel %vm1553, %v1555, %v1551
  %v1557 = vmul.f32 1.0, %v1556
  %v1558 = vrcp.pop %v1494
  %v1559 = vmul.f32 %v1494, %v1558
  %v1560 = vsub.f32 1.0, %v1559
  %v1561 = vmul.f32 %v1558, %v1560
  %v1562 = vadd.f32 %v1558, %v1561
  %vm1563 = vweird.f32 %v1494
  %vm1564 = vweird.f32 %v1558
  %vm1565 = vmor %vm1563, %vm1564
  %v1566 = vsel %vm1565, %v1558, %v1562
  %v1567 = vand.u32 2147483647, %v1494
  %vm1568 = vcmp.eq.f32.partialorder %v1567, 8.507059e+37
  %v1569 = vand.u32 %v1494, 2147483648
  %v1570 = vor.u32 1.1754944e-38, %v1569
  %v1571 = vsel %vm1568, %v1570, %v1566
  %v1572 = vmul.f32 1.0, %v1571
  %v1573 = vrcp.pop %v1495
  %v1574 = vmul.f32 %v1495, %v1573
  %v1575 = vsub.f32 1.0, %v1574
  %v1576 = vmul.f32 %v1573, %v1575
  %v1577 = vadd.f32 %v1573, %v1576
  %vm1578 = vweird.f32 %v1495
  %vm1579 = vweird.f32 %v1573
  %vm1580 = vmor %vm1578, %vm1579
  %v1581 = vsel %vm1580, %v1573, %v1577
  %v1582 = vand.u32 2147483647, %v1495
  %vm1583 = vcmp.eq.f32.partialorder %v1582, 8.507059e+37
  %v1584 = vand.u32 %v1495, 2147483648
  %v1585 = vor.u32 1.1754944e-38, %v1584
  %v1586 = vsel %vm1583, %v1585, %v1581
  %v1587 = vmul.f32 1.0, %v1586
  %v1588 = vrcp.pop %v1496
  %v1589 = vmul.f32 %v1496, %v1588
  %v1590 = vsub.f32 1.0, %v1589
  %v1591 = vmul.f32 %v1588, %v1590
  %v1592 = vadd.f32 %v1588, %v1591
  %vm1593 = vweird.f32 %v1496
  %vm1594 = vweird.f32 %v1588
  %vm1595 = vmor %vm1593, %vm1594
  %v1596 = vsel %vm1595, %v1588, %v1592
  %v1597 = vand.u32 2147483647, %v1496
  %vm1598 = vcmp.eq.f32.partialorder %v1597, 8.507059e+37
  %v1599 = vand.u32 %v1496, 2147483648
  %v1600 = vor.u32 1.1754944e-38, %v1599
  %v1601 = vsel %vm1598, %v1600, %v1596
  %v1602 = vmul.f32 1.0, %v1601
  %v1603 = vrcp.pop %v1497
  %v1604 = vmul.f32 %v1497, %v1603
  %v1605 = vsub.f32 1.0, %v1604
  %v1606 = vmul.f32 %v1603, %v1605
  %v1607 = vadd.f32 %v1603, %v1606
  %vm1608 = vweird.f32 %v1497
  %vm1609 = vweird.f32 %v1603
  %vm1610 = vmor %vm1608, %vm1609
  %v1611 = vsel %vm1610, %v1603, %v1607
  %v1612 = vand.u32 2147483647, %v1497
  %vm1613 = vcmp.eq.f32.partialorder %v1612, 8.507059e+37
  %v1614 = vand.u32 %v1497, 2147483648
  %v1615 = vor.u32 1.1754944e-38, %v1614
  %v1616 = vsel %vm1613, %v1615, %v1611
  %v1617 = vmul.f32 1.0, %v1616
  %v1618 = vld [vmem:[#allocation3] sm:$0xff]
  %v1620 = vrot.slane %v1618, 1
  %v1621 = vrot.slane %v1618, 2
  %v1622 = vrot.slane %v1618, 3
  %v1623 = vrot.slane %v1618, 4
  %v1624 = vrot.slane %v1618, 5
  %v1625 = vrot.slane %v1618, 6
  %v1626 = vrot.slane %v1618, 7
  %v1634 = vmul.f32 %v1320, %v1618
  %v1635 = vmul.f32 %v1335, %v1620
  %v1636 = vmul.f32 %v1350, %v1621
  %v1637 = vmul.f32 %v1365, %v1622
  %v1638 = vmul.f32 %v1380, %v1623
  %v1639 = vmul.f32 %v1395, %v1624
  %v1640 = vmul.f32 %v1410, %v1625
  %v1641 = vmul.f32 %v1425, %v1626
  %v1642 = vmul.f32 %v1144, %v1442
  %v1643 = vmul.f32 %v1159, %v1443
  %v1644 = vmul.f32 %v1174, %v1444
  %v1645 = vmul.f32 %v1189, %v1445
  %v1646 = vmul.f32 %v1204, %v1446
  %v1647 = vmul.f32 %v1219, %v1447
  %v1648 = vmul.f32 %v1234, %v1448
  %v1649 = vmul.f32 %v1249, %v1449
  %v1650 = vadd.f32 %v1634, %v1642
  %v1651 = vadd.f32 %v1635, %v1643
  %v1652 = vadd.f32 %v1636, %v1644
  %v1653 = vadd.f32 %v1637, %v1645
  %v1654 = vadd.f32 %v1638, %v1646
  %v1655 = vadd.f32 %v1639, %v1647
  %v1656 = vadd.f32 %v1640, %v1648
  %v1657 = vadd.f32 %v1641, %v1649
  %v1658 = vtanh.pop %v1650
  %v1659 = vtanh.pop %v1651
  %v1660 = vtanh.pop %v1652
  %v1661 = vtanh.pop %v1653
  %v1662 = vtanh.pop %v1654
  %v1663 = vtanh.pop %v1655
  %v1664 = vtanh.pop %v1656
  %v1665 = vtanh.pop %v1657
  %v1666 = vmul.f32 %v1512, %v1658
  %v1667 = vmul.f32 %v1527, %v1659
  %v1668 = vmul.f32 %v1542, %v1660
  %v1669 = vmul.f32 %v1557, %v1661
  %v1670 = vmul.f32 %v1572, %v1662
  %v1671 = vmul.f32 %v1587, %v1663
  %v1672 = vmul.f32 %v1602, %v1664
  %v1673 = vmul.f32 %v1617, %v1665
  %1682 = vst [vmem:[#allocation1] ss:$9 sm:$0xff] %v1650
  %s1683 = scalar_lea.vmem [#allocation1], 1
  %1684 = vst [vmem:[%s1683] ss:$9 sm:$0xff] %v1651
  %s1685 = scalar_lea.vmem [#allocation1], 2
  %1686 = vst [vmem:[%s1685] ss:$9 sm:$0xff] %v1652
  %s1687 = scalar_lea.vmem [#allocation1], 3
  %1688 = vst [vmem:[%s1687] ss:$9 sm:$0xff] %v1653
  %s1689 = scalar_lea.vmem [#allocation1], 4
  %1690 = vst [vmem:[%s1689] ss:$9 sm:$0xff] %v1654
  %s1691 = scalar_lea.vmem [#allocation1], 5
  %1692 = vst [vmem:[%s1691] ss:$9 sm:$0xff] %v1655
  %s1693 = scalar_lea.vmem [#allocation1], 6
  %1694 = vst [vmem:[%s1693] ss:$9 sm:$0xff] %v1656
  %s1695 = scalar_lea.vmem [#allocation1], 7
  %1696 = vst [vmem:[%s1695] ss:$9 sm:$0xff] %v1657
  %v1697 = vld [vmem:[#allocation1] sm:$0xff]
  %1699 = vst [vmem:[#allocation3] sm:$0xff] %v1697
  %1708 = vst [vmem:[#allocation1] ss:$9 sm:$0xff] %v1666
  %s1709 = scalar_lea.vmem [#allocation1], 1
  %1710 = vst [vmem:[%s1709] ss:$9 sm:$0xff] %v1667
  %s1711 = scalar_lea.vmem [#allocation1], 2
  %1712 = vst [vmem:[%s1711] ss:$9 sm:$0xff] %v1668
  %s1713 = scalar_lea.vmem [#allocation1], 3
  %1714 = vst [vmem:[%s1713] ss:$9 sm:$0xff] %v1669
  %s1715 = scalar_lea.vmem [#allocation1], 4
  %1716 = vst [vmem:[%s1715] ss:$9 sm:$0xff] %v1670
  %s1717 = scalar_lea.vmem [#allocation1], 5
  %1718 = vst [vmem:[%s1717] ss:$9 sm:$0xff] %v1671
  %s1719 = scalar_lea.vmem [#allocation1], 6
  %1720 = vst [vmem:[%s1719] ss:$9 sm:$0xff] %v1672
  %s1721 = scalar_lea.vmem [#allocation1], 7
  %1722 = vst [vmem:[%s1721] ss:$9 sm:$0xff] %v1673
  %v1723 = vld [vmem:[#allocation1] sm:$0xff]
  %1725 = vst [vmem:[#allocation2] sm:$0xff] %v1723
  %1726 = vst [vmem:[%s2 + $0x1] sm:$0x1] %v1666
  %1727 = vst [vmem:[%s2 + $0x9] sm:$0x1] %v1667
  %1728 = vst [vmem:[%s2 + $0x11] sm:$0x1] %v1668
  %1729 = vst [vmem:[%s2 + $0x19] sm:$0x1] %v1669
  %1730 = vst [vmem:[%s2 + $0x21] sm:$0x1] %v1670
  %1731 = vst [vmem:[%s2 + $0x29] sm:$0x1] %v1671
  %1732 = vst [vmem:[%s2 + $0x31] sm:$0x1] %v1672
  %1733 = vst [vmem:[%s2 + $0x39] sm:$0x1] %v1673
  %s1734 = scalar_lea.vmem %s0, 2
  %v1735 = vld [vmem:[%s1734] ss:$8 sm:$0xf]
  %s1736 = scalar_lea.vmem %s0, 34
  %v1737 = vld [vmem:[%s1736] ss:$8 sm:$0xf]
  %s1738 = scalar_lea.vmem %s0, 66
  %v1739 = vld [vmem:[%s1738] ss:$8 sm:$0xf]
  %s1740 = scalar_lea.vmem %s0, 98
  %v1741 = vld [vmem:[%s1740] ss:$8 sm:$0xf]
  %s1742 = scalar_lea.vmem %s0, 130
  %v1743 = vld [vmem:[%s1742] ss:$8 sm:$0xf]
  %s1744 = scalar_lea.vmem %s0, 162
  %v1745 = vld [vmem:[%s1744] ss:$8 sm:$0xf]
  %s1746 = scalar_lea.vmem %s0, 194
  %v1747 = vld [vmem:[%s1746] ss:$8 sm:$0xf]
  %s1748 = scalar_lea.vmem %s0, 226
  %v1749 = vld [vmem:[%s1748] ss:$8 sm:$0xf]
  %v1750 = vld [vmem:[#allocation2] sm:$0xff]
  %v1751 = vld [vmem:[%s1] sm:$0xff]
  %v1752 = vld [vmem:[%s1 + $0x8] sm:$0xff]
  %v1753 = vld [vmem:[%s1 + $0x10] sm:$0xff]
  %v1754 = vld [vmem:[%s1 + $0x18] sm:$0xff]
  %v1755 = vld [vmem:[%s1 + $0x20] sm:$0xff]
  %v1756 = vld [vmem:[%s1 + $0x28] sm:$0xff]
  %v1757 = vld [vmem:[%s1 + $0x30] sm:$0xff]
  %v1758 = vld [vmem:[%s1 + $0x38] sm:$0xff]
  %v1759 = vld [vmem:[%s1 + $0x40] sm:$0xff]
  %v1760 = vld [vmem:[%s1 + $0x48] sm:$0xff]
  %v1761 = vld [vmem:[%s1 + $0x50] sm:$0xff]
  %v1762 = vld [vmem:[%s1 + $0x58] sm:$0xff]
  %v1763 = vld [vmem:[%s1 + $0x60] sm:$0xff]
  %v1764 = vld [vmem:[%s1 + $0x68] sm:$0xff]
  %v1765 = vld [vmem:[%s1 + $0x70] sm:$0xff]
  %v1766 = vld [vmem:[%s1 + $0x78] sm:$0xff]
  %v1767 = vld [vmem:[%s1 + $0x80] sm:$0xff]
  %v1768 = vld [vmem:[%s1 + $0x88] sm:$0xff]
  %v1769 = vld [vmem:[%s1 + $0x90] sm:$0xff]
  %v1770 = vld [vmem:[%s1 + $0x98] sm:$0xff]
  %v1771 = vld [vmem:[%s1 + $0xa0] sm:$0xff]
  %v1772 = vld [vmem:[%s1 + $0xa8] sm:$0xff]
  %v1773 = vld [vmem:[%s1 + $0xb0] sm:$0xff]
  %v1774 = vld [vmem:[%s1 + $0xb8] sm:$0xff]
  %v1775 = vld [vmem:[%s1 + $0xc0] sm:$0xff]
  %v1776 = vld [vmem:[%s1 + $0xc8] sm:$0xff]
  %v1777 = vld [vmem:[%s1 + $0xd0] sm:$0xff]
  %v1778 = vld [vmem:[%s1 + $0xd8] sm:$0xff]
  %v1779 = vld [vmem:[%s1 + $0xe0] sm:$0xff]
  %v1780 = vld [vmem:[%s1 + $0xe8] sm:$0xff]
  %v1781 = vld [vmem:[%s1 + $0xf0] sm:$0xff]
  %v1782 = vld [vmem:[%s1 + $0xf8] sm:$0xff]
  %v1783 = vld [vmem:[%s1 + $0x100] sm:$0xff]
  %v1784 = vld [vmem:[%s1 + $0x108] sm:$0xff]
  %v1785 = vld [vmem:[%s1 + $0x110] sm:$0xff]
  %v1786 = vld [vmem:[%s1 + $0x118] sm:$0xff]
  %v1787 = vld [vmem:[%s1 + $0x120] sm:$0xff]
  %v1788 = vld [vmem:[%s1 + $0x128] sm:$0xff]
  %v1789 = vld [vmem:[%s1 + $0x130] sm:$0xff]
  %v1790 = vld [vmem:[%s1 + $0x138] sm:$0xff]
  %v1791 = vld [vmem:[%s1 + $0x140] sm:$0xff]
  %v1792 = vld [vmem:[%s1 + $0x148] sm:$0xff]
  %v1793 = vld [vmem:[%s1 + $0x150] sm:$0xff]
  %v1794 = vld [vmem:[%s1 + $0x158] sm:$0xff]
  %v1795 = vld [vmem:[%s1 + $0x160] sm:$0xff]
  %v1796 = vld [vmem:[%s1 + $0x168] sm:$0xff]
  %v1797 = vld [vmem:[%s1 + $0x170] sm:$0xff]
  %v1798 = vld [vmem:[%s1 + $0x178] sm:$0xff]
  %v1799 = vld [vmem:[%s1 + $0x180] sm:$0xff]
  %v1800 = vld [vmem:[%s1 + $0x188] sm:$0xff]
  %v1801 = vld [vmem:[%s1 + $0x190] sm:$0xff]
  %v1802 = vld [vmem:[%s1 + $0x198] sm:$0xff]
  %v1803 = vld [vmem:[%s1 + $0x1a0] sm:$0xff]
  %v1804 = vld [vmem:[%s1 + $0x1a8] sm:$0xff]
  %v1805 = vld [vmem:[%s1 + $0x1b0] sm:$0xff]
  %v1806 = vld [vmem:[%s1 + $0x1b8] sm:$0xff]
  %v1807 = vld [vmem:[%s1 + $0x1c0] sm:$0xff]
  %v1808 = vld [vmem:[%s1 + $0x1c8] sm:$0xff]
  %v1809 = vld [vmem:[%s1 + $0x1d0] sm:$0xff]
  %v1810 = vld [vmem:[%s1 + $0x1d8] sm:$0xff]
  %v1811 = vld [vmem:[%s1 + $0x1e0] sm:$0xff]
  %v1812 = vld [vmem:[%s1 + $0x1e8] sm:$0xff]
  %v1813 = vld [vmem:[%s1 + $0x1f0] sm:$0xff]
  %v1814 = vld [vmem:[%s1 + $0x1f8] sm:$0xff]
  %1815 = vmatpush.msra.mxu0 %v1811
  %1816 = vmatpush.msra.mxu0 %v1807
  %1817 = vmatpush.msra.mxu0 %v1803
  %1818 = vmatpush.msra.mxu0 %v1799
  %1819 = vmatpush.msra.mxu0 %v1795
  %1820 = vmatpush.msra.mxu0 %v1791
  %1821 = vmatpush.msra.mxu0 %v1787
  %1822 = vmatpush.msra.mxu0 %v1783
  %1823 = vmatpush.msra.mxu0 %v1779
  %1824 = vmatpush.msra.mxu0 %v1775
  %1825 = vmatpush.msra.mxu0 %v1771
  %1826 = vmatpush.msra.mxu0 %v1767
  %1827 = vmatpush.msra.mxu0 %v1763
  %1828 = vmatpush.msra.mxu0 %v1759
  %1829 = vmatpush.msra.mxu0 %v1755
  %1830 = vmatpush.msra.mxu0 %v1751
  %1831 = vmatmul.f32.gmra.mxu0 %v1750
  %v1832 = vpop.f32.mrf.mxu0
  %v1833 = vadd.f32 0.0, %v1832
  %1834 = vdwg.mxu0
  %1835 = vmatpush.msra.mxu0 %v1812
  %1836 = vmatpush.msra.mxu0 %v1808
  %1837 = vmatpush.msra.mxu0 %v1804
  %1838 = vmatpush.msra.mxu0 %v1800
  %1839 = vmatpush.msra.mxu0 %v1796
  %1840 = vmatpush.msra.mxu0 %v1792
  %1841 = vmatpush.msra.mxu0 %v1788
  %1842 = vmatpush.msra.mxu0 %v1784
  %1843 = vmatpush.msra.mxu0 %v1780
  %1844 = vmatpush.msra.mxu0 %v1776
  %1845 = vmatpush.msra.mxu0 %v1772
  %1846 = vmatpush.msra.mxu0 %v1768
  %1847 = vmatpush.msra.mxu0 %v1764
  %1848 = vmatpush.msra.mxu0 %v1760
  %1849 = vmatpush.msra.mxu0 %v1756
  %1850 = vmatpush.msra.mxu0 %v1752
  %1851 = vmatmul.f32.gmra.mxu0 %v1750
  %v1852 = vpop.f32.mrf.mxu0
  %v1853 = vadd.f32 0.0, %v1852
  %1854 = vdwg.mxu0
  %1855 = vmatpush.msra.mxu0 %v1813
  %1856 = vmatpush.msra.mxu0 %v1809
  %1857 = vmatpush.msra.mxu0 %v1805
  %1858 = vmatpush.msra.mxu0 %v1801
  %1859 = vmatpush.msra.mxu0 %v1797
  %1860 = vmatpush.msra.mxu0 %v1793
  %1861 = vmatpush.msra.mxu0 %v1789
  %1862 = vmatpush.msra.mxu0 %v1785
  %1863 = vmatpush.msra.mxu0 %v1781
  %1864 = vmatpush.msra.mxu0 %v1777
  %1865 = vmatpush.msra.mxu0 %v1773
  %1866 = vmatpush.msra.mxu0 %v1769
  %1867 = vmatpush.msra.mxu0 %v1765
  %1868 = vmatpush.msra.mxu0 %v1761
  %1869 = vmatpush.msra.mxu0 %v1757
  %1870 = vmatpush.msra.mxu0 %v1753
  %1871 = vmatmul.f32.gmra.mxu0 %v1750
  %v1872 = vpop.f32.mrf.mxu0
  %v1873 = vadd.f32 0.0, %v1872
  %1874 = vdwg.mxu0
  %1875 = vmatpush.msra.mxu0 %v1814
  %1876 = vmatpush.msra.mxu0 %v1810
  %1877 = vmatpush.msra.mxu0 %v1806
  %1878 = vmatpush.msra.mxu0 %v1802
  %1879 = vmatpush.msra.mxu0 %v1798
  %1880 = vmatpush.msra.mxu0 %v1794
  %1881 = vmatpush.msra.mxu0 %v1790
  %1882 = vmatpush.msra.mxu0 %v1786
  %1883 = vmatpush.msra.mxu0 %v1782
  %1884 = vmatpush.msra.mxu0 %v1778
  %1885 = vmatpush.msra.mxu0 %v1774
  %1886 = vmatpush.msra.mxu0 %v1770
  %1887 = vmatpush.msra.mxu0 %v1766
  %1888 = vmatpush.msra.mxu0 %v1762
  %1889 = vmatpush.msra.mxu0 %v1758
  %1890 = vmatpush.msra.mxu0 %v1754
  %1891 = vmatmul.f32.gmra.mxu0 %v1750
  %v1892 = vpop.f32.mrf.mxu0
  %v1893 = vadd.f32 0.0, %v1892
  %1894 = vdwg.mxu0
  %v1899 = vrot.slane %v1853, 7
  %v1900 = vrot.slane %v1873, 6
  %v1901 = vrot.slane %v1893, 5
  %v1902 = vsel %vm184, %v1833, %v1899
  %v1903 = vsel %vm186, %v1900, %v1901
  %v1904 = vsel %vm188, %v1902, %v1903
  %v1905 = vsel %vm190, %v1833, %v1899
  %v1906 = vsel %vm192, %v1900, %v1901
  %v1907 = vsel %vm194, %v1905, %v1906
  %v1908 = vrot.slane %v1907, 1
  %v1909 = vsel %vm186, %v1833, %v1899
  %v1910 = vsel %vm198, %v1900, %v1901
  %v1911 = vsel %vm200, %v1909, %v1910
  %v1912 = vrot.slane %v1911, 2
  %v1913 = vsel %vm192, %v1833, %v1899
  %v1914 = vsel %vm204, %v1900, %v1901
  %v1915 = vsel %vm206, %v1913, %v1914
  %v1916 = vrot.slane %v1915, 3
  %v1917 = vsel %vm198, %v1833, %v1899
  %v1918 = vsel %vm210, %v1900, %v1901
  %v1919 = vsel %vm212, %v1917, %v1918
  %v1920 = vrot.slane %v1919, 4
  %v1921 = vsel %vm204, %v1833, %v1899
  %v1922 = vsel %vm216, %v1901, %v1900
  %v1923 = vsel %vm218, %v1921, %v1922
  %v1924 = vrot.slane %v1923, 5
  %v1925 = vsel %vm210, %v1833, %v1899
  %v1926 = vsel %vm184, %v1900, %v1901
  %v1927 = vsel %vm223, %v1926, %v1925
  %v1928 = vrot.slane %v1927, 6
  %v1929 = vsel %vm216, %v1899, %v1833
  %v1930 = vsel %vm190, %v1900, %v1901
  %v1931 = vsel %vm228, %v1930, %v1929
  %v1932 = vrot.slane %v1931, 7
  %v1941 = vadd.f32 %v1735, %v1904
  %v1942 = vadd.f32 %v1737, %v1908
  %v1943 = vadd.f32 %v1739, %v1912
  %v1944 = vadd.f32 %v1741, %v1916
  %v1945 = vadd.f32 %v1743, %v1920
  %v1946 = vadd.f32 %v1745, %v1924
  %v1947 = vadd.f32 %v1747, %v1928
  %v1948 = vadd.f32 %v1749, %v1932
  %v1949 = vxor.u32 %v1941, 2147483648
  %v1950 = vxor.u32 %v1942, 2147483648
  %v1951 = vxor.u32 %v1943, 2147483648
  %v1952 = vxor.u32 %v1944, 2147483648
  %v1953 = vxor.u32 %v1945, 2147483648
  %v1954 = vxor.u32 %v1946, 2147483648
  %v1955 = vxor.u32 %v1947, 2147483648
  %v1956 = vxor.u32 %v1948, 2147483648
  %v1957 = vmul.f32 %v1949, 1.442695
  %v1958 = vpow.pop %v1957
  %v1959 = vmul.f32 %v1950, 1.442695
  %v1960 = vpow.pop %v1959
  %v1961 = vmul.f32 %v1951, 1.442695
  %v1962 = vpow.pop %v1961
  %v1963 = vmul.f32 %v1952, 1.442695
  %v1964 = vpow.pop %v1963
  %v1965 = vmul.f32 %v1953, 1.442695
  %v1966 = vpow.pop %v1965
  %v1967 = vmul.f32 %v1954, 1.442695
  %v1968 = vpow.pop %v1967
  %v1969 = vmul.f32 %v1955, 1.442695
  %v1970 = vpow.pop %v1969
  %v1971 = vmul.f32 %v1956, 1.442695
  %v1972 = vpow.pop %v1971
  %v1973 = vadd.f32 %v1958, 1.0
  %v1974 = vadd.f32 %v1960, 1.0
  %v1975 = vadd.f32 %v1962, 1.0
  %v1976 = vadd.f32 %v1964, 1.0
  %v1977 = vadd.f32 %v1966, 1.0
  %v1978 = vadd.f32 %v1968, 1.0
  %v1979 = vadd.f32 %v1970, 1.0
  %v1980 = vadd.f32 %v1972, 1.0
  %v1981 = vrcp.pop %v1973
  %v1982 = vmul.f32 %v1973, %v1981
  %v1983 = vsub.f32 1.0, %v1982
  %v1984 = vmul.f32 %v1981, %v1983
  %v1985 = vadd.f32 %v1981, %v1984
  %vm1986 = vweird.f32 %v1973
  %vm1987 = vweird.f32 %v1981
  %vm1988 = vmor %vm1986, %vm1987
  %v1989 = vsel %vm1988, %v1981, %v1985
  %v1990 = vand.u32 2147483647, %v1973
  %vm1991 = vcmp.eq.f32.partialorder %v1990, 8.507059e+37
  %v1992 = vand.u32 %v1973, 2147483648
  %v1993 = vor.u32 1.1754944e-38, %v1992
  %v1994 = vsel %vm1991, %v1993, %v1989
  %v1995 = vmul.f32 1.0, %v1994
  %v1996 = vrcp.pop %v1974
  %v1997 = vmul.f32 %v1974, %v1996
  %v1998 = vsub.f32 1.0, %v1997
  %v1999 = vmul.f32 %v1996, %v1998
  %v2000 = vadd.f32 %v1996, %v1999
  %vm2001 = vweird.f32 %v1974
  %vm2002 = vweird.f32 %v1996
  %vm2003 = vmor %vm2001, %vm2002
  %v2004 = vsel %vm2003, %v1996, %v2000
  %v2005 = vand.u32 2147483647, %v1974
  %vm2006 = vcmp.eq.f32.partialorder %v2005, 8.507059e+37
  %v2007 = vand.u32 %v1974, 2147483648
  %v2008 = vor.u32 1.1754944e-38, %v2007
  %v2009 = vsel %vm2006, %v2008, %v2004
  %v2010 = vmul.f32 1.0, %v2009
  %v2011 = vrcp.pop %v1975
  %v2012 = vmul.f32 %v1975, %v2011
  %v2013 = vsub.f32 1.0, %v2012
  %v2014 = vmul.f32 %v2011, %v2013
  %v2015 = vadd.f32 %v2011, %v2014
  %vm2016 = vweird.f32 %v1975
  %vm2017 = vweird.f32 %v2011
  %vm2018 = vmor %vm2016, %vm2017
  %v2019 = vsel %vm2018, %v2011, %v2015
  %v2020 = vand.u32 2147483647, %v1975
  %vm2021 = vcmp.eq.f32.partialorder %v2020, 8.507059e+37
  %v2022 = vand.u32 %v1975, 2147483648
  %v2023 = vor.u32 1.1754944e-38, %v2022
  %v2024 = vsel %vm2021, %v2023, %v2019
  %v2025 = vmul.f32 1.0, %v2024
  %v2026 = vrcp.pop %v1976
  %v2027 = vmul.f32 %v1976, %v2026
  %v2028 = vsub.f32 1.0, %v2027
  %v2029 = vmul.f32 %v2026, %v2028
  %v2030 = vadd.f32 %v2026, %v2029
  %vm2031 = vweird.f32 %v1976
  %vm2032 = vweird.f32 %v2026
  %vm2033 = vmor %vm2031, %vm2032
  %v2034 = vsel %vm2033, %v2026, %v2030
  %v2035 = vand.u32 2147483647, %v1976
  %vm2036 = vcmp.eq.f32.partialorder %v2035, 8.507059e+37
  %v2037 = vand.u32 %v1976, 2147483648
  %v2038 = vor.u32 1.1754944e-38, %v2037
  %v2039 = vsel %vm2036, %v2038, %v2034
  %v2040 = vmul.f32 1.0, %v2039
  %v2041 = vrcp.pop %v1977
  %v2042 = vmul.f32 %v1977, %v2041
  %v2043 = vsub.f32 1.0, %v2042
  %v2044 = vmul.f32 %v2041, %v2043
  %v2045 = vadd.f32 %v2041, %v2044
  %vm2046 = vweird.f32 %v1977
  %vm2047 = vweird.f32 %v2041
  %vm2048 = vmor %vm2046, %vm2047
  %v2049 = vsel %vm2048, %v2041, %v2045
  %v2050 = vand.u32 2147483647, %v1977
  %vm2051 = vcmp.eq.f32.partialorder %v2050, 8.507059e+37
  %v2052 = vand.u32 %v1977, 2147483648
  %v2053 = vor.u32 1.1754944e-38, %v2052
  %v2054 = vsel %vm2051, %v2053, %v2049
  %v2055 = vmul.f32 1.0, %v2054
  %v2056 = vrcp.pop %v1978
  %v2057 = vmul.f32 %v1978, %v2056
  %v2058 = vsub.f32 1.0, %v2057
  %v2059 = vmul.f32 %v2056, %v2058
  %v2060 = vadd.f32 %v2056, %v2059
  %vm2061 = vweird.f32 %v1978
  %vm2062 = vweird.f32 %v2056
  %vm2063 = vmor %vm2061, %vm2062
  %v2064 = vsel %vm2063, %v2056, %v2060
  %v2065 = vand.u32 2147483647, %v1978
  %vm2066 = vcmp.eq.f32.partialorder %v2065, 8.507059e+37
  %v2067 = vand.u32 %v1978, 2147483648
  %v2068 = vor.u32 1.1754944e-38, %v2067
  %v2069 = vsel %vm2066, %v2068, %v2064
  %v2070 = vmul.f32 1.0, %v2069
  %v2071 = vrcp.pop %v1979
  %v2072 = vmul.f32 %v1979, %v2071
  %v2073 = vsub.f32 1.0, %v2072
  %v2074 = vmul.f32 %v2071, %v2073
  %v2075 = vadd.f32 %v2071, %v2074
  %vm2076 = vweird.f32 %v1979
  %vm2077 = vweird.f32 %v2071
  %vm2078 = vmor %vm2076, %vm2077
  %v2079 = vsel %vm2078, %v2071, %v2075
  %v2080 = vand.u32 2147483647, %v1979
  %vm2081 = vcmp.eq.f32.partialorder %v2080, 8.507059e+37
  %v2082 = vand.u32 %v1979, 2147483648
  %v2083 = vor.u32 1.1754944e-38, %v2082
  %v2084 = vsel %vm2081, %v2083, %v2079
  %v2085 = vmul.f32 1.0, %v2084
  %v2086 = vrcp.pop %v1980
  %v2087 = vmul.f32 %v1980, %v2086
  %v2088 = vsub.f32 1.0, %v2087
  %v2089 = vmul.f32 %v2086, %v2088
  %v2090 = vadd.f32 %v2086, %v2089
  %vm2091 = vweird.f32 %v1980
  %vm2092 = vweird.f32 %v2086
  %vm2093 = vmor %vm2091, %vm2092
  %v2094 = vsel %vm2093, %v2086, %v2090
  %v2095 = vand.u32 2147483647, %v1980
  %vm2096 = vcmp.eq.f32.partialorder %v2095, 8.507059e+37
  %v2097 = vand.u32 %v1980, 2147483648
  %v2098 = vor.u32 1.1754944e-38, %v2097
  %v2099 = vsel %vm2096, %v2098, %v2094
  %v2100 = vmul.f32 1.0, %v2099
  %v2109 = vrot.slane %v1941, 1
  %v2110 = vrot.slane %v1942, 1
  %v2111 = vrot.slane %v1943, 1
  %v2112 = vrot.slane %v1944, 1
  %v2113 = vrot.slane %v1945, 1
  %v2114 = vrot.slane %v1946, 1
  %v2115 = vrot.slane %v1947, 1
  %v2116 = vrot.slane %v1948, 1
  %v2125 = vxor.u32 %v2109, 2147483648
  %v2126 = vxor.u32 %v2110, 2147483648
  %v2127 = vxor.u32 %v2111, 2147483648
  %v2128 = vxor.u32 %v2112, 2147483648
  %v2129 = vxor.u32 %v2113, 2147483648
  %v2130 = vxor.u32 %v2114, 2147483648
  %v2131 = vxor.u32 %v2115, 2147483648
  %v2132 = vxor.u32 %v2116, 2147483648
  %v2133 = vmul.f32 %v2125, 1.442695
  %v2134 = vpow.pop %v2133
  %v2135 = vmul.f32 %v2126, 1.442695
  %v2136 = vpow.pop %v2135
  %v2137 = vmul.f32 %v2127, 1.442695
  %v2138 = vpow.pop %v2137
  %v2139 = vmul.f32 %v2128, 1.442695
  %v2140 = vpow.pop %v2139
  %v2141 = vmul.f32 %v2129, 1.442695
  %v2142 = vpow.pop %v2141
  %v2143 = vmul.f32 %v2130, 1.442695
  %v2144 = vpow.pop %v2143
  %v2145 = vmul.f32 %v2131, 1.442695
  %v2146 = vpow.pop %v2145
  %v2147 = vmul.f32 %v2132, 1.442695
  %v2148 = vpow.pop %v2147
  %v2149 = vadd.f32 %v2134, 1.0
  %v2150 = vadd.f32 %v2136, 1.0
  %v2151 = vadd.f32 %v2138, 1.0
  %v2152 = vadd.f32 %v2140, 1.0
  %v2153 = vadd.f32 %v2142, 1.0
  %v2154 = vadd.f32 %v2144, 1.0
  %v2155 = vadd.f32 %v2146, 1.0
  %v2156 = vadd.f32 %v2148, 1.0
  %v2157 = vrcp.pop %v2149
  %v2158 = vmul.f32 %v2149, %v2157
  %v2159 = vsub.f32 1.0, %v2158
  %v2160 = vmul.f32 %v2157, %v2159
  %v2161 = vadd.f32 %v2157, %v2160
  %vm2162 = vweird.f32 %v2149
  %vm2163 = vweird.f32 %v2157
  %vm2164 = vmor %vm2162, %vm2163
  %v2165 = vsel %vm2164, %v2157, %v2161
  %v2166 = vand.u32 2147483647, %v2149
  %vm2167 = vcmp.eq.f32.partialorder %v2166, 8.507059e+37
  %v2168 = vand.u32 %v2149, 2147483648
  %v2169 = vor.u32 1.1754944e-38, %v2168
  %v2170 = vsel %vm2167, %v2169, %v2165
  %v2171 = vmul.f32 1.0, %v2170
  %v2172 = vrcp.pop %v2150
  %v2173 = vmul.f32 %v2150, %v2172
  %v2174 = vsub.f32 1.0, %v2173
  %v2175 = vmul.f32 %v2172, %v2174
  %v2176 = vadd.f32 %v2172, %v2175
  %vm2177 = vweird.f32 %v2150
  %vm2178 = vweird.f32 %v2172
  %vm2179 = vmor %vm2177, %vm2178
  %v2180 = vsel %vm2179, %v2172, %v2176
  %v2181 = vand.u32 2147483647, %v2150
  %vm2182 = vcmp.eq.f32.partialorder %v2181, 8.507059e+37
  %v2183 = vand.u32 %v2150, 2147483648
  %v2184 = vor.u32 1.1754944e-38, %v2183
  %v2185 = vsel %vm2182, %v2184, %v2180
  %v2186 = vmul.f32 1.0, %v2185
  %v2187 = vrcp.pop %v2151
  %v2188 = vmul.f32 %v2151, %v2187
  %v2189 = vsub.f32 1.0, %v2188
  %v2190 = vmul.f32 %v2187, %v2189
  %v2191 = vadd.f32 %v2187, %v2190
  %vm2192 = vweird.f32 %v2151
  %vm2193 = vweird.f32 %v2187
  %vm2194 = vmor %vm2192, %vm2193
  %v2195 = vsel %vm2194, %v2187, %v2191
  %v2196 = vand.u32 2147483647, %v2151
  %vm2197 = vcmp.eq.f32.partialorder %v2196, 8.507059e+37
  %v2198 = vand.u32 %v2151, 2147483648
  %v2199 = vor.u32 1.1754944e-38, %v2198
  %v2200 = vsel %vm2197, %v2199, %v2195
  %v2201 = vmul.f32 1.0, %v2200
  %v2202 = vrcp.pop %v2152
  %v2203 = vmul.f32 %v2152, %v2202
  %v2204 = vsub.f32 1.0, %v2203
  %v2205 = vmul.f32 %v2202, %v2204
  %v2206 = vadd.f32 %v2202, %v2205
  %vm2207 = vweird.f32 %v2152
  %vm2208 = vweird.f32 %v2202
  %vm2209 = vmor %vm2207, %vm2208
  %v2210 = vsel %vm2209, %v2202, %v2206
  %v2211 = vand.u32 2147483647, %v2152
  %vm2212 = vcmp.eq.f32.partialorder %v2211, 8.507059e+37
  %v2213 = vand.u32 %v2152, 2147483648
  %v2214 = vor.u32 1.1754944e-38, %v2213
  %v2215 = vsel %vm2212, %v2214, %v2210
  %v2216 = vmul.f32 1.0, %v2215
  %v2217 = vrcp.pop %v2153
  %v2218 = vmul.f32 %v2153, %v2217
  %v2219 = vsub.f32 1.0, %v2218
  %v2220 = vmul.f32 %v2217, %v2219
  %v2221 = vadd.f32 %v2217, %v2220
  %vm2222 = vweird.f32 %v2153
  %vm2223 = vweird.f32 %v2217
  %vm2224 = vmor %vm2222, %vm2223
  %v2225 = vsel %vm2224, %v2217, %v2221
  %v2226 = vand.u32 2147483647, %v2153
  %vm2227 = vcmp.eq.f32.partialorder %v2226, 8.507059e+37
  %v2228 = vand.u32 %v2153, 2147483648
  %v2229 = vor.u32 1.1754944e-38, %v2228
  %v2230 = vsel %vm2227, %v2229, %v2225
  %v2231 = vmul.f32 1.0, %v2230
  %v2232 = vrcp.pop %v2154
  %v2233 = vmul.f32 %v2154, %v2232
  %v2234 = vsub.f32 1.0, %v2233
  %v2235 = vmul.f32 %v2232, %v2234
  %v2236 = vadd.f32 %v2232, %v2235
  %vm2237 = vweird.f32 %v2154
  %vm2238 = vweird.f32 %v2232
  %vm2239 = vmor %vm2237, %vm2238
  %v2240 = vsel %vm2239, %v2232, %v2236
  %v2241 = vand.u32 2147483647, %v2154
  %vm2242 = vcmp.eq.f32.partialorder %v2241, 8.507059e+37
  %v2243 = vand.u32 %v2154, 2147483648
  %v2244 = vor.u32 1.1754944e-38, %v2243
  %v2245 = vsel %vm2242, %v2244, %v2240
  %v2246 = vmul.f32 1.0, %v2245
  %v2247 = vrcp.pop %v2155
  %v2248 = vmul.f32 %v2155, %v2247
  %v2249 = vsub.f32 1.0, %v2248
  %v2250 = vmul.f32 %v2247, %v2249
  %v2251 = vadd.f32 %v2247, %v2250
  %vm2252 = vweird.f32 %v2155
  %vm2253 = vweird.f32 %v2247
  %vm2254 = vmor %vm2252, %vm2253
  %v2255 = vsel %vm2254, %v2247, %v2251
  %v2256 = vand.u32 2147483647, %v2155
  %vm2257 = vcmp.eq.f32.partialorder %v2256, 8.507059e+37
  %v2258 = vand.u32 %v2155, 2147483648
  %v2259 = vor.u32 1.1754944e-38, %v2258
  %v2260 = vsel %vm2257, %v2259, %v2255
  %v2261 = vmul.f32 1.0, %v2260
  %v2262 = vrcp.pop %v2156
  %v2263 = vmul.f32 %v2156, %v2262
  %v2264 = vsub.f32 1.0, %v2263
  %v2265 = vmul.f32 %v2262, %v2264
  %v2266 = vadd.f32 %v2262, %v2265
  %vm2267 = vweird.f32 %v2156
  %vm2268 = vweird.f32 %v2262
  %vm2269 = vmor %vm2267, %vm2268
  %v2270 = vsel %vm2269, %v2262, %v2266
  %v2271 = vand.u32 2147483647, %v2156
  %vm2272 = vcmp.eq.f32.partialorder %v2271, 8.507059e+37
  %v2273 = vand.u32 %v2156, 2147483648
  %v2274 = vor.u32 1.1754944e-38, %v2273
  %v2275 = vsel %vm2272, %v2274, %v2270
  %v2276 = vmul.f32 1.0, %v2275
  %v2277 = vrot.slane %v1941, 2
  %v2278 = vrot.slane %v1942, 2
  %v2279 = vrot.slane %v1943, 2
  %v2280 = vrot.slane %v1944, 2
  %v2281 = vrot.slane %v1945, 2
  %v2282 = vrot.slane %v1946, 2
  %v2283 = vrot.slane %v1947, 2
  %v2284 = vrot.slane %v1948, 2
  %v2293 = vtanh.pop %v2277
  %v2294 = vtanh.pop %v2278
  %v2295 = vtanh.pop %v2279
  %v2296 = vtanh.pop %v2280
  %v2297 = vtanh.pop %v2281
  %v2298 = vtanh.pop %v2282
  %v2299 = vtanh.pop %v2283
  %v2300 = vtanh.pop %v2284
  %v2301 = vrot.slane %v1941, 3
  %v2302 = vrot.slane %v1942, 3
  %v2303 = vrot.slane %v1943, 3
  %v2304 = vrot.slane %v1944, 3
  %v2305 = vrot.slane %v1945, 3
  %v2306 = vrot.slane %v1946, 3
  %v2307 = vrot.slane %v1947, 3
  %v2308 = vrot.slane %v1948, 3
  %v2317 = vxor.u32 %v2301, 2147483648
  %v2318 = vxor.u32 %v2302, 2147483648
  %v2319 = vxor.u32 %v2303, 2147483648
  %v2320 = vxor.u32 %v2304, 2147483648
  %v2321 = vxor.u32 %v2305, 2147483648
  %v2322 = vxor.u32 %v2306, 2147483648
  %v2323 = vxor.u32 %v2307, 2147483648
  %v2324 = vxor.u32 %v2308, 2147483648
  %v2325 = vmul.f32 %v2317, 1.442695
  %v2326 = vpow.pop %v2325
  %v2327 = vmul.f32 %v2318, 1.442695
  %v2328 = vpow.pop %v2327
  %v2329 = vmul.f32 %v2319, 1.442695
  %v2330 = vpow.pop %v2329
  %v2331 = vmul.f32 %v2320, 1.442695
  %v2332 = vpow.pop %v2331
  %v2333 = vmul.f32 %v2321, 1.442695
  %v2334 = vpow.pop %v2333
  %v2335 = vmul.f32 %v2322, 1.442695
  %v2336 = vpow.pop %v2335
  %v2337 = vmul.f32 %v2323, 1.442695
  %v2338 = vpow.pop %v2337
  %v2339 = vmul.f32 %v2324, 1.442695
  %v2340 = vpow.pop %v2339
  %v2341 = vadd.f32 %v2326, 1.0
  %v2342 = vadd.f32 %v2328, 1.0
  %v2343 = vadd.f32 %v2330, 1.0
  %v2344 = vadd.f32 %v2332, 1.0
  %v2345 = vadd.f32 %v2334, 1.0
  %v2346 = vadd.f32 %v2336, 1.0
  %v2347 = vadd.f32 %v2338, 1.0
  %v2348 = vadd.f32 %v2340, 1.0
  %v2349 = vrcp.pop %v2341
  %v2350 = vmul.f32 %v2341, %v2349
  %v2351 = vsub.f32 1.0, %v2350
  %v2352 = vmul.f32 %v2349, %v2351
  %v2353 = vadd.f32 %v2349, %v2352
  %vm2354 = vweird.f32 %v2341
  %vm2355 = vweird.f32 %v2349
  %vm2356 = vmor %vm2354, %vm2355
  %v2357 = vsel %vm2356, %v2349, %v2353
  %v2358 = vand.u32 2147483647, %v2341
  %vm2359 = vcmp.eq.f32.partialorder %v2358, 8.507059e+37
  %v2360 = vand.u32 %v2341, 2147483648
  %v2361 = vor.u32 1.1754944e-38, %v2360
  %v2362 = vsel %vm2359, %v2361, %v2357
  %v2363 = vmul.f32 1.0, %v2362
  %v2364 = vrcp.pop %v2342
  %v2365 = vmul.f32 %v2342, %v2364
  %v2366 = vsub.f32 1.0, %v2365
  %v2367 = vmul.f32 %v2364, %v2366
  %v2368 = vadd.f32 %v2364, %v2367
  %vm2369 = vweird.f32 %v2342
  %vm2370 = vweird.f32 %v2364
  %vm2371 = vmor %vm2369, %vm2370
  %v2372 = vsel %vm2371, %v2364, %v2368
  %v2373 = vand.u32 2147483647, %v2342
  %vm2374 = vcmp.eq.f32.partialorder %v2373, 8.507059e+37
  %v2375 = vand.u32 %v2342, 2147483648
  %v2376 = vor.u32 1.1754944e-38, %v2375
  %v2377 = vsel %vm2374, %v2376, %v2372
  %v2378 = vmul.f32 1.0, %v2377
  %v2379 = vrcp.pop %v2343
  %v2380 = vmul.f32 %v2343, %v2379
  %v2381 = vsub.f32 1.0, %v2380
  %v2382 = vmul.f32 %v2379, %v2381
  %v2383 = vadd.f32 %v2379, %v2382
  %vm2384 = vweird.f32 %v2343
  %vm2385 = vweird.f32 %v2379
  %vm2386 = vmor %vm2384, %vm2385
  %v2387 = vsel %vm2386, %v2379, %v2383
  %v2388 = vand.u32 2147483647, %v2343
  %vm2389 = vcmp.eq.f32.partialorder %v2388, 8.507059e+37
  %v2390 = vand.u32 %v2343, 2147483648
  %v2391 = vor.u32 1.1754944e-38, %v2390
  %v2392 = vsel %vm2389, %v2391, %v2387
  %v2393 = vmul.f32 1.0, %v2392
  %v2394 = vrcp.pop %v2344
  %v2395 = vmul.f32 %v2344, %v2394
  %v2396 = vsub.f32 1.0, %v2395
  %v2397 = vmul.f32 %v2394, %v2396
  %v2398 = vadd.f32 %v2394, %v2397
  %vm2399 = vweird.f32 %v2344
  %vm2400 = vweird.f32 %v2394
  %vm2401 = vmor %vm2399, %vm2400
  %v2402 = vsel %vm2401, %v2394, %v2398
  %v2403 = vand.u32 2147483647, %v2344
  %vm2404 = vcmp.eq.f32.partialorder %v2403, 8.507059e+37
  %v2405 = vand.u32 %v2344, 2147483648
  %v2406 = vor.u32 1.1754944e-38, %v2405
  %v2407 = vsel %vm2404, %v2406, %v2402
  %v2408 = vmul.f32 1.0, %v2407
  %v2409 = vrcp.pop %v2345
  %v2410 = vmul.f32 %v2345, %v2409
  %v2411 = vsub.f32 1.0, %v2410
  %v2412 = vmul.f32 %v2409, %v2411
  %v2413 = vadd.f32 %v2409, %v2412
  %vm2414 = vweird.f32 %v2345
  %vm2415 = vweird.f32 %v2409
  %vm2416 = vmor %vm2414, %vm2415
  %v2417 = vsel %vm2416, %v2409, %v2413
  %v2418 = vand.u32 2147483647, %v2345
  %vm2419 = vcmp.eq.f32.partialorder %v2418, 8.507059e+37
  %v2420 = vand.u32 %v2345, 2147483648
  %v2421 = vor.u32 1.1754944e-38, %v2420
  %v2422 = vsel %vm2419, %v2421, %v2417
  %v2423 = vmul.f32 1.0, %v2422
  %v2424 = vrcp.pop %v2346
  %v2425 = vmul.f32 %v2346, %v2424
  %v2426 = vsub.f32 1.0, %v2425
  %v2427 = vmul.f32 %v2424, %v2426
  %v2428 = vadd.f32 %v2424, %v2427
  %vm2429 = vweird.f32 %v2346
  %vm2430 = vweird.f32 %v2424
  %vm2431 = vmor %vm2429, %vm2430
  %v2432 = vsel %vm2431, %v2424, %v2428
  %v2433 = vand.u32 2147483647, %v2346
  %vm2434 = vcmp.eq.f32.partialorder %v2433, 8.507059e+37
  %v2435 = vand.u32 %v2346, 2147483648
  %v2436 = vor.u32 1.1754944e-38, %v2435
  %v2437 = vsel %vm2434, %v2436, %v2432
  %v2438 = vmul.f32 1.0, %v2437
  %v2439 = vrcp.pop %v2347
  %v2440 = vmul.f32 %v2347, %v2439
  %v2441 = vsub.f32 1.0, %v2440
  %v2442 = vmul.f32 %v2439, %v2441
  %v2443 = vadd.f32 %v2439, %v2442
  %vm2444 = vweird.f32 %v2347
  %vm2445 = vweird.f32 %v2439
  %vm2446 = vmor %vm2444, %vm2445
  %v2447 = vsel %vm2446, %v2439, %v2443
  %v2448 = vand.u32 2147483647, %v2347
  %vm2449 = vcmp.eq.f32.partialorder %v2448, 8.507059e+37
  %v2450 = vand.u32 %v2347, 2147483648
  %v2451 = vor.u32 1.1754944e-38, %v2450
  %v2452 = vsel %vm2449, %v2451, %v2447
  %v2453 = vmul.f32 1.0, %v2452
  %v2454 = vrcp.pop %v2348
  %v2455 = vmul.f32 %v2348, %v2454
  %v2456 = vsub.f32 1.0, %v2455
  %v2457 = vmul.f32 %v2454, %v2456
  %v2458 = vadd.f32 %v2454, %v2457
  %vm2459 = vweird.f32 %v2348
  %vm2460 = vweird.f32 %v2454
  %vm2461 = vmor %vm2459, %vm2460
  %v2462 = vsel %vm2461, %v2454, %v2458
  %v2463 = vand.u32 2147483647, %v2348
  %vm2464 = vcmp.eq.f32.partialorder %v2463, 8.507059e+37
  %v2465 = vand.u32 %v2348, 2147483648
  %v2466 = vor.u32 1.1754944e-38, %v2465
  %v2467 = vsel %vm2464, %v2466, %v2462
  %v2468 = vmul.f32 1.0, %v2467
  %v2469 = vld [vmem:[#allocation3] sm:$0xff]
  %v2471 = vrot.slane %v2469, 1
  %v2472 = vrot.slane %v2469, 2
  %v2473 = vrot.slane %v2469, 3
  %v2474 = vrot.slane %v2469, 4
  %v2475 = vrot.slane %v2469, 5
  %v2476 = vrot.slane %v2469, 6
  %v2477 = vrot.slane %v2469, 7
  %v2485 = vmul.f32 %v2171, %v2469
  %v2486 = vmul.f32 %v2186, %v2471
  %v2487 = vmul.f32 %v2201, %v2472
  %v2488 = vmul.f32 %v2216, %v2473
  %v2489 = vmul.f32 %v2231, %v2474
  %v2490 = vmul.f32 %v2246, %v2475
  %v2491 = vmul.f32 %v2261, %v2476
  %v2492 = vmul.f32 %v2276, %v2477
  %v2493 = vmul.f32 %v1995, %v2293
  %v2494 = vmul.f32 %v2010, %v2294
  %v2495 = vmul.f32 %v2025, %v2295
  %v2496 = vmul.f32 %v2040, %v2296
  %v2497 = vmul.f32 %v2055, %v2297
  %v2498 = vmul.f32 %v2070, %v2298
  %v2499 = vmul.f32 %v2085, %v2299
  %v2500 = vmul.f32 %v2100, %v2300
  %v2501 = vadd.f32 %v2485, %v2493
  %v2502 = vadd.f32 %v2486, %v2494
  %v2503 = vadd.f32 %v2487, %v2495
  %v2504 = vadd.f32 %v2488, %v2496
  %v2505 = vadd.f32 %v2489, %v2497
  %v2506 = vadd.f32 %v2490, %v2498
  %v2507 = vadd.f32 %v2491, %v2499
  %v2508 = vadd.f32 %v2492, %v2500
  %v2509 = vtanh.pop %v2501
  %v2510 = vtanh.pop %v2502
  %v2511 = vtanh.pop %v2503
  %v2512 = vtanh.pop %v2504
  %v2513 = vtanh.pop %v2505
  %v2514 = vtanh.pop %v2506
  %v2515 = vtanh.pop %v2507
  %v2516 = vtanh.pop %v2508
  %v2517 = vmul.f32 %v2363, %v2509
  %v2518 = vmul.f32 %v2378, %v2510
  %v2519 = vmul.f32 %v2393, %v2511
  %v2520 = vmul.f32 %v2408, %v2512
  %v2521 = vmul.f32 %v2423, %v2513
  %v2522 = vmul.f32 %v2438, %v2514
  %v2523 = vmul.f32 %v2453, %v2515
  %v2524 = vmul.f32 %v2468, %v2516
  %2533 = vst [vmem:[#allocation1] ss:$9 sm:$0xff] %v2501
  %s2534 = scalar_lea.vmem [#allocation1], 1
  %2535 = vst [vmem:[%s2534] ss:$9 sm:$0xff] %v2502
  %s2536 = scalar_lea.vmem [#allocation1], 2
  %2537 = vst [vmem:[%s2536] ss:$9 sm:$0xff] %v2503
  %s2538 = scalar_lea.vmem [#allocation1], 3
  %2539 = vst [vmem:[%s2538] ss:$9 sm:$0xff] %v2504
  %s2540 = scalar_lea.vmem [#allocation1], 4
  %2541 = vst [vmem:[%s2540] ss:$9 sm:$0xff] %v2505
  %s2542 = scalar_lea.vmem [#allocation1], 5
  %2543 = vst [vmem:[%s2542] ss:$9 sm:$0xff] %v2506
  %s2544 = scalar_lea.vmem [#allocation1], 6
  %2545 = vst [vmem:[%s2544] ss:$9 sm:$0xff] %v2507
  %s2546 = scalar_lea.vmem [#allocation1], 7
  %2547 = vst [vmem:[%s2546] ss:$9 sm:$0xff] %v2508
  %v2548 = vld [vmem:[#allocation1] sm:$0xff]
  %2550 = vst [vmem:[#allocation3] sm:$0xff] %v2548
  %2559 = vst [vmem:[#allocation1] ss:$9 sm:$0xff] %v2517
  %s2560 = scalar_lea.vmem [#allocation1], 1
  %2561 = vst [vmem:[%s2560] ss:$9 sm:$0xff] %v2518
  %s2562 = scalar_lea.vmem [#allocation1], 2
  %2563 = vst [vmem:[%s2562] ss:$9 sm:$0xff] %v2519
  %s2564 = scalar_lea.vmem [#allocation1], 3
  %2565 = vst [vmem:[%s2564] ss:$9 sm:$0xff] %v2520
  %s2566 = scalar_lea.vmem [#allocation1], 4
  %2567 = vst [vmem:[%s2566] ss:$9 sm:$0xff] %v2521
  %s2568 = scalar_lea.vmem [#allocation1], 5
  %2569 = vst [vmem:[%s2568] ss:$9 sm:$0xff] %v2522
  %s2570 = scalar_lea.vmem [#allocation1], 6
  %2571 = vst [vmem:[%s2570] ss:$9 sm:$0xff] %v2523
  %s2572 = scalar_lea.vmem [#allocation1], 7
  %2573 = vst [vmem:[%s2572] ss:$9 sm:$0xff] %v2524
  %v2574 = vld [vmem:[#allocation1] sm:$0xff]
  %2576 = vst [vmem:[#allocation2] sm:$0xff] %v2574
  %2577 = vst [vmem:[%s2 + $0x2] sm:$0x1] %v2517
  %2578 = vst [vmem:[%s2 + $0xa] sm:$0x1] %v2518
  %2579 = vst [vmem:[%s2 + $0x12] sm:$0x1] %v2519
  %2580 = vst [vmem:[%s2 + $0x1a] sm:$0x1] %v2520
  %2581 = vst [vmem:[%s2 + $0x22] sm:$0x1] %v2521
  %2582 = vst [vmem:[%s2 + $0x2a] sm:$0x1] %v2522
  %2583 = vst [vmem:[%s2 + $0x32] sm:$0x1] %v2523
  %2584 = vst [vmem:[%s2 + $0x3a] sm:$0x1] %v2524
  %s2585 = scalar_lea.vmem %s0, 3
  %v2586 = vld [vmem:[%s2585] ss:$8 sm:$0xf]
  %s2587 = scalar_lea.vmem %s0, 35
  %v2588 = vld [vmem:[%s2587] ss:$8 sm:$0xf]
  %s2589 = scalar_lea.vmem %s0, 67
  %v2590 = vld [vmem:[%s2589] ss:$8 sm:$0xf]
  %s2591 = scalar_lea.vmem %s0, 99
  %v2592 = vld [vmem:[%s2591] ss:$8 sm:$0xf]
  %s2593 = scalar_lea.vmem %s0, 131
  %v2594 = vld [vmem:[%s2593] ss:$8 sm:$0xf]
  %s2595 = scalar_lea.vmem %s0, 163
  %v2596 = vld [vmem:[%s2595] ss:$8 sm:$0xf]
  %s2597 = scalar_lea.vmem %s0, 195
  %v2598 = vld [vmem:[%s2597] ss:$8 sm:$0xf]
  %s2599 = scalar_lea.vmem %s0, 227
  %v2600 = vld [vmem:[%s2599] ss:$8 sm:$0xf]
  %v2601 = vld [vmem:[#allocation2] sm:$0xff]
  %v2602 = vld [vmem:[%s1] sm:$0xff]
  %v2603 = vld [vmem:[%s1 + $0x8] sm:$0xff]
  %v2604 = vld [vmem:[%s1 + $0x10] sm:$0xff]
  %v2605 = vld [vmem:[%s1 + $0x18] sm:$0xff]
  %v2606 = vld [vmem:[%s1 + $0x20] sm:$0xff]
  %v2607 = vld [vmem:[%s1 + $0x28] sm:$0xff]
  %v2608 = vld [vmem:[%s1 + $0x30] sm:$0xff]
  %v2609 = vld [vmem:[%s1 + $0x38] sm:$0xff]
  %v2610 = vld [vmem:[%s1 + $0x40] sm:$0xff]
  %v2611 = vld [vmem:[%s1 + $0x48] sm:$0xff]
  %v2612 = vld [vmem:[%s1 + $0x50] sm:$0xff]
  %v2613 = vld [vmem:[%s1 + $0x58] sm:$0xff]
  %v2614 = vld [vmem:[%s1 + $0x60] sm:$0xff]
  %v2615 = vld [vmem:[%s1 + $0x68] sm:$0xff]
  %v2616 = vld [vmem:[%s1 + $0x70] sm:$0xff]
  %v2617 = vld [vmem:[%s1 + $0x78] sm:$0xff]
  %v2618 = vld [vmem:[%s1 + $0x80] sm:$0xff]
  %v2619 = vld [vmem:[%s1 + $0x88] sm:$0xff]
  %v2620 = vld [vmem:[%s1 + $0x90] sm:$0xff]
  %v2621 = vld [vmem:[%s1 + $0x98] sm:$0xff]
  %v2622 = vld [vmem:[%s1 + $0xa0] sm:$0xff]
  %v2623 = vld [vmem:[%s1 + $0xa8] sm:$0xff]
  %v2624 = vld [vmem:[%s1 + $0xb0] sm:$0xff]
  %v2625 = vld [vmem:[%s1 + $0xb8] sm:$0xff]
  %v2626 = vld [vmem:[%s1 + $0xc0] sm:$0xff]
  %v2627 = vld [vmem:[%s1 + $0xc8] sm:$0xff]
  %v2628 = vld [vmem:[%s1 + $0xd0] sm:$0xff]
  %v2629 = vld [vmem:[%s1 + $0xd8] sm:$0xff]
  %v2630 = vld [vmem:[%s1 + $0xe0] sm:$0xff]
  %v2631 = vld [vmem:[%s1 + $0xe8] sm:$0xff]
  %v2632 = vld [vmem:[%s1 + $0xf0] sm:$0xff]
  %v2633 = vld [vmem:[%s1 + $0xf8] sm:$0xff]
  %v2634 = vld [vmem:[%s1 + $0x100] sm:$0xff]
  %v2635 = vld [vmem:[%s1 + $0x108] sm:$0xff]
  %v2636 = vld [vmem:[%s1 + $0x110] sm:$0xff]
  %v2637 = vld [vmem:[%s1 + $0x118] sm:$0xff]
  %v2638 = vld [vmem:[%s1 + $0x120] sm:$0xff]
  %v2639 = vld [vmem:[%s1 + $0x128] sm:$0xff]
  %v2640 = vld [vmem:[%s1 + $0x130] sm:$0xff]
  %v2641 = vld [vmem:[%s1 + $0x138] sm:$0xff]
  %v2642 = vld [vmem:[%s1 + $0x140] sm:$0xff]
  %v2643 = vld [vmem:[%s1 + $0x148] sm:$0xff]
  %v2644 = vld [vmem:[%s1 + $0x150] sm:$0xff]
  %v2645 = vld [vmem:[%s1 + $0x158] sm:$0xff]
  %v2646 = vld [vmem:[%s1 + $0x160] sm:$0xff]
  %v2647 = vld [vmem:[%s1 + $0x168] sm:$0xff]
  %v2648 = vld [vmem:[%s1 + $0x170] sm:$0xff]
  %v2649 = vld [vmem:[%s1 + $0x178] sm:$0xff]
  %v2650 = vld [vmem:[%s1 + $0x180] sm:$0xff]
  %v2651 = vld [vmem:[%s1 + $0x188] sm:$0xff]
  %v2652 = vld [vmem:[%s1 + $0x190] sm:$0xff]
  %v2653 = vld [vmem:[%s1 + $0x198] sm:$0xff]
  %v2654 = vld [vmem:[%s1 + $0x1a0] sm:$0xff]
  %v2655 = vld [vmem:[%s1 + $0x1a8] sm:$0xff]
  %v2656 = vld [vmem:[%s1 + $0x1b0] sm:$0xff]
  %v2657 = vld [vmem:[%s1 + $0x1b8] sm:$0xff]
  %v2658 = vld [vmem:[%s1 + $0x1c0] sm:$0xff]
  %v2659 = vld [vmem:[%s1 + $0x1c8] sm:$0xff]
  %v2660 = vld [vmem:[%s1 + $0x1d0] sm:$0xff]
  %v2661 = vld [vmem:[%s1 + $0x1d8] sm:$0xff]
  %v2662 = vld [vmem:[%s1 + $0x1e0] sm:$0xff]
  %v2663 = vld [vmem:[%s1 + $0x1e8] sm:$0xff]
  %v2664 = vld [vmem:[%s1 + $0x1f0] sm:$0xff]
  %v2665 = vld [vmem:[%s1 + $0x1f8] sm:$0xff]
  %2666 = vmatpush.msra.mxu0 %v2662
  %2667 = vmatpush.msra.mxu0 %v2658
  %2668 = vmatpush.msra.mxu0 %v2654
  %2669 = vmatpush.msra.mxu0 %v2650
  %2670 = vmatpush.msra.mxu0 %v2646
  %2671 = vmatpush.msra.mxu0 %v2642
  %2672 = vmatpush.msra.mxu0 %v2638
  %2673 = vmatpush.msra.mxu0 %v2634
  %2674 = vmatpush.msra.mxu0 %v2630
  %2675 = vmatpush.msra.mxu0 %v2626
  %2676 = vmatpush.msra.mxu0 %v2622
  %2677 = vmatpush.msra.mxu0 %v2618
  %2678 = vmatpush.msra.mxu0 %v2614
  %2679 = vmatpush.msra.mxu0 %v2610
  %2680 = vmatpush.msra.mxu0 %v2606
  %2681 = vmatpush.msra.mxu0 %v2602
  %2682 = vmatmul.f32.gmra.mxu0 %v2601
  %v2683 = vpop.f32.mrf.mxu0
  %v2684 = vadd.f32 0.0, %v2683
  %2685 = vdwg.mxu0
  %2686 = vmatpush.msra.mxu0 %v2663
  %2687 = vmatpush.msra.mxu0 %v2659
  %2688 = vmatpush.msra.mxu0 %v2655
  %2689 = vmatpush.msra.mxu0 %v2651
  %2690 = vmatpush.msra.mxu0 %v2647
  %2691 = vmatpush.msra.mxu0 %v2643
  %2692 = vmatpush.msra.mxu0 %v2639
  %2693 = vmatpush.msra.mxu0 %v2635
  %2694 = vmatpush.msra.mxu0 %v2631
  %2695 = vmatpush.msra.mxu0 %v2627
  %2696 = vmatpush.msra.mxu0 %v2623
  %2697 = vmatpush.msra.mxu0 %v2619
  %2698 = vmatpush.msra.mxu0 %v2615
  %2699 = vmatpush.msra.mxu0 %v2611
  %2700 = vmatpush.msra.mxu0 %v2607
  %2701 = vmatpush.msra.mxu0 %v2603
  %2702 = vmatmul.f32.gmra.mxu0 %v2601
  %v2703 = vpop.f32.mrf.mxu0
  %v2704 = vadd.f32 0.0, %v2703
  %2705 = vdwg.mxu0
  %2706 = vmatpush.msra.mxu0 %v2664
  %2707 = vmatpush.msra.mxu0 %v2660
  %2708 = vmatpush.msra.mxu0 %v2656
  %2709 = vmatpush.msra.mxu0 %v2652
  %2710 = vmatpush.msra.mxu0 %v2648
  %2711 = vmatpush.msra.mxu0 %v2644
  %2712 = vmatpush.msra.mxu0 %v2640
  %2713 = vmatpush.msra.mxu0 %v2636
  %2714 = vmatpush.msra.mxu0 %v2632
  %2715 = vmatpush.msra.mxu0 %v2628
  %2716 = vmatpush.msra.mxu0 %v2624
  %2717 = vmatpush.msra.mxu0 %v2620
  %2718 = vmatpush.msra.mxu0 %v2616
  %2719 = vmatpush.msra.mxu0 %v2612
  %2720 = vmatpush.msra.mxu0 %v2608
  %2721 = vmatpush.msra.mxu0 %v2604
  %2722 = vmatmul.f32.gmra.mxu0 %v2601
  %v2723 = vpop.f32.mrf.mxu0
  %v2724 = vadd.f32 0.0, %v2723
  %2725 = vdwg.mxu0
  %2726 = vmatpush.msra.mxu0 %v2665
  %2727 = vmatpush.msra.mxu0 %v2661
  %2728 = vmatpush.msra.mxu0 %v2657
  %2729 = vmatpush.msra.mxu0 %v2653
  %2730 = vmatpush.msra.mxu0 %v2649
  %2731 = vmatpush.msra.mxu0 %v2645
  %2732 = vmatpush.msra.mxu0 %v2641
  %2733 = vmatpush.msra.mxu0 %v2637
  %2734 = vmatpush.msra.mxu0 %v2633
  %2735 = vmatpush.msra.mxu0 %v2629
  %2736 = vmatpush.msra.mxu0 %v2625
  %2737 = vmatpush.msra.mxu0 %v2621
  %2738 = vmatpush.msra.mxu0 %v2617
  %2739 = vmatpush.msra.mxu0 %v2613
  %2740 = vmatpush.msra.mxu0 %v2609
  %2741 = vmatpush.msra.mxu0 %v2605
  %2742 = vmatmul.f32.gmra.mxu0 %v2601
  %v2743 = vpop.f32.mrf.mxu0
  %v2744 = vadd.f32 0.0, %v2743
  %2745 = vdwg.mxu0
  %v2750 = vrot.slane %v2704, 7
  %v2751 = vrot.slane %v2724, 6
  %v2752 = vrot.slane %v2744, 5
  %v2753 = vsel %vm184, %v2684, %v2750
  %v2754 = vsel %vm186, %v2751, %v2752
  %v2755 = vsel %vm188, %v2753, %v2754
  %v2756 = vsel %vm190, %v2684, %v2750
  %v2757 = vsel %vm192, %v2751, %v2752
  %v2758 = vsel %vm194, %v2756, %v2757
  %v2759 = vrot.slane %v2758, 1
  %v2760 = vsel %vm186, %v2684, %v2750
  %v2761 = vsel %vm198, %v2751, %v2752
  %v2762 = vsel %vm200, %v2760, %v2761
  %v2763 = vrot.slane %v2762, 2
  %v2764 = vsel %vm192, %v2684, %v2750
  %v2765 = vsel %vm204, %v2751, %v2752
  %v2766 = vsel %vm206, %v2764, %v2765
  %v2767 = vrot.slane %v2766, 3
  %v2768 = vsel %vm198, %v2684, %v2750
  %v2769 = vsel %vm210, %v2751, %v2752
  %v2770 = vsel %vm212, %v2768, %v2769
  %v2771 = vrot.slane %v2770, 4
  %v2772 = vsel %vm204, %v2684, %v2750
  %v2773 = vsel %vm216, %v2752, %v2751
  %v2774 = vsel %vm218, %v2772, %v2773
  %v2775 = vrot.slane %v2774, 5
  %v2776 = vsel %vm210, %v2684, %v2750
  %v2777 = vsel %vm184, %v2751, %v2752
  %v2778 = vsel %vm223, %v2777, %v2776
  %v2779 = vrot.slane %v2778, 6
  %v2780 = vsel %vm216, %v2750, %v2684
  %v2781 = vsel %vm190, %v2751, %v2752
  %v2782 = vsel %vm228, %v2781, %v2780
  %v2783 = vrot.slane %v2782, 7
  %v2792 = vadd.f32 %v2586, %v2755
  %v2793 = vadd.f32 %v2588, %v2759
  %v2794 = vadd.f32 %v2590, %v2763
  %v2795 = vadd.f32 %v2592, %v2767
  %v2796 = vadd.f32 %v2594, %v2771
  %v2797 = vadd.f32 %v2596, %v2775
  %v2798 = vadd.f32 %v2598, %v2779
  %v2799 = vadd.f32 %v2600, %v2783
  %v2800 = vxor.u32 %v2792, 2147483648
  %v2801 = vxor.u32 %v2793, 2147483648
  %v2802 = vxor.u32 %v2794, 2147483648
  %v2803 = vxor.u32 %v2795, 2147483648
  %v2804 = vxor.u32 %v2796, 2147483648
  %v2805 = vxor.u32 %v2797, 2147483648
  %v2806 = vxor.u32 %v2798, 2147483648
  %v2807 = vxor.u32 %v2799, 2147483648
  %v2808 = vmul.f32 %v2800, 1.442695
  %v2809 = vpow.pop %v2808
  %v2810 = vmul.f32 %v2801, 1.442695
  %v2811 = vpow.pop %v2810
  %v2812 = vmul.f32 %v2802, 1.442695
  %v2813 = vpow.pop %v2812
  %v2814 = vmul.f32 %v2803, 1.442695
  %v2815 = vpow.pop %v2814
  %v2816 = vmul.f32 %v2804, 1.442695
  %v2817 = vpow.pop %v2816
  %v2818 = vmul.f32 %v2805, 1.442695
  %v2819 = vpow.pop %v2818
  %v2820 = vmul.f32 %v2806, 1.442695
  %v2821 = vpow.pop %v2820
  %v2822 = vmul.f32 %v2807, 1.442695
  %v2823 = vpow.pop %v2822
  %v2824 = vadd.f32 %v2809, 1.0
  %v2825 = vadd.f32 %v2811, 1.0
  %v2826 = vadd.f32 %v2813, 1.0
  %v2827 = vadd.f32 %v2815, 1.0
  %v2828 = vadd.f32 %v2817, 1.0
  %v2829 = vadd.f32 %v2819, 1.0
  %v2830 = vadd.f32 %v2821, 1.0
  %v2831 = vadd.f32 %v2823, 1.0
  %v2832 = vrcp.pop %v2824
  %v2833 = vmul.f32 %v2824, %v2832
  %v2834 = vsub.f32 1.0, %v2833
  %v2835 = vmul.f32 %v2832, %v2834
  %v2836 = vadd.f32 %v2832, %v2835
  %vm2837 = vweird.f32 %v2824
  %vm2838 = vweird.f32 %v2832
  %vm2839 = vmor %vm2837, %vm2838
  %v2840 = vsel %vm2839, %v2832, %v2836
  %v2841 = vand.u32 2147483647, %v2824
  %vm2842 = vcmp.eq.f32.partialorder %v2841, 8.507059e+37
  %v2843 = vand.u32 %v2824, 2147483648
  %v2844 = vor.u32 1.1754944e-38, %v2843
  %v2845 = vsel %vm2842, %v2844, %v2840
  %v2846 = vmul.f32 1.0, %v2845
  %v2847 = vrcp.pop %v2825
  %v2848 = vmul.f32 %v2825, %v2847
  %v2849 = vsub.f32 1.0, %v2848
  %v2850 = vmul.f32 %v2847, %v2849
  %v2851 = vadd.f32 %v2847, %v2850
  %vm2852 = vweird.f32 %v2825
  %vm2853 = vweird.f32 %v2847
  %vm2854 = vmor %vm2852, %vm2853
  %v2855 = vsel %vm2854, %v2847, %v2851
  %v2856 = vand.u32 2147483647, %v2825
  %vm2857 = vcmp.eq.f32.partialorder %v2856, 8.507059e+37
  %v2858 = vand.u32 %v2825, 2147483648
  %v2859 = vor.u32 1.1754944e-38, %v2858
  %v2860 = vsel %vm2857, %v2859, %v2855
  %v2861 = vmul.f32 1.0, %v2860
  %v2862 = vrcp.pop %v2826
  %v2863 = vmul.f32 %v2826, %v2862
  %v2864 = vsub.f32 1.0, %v2863
  %v2865 = vmul.f32 %v2862, %v2864
  %v2866 = vadd.f32 %v2862, %v2865
  %vm2867 = vweird.f32 %v2826
  %vm2868 = vweird.f32 %v2862
  %vm2869 = vmor %vm2867, %vm2868
  %v2870 = vsel %vm2869, %v2862, %v2866
  %v2871 = vand.u32 2147483647, %v2826
  %vm2872 = vcmp.eq.f32.partialorder %v2871, 8.507059e+37
  %v2873 = vand.u32 %v2826, 2147483648
  %v2874 = vor.u32 1.1754944e-38, %v2873
  %v2875 = vsel %vm2872, %v2874, %v2870
  %v2876 = vmul.f32 1.0, %v2875
  %v2877 = vrcp.pop %v2827
  %v2878 = vmul.f32 %v2827, %v2877
  %v2879 = vsub.f32 1.0, %v2878
  %v2880 = vmul.f32 %v2877, %v2879
  %v2881 = vadd.f32 %v2877, %v2880
  %vm2882 = vweird.f32 %v2827
  %vm2883 = vweird.f32 %v2877
  %vm2884 = vmor %vm2882, %vm2883
  %v2885 = vsel %vm2884, %v2877, %v2881
  %v2886 = vand.u32 2147483647, %v2827
  %vm2887 = vcmp.eq.f32.partialorder %v2886, 8.507059e+37
  %v2888 = vand.u32 %v2827, 2147483648
  %v2889 = vor.u32 1.1754944e-38, %v2888
  %v2890 = vsel %vm2887, %v2889, %v2885
  %v2891 = vmul.f32 1.0, %v2890
  %v2892 = vrcp.pop %v2828
  %v2893 = vmul.f32 %v2828, %v2892
  %v2894 = vsub.f32 1.0, %v2893
  %v2895 = vmul.f32 %v2892, %v2894
  %v2896 = vadd.f32 %v2892, %v2895
  %vm2897 = vweird.f32 %v2828
  %vm2898 = vweird.f32 %v2892
  %vm2899 = vmor %vm2897, %vm2898
  %v2900 = vsel %vm2899, %v2892, %v2896
  %v2901 = vand.u32 2147483647, %v2828
  %vm2902 = vcmp.eq.f32.partialorder %v2901, 8.507059e+37
  %v2903 = vand.u32 %v2828, 2147483648
  %v2904 = vor.u32 1.1754944e-38, %v2903
  %v2905 = vsel %vm2902, %v2904, %v2900
  %v2906 = vmul.f32 1.0, %v2905
  %v2907 = vrcp.pop %v2829
  %v2908 = vmul.f32 %v2829, %v2907
  %v2909 = vsub.f32 1.0, %v2908
  %v2910 = vmul.f32 %v2907, %v2909
  %v2911 = vadd.f32 %v2907, %v2910
  %vm2912 = vweird.f32 %v2829
  %vm2913 = vweird.f32 %v2907
  %vm2914 = vmor %vm2912, %vm2913
  %v2915 = vsel %vm2914, %v2907, %v2911
  %v2916 = vand.u32 2147483647, %v2829
  %vm2917 = vcmp.eq.f32.partialorder %v2916, 8.507059e+37
  %v2918 = vand.u32 %v2829, 2147483648
  %v2919 = vor.u32 1.1754944e-38, %v2918
  %v2920 = vsel %vm2917, %v2919, %v2915
  %v2921 = vmul.f32 1.0, %v2920
  %v2922 = vrcp.pop %v2830
  %v2923 = vmul.f32 %v2830, %v2922
  %v2924 = vsub.f32 1.0, %v2923
  %v2925 = vmul.f32 %v2922, %v2924
  %v2926 = vadd.f32 %v2922, %v2925
  %vm2927 = vweird.f32 %v2830
  %vm2928 = vweird.f32 %v2922
  %vm2929 = vmor %vm2927, %vm2928
  %v2930 = vsel %vm2929, %v2922, %v2926
  %v2931 = vand.u32 2147483647, %v2830
  %vm2932 = vcmp.eq.f32.partialorder %v2931, 8.507059e+37
  %v2933 = vand.u32 %v2830, 2147483648
  %v2934 = vor.u32 1.1754944e-38, %v2933
  %v2935 = vsel %vm2932, %v2934, %v2930
  %v2936 = vmul.f32 1.0, %v2935
  %v2937 = vrcp.pop %v2831
  %v2938 = vmul.f32 %v2831, %v2937
  %v2939 = vsub.f32 1.0, %v2938
  %v2940 = vmul.f32 %v2937, %v2939
  %v2941 = vadd.f32 %v2937, %v2940
  %vm2942 = vweird.f32 %v2831
  %vm2943 = vweird.f32 %v2937
  %vm2944 = vmor %vm2942, %vm2943
  %v2945 = vsel %vm2944, %v2937, %v2941
  %v2946 = vand.u32 2147483647, %v2831
  %vm2947 = vcmp.eq.f32.partialorder %v2946, 8.507059e+37
  %v2948 = vand.u32 %v2831, 2147483648
  %v2949 = vor.u32 1.1754944e-38, %v2948
  %v2950 = vsel %vm2947, %v2949, %v2945
  %v2951 = vmul.f32 1.0, %v2950
  %v2960 = vrot.slane %v2792, 1
  %v2961 = vrot.slane %v2793, 1
  %v2962 = vrot.slane %v2794, 1
  %v2963 = vrot.slane %v2795, 1
  %v2964 = vrot.slane %v2796, 1
  %v2965 = vrot.slane %v2797, 1
  %v2966 = vrot.slane %v2798, 1
  %v2967 = vrot.slane %v2799, 1
  %v2976 = vxor.u32 %v2960, 2147483648
  %v2977 = vxor.u32 %v2961, 2147483648
  %v2978 = vxor.u32 %v2962, 2147483648
  %v2979 = vxor.u32 %v2963, 2147483648
  %v2980 = vxor.u32 %v2964, 2147483648
  %v2981 = vxor.u32 %v2965, 2147483648
  %v2982 = vxor.u32 %v2966, 2147483648
  %v2983 = vxor.u32 %v2967, 2147483648
  %v2984 = vmul.f32 %v2976, 1.442695
  %v2985 = vpow.pop %v2984
  %v2986 = vmul.f32 %v2977, 1.442695
  %v2987 = vpow.pop %v2986
  %v2988 = vmul.f32 %v2978, 1.442695
  %v2989 = vpow.pop %v2988
  %v2990 = vmul.f32 %v2979, 1.442695
  %v2991 = vpow.pop %v2990
  %v2992 = vmul.f32 %v2980, 1.442695
  %v2993 = vpow.pop %v2992
  %v2994 = vmul.f32 %v2981, 1.442695
  %v2995 = vpow.pop %v2994
  %v2996 = vmul.f32 %v2982, 1.442695
  %v2997 = vpow.pop %v2996
  %v2998 = vmul.f32 %v2983, 1.442695
  %v2999 = vpow.pop %v2998
  %v3000 = vadd.f32 %v2985, 1.0
  %v3001 = vadd.f32 %v2987, 1.0
  %v3002 = vadd.f32 %v2989, 1.0
  %v3003 = vadd.f32 %v2991, 1.0
  %v3004 = vadd.f32 %v2993, 1.0
  %v3005 = vadd.f32 %v2995, 1.0
  %v3006 = vadd.f32 %v2997, 1.0
  %v3007 = vadd.f32 %v2999, 1.0
  %v3008 = vrcp.pop %v3000
  %v3009 = vmul.f32 %v3000, %v3008
  %v3010 = vsub.f32 1.0, %v3009
  %v3011 = vmul.f32 %v3008, %v3010
  %v3012 = vadd.f32 %v3008, %v3011
  %vm3013 = vweird.f32 %v3000
  %vm3014 = vweird.f32 %v3008
  %vm3015 = vmor %vm3013, %vm3014
  %v3016 = vsel %vm3015, %v3008, %v3012
  %v3017 = vand.u32 2147483647, %v3000
  %vm3018 = vcmp.eq.f32.partialorder %v3017, 8.507059e+37
  %v3019 = vand.u32 %v3000, 2147483648
  %v3020 = vor.u32 1.1754944e-38, %v3019
  %v3021 = vsel %vm3018, %v3020, %v3016
  %v3022 = vmul.f32 1.0, %v3021
  %v3023 = vrcp.pop %v3001
  %v3024 = vmul.f32 %v3001, %v3023
  %v3025 = vsub.f32 1.0, %v3024
  %v3026 = vmul.f32 %v3023, %v3025
  %v3027 = vadd.f32 %v3023, %v3026
  %vm3028 = vweird.f32 %v3001
  %vm3029 = vweird.f32 %v3023
  %vm3030 = vmor %vm3028, %vm3029
  %v3031 = vsel %vm3030, %v3023, %v3027
  %v3032 = vand.u32 2147483647, %v3001
  %vm3033 = vcmp.eq.f32.partialorder %v3032, 8.507059e+37
  %v3034 = vand.u32 %v3001, 2147483648
  %v3035 = vor.u32 1.1754944e-38, %v3034
  %v3036 = vsel %vm3033, %v3035, %v3031
  %v3037 = vmul.f32 1.0, %v3036
  %v3038 = vrcp.pop %v3002
  %v3039 = vmul.f32 %v3002, %v3038
  %v3040 = vsub.f32 1.0, %v3039
  %v3041 = vmul.f32 %v3038, %v3040
  %v3042 = vadd.f32 %v3038, %v3041
  %vm3043 = vweird.f32 %v3002
  %vm3044 = vweird.f32 %v3038
  %vm3045 = vmor %vm3043, %vm3044
  %v3046 = vsel %vm3045, %v3038, %v3042
  %v3047 = vand.u32 2147483647, %v3002
  %vm3048 = vcmp.eq.f32.partialorder %v3047, 8.507059e+37
  %v3049 = vand.u32 %v3002, 2147483648
  %v3050 = vor.u32 1.1754944e-38, %v3049
  %v3051 = vsel %vm3048, %v3050, %v3046
  %v3052 = vmul.f32 1.0, %v3051
  %v3053 = vrcp.pop %v3003
  %v3054 = vmul.f32 %v3003, %v3053
  %v3055 = vsub.f32 1.0, %v3054
  %v3056 = vmul.f32 %v3053, %v3055
  %v3057 = vadd.f32 %v3053, %v3056
  %vm3058 = vweird.f32 %v3003
  %vm3059 = vweird.f32 %v3053
  %vm3060 = vmor %vm3058, %vm3059
  %v3061 = vsel %vm3060, %v3053, %v3057
  %v3062 = vand.u32 2147483647, %v3003
  %vm3063 = vcmp.eq.f32.partialorder %v3062, 8.507059e+37
  %v3064 = vand.u32 %v3003, 2147483648
  %v3065 = vor.u32 1.1754944e-38, %v3064
  %v3066 = vsel %vm3063, %v3065, %v3061
  %v3067 = vmul.f32 1.0, %v3066
  %v3068 = vrcp.pop %v3004
  %v3069 = vmul.f32 %v3004, %v3068
  %v3070 = vsub.f32 1.0, %v3069
  %v3071 = vmul.f32 %v3068, %v3070
  %v3072 = vadd.f32 %v3068, %v3071
  %vm3073 = vweird.f32 %v3004
  %vm3074 = vweird.f32 %v3068
  %vm3075 = vmor %vm3073, %vm3074
  %v3076 = vsel %vm3075, %v3068, %v3072
  %v3077 = vand.u32 2147483647, %v3004
  %vm3078 = vcmp.eq.f32.partialorder %v3077, 8.507059e+37
  %v3079 = vand.u32 %v3004, 2147483648
  %v3080 = vor.u32 1.1754944e-38, %v3079
  %v3081 = vsel %vm3078, %v3080, %v3076
  %v3082 = vmul.f32 1.0, %v3081
  %v3083 = vrcp.pop %v3005
  %v3084 = vmul.f32 %v3005, %v3083
  %v3085 = vsub.f32 1.0, %v3084
  %v3086 = vmul.f32 %v3083, %v3085
  %v3087 = vadd.f32 %v3083, %v3086
  %vm3088 = vweird.f32 %v3005
  %vm3089 = vweird.f32 %v3083
  %vm3090 = vmor %vm3088, %vm3089
  %v3091 = vsel %vm3090, %v3083, %v3087
  %v3092 = vand.u32 2147483647, %v3005
  %vm3093 = vcmp.eq.f32.partialorder %v3092, 8.507059e+37
  %v3094 = vand.u32 %v3005, 2147483648
  %v3095 = vor.u32 1.1754944e-38, %v3094
  %v3096 = vsel %vm3093, %v3095, %v3091
  %v3097 = vmul.f32 1.0, %v3096
  %v3098 = vrcp.pop %v3006
  %v3099 = vmul.f32 %v3006, %v3098
  %v3100 = vsub.f32 1.0, %v3099
  %v3101 = vmul.f32 %v3098, %v3100
  %v3102 = vadd.f32 %v3098, %v3101
  %vm3103 = vweird.f32 %v3006
  %vm3104 = vweird.f32 %v3098
  %vm3105 = vmor %vm3103, %vm3104
  %v3106 = vsel %vm3105, %v3098, %v3102
  %v3107 = vand.u32 2147483647, %v3006
  %vm3108 = vcmp.eq.f32.partialorder %v3107, 8.507059e+37
  %v3109 = vand.u32 %v3006, 2147483648
  %v3110 = vor.u32 1.1754944e-38, %v3109
  %v3111 = vsel %vm3108, %v3110, %v3106
  %v3112 = vmul.f32 1.0, %v3111
  %v3113 = vrcp.pop %v3007
  %v3114 = vmul.f32 %v3007, %v3113
  %v3115 = vsub.f32 1.0, %v3114
  %v3116 = vmul.f32 %v3113, %v3115
  %v3117 = vadd.f32 %v3113, %v3116
  %vm3118 = vweird.f32 %v3007
  %vm3119 = vweird.f32 %v3113
  %vm3120 = vmor %vm3118, %vm3119
  %v3121 = vsel %vm3120, %v3113, %v3117
  %v3122 = vand.u32 2147483647, %v3007
  %vm3123 = vcmp.eq.f32.partialorder %v3122, 8.507059e+37
  %v3124 = vand.u32 %v3007, 2147483648
  %v3125 = vor.u32 1.1754944e-38, %v3124
  %v3126 = vsel %vm3123, %v3125, %v3121
  %v3127 = vmul.f32 1.0, %v3126
  %v3128 = vrot.slane %v2792, 2
  %v3129 = vrot.slane %v2793, 2
  %v3130 = vrot.slane %v2794, 2
  %v3131 = vrot.slane %v2795, 2
  %v3132 = vrot.slane %v2796, 2
  %v3133 = vrot.slane %v2797, 2
  %v3134 = vrot.slane %v2798, 2
  %v3135 = vrot.slane %v2799, 2
  %v3144 = vtanh.pop %v3128
  %v3145 = vtanh.pop %v3129
  %v3146 = vtanh.pop %v3130
  %v3147 = vtanh.pop %v3131
  %v3148 = vtanh.pop %v3132
  %v3149 = vtanh.pop %v3133
  %v3150 = vtanh.pop %v3134
  %v3151 = vtanh.pop %v3135
  %v3152 = vrot.slane %v2792, 3
  %v3153 = vrot.slane %v2793, 3
  %v3154 = vrot.slane %v2794, 3
  %v3155 = vrot.slane %v2795, 3
  %v3156 = vrot.slane %v2796, 3
  %v3157 = vrot.slane %v2797, 3
  %v3158 = vrot.slane %v2798, 3
  %v3159 = vrot.slane %v2799, 3
  %v3168 = vxor.u32 %v3152, 2147483648
  %v3169 = vxor.u32 %v3153, 2147483648
  %v3170 = vxor.u32 %v3154, 2147483648
  %v3171 = vxor.u32 %v3155, 2147483648
  %v3172 = vxor.u32 %v3156, 2147483648
  %v3173 = vxor.u32 %v3157, 2147483648
  %v3174 = vxor.u32 %v3158, 2147483648
  %v3175 = vxor.u32 %v3159, 2147483648
  %v3176 = vmul.f32 %v3168, 1.442695
  %v3177 = vpow.pop %v3176
  %v3178 = vmul.f32 %v3169, 1.442695
  %v3179 = vpow.pop %v3178
  %v3180 = vmul.f32 %v3170, 1.442695
  %v3181 = vpow.pop %v3180
  %v3182 = vmul.f32 %v3171, 1.442695
  %v3183 = vpow.pop %v3182
  %v3184 = vmul.f32 %v3172, 1.442695
  %v3185 = vpow.pop %v3184
  %v3186 = vmul.f32 %v3173, 1.442695
  %v3187 = vpow.pop %v3186
  %v3188 = vmul.f32 %v3174, 1.442695
  %v3189 = vpow.pop %v3188
  %v3190 = vmul.f32 %v3175, 1.442695
  %v3191 = vpow.pop %v3190
  %v3192 = vadd.f32 %v3177, 1.0
  %v3193 = vadd.f32 %v3179, 1.0
  %v3194 = vadd.f32 %v3181, 1.0
  %v3195 = vadd.f32 %v3183, 1.0
  %v3196 = vadd.f32 %v3185, 1.0
  %v3197 = vadd.f32 %v3187, 1.0
  %v3198 = vadd.f32 %v3189, 1.0
  %v3199 = vadd.f32 %v3191, 1.0
  %v3200 = vrcp.pop %v3192
  %v3201 = vmul.f32 %v3192, %v3200
  %v3202 = vsub.f32 1.0, %v3201
  %v3203 = vmul.f32 %v3200, %v3202
  %v3204 = vadd.f32 %v3200, %v3203
  %vm3205 = vweird.f32 %v3192
  %vm3206 = vweird.f32 %v3200
  %vm3207 = vmor %vm3205, %vm3206
  %v3208 = vsel %vm3207, %v3200, %v3204
  %v3209 = vand.u32 2147483647, %v3192
  %vm3210 = vcmp.eq.f32.partialorder %v3209, 8.507059e+37
  %v3211 = vand.u32 %v3192, 2147483648
  %v3212 = vor.u32 1.1754944e-38, %v3211
  %v3213 = vsel %vm3210, %v3212, %v3208
  %v3214 = vmul.f32 1.0, %v3213
  %v3215 = vrcp.pop %v3193
  %v3216 = vmul.f32 %v3193, %v3215
  %v3217 = vsub.f32 1.0, %v3216
  %v3218 = vmul.f32 %v3215, %v3217
  %v3219 = vadd.f32 %v3215, %v3218
  %vm3220 = vweird.f32 %v3193
  %vm3221 = vweird.f32 %v3215
  %vm3222 = vmor %vm3220, %vm3221
  %v3223 = vsel %vm3222, %v3215, %v3219
  %v3224 = vand.u32 2147483647, %v3193
  %vm3225 = vcmp.eq.f32.partialorder %v3224, 8.507059e+37
  %v3226 = vand.u32 %v3193, 2147483648
  %v3227 = vor.u32 1.1754944e-38, %v3226
  %v3228 = vsel %vm3225, %v3227, %v3223
  %v3229 = vmul.f32 1.0, %v3228
  %v3230 = vrcp.pop %v3194
  %v3231 = vmul.f32 %v3194, %v3230
  %v3232 = vsub.f32 1.0, %v3231
  %v3233 = vmul.f32 %v3230, %v3232
  %v3234 = vadd.f32 %v3230, %v3233
  %vm3235 = vweird.f32 %v3194
  %vm3236 = vweird.f32 %v3230
  %vm3237 = vmor %vm3235, %vm3236
  %v3238 = vsel %vm3237, %v3230, %v3234
  %v3239 = vand.u32 2147483647, %v3194
  %vm3240 = vcmp.eq.f32.partialorder %v3239, 8.507059e+37
  %v3241 = vand.u32 %v3194, 2147483648
  %v3242 = vor.u32 1.1754944e-38, %v3241
  %v3243 = vsel %vm3240, %v3242, %v3238
  %v3244 = vmul.f32 1.0, %v3243
  %v3245 = vrcp.pop %v3195
  %v3246 = vmul.f32 %v3195, %v3245
  %v3247 = vsub.f32 1.0, %v3246
  %v3248 = vmul.f32 %v3245, %v3247
  %v3249 = vadd.f32 %v3245, %v3248
  %vm3250 = vweird.f32 %v3195
  %vm3251 = vweird.f32 %v3245
  %vm3252 = vmor %vm3250, %vm3251
  %v3253 = vsel %vm3252, %v3245, %v3249
  %v3254 = vand.u32 2147483647, %v3195
  %vm3255 = vcmp.eq.f32.partialorder %v3254, 8.507059e+37
  %v3256 = vand.u32 %v3195, 2147483648
  %v3257 = vor.u32 1.1754944e-38, %v3256
  %v3258 = vsel %vm3255, %v3257, %v3253
  %v3259 = vmul.f32 1.0, %v3258
  %v3260 = vrcp.pop %v3196
  %v3261 = vmul.f32 %v3196, %v3260
  %v3262 = vsub.f32 1.0, %v3261
  %v3263 = vmul.f32 %v3260, %v3262
  %v3264 = vadd.f32 %v3260, %v3263
  %vm3265 = vweird.f32 %v3196
  %vm3266 = vweird.f32 %v3260
  %vm3267 = vmor %vm3265, %vm3266
  %v3268 = vsel %vm3267, %v3260, %v3264
  %v3269 = vand.u32 2147483647, %v3196
  %vm3270 = vcmp.eq.f32.partialorder %v3269, 8.507059e+37
  %v3271 = vand.u32 %v3196, 2147483648
  %v3272 = vor.u32 1.1754944e-38, %v3271
  %v3273 = vsel %vm3270, %v3272, %v3268
  %v3274 = vmul.f32 1.0, %v3273
  %v3275 = vrcp.pop %v3197
  %v3276 = vmul.f32 %v3197, %v3275
  %v3277 = vsub.f32 1.0, %v3276
  %v3278 = vmul.f32 %v3275, %v3277
  %v3279 = vadd.f32 %v3275, %v3278
  %vm3280 = vweird.f32 %v3197
  %vm3281 = vweird.f32 %v3275
  %vm3282 = vmor %vm3280, %vm3281
  %v3283 = vsel %vm3282, %v3275, %v3279
  %v3284 = vand.u32 2147483647, %v3197
  %vm3285 = vcmp.eq.f32.partialorder %v3284, 8.507059e+37
  %v3286 = vand.u32 %v3197, 2147483648
  %v3287 = vor.u32 1.1754944e-38, %v3286
  %v3288 = vsel %vm3285, %v3287, %v3283
  %v3289 = vmul.f32 1.0, %v3288
  %v3290 = vrcp.pop %v3198
  %v3291 = vmul.f32 %v3198, %v3290
  %v3292 = vsub.f32 1.0, %v3291
  %v3293 = vmul.f32 %v3290, %v3292
  %v3294 = vadd.f32 %v3290, %v3293
  %vm3295 = vweird.f32 %v3198
  %vm3296 = vweird.f32 %v3290
  %vm3297 = vmor %vm3295, %vm3296
  %v3298 = vsel %vm3297, %v3290, %v3294
  %v3299 = vand.u32 2147483647, %v3198
  %vm3300 = vcmp.eq.f32.partialorder %v3299, 8.507059e+37
  %v3301 = vand.u32 %v3198, 2147483648
  %v3302 = vor.u32 1.1754944e-38, %v3301
  %v3303 = vsel %vm3300, %v3302, %v3298
  %v3304 = vmul.f32 1.0, %v3303
  %v3305 = vrcp.pop %v3199
  %v3306 = vmul.f32 %v3199, %v3305
  %v3307 = vsub.f32 1.0, %v3306
  %v3308 = vmul.f32 %v3305, %v3307
  %v3309 = vadd.f32 %v3305, %v3308
  %vm3310 = vweird.f32 %v3199
  %vm3311 = vweird.f32 %v3305
  %vm3312 = vmor %vm3310, %vm3311
  %v3313 = vsel %vm3312, %v3305, %v3309
  %v3314 = vand.u32 2147483647, %v3199
  %vm3315 = vcmp.eq.f32.partialorder %v3314, 8.507059e+37
  %v3316 = vand.u32 %v3199, 2147483648
  %v3317 = vor.u32 1.1754944e-38, %v3316
  %v3318 = vsel %vm3315, %v3317, %v3313
  %v3319 = vmul.f32 1.0, %v3318
  %v3320 = vld [vmem:[#allocation3] sm:$0xff]
  %v3322 = vrot.slane %v3320, 1
  %v3323 = vrot.slane %v3320, 2
  %v3324 = vrot.slane %v3320, 3
  %v3325 = vrot.slane %v3320, 4
  %v3326 = vrot.slane %v3320, 5
  %v3327 = vrot.slane %v3320, 6
  %v3328 = vrot.slane %v3320, 7
  %v3336 = vmul.f32 %v3022, %v3320
  %v3337 = vmul.f32 %v3037, %v3322
  %v3338 = vmul.f32 %v3052, %v3323
  %v3339 = vmul.f32 %v3067, %v3324
  %v3340 = vmul.f32 %v3082, %v3325
  %v3341 = vmul.f32 %v3097, %v3326
  %v3342 = vmul.f32 %v3112, %v3327
  %v3343 = vmul.f32 %v3127, %v3328
  %v3344 = vmul.f32 %v2846, %v3144
  %v3345 = vmul.f32 %v2861, %v3145
  %v3346 = vmul.f32 %v2876, %v3146
  %v3347 = vmul.f32 %v2891, %v3147
  %v3348 = vmul.f32 %v2906, %v3148
  %v3349 = vmul.f32 %v2921, %v3149
  %v3350 = vmul.f32 %v2936, %v3150
  %v3351 = vmul.f32 %v2951, %v3151
  %v3352 = vadd.f32 %v3336, %v3344
  %v3353 = vadd.f32 %v3337, %v3345
  %v3354 = vadd.f32 %v3338, %v3346
  %v3355 = vadd.f32 %v3339, %v3347
  %v3356 = vadd.f32 %v3340, %v3348
  %v3357 = vadd.f32 %v3341, %v3349
  %v3358 = vadd.f32 %v3342, %v3350
  %v3359 = vadd.f32 %v3343, %v3351
  %v3360 = vtanh.pop %v3352
  %v3361 = vtanh.pop %v3353
  %v3362 = vtanh.pop %v3354
  %v3363 = vtanh.pop %v3355
  %v3364 = vtanh.pop %v3356
  %v3365 = vtanh.pop %v3357
  %v3366 = vtanh.pop %v3358
  %v3367 = vtanh.pop %v3359
  %v3368 = vmul.f32 %v3214, %v3360
  %v3369 = vmul.f32 %v3229, %v3361
  %v3370 = vmul.f32 %v3244, %v3362
  %v3371 = vmul.f32 %v3259, %v3363
  %v3372 = vmul.f32 %v3274, %v3364
  %v3373 = vmul.f32 %v3289, %v3365
  %v3374 = vmul.f32 %v3304, %v3366
  %v3375 = vmul.f32 %v3319, %v3367
  %3384 = vst [vmem:[#allocation1] ss:$9 sm:$0xff] %v3352
  %s3385 = scalar_lea.vmem [#allocation1], 1
  %3386 = vst [vmem:[%s3385] ss:$9 sm:$0xff] %v3353
  %s3387 = scalar_lea.vmem [#allocation1], 2
  %3388 = vst [vmem:[%s3387] ss:$9 sm:$0xff] %v3354
  %s3389 = scalar_lea.vmem [#allocation1], 3
  %3390 = vst [vmem:[%s3389] ss:$9 sm:$0xff] %v3355
  %s3391 = scalar_lea.vmem [#allocation1], 4
  %3392 = vst [vmem:[%s3391] ss:$9 sm:$0xff] %v3356
  %s3393 = scalar_lea.vmem [#allocation1], 5
  %3394 = vst [vmem:[%s3393] ss:$9 sm:$0xff] %v3357
  %s3395 = scalar_lea.vmem [#allocation1], 6
  %3396 = vst [vmem:[%s3395] ss:$9 sm:$0xff] %v3358
  %s3397 = scalar_lea.vmem [#allocation1], 7
  %3398 = vst [vmem:[%s3397] ss:$9 sm:$0xff] %v3359
  %v3399 = vld [vmem:[#allocation1] sm:$0xff]
  %3401 = vst [vmem:[#allocation3] sm:$0xff] %v3399
  %3410 = vst [vmem:[#allocation1] ss:$9 sm:$0xff] %v3368
  %s3411 = scalar_lea.vmem [#allocation1], 1
  %3412 = vst [vmem:[%s3411] ss:$9 sm:$0xff] %v3369
  %s3413 = scalar_lea.vmem [#allocation1], 2
  %3414 = vst [vmem:[%s3413] ss:$9 sm:$0xff] %v3370
  %s3415 = scalar_lea.vmem [#allocation1], 3
  %3416 = vst [vmem:[%s3415] ss:$9 sm:$0xff] %v3371
  %s3417 = scalar_lea.vmem [#allocation1], 4
  %3418 = vst [vmem:[%s3417] ss:$9 sm:$0xff] %v3372
  %s3419 = scalar_lea.vmem [#allocation1], 5
  %3420 = vst [vmem:[%s3419] ss:$9 sm:$0xff] %v3373
  %s3421 = scalar_lea.vmem [#allocation1], 6
  %3422 = vst [vmem:[%s3421] ss:$9 sm:$0xff] %v3374
  %s3423 = scalar_lea.vmem [#allocation1], 7
  %3424 = vst [vmem:[%s3423] ss:$9 sm:$0xff] %v3375
  %v3425 = vld [vmem:[#allocation1] sm:$0xff]
  %3427 = vst [vmem:[#allocation2] sm:$0xff] %v3425
  %3428 = vst [vmem:[%s2 + $0x3] sm:$0x1] %v3368
  %3429 = vst [vmem:[%s2 + $0xb] sm:$0x1] %v3369
  %3430 = vst [vmem:[%s2 + $0x13] sm:$0x1] %v3370
  %3431 = vst [vmem:[%s2 + $0x1b] sm:$0x1] %v3371
  %3432 = vst [vmem:[%s2 + $0x23] sm:$0x1] %v3372
  %3433 = vst [vmem:[%s2 + $0x2b] sm:$0x1] %v3373
  %3434 = vst [vmem:[%s2 + $0x33] sm:$0x1] %v3374
  %3435 = vst [vmem:[%s2 + $0x3b] sm:$0x1] %v3375
  %s3436 = scalar_lea.vmem %s0, 4
  %v3437 = vld [vmem:[%s3436] ss:$8 sm:$0xf]
  %s3438 = scalar_lea.vmem %s0, 36
  %v3439 = vld [vmem:[%s3438] ss:$8 sm:$0xf]
  %s3440 = scalar_lea.vmem %s0, 68
  %v3441 = vld [vmem:[%s3440] ss:$8 sm:$0xf]
  %s3442 = scalar_lea.vmem %s0, 100
  %v3443 = vld [vmem:[%s3442] ss:$8 sm:$0xf]
  %s3444 = scalar_lea.vmem %s0, 132
  %v3445 = vld [vmem:[%s3444] ss:$8 sm:$0xf]
  %s3446 = scalar_lea.vmem %s0, 164
  %v3447 = vld [vmem:[%s3446] ss:$8 sm:$0xf]
  %s3448 = scalar_lea.vmem %s0, 196
  %v3449 = vld [vmem:[%s3448] ss:$8 sm:$0xf]
  %s3450 = scalar_lea.vmem %s0, 228
  %v3451 = vld [vmem:[%s3450] ss:$8 sm:$0xf]
  %v3452 = vld [vmem:[#allocation2] sm:$0xff]
  %v3453 = vld [vmem:[%s1] sm:$0xff]
  %v3454 = vld [vmem:[%s1 + $0x8] sm:$0xff]
  %v3455 = vld [vmem:[%s1 + $0x10] sm:$0xff]
  %v3456 = vld [vmem:[%s1 + $0x18] sm:$0xff]
  %v3457 = vld [vmem:[%s1 + $0x20] sm:$0xff]
  %v3458 = vld [vmem:[%s1 + $0x28] sm:$0xff]
  %v3459 = vld [vmem:[%s1 + $0x30] sm:$0xff]
  %v3460 = vld [vmem:[%s1 + $0x38] sm:$0xff]
  %v3461 = vld [vmem:[%s1 + $0x40] sm:$0xff]
  %v3462 = vld [vmem:[%s1 + $0x48] sm:$0xff]
  %v3463 = vld [vmem:[%s1 + $0x50] sm:$0xff]
  %v3464 = vld [vmem:[%s1 + $0x58] sm:$0xff]
  %v3465 = vld [vmem:[%s1 + $0x60] sm:$0xff]
  %v3466 = vld [vmem:[%s1 + $0x68] sm:$0xff]
  %v3467 = vld [vmem:[%s1 + $0x70] sm:$0xff]
  %v3468 = vld [vmem:[%s1 + $0x78] sm:$0xff]
  %v3469 = vld [vmem:[%s1 + $0x80] sm:$0xff]
  %v3470 = vld [vmem:[%s1 + $0x88] sm:$0xff]
  %v3471 = vld [vmem:[%s1 + $0x90] sm:$0xff]
  %v3472 = vld [vmem:[%s1 + $0x98] sm:$0xff]
  %v3473 = vld [vmem:[%s1 + $0xa0] sm:$0xff]
  %v3474 = vld [vmem:[%s1 + $0xa8] sm:$0xff]
  %v3475 = vld [vmem:[%s1 + $0xb0] sm:$0xff]
  %v3476 = vld [vmem:[%s1 + $0xb8] sm:$0xff]
  %v3477 = vld [vmem:[%s1 + $0xc0] sm:$0xff]
  %v3478 = vld [vmem:[%s1 + $0xc8] sm:$0xff]
  %v3479 = vld [vmem:[%s1 + $0xd0] sm:$0xff]
  %v3480 = vld [vmem:[%s1 + $0xd8] sm:$0xff]
  %v3481 = vld [vmem:[%s1 + $0xe0] sm:$0xff]
  %v3482 = vld [vmem:[%s1 + $0xe8] sm:$0xff]
  %v3483 = vld [vmem:[%s1 + $0xf0] sm:$0xff]
  %v3484 = vld [vmem:[%s1 + $0xf8] sm:$0xff]
  %v3485 = vld [vmem:[%s1 + $0x100] sm:$0xff]
  %v3486 = vld [vmem:[%s1 + $0x108] sm:$0xff]
  %v3487 = vld [vmem:[%s1 + $0x110] sm:$0xff]
  %v3488 = vld [vmem:[%s1 + $0x118] sm:$0xff]
  %v3489 = vld [vmem:[%s1 + $0x120] sm:$0xff]
  %v3490 = vld [vmem:[%s1 + $0x128] sm:$0xff]
  %v3491 = vld [vmem:[%s1 + $0x130] sm:$0xff]
  %v3492 = vld [vmem:[%s1 + $0x138] sm:$0xff]
  %v3493 = vld [vmem:[%s1 + $0x140] sm:$0xff]
  %v3494 = vld [vmem:[%s1 + $0x148] sm:$0xff]
  %v3495 = vld [vmem:[%s1 + $0x150] sm:$0xff]
  %v3496 = vld [vmem:[%s1 + $0x158] sm:$0xff]
  %v3497 = vld [vmem:[%s1 + $0x160] sm:$0xff]
  %v3498 = vld [vmem:[%s1 + $0x168] sm:$0xff]
  %v3499 = vld [vmem:[%s1 + $0x170] sm:$0xff]
  %v3500 = vld [vmem:[%s1 + $0x178] sm:$0xff]
  %v3501 = vld [vmem:[%s1 + $0x180] sm:$0xff]
  %v3502 = vld [vmem:[%s1 + $0x188] sm:$0xff]
  %v3503 = vld [vmem:[%s1 + $0x190] sm:$0xff]
  %v3504 = vld [vmem:[%s1 + $0x198] sm:$0xff]
  %v3505 = vld [vmem:[%s1 + $0x1a0] sm:$0xff]
  %v3506 = vld [vmem:[%s1 + $0x1a8] sm:$0xff]
  %v3507 = vld [vmem:[%s1 + $0x1b0] sm:$0xff]
  %v3508 = vld [vmem:[%s1 + $0x1b8] sm:$0xff]
  %v3509 = vld [vmem:[%s1 + $0x1c0] sm:$0xff]
  %v3510 = vld [vmem:[%s1 + $0x1c8] sm:$0xff]
  %v3511 = vld [vmem:[%s1 + $0x1d0] sm:$0xff]
  %v3512 = vld [vmem:[%s1 + $0x1d8] sm:$0xff]
  %v3513 = vld [vmem:[%s1 + $0x1e0] sm:$0xff]
  %v3514 = vld [vmem:[%s1 + $0x1e8] sm:$0xff]
  %v3515 = vld [vmem:[%s1 + $0x1f0] sm:$0xff]
  %v3516 = vld [vmem:[%s1 + $0x1f8] sm:$0xff]
  %3517 = vmatpush.msra.mxu0 %v3513
  %3518 = vmatpush.msra.mxu0 %v3509
  %3519 = vmatpush.msra.mxu0 %v3505
  %3520 = vmatpush.msra.mxu0 %v3501
  %3521 = vmatpush.msra.mxu0 %v3497
  %3522 = vmatpush.msra.mxu0 %v3493
  %3523 = vmatpush.msra.mxu0 %v3489
  %3524 = vmatpush.msra.mxu0 %v3485
  %3525 = vmatpush.msra.mxu0 %v3481
  %3526 = vmatpush.msra.mxu0 %v3477
  %3527 = vmatpush.msra.mxu0 %v3473
  %3528 = vmatpush.msra.mxu0 %v3469
  %3529 = vmatpush.msra.mxu0 %v3465
  %3530 = vmatpush.msra.mxu0 %v3461
  %3531 = vmatpush.msra.mxu0 %v3457
  %3532 = vmatpush.msra.mxu0 %v3453
  %3533 = vmatmul.f32.gmra.mxu0 %v3452
  %v3534 = vpop.f32.mrf.mxu0
  %v3535 = vadd.f32 0.0, %v3534
  %3536 = vdwg.mxu0
  %3537 = vmatpush.msra.mxu0 %v3514
  %3538 = vmatpush.msra.mxu0 %v3510
  %3539 = vmatpush.msra.mxu0 %v3506
  %3540 = vmatpush.msra.mxu0 %v3502
  %3541 = vmatpush.msra.mxu0 %v3498
  %3542 = vmatpush.msra.mxu0 %v3494
  %3543 = vmatpush.msra.mxu0 %v3490
  %3544 = vmatpush.msra.mxu0 %v3486
  %3545 = vmatpush.msra.mxu0 %v3482
  %3546 = vmatpush.msra.mxu0 %v3478
  %3547 = vmatpush.msra.mxu0 %v3474
  %3548 = vmatpush.msra.mxu0 %v3470
  %3549 = vmatpush.msra.mxu0 %v3466
  %3550 = vmatpush.msra.mxu0 %v3462
  %3551 = vmatpush.msra.mxu0 %v3458
  %3552 = vmatpush.msra.mxu0 %v3454
  %3553 = vmatmul.f32.gmra.mxu0 %v3452
  %v3554 = vpop.f32.mrf.mxu0
  %v3555 = vadd.f32 0.0, %v3554
  %3556 = vdwg.mxu0
  %3557 = vmatpush.msra.mxu0 %v3515
  %3558 = vmatpush.msra.mxu0 %v3511
  %3559 = vmatpush.msra.mxu0 %v3507
  %3560 = vmatpush.msra.mxu0 %v3503
  %3561 = vmatpush.msra.mxu0 %v3499
  %3562 = vmatpush.msra.mxu0 %v3495
  %3563 = vmatpush.msra.mxu0 %v3491
  %3564 = vmatpush.msra.mxu0 %v3487
  %3565 = vmatpush.msra.mxu0 %v3483
  %3566 = vmatpush.msra.mxu0 %v3479
  %3567 = vmatpush.msra.mxu0 %v3475
  %3568 = vmatpush.msra.mxu0 %v3471
  %3569 = vmatpush.msra.mxu0 %v3467
  %3570 = vmatpush.msra.mxu0 %v3463
  %3571 = vmatpush.msra.mxu0 %v3459
  %3572 = vmatpush.msra.mxu0 %v3455
  %3573 = vmatmul.f32.gmra.mxu0 %v3452
  %v3574 = vpop.f32.mrf.mxu0
  %v3575 = vadd.f32 0.0, %v3574
  %3576 = vdwg.mxu0
  %3577 = vmatpush.msra.mxu0 %v3516
  %3578 = vmatpush.msra.mxu0 %v3512
  %3579 = vmatpush.msra.mxu0 %v3508
  %3580 = vmatpush.msra.mxu0 %v3504
  %3581 = vmatpush.msra.mxu0 %v3500
  %3582 = vmatpush.msra.mxu0 %v3496
  %3583 = vmatpush.msra.mxu0 %v3492
  %3584 = vmatpush.msra.mxu0 %v3488
  %3585 = vmatpush.msra.mxu0 %v3484
  %3586 = vmatpush.msra.mxu0 %v3480
  %3587 = vmatpush.msra.mxu0 %v3476
  %3588 = vmatpush.msra.mxu0 %v3472
  %3589 = vmatpush.msra.mxu0 %v3468
  %3590 = vmatpush.msra.mxu0 %v3464
  %3591 = vmatpush.msra.mxu0 %v3460
  %3592 = vmatpush.msra.mxu0 %v3456
  %3593 = vmatmul.f32.gmra.mxu0 %v3452
  %v3594 = vpop.f32.mrf.mxu0
  %v3595 = vadd.f32 0.0, %v3594
  %3596 = vdwg.mxu0
  %v3601 = vrot.slane %v3555, 7
  %v3602 = vrot.slane %v3575, 6
  %v3603 = vrot.slane %v3595, 5
  %v3604 = vsel %vm184, %v3535, %v3601
  %v3605 = vsel %vm186, %v3602, %v3603
  %v3606 = vsel %vm188, %v3604, %v3605
  %v3607 = vsel %vm190, %v3535, %v3601
  %v3608 = vsel %vm192, %v3602, %v3603
  %v3609 = vsel %vm194, %v3607, %v3608
  %v3610 = vrot.slane %v3609, 1
  %v3611 = vsel %vm186, %v3535, %v3601
  %v3612 = vsel %vm198, %v3602, %v3603
  %v3613 = vsel %vm200, %v3611, %v3612
  %v3614 = vrot.slane %v3613, 2
  %v3615 = vsel %vm192, %v3535, %v3601
  %v3616 = vsel %vm204, %v3602, %v3603
  %v3617 = vsel %vm206, %v3615, %v3616
  %v3618 = vrot.slane %v3617, 3
  %v3619 = vsel %vm198, %v3535, %v3601
  %v3620 = vsel %vm210, %v3602, %v3603
  %v3621 = vsel %vm212, %v3619, %v3620
  %v3622 = vrot.slane %v3621, 4
  %v3623 = vsel %vm204, %v3535, %v3601
  %v3624 = vsel %vm216, %v3603, %v3602
  %v3625 = vsel %vm218, %v3623, %v3624
  %v3626 = vrot.slane %v3625, 5
  %v3627 = vsel %vm210, %v3535, %v3601
  %v3628 = vsel %vm184, %v3602, %v3603
  %v3629 = vsel %vm223, %v3628, %v3627
  %v3630 = vrot.slane %v3629, 6
  %v3631 = vsel %vm216, %v3601, %v3535
  %v3632 = vsel %vm190, %v3602, %v3603
  %v3633 = vsel %vm228, %v3632, %v3631
  %v3634 = vrot.slane %v3633, 7
  %v3643 = vadd.f32 %v3437, %v3606
  %v3644 = vadd.f32 %v3439, %v3610
  %v3645 = vadd.f32 %v3441, %v3614
  %v3646 = vadd.f32 %v3443, %v3618
  %v3647 = vadd.f32 %v3445, %v3622
  %v3648 = vadd.f32 %v3447, %v3626
  %v3649 = vadd.f32 %v3449, %v3630
  %v3650 = vadd.f32 %v3451, %v3634
  %v3651 = vxor.u32 %v3643, 2147483648
  %v3652 = vxor.u32 %v3644, 2147483648
  %v3653 = vxor.u32 %v3645, 2147483648
  %v3654 = vxor.u32 %v3646, 2147483648
  %v3655 = vxor.u32 %v3647, 2147483648
  %v3656 = vxor.u32 %v3648, 2147483648
  %v3657 = vxor.u32 %v3649, 2147483648
  %v3658 = vxor.u32 %v3650, 2147483648
  %v3659 = vmul.f32 %v3651, 1.442695
  %v3660 = vpow.pop %v3659
  %v3661 = vmul.f32 %v3652, 1.442695
  %v3662 = vpow.pop %v3661
  %v3663 = vmul.f32 %v3653, 1.442695
  %v3664 = vpow.pop %v3663
  %v3665 = vmul.f32 %v3654, 1.442695
  %v3666 = vpow.pop %v3665
  %v3667 = vmul.f32 %v3655, 1.442695
  %v3668 = vpow.pop %v3667
  %v3669 = vmul.f32 %v3656, 1.442695
  %v3670 = vpow.pop %v3669
  %v3671 = vmul.f32 %v3657, 1.442695
  %v3672 = vpow.pop %v3671
  %v3673 = vmul.f32 %v3658, 1.442695
  %v3674 = vpow.pop %v3673
  %v3675 = vadd.f32 %v3660, 1.0
  %v3676 = vadd.f32 %v3662, 1.0
  %v3677 = vadd.f32 %v3664, 1.0
  %v3678 = vadd.f32 %v3666, 1.0
  %v3679 = vadd.f32 %v3668, 1.0
  %v3680 = vadd.f32 %v3670, 1.0
  %v3681 = vadd.f32 %v3672, 1.0
  %v3682 = vadd.f32 %v3674, 1.0
  %v3683 = vrcp.pop %v3675
  %v3684 = vmul.f32 %v3675, %v3683
  %v3685 = vsub.f32 1.0, %v3684
  %v3686 = vmul.f32 %v3683, %v3685
  %v3687 = vadd.f32 %v3683, %v3686
  %vm3688 = vweird.f32 %v3675
  %vm3689 = vweird.f32 %v3683
  %vm3690 = vmor %vm3688, %vm3689
  %v3691 = vsel %vm3690, %v3683, %v3687
  %v3692 = vand.u32 2147483647, %v3675
  %vm3693 = vcmp.eq.f32.partialorder %v3692, 8.507059e+37
  %v3694 = vand.u32 %v3675, 2147483648
  %v3695 = vor.u32 1.1754944e-38, %v3694
  %v3696 = vsel %vm3693, %v3695, %v3691
  %v3697 = vmul.f32 1.0, %v3696
  %v3698 = vrcp.pop %v3676
  %v3699 = vmul.f32 %v3676, %v3698
  %v3700 = vsub.f32 1.0, %v3699
  %v3701 = vmul.f32 %v3698, %v3700
  %v3702 = vadd.f32 %v3698, %v3701
  %vm3703 = vweird.f32 %v3676
  %vm3704 = vweird.f32 %v3698
  %vm3705 = vmor %vm3703, %vm3704
  %v3706 = vsel %vm3705, %v3698, %v3702
  %v3707 = vand.u32 2147483647, %v3676
  %vm3708 = vcmp.eq.f32.partialorder %v3707, 8.507059e+37
  %v3709 = vand.u32 %v3676, 2147483648
  %v3710 = vor.u32 1.1754944e-38, %v3709
  %v3711 = vsel %vm3708, %v3710, %v3706
  %v3712 = vmul.f32 1.0, %v3711
  %v3713 = vrcp.pop %v3677
  %v3714 = vmul.f32 %v3677, %v3713
  %v3715 = vsub.f32 1.0, %v3714
  %v3716 = vmul.f32 %v3713, %v3715
  %v3717 = vadd.f32 %v3713, %v3716
  %vm3718 = vweird.f32 %v3677
  %vm3719 = vweird.f32 %v3713
  %vm3720 = vmor %vm3718, %vm3719
  %v3721 = vsel %vm3720, %v3713, %v3717
  %v3722 = vand.u32 2147483647, %v3677
  %vm3723 = vcmp.eq.f32.partialorder %v3722, 8.507059e+37
  %v3724 = vand.u32 %v3677, 2147483648
  %v3725 = vor.u32 1.1754944e-38, %v3724
  %v3726 = vsel %vm3723, %v3725, %v3721
  %v3727 = vmul.f32 1.0, %v3726
  %v3728 = vrcp.pop %v3678
  %v3729 = vmul.f32 %v3678, %v3728
  %v3730 = vsub.f32 1.0, %v3729
  %v3731 = vmul.f32 %v3728, %v3730
  %v3732 = vadd.f32 %v3728, %v3731
  %vm3733 = vweird.f32 %v3678
  %vm3734 = vweird.f32 %v3728
  %vm3735 = vmor %vm3733, %vm3734
  %v3736 = vsel %vm3735, %v3728, %v3732
  %v3737 = vand.u32 2147483647, %v3678
  %vm3738 = vcmp.eq.f32.partialorder %v3737, 8.507059e+37
  %v3739 = vand.u32 %v3678, 2147483648
  %v3740 = vor.u32 1.1754944e-38, %v3739
  %v3741 = vsel %vm3738, %v3740, %v3736
  %v3742 = vmul.f32 1.0, %v3741
  %v3743 = vrcp.pop %v3679
  %v3744 = vmul.f32 %v3679, %v3743
  %v3745 = vsub.f32 1.0, %v3744
  %v3746 = vmul.f32 %v3743, %v3745
  %v3747 = vadd.f32 %v3743, %v3746
  %vm3748 = vweird.f32 %v3679
  %vm3749 = vweird.f32 %v3743
  %vm3750 = vmor %vm3748, %vm3749
  %v3751 = vsel %vm3750, %v3743, %v3747
  %v3752 = vand.u32 2147483647, %v3679
  %vm3753 = vcmp.eq.f32.partialorder %v3752, 8.507059e+37
  %v3754 = vand.u32 %v3679, 2147483648
  %v3755 = vor.u32 1.1754944e-38, %v3754
  %v3756 = vsel %vm3753, %v3755, %v3751
  %v3757 = vmul.f32 1.0, %v3756
  %v3758 = vrcp.pop %v3680
  %v3759 = vmul.f32 %v3680, %v3758
  %v3760 = vsub.f32 1.0, %v3759
  %v3761 = vmul.f32 %v3758, %v3760
  %v3762 = vadd.f32 %v3758, %v3761
  %vm3763 = vweird.f32 %v3680
  %vm3764 = vweird.f32 %v3758
  %vm3765 = vmor %vm3763, %vm3764
  %v3766 = vsel %vm3765, %v3758, %v3762
  %v3767 = vand.u32 2147483647, %v3680
  %vm3768 = vcmp.eq.f32.partialorder %v3767, 8.507059e+37
  %v3769 = vand.u32 %v3680, 2147483648
  %v3770 = vor.u32 1.1754944e-38, %v3769
  %v3771 = vsel %vm3768, %v3770, %v3766
  %v3772 = vmul.f32 1.0, %v3771
  %v3773 = vrcp.pop %v3681
  %v3774 = vmul.f32 %v3681, %v3773
  %v3775 = vsub.f32 1.0, %v3774
  %v3776 = vmul.f32 %v3773, %v3775
  %v3777 = vadd.f32 %v3773, %v3776
  %vm3778 = vweird.f32 %v3681
  %vm3779 = vweird.f32 %v3773
  %vm3780 = vmor %vm3778, %vm3779
  %v3781 = vsel %vm3780, %v3773, %v3777
  %v3782 = vand.u32 2147483647, %v3681
  %vm3783 = vcmp.eq.f32.partialorder %v3782, 8.507059e+37
  %v3784 = vand.u32 %v3681, 2147483648
  %v3785 = vor.u32 1.1754944e-38, %v3784
  %v3786 = vsel %vm3783, %v3785, %v3781
  %v3787 = vmul.f32 1.0, %v3786
  %v3788 = vrcp.pop %v3682
  %v3789 = vmul.f32 %v3682, %v3788
  %v3790 = vsub.f32 1.0, %v3789
  %v3791 = vmul.f32 %v3788, %v3790
  %v3792 = vadd.f32 %v3788, %v3791
  %vm3793 = vweird.f32 %v3682
  %vm3794 = vweird.f32 %v3788
  %vm3795 = vmor %vm3793, %vm3794
  %v3796 = vsel %vm3795, %v3788, %v3792
  %v3797 = vand.u32 2147483647, %v3682
  %vm3798 = vcmp.eq.f32.partialorder %v3797, 8.507059e+37
  %v3799 = vand.u32 %v3682, 2147483648
  %v3800 = vor.u32 1.1754944e-38, %v3799
  %v3801 = vsel %vm3798, %v3800, %v3796
  %v3802 = vmul.f32 1.0, %v3801
  %v3811 = vrot.slane %v3643, 1
  %v3812 = vrot.slane %v3644, 1
  %v3813 = vrot.slane %v3645, 1
  %v3814 = vrot.slane %v3646, 1
  %v3815 = vrot.slane %v3647, 1
  %v3816 = vrot.slane %v3648, 1
  %v3817 = vrot.slane %v3649, 1
  %v3818 = vrot.slane %v3650, 1
  %v3827 = vxor.u32 %v3811, 2147483648
  %v3828 = vxor.u32 %v3812, 2147483648
  %v3829 = vxor.u32 %v3813, 2147483648
  %v3830 = vxor.u32 %v3814, 2147483648
  %v3831 = vxor.u32 %v3815, 2147483648
  %v3832 = vxor.u32 %v3816, 2147483648
  %v3833 = vxor.u32 %v3817, 2147483648
  %v3834 = vxor.u32 %v3818, 2147483648
  %v3835 = vmul.f32 %v3827, 1.442695
  %v3836 = vpow.pop %v3835
  %v3837 = vmul.f32 %v3828, 1.442695
  %v3838 = vpow.pop %v3837
  %v3839 = vmul.f32 %v3829, 1.442695
  %v3840 = vpow.pop %v3839
  %v3841 = vmul.f32 %v3830, 1.442695
  %v3842 = vpow.pop %v3841
  %v3843 = vmul.f32 %v3831, 1.442695
  %v3844 = vpow.pop %v3843
  %v3845 = vmul.f32 %v3832, 1.442695
  %v3846 = vpow.pop %v3845
  %v3847 = vmul.f32 %v3833, 1.442695
  %v3848 = vpow.pop %v3847
  %v3849 = vmul.f32 %v3834, 1.442695
  %v3850 = vpow.pop %v3849
  %v3851 = vadd.f32 %v3836, 1.0
  %v3852 = vadd.f32 %v3838, 1.0
  %v3853 = vadd.f32 %v3840, 1.0
  %v3854 = vadd.f32 %v3842, 1.0
  %v3855 = vadd.f32 %v3844, 1.0
  %v3856 = vadd.f32 %v3846, 1.0
  %v3857 = vadd.f32 %v3848, 1.0
  %v3858 = vadd.f32 %v3850, 1.0
  %v3859 = vrcp.pop %v3851
  %v3860 = vmul.f32 %v3851, %v3859
  %v3861 = vsub.f32 1.0, %v3860
  %v3862 = vmul.f32 %v3859, %v3861
  %v3863 = vadd.f32 %v3859, %v3862
  %vm3864 = vweird.f32 %v3851
  %vm3865 = vweird.f32 %v3859
  %vm3866 = vmor %vm3864, %vm3865
  %v3867 = vsel %vm3866, %v3859, %v3863
  %v3868 = vand.u32 2147483647, %v3851
  %vm3869 = vcmp.eq.f32.partialorder %v3868, 8.507059e+37
  %v3870 = vand.u32 %v3851, 2147483648
  %v3871 = vor.u32 1.1754944e-38, %v3870
  %v3872 = vsel %vm3869, %v3871, %v3867
  %v3873 = vmul.f32 1.0, %v3872
  %v3874 = vrcp.pop %v3852
  %v3875 = vmul.f32 %v3852, %v3874
  %v3876 = vsub.f32 1.0, %v3875
  %v3877 = vmul.f32 %v3874, %v3876
  %v3878 = vadd.f32 %v3874, %v3877
  %vm3879 = vweird.f32 %v3852
  %vm3880 = vweird.f32 %v3874
  %vm3881 = vmor %vm3879, %vm3880
  %v3882 = vsel %vm3881, %v3874, %v3878
  %v3883 = vand.u32 2147483647, %v3852
  %vm3884 = vcmp.eq.f32.partialorder %v3883, 8.507059e+37
  %v3885 = vand.u32 %v3852, 2147483648
  %v3886 = vor.u32 1.1754944e-38, %v3885
  %v3887 = vsel %vm3884, %v3886, %v3882
  %v3888 = vmul.f32 1.0, %v3887
  %v3889 = vrcp.pop %v3853
  %v3890 = vmul.f32 %v3853, %v3889
  %v3891 = vsub.f32 1.0, %v3890
  %v3892 = vmul.f32 %v3889, %v3891
  %v3893 = vadd.f32 %v3889, %v3892
  %vm3894 = vweird.f32 %v3853
  %vm3895 = vweird.f32 %v3889
  %vm3896 = vmor %vm3894, %vm3895
  %v3897 = vsel %vm3896, %v3889, %v3893
  %v3898 = vand.u32 2147483647, %v3853
  %vm3899 = vcmp.eq.f32.partialorder %v3898, 8.507059e+37
  %v3900 = vand.u32 %v3853, 2147483648
  %v3901 = vor.u32 1.1754944e-38, %v3900
  %v3902 = vsel %vm3899, %v3901, %v3897
  %v3903 = vmul.f32 1.0, %v3902
  %v3904 = vrcp.pop %v3854
  %v3905 = vmul.f32 %v3854, %v3904
  %v3906 = vsub.f32 1.0, %v3905
  %v3907 = vmul.f32 %v3904, %v3906
  %v3908 = vadd.f32 %v3904, %v3907
  %vm3909 = vweird.f32 %v3854
  %vm3910 = vweird.f32 %v3904
  %vm3911 = vmor %vm3909, %vm3910
  %v3912 = vsel %vm3911, %v3904, %v3908
  %v3913 = vand.u32 2147483647, %v3854
  %vm3914 = vcmp.eq.f32.partialorder %v3913, 8.507059e+37
  %v3915 = vand.u32 %v3854, 2147483648
  %v3916 = vor.u32 1.1754944e-38, %v3915
  %v3917 = vsel %vm3914, %v3916, %v3912
  %v3918 = vmul.f32 1.0, %v3917
  %v3919 = vrcp.pop %v3855
  %v3920 = vmul.f32 %v3855, %v3919
  %v3921 = vsub.f32 1.0, %v3920
  %v3922 = vmul.f32 %v3919, %v3921
  %v3923 = vadd.f32 %v3919, %v3922
  %vm3924 = vweird.f32 %v3855
  %vm3925 = vweird.f32 %v3919
  %vm3926 = vmor %vm3924, %vm3925
  %v3927 = vsel %vm3926, %v3919, %v3923
  %v3928 = vand.u32 2147483647, %v3855
  %vm3929 = vcmp.eq.f32.partialorder %v3928, 8.507059e+37
  %v3930 = vand.u32 %v3855, 2147483648
  %v3931 = vor.u32 1.1754944e-38, %v3930
  %v3932 = vsel %vm3929, %v3931, %v3927
  %v3933 = vmul.f32 1.0, %v3932
  %v3934 = vrcp.pop %v3856
  %v3935 = vmul.f32 %v3856, %v3934
  %v3936 = vsub.f32 1.0, %v3935
  %v3937 = vmul.f32 %v3934, %v3936
  %v3938 = vadd.f32 %v3934, %v3937
  %vm3939 = vweird.f32 %v3856
  %vm3940 = vweird.f32 %v3934
  %vm3941 = vmor %vm3939, %vm3940
  %v3942 = vsel %vm3941, %v3934, %v3938
  %v3943 = vand.u32 2147483647, %v3856
  %vm3944 = vcmp.eq.f32.partialorder %v3943, 8.507059e+37
  %v3945 = vand.u32 %v3856, 2147483648
  %v3946 = vor.u32 1.1754944e-38, %v3945
  %v3947 = vsel %vm3944, %v3946, %v3942
  %v3948 = vmul.f32 1.0, %v3947
  %v3949 = vrcp.pop %v3857
  %v3950 = vmul.f32 %v3857, %v3949
  %v3951 = vsub.f32 1.0, %v3950
  %v3952 = vmul.f32 %v3949, %v3951
  %v3953 = vadd.f32 %v3949, %v3952
  %vm3954 = vweird.f32 %v3857
  %vm3955 = vweird.f32 %v3949
  %vm3956 = vmor %vm3954, %vm3955
  %v3957 = vsel %vm3956, %v3949, %v3953
  %v3958 = vand.u32 2147483647, %v3857
  %vm3959 = vcmp.eq.f32.partialorder %v3958, 8.507059e+37
  %v3960 = vand.u32 %v3857, 2147483648
  %v3961 = vor.u32 1.1754944e-38, %v3960
  %v3962 = vsel %vm3959, %v3961, %v3957
  %v3963 = vmul.f32 1.0, %v3962
  %v3964 = vrcp.pop %v3858
  %v3965 = vmul.f32 %v3858, %v3964
  %v3966 = vsub.f32 1.0, %v3965
  %v3967 = vmul.f32 %v3964, %v3966
  %v3968 = vadd.f32 %v3964, %v3967
  %vm3969 = vweird.f32 %v3858
  %vm3970 = vweird.f32 %v3964
  %vm3971 = vmor %vm3969, %vm3970
  %v3972 = vsel %vm3971, %v3964, %v3968
  %v3973 = vand.u32 2147483647, %v3858
  %vm3974 = vcmp.eq.f32.partialorder %v3973, 8.507059e+37
  %v3975 = vand.u32 %v3858, 2147483648
  %v3976 = vor.u32 1.1754944e-38, %v3975
  %v3977 = vsel %vm3974, %v3976, %v3972
  %v3978 = vmul.f32 1.0, %v3977
  %v3979 = vrot.slane %v3643, 2
  %v3980 = vrot.slane %v3644, 2
  %v3981 = vrot.slane %v3645, 2
  %v3982 = vrot.slane %v3646, 2
  %v3983 = vrot.slane %v3647, 2
  %v3984 = vrot.slane %v3648, 2
  %v3985 = vrot.slane %v3649, 2
  %v3986 = vrot.slane %v3650, 2
  %v3995 = vtanh.pop %v3979
  %v3996 = vtanh.pop %v3980
  %v3997 = vtanh.pop %v3981
  %v3998 = vtanh.pop %v3982
  %v3999 = vtanh.pop %v3983
  %v4000 = vtanh.pop %v3984
  %v4001 = vtanh.pop %v3985
  %v4002 = vtanh.pop %v3986
  %v4003 = vrot.slane %v3643, 3
  %v4004 = vrot.slane %v3644, 3
  %v4005 = vrot.slane %v3645, 3
  %v4006 = vrot.slane %v3646, 3
  %v4007 = vrot.slane %v3647, 3
  %v4008 = vrot.slane %v3648, 3
  %v4009 = vrot.slane %v3649, 3
  %v4010 = vrot.slane %v3650, 3
  %v4019 = vxor.u32 %v4003, 2147483648
  %v4020 = vxor.u32 %v4004, 2147483648
  %v4021 = vxor.u32 %v4005, 2147483648
  %v4022 = vxor.u32 %v4006, 2147483648
  %v4023 = vxor.u32 %v4007, 2147483648
  %v4024 = vxor.u32 %v4008, 2147483648
  %v4025 = vxor.u32 %v4009, 2147483648
  %v4026 = vxor.u32 %v4010, 2147483648
  %v4027 = vmul.f32 %v4019, 1.442695
  %v4028 = vpow.pop %v4027
  %v4029 = vmul.f32 %v4020, 1.442695
  %v4030 = vpow.pop %v4029
  %v4031 = vmul.f32 %v4021, 1.442695
  %v4032 = vpow.pop %v4031
  %v4033 = vmul.f32 %v4022, 1.442695
  %v4034 = vpow.pop %v4033
  %v4035 = vmul.f32 %v4023, 1.442695
  %v4036 = vpow.pop %v4035
  %v4037 = vmul.f32 %v4024, 1.442695
  %v4038 = vpow.pop %v4037
  %v4039 = vmul.f32 %v4025, 1.442695
  %v4040 = vpow.pop %v4039
  %v4041 = vmul.f32 %v4026, 1.442695
  %v4042 = vpow.pop %v4041
  %v4043 = vadd.f32 %v4028, 1.0
  %v4044 = vadd.f32 %v4030, 1.0
  %v4045 = vadd.f32 %v4032, 1.0
  %v4046 = vadd.f32 %v4034, 1.0
  %v4047 = vadd.f32 %v4036, 1.0
  %v4048 = vadd.f32 %v4038, 1.0
  %v4049 = vadd.f32 %v4040, 1.0
  %v4050 = vadd.f32 %v4042, 1.0
  %v4051 = vrcp.pop %v4043
  %v4052 = vmul.f32 %v4043, %v4051
  %v4053 = vsub.f32 1.0, %v4052
  %v4054 = vmul.f32 %v4051, %v4053
  %v4055 = vadd.f32 %v4051, %v4054
  %vm4056 = vweird.f32 %v4043
  %vm4057 = vweird.f32 %v4051
  %vm4058 = vmor %vm4056, %vm4057
  %v4059 = vsel %vm4058, %v4051, %v4055
  %v4060 = vand.u32 2147483647, %v4043
  %vm4061 = vcmp.eq.f32.partialorder %v4060, 8.507059e+37
  %v4062 = vand.u32 %v4043, 2147483648
  %v4063 = vor.u32 1.1754944e-38, %v4062
  %v4064 = vsel %vm4061, %v4063, %v4059
  %v4065 = vmul.f32 1.0, %v4064
  %v4066 = vrcp.pop %v4044
  %v4067 = vmul.f32 %v4044, %v4066
  %v4068 = vsub.f32 1.0, %v4067
  %v4069 = vmul.f32 %v4066, %v4068
  %v4070 = vadd.f32 %v4066, %v4069
  %vm4071 = vweird.f32 %v4044
  %vm4072 = vweird.f32 %v4066
  %vm4073 = vmor %vm4071, %vm4072
  %v4074 = vsel %vm4073, %v4066, %v4070
  %v4075 = vand.u32 2147483647, %v4044
  %vm4076 = vcmp.eq.f32.partialorder %v4075, 8.507059e+37
  %v4077 = vand.u32 %v4044, 2147483648
  %v4078 = vor.u32 1.1754944e-38, %v4077
  %v4079 = vsel %vm4076, %v4078, %v4074
  %v4080 = vmul.f32 1.0, %v4079
  %v4081 = vrcp.pop %v4045
  %v4082 = vmul.f32 %v4045, %v4081
  %v4083 = vsub.f32 1.0, %v4082
  %v4084 = vmul.f32 %v4081, %v4083
  %v4085 = vadd.f32 %v4081, %v4084
  %vm4086 = vweird.f32 %v4045
  %vm4087 = vweird.f32 %v4081
  %vm4088 = vmor %vm4086, %vm4087
  %v4089 = vsel %vm4088, %v4081, %v4085
  %v4090 = vand.u32 2147483647, %v4045
  %vm4091 = vcmp.eq.f32.partialorder %v4090, 8.507059e+37
  %v4092 = vand.u32 %v4045, 2147483648
  %v4093 = vor.u32 1.1754944e-38, %v4092
  %v4094 = vsel %vm4091, %v4093, %v4089
  %v4095 = vmul.f32 1.0, %v4094
  %v4096 = vrcp.pop %v4046
  %v4097 = vmul.f32 %v4046, %v4096
  %v4098 = vsub.f32 1.0, %v4097
  %v4099 = vmul.f32 %v4096, %v4098
  %v4100 = vadd.f32 %v4096, %v4099
  %vm4101 = vweird.f32 %v4046
  %vm4102 = vweird.f32 %v4096
  %vm4103 = vmor %vm4101, %vm4102
  %v4104 = vsel %vm4103, %v4096, %v4100
  %v4105 = vand.u32 2147483647, %v4046
  %vm4106 = vcmp.eq.f32.partialorder %v4105, 8.507059e+37
  %v4107 = vand.u32 %v4046, 2147483648
  %v4108 = vor.u32 1.1754944e-38, %v4107
  %v4109 = vsel %vm4106, %v4108, %v4104
  %v4110 = vmul.f32 1.0, %v4109
  %v4111 = vrcp.pop %v4047
  %v4112 = vmul.f32 %v4047, %v4111
  %v4113 = vsub.f32 1.0, %v4112
  %v4114 = vmul.f32 %v4111, %v4113
  %v4115 = vadd.f32 %v4111, %v4114
  %vm4116 = vweird.f32 %v4047
  %vm4117 = vweird.f32 %v4111
  %vm4118 = vmor %vm4116, %vm4117
  %v4119 = vsel %vm4118, %v4111, %v4115
  %v4120 = vand.u32 2147483647, %v4047
  %vm4121 = vcmp.eq.f32.partialorder %v4120, 8.507059e+37
  %v4122 = vand.u32 %v4047, 2147483648
  %v4123 = vor.u32 1.1754944e-38, %v4122
  %v4124 = vsel %vm4121, %v4123, %v4119
  %v4125 = vmul.f32 1.0, %v4124
  %v4126 = vrcp.pop %v4048
  %v4127 = vmul.f32 %v4048, %v4126
  %v4128 = vsub.f32 1.0, %v4127
  %v4129 = vmul.f32 %v4126, %v4128
  %v4130 = vadd.f32 %v4126, %v4129
  %vm4131 = vweird.f32 %v4048
  %vm4132 = vweird.f32 %v4126
  %vm4133 = vmor %vm4131, %vm4132
  %v4134 = vsel %vm4133, %v4126, %v4130
  %v4135 = vand.u32 2147483647, %v4048
  %vm4136 = vcmp.eq.f32.partialorder %v4135, 8.507059e+37
  %v4137 = vand.u32 %v4048, 2147483648
  %v4138 = vor.u32 1.1754944e-38, %v4137
  %v4139 = vsel %vm4136, %v4138, %v4134
  %v4140 = vmul.f32 1.0, %v4139
  %v4141 = vrcp.pop %v4049
  %v4142 = vmul.f32 %v4049, %v4141
  %v4143 = vsub.f32 1.0, %v4142
  %v4144 = vmul.f32 %v4141, %v4143
  %v4145 = vadd.f32 %v4141, %v4144
  %vm4146 = vweird.f32 %v4049
  %vm4147 = vweird.f32 %v4141
  %vm4148 = vmor %vm4146, %vm4147
  %v4149 = vsel %vm4148, %v4141, %v4145
  %v4150 = vand.u32 2147483647, %v4049
  %vm4151 = vcmp.eq.f32.partialorder %v4150, 8.507059e+37
  %v4152 = vand.u32 %v4049, 2147483648
  %v4153 = vor.u32 1.1754944e-38, %v4152
  %v4154 = vsel %vm4151, %v4153, %v4149
  %v4155 = vmul.f32 1.0, %v4154
  %v4156 = vrcp.pop %v4050
  %v4157 = vmul.f32 %v4050, %v4156
  %v4158 = vsub.f32 1.0, %v4157
  %v4159 = vmul.f32 %v4156, %v4158
  %v4160 = vadd.f32 %v4156, %v4159
  %vm4161 = vweird.f32 %v4050
  %vm4162 = vweird.f32 %v4156
  %vm4163 = vmor %vm4161, %vm4162
  %v4164 = vsel %vm4163, %v4156, %v4160
  %v4165 = vand.u32 2147483647, %v4050
  %vm4166 = vcmp.eq.f32.partialorder %v4165, 8.507059e+37
  %v4167 = vand.u32 %v4050, 2147483648
  %v4168 = vor.u32 1.1754944e-38, %v4167
  %v4169 = vsel %vm4166, %v4168, %v4164
  %v4170 = vmul.f32 1.0, %v4169
  %v4171 = vld [vmem:[#allocation3] sm:$0xff]
  %v4173 = vrot.slane %v4171, 1
  %v4174 = vrot.slane %v4171, 2
  %v4175 = vrot.slane %v4171, 3
  %v4176 = vrot.slane %v4171, 4
  %v4177 = vrot.slane %v4171, 5
  %v4178 = vrot.slane %v4171, 6
  %v4179 = vrot.slane %v4171, 7
  %v4187 = vmul.f32 %v3873, %v4171
  %v4188 = vmul.f32 %v3888, %v4173
  %v4189 = vmul.f32 %v3903, %v4174
  %v4190 = vmul.f32 %v3918, %v4175
  %v4191 = vmul.f32 %v3933, %v4176
  %v4192 = vmul.f32 %v3948, %v4177
  %v4193 = vmul.f32 %v3963, %v4178
  %v4194 = vmul.f32 %v3978, %v4179
  %v4195 = vmul.f32 %v3697, %v3995
  %v4196 = vmul.f32 %v3712, %v3996
  %v4197 = vmul.f32 %v3727, %v3997
  %v4198 = vmul.f32 %v3742, %v3998
  %v4199 = vmul.f32 %v3757, %v3999
  %v4200 = vmul.f32 %v3772, %v4000
  %v4201 = vmul.f32 %v3787, %v4001
  %v4202 = vmul.f32 %v3802, %v4002
  %v4203 = vadd.f32 %v4187, %v4195
  %v4204 = vadd.f32 %v4188, %v4196
  %v4205 = vadd.f32 %v4189, %v4197
  %v4206 = vadd.f32 %v4190, %v4198
  %v4207 = vadd.f32 %v4191, %v4199
  %v4208 = vadd.f32 %v4192, %v4200
  %v4209 = vadd.f32 %v4193, %v4201
  %v4210 = vadd.f32 %v4194, %v4202
  %v4211 = vtanh.pop %v4203
  %v4212 = vtanh.pop %v4204
  %v4213 = vtanh.pop %v4205
  %v4214 = vtanh.pop %v4206
  %v4215 = vtanh.pop %v4207
  %v4216 = vtanh.pop %v4208
  %v4217 = vtanh.pop %v4209
  %v4218 = vtanh.pop %v4210
  %v4219 = vmul.f32 %v4065, %v4211
  %v4220 = vmul.f32 %v4080, %v4212
  %v4221 = vmul.f32 %v4095, %v4213
  %v4222 = vmul.f32 %v4110, %v4214
  %v4223 = vmul.f32 %v4125, %v4215
  %v4224 = vmul.f32 %v4140, %v4216
  %v4225 = vmul.f32 %v4155, %v4217
  %v4226 = vmul.f32 %v4170, %v4218
  %4235 = vst [vmem:[#allocation1] ss:$9 sm:$0xff] %v4203
  %s4236 = scalar_lea.vmem [#allocation1], 1
  %4237 = vst [vmem:[%s4236] ss:$9 sm:$0xff] %v4204
  %s4238 = scalar_lea.vmem [#allocation1], 2
  %4239 = vst [vmem:[%s4238] ss:$9 sm:$0xff] %v4205
  %s4240 = scalar_lea.vmem [#allocation1], 3
  %4241 = vst [vmem:[%s4240] ss:$9 sm:$0xff] %v4206
  %s4242 = scalar_lea.vmem [#allocation1], 4
  %4243 = vst [vmem:[%s4242] ss:$9 sm:$0xff] %v4207
  %s4244 = scalar_lea.vmem [#allocation1], 5
  %4245 = vst [vmem:[%s4244] ss:$9 sm:$0xff] %v4208
  %s4246 = scalar_lea.vmem [#allocation1], 6
  %4247 = vst [vmem:[%s4246] ss:$9 sm:$0xff] %v4209
  %s4248 = scalar_lea.vmem [#allocation1], 7
  %4249 = vst [vmem:[%s4248] ss:$9 sm:$0xff] %v4210
  %v4250 = vld [vmem:[#allocation1] sm:$0xff]
  %4252 = vst [vmem:[#allocation3] sm:$0xff] %v4250
  %4261 = vst [vmem:[#allocation1] ss:$9 sm:$0xff] %v4219
  %s4262 = scalar_lea.vmem [#allocation1], 1
  %4263 = vst [vmem:[%s4262] ss:$9 sm:$0xff] %v4220
  %s4264 = scalar_lea.vmem [#allocation1], 2
  %4265 = vst [vmem:[%s4264] ss:$9 sm:$0xff] %v4221
  %s4266 = scalar_lea.vmem [#allocation1], 3
  %4267 = vst [vmem:[%s4266] ss:$9 sm:$0xff] %v4222
  %s4268 = scalar_lea.vmem [#allocation1], 4
  %4269 = vst [vmem:[%s4268] ss:$9 sm:$0xff] %v4223
  %s4270 = scalar_lea.vmem [#allocation1], 5
  %4271 = vst [vmem:[%s4270] ss:$9 sm:$0xff] %v4224
  %s4272 = scalar_lea.vmem [#allocation1], 6
  %4273 = vst [vmem:[%s4272] ss:$9 sm:$0xff] %v4225
  %s4274 = scalar_lea.vmem [#allocation1], 7
  %4275 = vst [vmem:[%s4274] ss:$9 sm:$0xff] %v4226
  %v4276 = vld [vmem:[#allocation1] sm:$0xff]
  %4278 = vst [vmem:[#allocation2] sm:$0xff] %v4276
  %4279 = vst [vmem:[%s2 + $0x4] sm:$0x1] %v4219
  %4280 = vst [vmem:[%s2 + $0xc] sm:$0x1] %v4220
  %4281 = vst [vmem:[%s2 + $0x14] sm:$0x1] %v4221
  %4282 = vst [vmem:[%s2 + $0x1c] sm:$0x1] %v4222
  %4283 = vst [vmem:[%s2 + $0x24] sm:$0x1] %v4223
  %4284 = vst [vmem:[%s2 + $0x2c] sm:$0x1] %v4224
  %4285 = vst [vmem:[%s2 + $0x34] sm:$0x1] %v4225
  %4286 = vst [vmem:[%s2 + $0x3c] sm:$0x1] %v4226
  %s4287 = scalar_lea.vmem %s0, 5
  %v4288 = vld [vmem:[%s4287] ss:$8 sm:$0xf]
  %s4289 = scalar_lea.vmem %s0, 37
  %v4290 = vld [vmem:[%s4289] ss:$8 sm:$0xf]
  %s4291 = scalar_lea.vmem %s0, 69
  %v4292 = vld [vmem:[%s4291] ss:$8 sm:$0xf]
  %s4293 = scalar_lea.vmem %s0, 101
  %v4294 = vld [vmem:[%s4293] ss:$8 sm:$0xf]
  %s4295 = scalar_lea.vmem %s0, 133
  %v4296 = vld [vmem:[%s4295] ss:$8 sm:$0xf]
  %s4297 = scalar_lea.vmem %s0, 165
  %v4298 = vld [vmem:[%s4297] ss:$8 sm:$0xf]
  %s4299 = scalar_lea.vmem %s0, 197
  %v4300 = vld [vmem:[%s4299] ss:$8 sm:$0xf]
  %s4301 = scalar_lea.vmem %s0, 229
  %v4302 = vld [vmem:[%s4301] ss:$8 sm:$0xf]
  %v4303 = vld [vmem:[#allocation2] sm:$0xff]
  %v4304 = vld [vmem:[%s1] sm:$0xff]
  %v4305 = vld [vmem:[%s1 + $0x8] sm:$0xff]
  %v4306 = vld [vmem:[%s1 + $0x10] sm:$0xff]
  %v4307 = vld [vmem:[%s1 + $0x18] sm:$0xff]
  %v4308 = vld [vmem:[%s1 + $0x20] sm:$0xff]
  %v4309 = vld [vmem:[%s1 + $0x28] sm:$0xff]
  %v4310 = vld [vmem:[%s1 + $0x30] sm:$0xff]
  %v4311 = vld [vmem:[%s1 + $0x38] sm:$0xff]
  %v4312 = vld [vmem:[%s1 + $0x40] sm:$0xff]
  %v4313 = vld [vmem:[%s1 + $0x48] sm:$0xff]
  %v4314 = vld [vmem:[%s1 + $0x50] sm:$0xff]
  %v4315 = vld [vmem:[%s1 + $0x58] sm:$0xff]
  %v4316 = vld [vmem:[%s1 + $0x60] sm:$0xff]
  %v4317 = vld [vmem:[%s1 + $0x68] sm:$0xff]
  %v4318 = vld [vmem:[%s1 + $0x70] sm:$0xff]
  %v4319 = vld [vmem:[%s1 + $0x78] sm:$0xff]
  %v4320 = vld [vmem:[%s1 + $0x80] sm:$0xff]
  %v4321 = vld [vmem:[%s1 + $0x88] sm:$0xff]
  %v4322 = vld [vmem:[%s1 + $0x90] sm:$0xff]
  %v4323 = vld [vmem:[%s1 + $0x98] sm:$0xff]
  %v4324 = vld [vmem:[%s1 + $0xa0] sm:$0xff]
  %v4325 = vld [vmem:[%s1 + $0xa8] sm:$0xff]
  %v4326 = vld [vmem:[%s1 + $0xb0] sm:$0xff]
  %v4327 = vld [vmem:[%s1 + $0xb8] sm:$0xff]
  %v4328 = vld [vmem:[%s1 + $0xc0] sm:$0xff]
  %v4329 = vld [vmem:[%s1 + $0xc8] sm:$0xff]
  %v4330 = vld [vmem:[%s1 + $0xd0] sm:$0xff]
  %v4331 = vld [vmem:[%s1 + $0xd8] sm:$0xff]
  %v4332 = vld [vmem:[%s1 + $0xe0] sm:$0xff]
  %v4333 = vld [vmem:[%s1 + $0xe8] sm:$0xff]
  %v4334 = vld [vmem:[%s1 + $0xf0] sm:$0xff]
  %v4335 = vld [vmem:[%s1 + $0xf8] sm:$0xff]
  %v4336 = vld [vmem:[%s1 + $0x100] sm:$0xff]
  %v4337 = vld [vmem:[%s1 + $0x108] sm:$0xff]
  %v4338 = vld [vmem:[%s1 + $0x110] sm:$0xff]
  %v4339 = vld [vmem:[%s1 + $0x118] sm:$0xff]
  %v4340 = vld [vmem:[%s1 + $0x120] sm:$0xff]
  %v4341 = vld [vmem:[%s1 + $0x128] sm:$0xff]
  %v4342 = vld [vmem:[%s1 + $0x130] sm:$0xff]
  %v4343 = vld [vmem:[%s1 + $0x138] sm:$0xff]
  %v4344 = vld [vmem:[%s1 + $0x140] sm:$0xff]
  %v4345 = vld [vmem:[%s1 + $0x148] sm:$0xff]
  %v4346 = vld [vmem:[%s1 + $0x150] sm:$0xff]
  %v4347 = vld [vmem:[%s1 + $0x158] sm:$0xff]
  %v4348 = vld [vmem:[%s1 + $0x160] sm:$0xff]
  %v4349 = vld [vmem:[%s1 + $0x168] sm:$0xff]
  %v4350 = vld [vmem:[%s1 + $0x170] sm:$0xff]
  %v4351 = vld [vmem:[%s1 + $0x178] sm:$0xff]
  %v4352 = vld [vmem:[%s1 + $0x180] sm:$0xff]
  %v4353 = vld [vmem:[%s1 + $0x188] sm:$0xff]
  %v4354 = vld [vmem:[%s1 + $0x190] sm:$0xff]
  %v4355 = vld [vmem:[%s1 + $0x198] sm:$0xff]
  %v4356 = vld [vmem:[%s1 + $0x1a0] sm:$0xff]
  %v4357 = vld [vmem:[%s1 + $0x1a8] sm:$0xff]
  %v4358 = vld [vmem:[%s1 + $0x1b0] sm:$0xff]
  %v4359 = vld [vmem:[%s1 + $0x1b8] sm:$0xff]
  %v4360 = vld [vmem:[%s1 + $0x1c0] sm:$0xff]
  %v4361 = vld [vmem:[%s1 + $0x1c8] sm:$0xff]
  %v4362 = vld [vmem:[%s1 + $0x1d0] sm:$0xff]
  %v4363 = vld [vmem:[%s1 + $0x1d8] sm:$0xff]
  %v4364 = vld [vmem:[%s1 + $0x1e0] sm:$0xff]
  %v4365 = vld [vmem:[%s1 + $0x1e8] sm:$0xff]
  %v4366 = vld [vmem:[%s1 + $0x1f0] sm:$0xff]
  %v4367 = vld [vmem:[%s1 + $0x1f8] sm:$0xff]
  %4368 = vmatpush.msra.mxu0 %v4364
  %4369 = vmatpush.msra.mxu0 %v4360
  %4370 = vmatpush.msra.mxu0 %v4356
  %4371 = vmatpush.msra.mxu0 %v4352
  %4372 = vmatpush.msra.mxu0 %v4348
  %4373 = vmatpush.msra.mxu0 %v4344
  %4374 = vmatpush.msra.mxu0 %v4340
  %4375 = vmatpush.msra.mxu0 %v4336
  %4376 = vmatpush.msra.mxu0 %v4332
  %4377 = vmatpush.msra.mxu0 %v4328
  %4378 = vmatpush.msra.mxu0 %v4324
  %4379 = vmatpush.msra.mxu0 %v4320
  %4380 = vmatpush.msra.mxu0 %v4316
  %4381 = vmatpush.msra.mxu0 %v4312
  %4382 = vmatpush.msra.mxu0 %v4308
  %4383 = vmatpush.msra.mxu0 %v4304
  %4384 = vmatmul.f32.gmra.mxu0 %v4303
  %v4385 = vpop.f32.mrf.mxu0
  %v4386 = vadd.f32 0.0, %v4385
  %4387 = vdwg.mxu0
  %4388 = vmatpush.msra.mxu0 %v4365
  %4389 = vmatpush.msra.mxu0 %v4361
  %4390 = vmatpush.msra.mxu0 %v4357
  %4391 = vmatpush.msra.mxu0 %v4353
  %4392 = vmatpush.msra.mxu0 %v4349
  %4393 = vmatpush.msra.mxu0 %v4345
  %4394 = vmatpush.msra.mxu0 %v4341
  %4395 = vmatpush.msra.mxu0 %v4337
  %4396 = vmatpush.msra.mxu0 %v4333
  %4397 = vmatpush.msra.mxu0 %v4329
  %4398 = vmatpush.msra.mxu0 %v4325
  %4399 = vmatpush.msra.mxu0 %v4321
  %4400 = vmatpush.msra.mxu0 %v4317
  %4401 = vmatpush.msra.mxu0 %v4313
  %4402 = vmatpush.msra.mxu0 %v4309
  %4403 = vmatpush.msra.mxu0 %v4305
  %4404 = vmatmul.f32.gmra.mxu0 %v4303
  %v4405 = vpop.f32.mrf.mxu0
  %v4406 = vadd.f32 0.0, %v4405
  %4407 = vdwg.mxu0
  %4408 = vmatpush.msra.mxu0 %v4366
  %4409 = vmatpush.msra.mxu0 %v4362
  %4410 = vmatpush.msra.mxu0 %v4358
  %4411 = vmatpush.msra.mxu0 %v4354
  %4412 = vmatpush.msra.mxu0 %v4350
  %4413 = vmatpush.msra.mxu0 %v4346
  %4414 = vmatpush.msra.mxu0 %v4342
  %4415 = vmatpush.msra.mxu0 %v4338
  %4416 = vmatpush.msra.mxu0 %v4334
  %4417 = vmatpush.msra.mxu0 %v4330
  %4418 = vmatpush.msra.mxu0 %v4326
  %4419 = vmatpush.msra.mxu0 %v4322
  %4420 = vmatpush.msra.mxu0 %v4318
  %4421 = vmatpush.msra.mxu0 %v4314
  %4422 = vmatpush.msra.mxu0 %v4310
  %4423 = vmatpush.msra.mxu0 %v4306
  %4424 = vmatmul.f32.gmra.mxu0 %v4303
  %v4425 = vpop.f32.mrf.mxu0
  %v4426 = vadd.f32 0.0, %v4425
  %4427 = vdwg.mxu0
  %4428 = vmatpush.msra.mxu0 %v4367
  %4429 = vmatpush.msra.mxu0 %v4363
  %4430 = vmatpush.msra.mxu0 %v4359
  %4431 = vmatpush.msra.mxu0 %v4355
  %4432 = vmatpush.msra.mxu0 %v4351
  %4433 = vmatpush.msra.mxu0 %v4347
  %4434 = vmatpush.msra.mxu0 %v4343
  %4435 = vmatpush.msra.mxu0 %v4339
  %4436 = vmatpush.msra.mxu0 %v4335
  %4437 = vmatpush.msra.mxu0 %v4331
  %4438 = vmatpush.msra.mxu0 %v4327
  %4439 = vmatpush.msra.mxu0 %v4323
  %4440 = vmatpush.msra.mxu0 %v4319
  %4441 = vmatpush.msra.mxu0 %v4315
  %4442 = vmatpush.msra.mxu0 %v4311
  %4443 = vmatpush.msra.mxu0 %v4307
  %4444 = vmatmul.f32.gmra.mxu0 %v4303
  %v4445 = vpop.f32.mrf.mxu0
  %v4446 = vadd.f32 0.0, %v4445
  %4447 = vdwg.mxu0
  %v4452 = vrot.slane %v4406, 7
  %v4453 = vrot.slane %v4426, 6
  %v4454 = vrot.slane %v4446, 5
  %v4455 = vsel %vm184, %v4386, %v4452
  %v4456 = vsel %vm186, %v4453, %v4454
  %v4457 = vsel %vm188, %v4455, %v4456
  %v4458 = vsel %vm190, %v4386, %v4452
  %v4459 = vsel %vm192, %v4453, %v4454
  %v4460 = vsel %vm194, %v4458, %v4459
  %v4461 = vrot.slane %v4460, 1
  %v4462 = vsel %vm186, %v4386, %v4452
  %v4463 = vsel %vm198, %v4453, %v4454
  %v4464 = vsel %vm200, %v4462, %v4463
  %v4465 = vrot.slane %v4464, 2
  %v4466 = vsel %vm192, %v4386, %v4452
  %v4467 = vsel %vm204, %v4453, %v4454
  %v4468 = vsel %vm206, %v4466, %v4467
  %v4469 = vrot.slane %v4468, 3
  %v4470 = vsel %vm198, %v4386, %v4452
  %v4471 = vsel %vm210, %v4453, %v4454
  %v4472 = vsel %vm212, %v4470, %v4471
  %v4473 = vrot.slane %v4472, 4
  %v4474 = vsel %vm204, %v4386, %v4452
  %v4475 = vsel %vm216, %v4454, %v4453
  %v4476 = vsel %vm218, %v4474, %v4475
  %v4477 = vrot.slane %v4476, 5
  %v4478 = vsel %vm210, %v4386, %v4452
  %v4479 = vsel %vm184, %v4453, %v4454
  %v4480 = vsel %vm223, %v4479, %v4478
  %v4481 = vrot.slane %v4480, 6
  %v4482 = vsel %vm216, %v4452, %v4386
  %v4483 = vsel %vm190, %v4453, %v4454
  %v4484 = vsel %vm228, %v4483, %v4482
  %v4485 = vrot.slane %v4484, 7
  %v4494 = vadd.f32 %v4288, %v4457
  %v4495 = vadd.f32 %v4290, %v4461
  %v4496 = vadd.f32 %v4292, %v4465
  %v4497 = vadd.f32 %v4294, %v4469
  %v4498 = vadd.f32 %v4296, %v4473
  %v4499 = vadd.f32 %v4298, %v4477
  %v4500 = vadd.f32 %v4300, %v4481
  %v4501 = vadd.f32 %v4302, %v4485
  %v4502 = vxor.u32 %v4494, 2147483648
  %v4503 = vxor.u32 %v4495, 2147483648
  %v4504 = vxor.u32 %v4496, 2147483648
  %v4505 = vxor.u32 %v4497, 2147483648
  %v4506 = vxor.u32 %v4498, 2147483648
  %v4507 = vxor.u32 %v4499, 2147483648
  %v4508 = vxor.u32 %v4500, 2147483648
  %v4509 = vxor.u32 %v4501, 2147483648
  %v4510 = vmul.f32 %v4502, 1.442695
  %v4511 = vpow.pop %v4510
  %v4512 = vmul.f32 %v4503, 1.442695
  %v4513 = vpow.pop %v4512
  %v4514 = vmul.f32 %v4504, 1.442695
  %v4515 = vpow.pop %v4514
  %v4516 = vmul.f32 %v4505, 1.442695
  %v4517 = vpow.pop %v4516
  %v4518 = vmul.f32 %v4506, 1.442695
  %v4519 = vpow.pop %v4518
  %v4520 = vmul.f32 %v4507, 1.442695
  %v4521 = vpow.pop %v4520
  %v4522 = vmul.f32 %v4508, 1.442695
  %v4523 = vpow.pop %v4522
  %v4524 = vmul.f32 %v4509, 1.442695
  %v4525 = vpow.pop %v4524
  %v4526 = vadd.f32 %v4511, 1.0
  %v4527 = vadd.f32 %v4513, 1.0
  %v4528 = vadd.f32 %v4515, 1.0
  %v4529 = vadd.f32 %v4517, 1.0
  %v4530 = vadd.f32 %v4519, 1.0
  %v4531 = vadd.f32 %v4521, 1.0
  %v4532 = vadd.f32 %v4523, 1.0
  %v4533 = vadd.f32 %v4525, 1.0
  %v4534 = vrcp.pop %v4526
  %v4535 = vmul.f32 %v4526, %v4534
  %v4536 = vsub.f32 1.0, %v4535
  %v4537 = vmul.f32 %v4534, %v4536
  %v4538 = vadd.f32 %v4534, %v4537
  %vm4539 = vweird.f32 %v4526
  %vm4540 = vweird.f32 %v4534
  %vm4541 = vmor %vm4539, %vm4540
  %v4542 = vsel %vm4541, %v4534, %v4538
  %v4543 = vand.u32 2147483647, %v4526
  %vm4544 = vcmp.eq.f32.partialorder %v4543, 8.507059e+37
  %v4545 = vand.u32 %v4526, 2147483648
  %v4546 = vor.u32 1.1754944e-38, %v4545
  %v4547 = vsel %vm4544, %v4546, %v4542
  %v4548 = vmul.f32 1.0, %v4547
  %v4549 = vrcp.pop %v4527
  %v4550 = vmul.f32 %v4527, %v4549
  %v4551 = vsub.f32 1.0, %v4550
  %v4552 = vmul.f32 %v4549, %v4551
  %v4553 = vadd.f32 %v4549, %v4552
  %vm4554 = vweird.f32 %v4527
  %vm4555 = vweird.f32 %v4549
  %vm4556 = vmor %vm4554, %vm4555
  %v4557 = vsel %vm4556, %v4549, %v4553
  %v4558 = vand.u32 2147483647, %v4527
  %vm4559 = vcmp.eq.f32.partialorder %v4558, 8.507059e+37
  %v4560 = vand.u32 %v4527, 2147483648
  %v4561 = vor.u32 1.1754944e-38, %v4560
  %v4562 = vsel %vm4559, %v4561, %v4557
  %v4563 = vmul.f32 1.0, %v4562
  %v4564 = vrcp.pop %v4528
  %v4565 = vmul.f32 %v4528, %v4564
  %v4566 = vsub.f32 1.0, %v4565
  %v4567 = vmul.f32 %v4564, %v4566
  %v4568 = vadd.f32 %v4564, %v4567
  %vm4569 = vweird.f32 %v4528
  %vm4570 = vweird.f32 %v4564
  %vm4571 = vmor %vm4569, %vm4570
  %v4572 = vsel %vm4571, %v4564, %v4568
  %v4573 = vand.u32 2147483647, %v4528
  %vm4574 = vcmp.eq.f32.partialorder %v4573, 8.507059e+37
  %v4575 = vand.u32 %v4528, 2147483648
  %v4576 = vor.u32 1.1754944e-38, %v4575
  %v4577 = vsel %vm4574, %v4576, %v4572
  %v4578 = vmul.f32 1.0, %v4577
  %v4579 = vrcp.pop %v4529
  %v4580 = vmul.f32 %v4529, %v4579
  %v4581 = vsub.f32 1.0, %v4580
  %v4582 = vmul.f32 %v4579, %v4581
  %v4583 = vadd.f32 %v4579, %v4582
  %vm4584 = vweird.f32 %v4529
  %vm4585 = vweird.f32 %v4579
  %vm4586 = vmor %vm4584, %vm4585
  %v4587 = vsel %vm4586, %v4579, %v4583
  %v4588 = vand.u32 2147483647, %v4529
  %vm4589 = vcmp.eq.f32.partialorder %v4588, 8.507059e+37
  %v4590 = vand.u32 %v4529, 2147483648
  %v4591 = vor.u32 1.1754944e-38, %v4590
  %v4592 = vsel %vm4589, %v4591, %v4587
  %v4593 = vmul.f32 1.0, %v4592
  %v4594 = vrcp.pop %v4530
  %v4595 = vmul.f32 %v4530, %v4594
  %v4596 = vsub.f32 1.0, %v4595
  %v4597 = vmul.f32 %v4594, %v4596
  %v4598 = vadd.f32 %v4594, %v4597
  %vm4599 = vweird.f32 %v4530
  %vm4600 = vweird.f32 %v4594
  %vm4601 = vmor %vm4599, %vm4600
  %v4602 = vsel %vm4601, %v4594, %v4598
  %v4603 = vand.u32 2147483647, %v4530
  %vm4604 = vcmp.eq.f32.partialorder %v4603, 8.507059e+37
  %v4605 = vand.u32 %v4530, 2147483648
  %v4606 = vor.u32 1.1754944e-38, %v4605
  %v4607 = vsel %vm4604, %v4606, %v4602
  %v4608 = vmul.f32 1.0, %v4607
  %v4609 = vrcp.pop %v4531
  %v4610 = vmul.f32 %v4531, %v4609
  %v4611 = vsub.f32 1.0, %v4610
  %v4612 = vmul.f32 %v4609, %v4611
  %v4613 = vadd.f32 %v4609, %v4612
  %vm4614 = vweird.f32 %v4531
  %vm4615 = vweird.f32 %v4609
  %vm4616 = vmor %vm4614, %vm4615
  %v4617 = vsel %vm4616, %v4609, %v4613
  %v4618 = vand.u32 2147483647, %v4531
  %vm4619 = vcmp.eq.f32.partialorder %v4618, 8.507059e+37
  %v4620 = vand.u32 %v4531, 2147483648
  %v4621 = vor.u32 1.1754944e-38, %v4620
  %v4622 = vsel %vm4619, %v4621, %v4617
  %v4623 = vmul.f32 1.0, %v4622
  %v4624 = vrcp.pop %v4532
  %v4625 = vmul.f32 %v4532, %v4624
  %v4626 = vsub.f32 1.0, %v4625
  %v4627 = vmul.f32 %v4624, %v4626
  %v4628 = vadd.f32 %v4624, %v4627
  %vm4629 = vweird.f32 %v4532
  %vm4630 = vweird.f32 %v4624
  %vm4631 = vmor %vm4629, %vm4630
  %v4632 = vsel %vm4631, %v4624, %v4628
  %v4633 = vand.u32 2147483647, %v4532
  %vm4634 = vcmp.eq.f32.partialorder %v4633, 8.507059e+37
  %v4635 = vand.u32 %v4532, 2147483648
  %v4636 = vor.u32 1.1754944e-38, %v4635
  %v4637 = vsel %vm4634, %v4636, %v4632
  %v4638 = vmul.f32 1.0, %v4637
  %v4639 = vrcp.pop %v4533
  %v4640 = vmul.f32 %v4533, %v4639
  %v4641 = vsub.f32 1.0, %v4640
  %v4642 = vmul.f32 %v4639, %v4641
  %v4643 = vadd.f32 %v4639, %v4642
  %vm4644 = vweird.f32 %v4533
  %vm4645 = vweird.f32 %v4639
  %vm4646 = vmor %vm4644, %vm4645
  %v4647 = vsel %vm4646, %v4639, %v4643
  %v4648 = vand.u32 2147483647, %v4533
  %vm4649 = vcmp.eq.f32.partialorder %v4648, 8.507059e+37
  %v4650 = vand.u32 %v4533, 2147483648
  %v4651 = vor.u32 1.1754944e-38, %v4650
  %v4652 = vsel %vm4649, %v4651, %v4647
  %v4653 = vmul.f32 1.0, %v4652
  %v4662 = vrot.slane %v4494, 1
  %v4663 = vrot.slane %v4495, 1
  %v4664 = vrot.slane %v4496, 1
  %v4665 = vrot.slane %v4497, 1
  %v4666 = vrot.slane %v4498, 1
  %v4667 = vrot.slane %v4499, 1
  %v4668 = vrot.slane %v4500, 1
  %v4669 = vrot.slane %v4501, 1
  %v4678 = vxor.u32 %v4662, 2147483648
  %v4679 = vxor.u32 %v4663, 2147483648
  %v4680 = vxor.u32 %v4664, 2147483648
  %v4681 = vxor.u32 %v4665, 2147483648
  %v4682 = vxor.u32 %v4666, 2147483648
  %v4683 = vxor.u32 %v4667, 2147483648
  %v4684 = vxor.u32 %v4668, 2147483648
  %v4685 = vxor.u32 %v4669, 2147483648
  %v4686 = vmul.f32 %v4678, 1.442695
  %v4687 = vpow.pop %v4686
  %v4688 = vmul.f32 %v4679, 1.442695
  %v4689 = vpow.pop %v4688
  %v4690 = vmul.f32 %v4680, 1.442695
  %v4691 = vpow.pop %v4690
  %v4692 = vmul.f32 %v4681, 1.442695
  %v4693 = vpow.pop %v4692
  %v4694 = vmul.f32 %v4682, 1.442695
  %v4695 = vpow.pop %v4694
  %v4696 = vmul.f32 %v4683, 1.442695
  %v4697 = vpow.pop %v4696
  %v4698 = vmul.f32 %v4684, 1.442695
  %v4699 = vpow.pop %v4698
  %v4700 = vmul.f32 %v4685, 1.442695
  %v4701 = vpow.pop %v4700
  %v4702 = vadd.f32 %v4687, 1.0
  %v4703 = vadd.f32 %v4689, 1.0
  %v4704 = vadd.f32 %v4691, 1.0
  %v4705 = vadd.f32 %v4693, 1.0
  %v4706 = vadd.f32 %v4695, 1.0
  %v4707 = vadd.f32 %v4697, 1.0
  %v4708 = vadd.f32 %v4699, 1.0
  %v4709 = vadd.f32 %v4701, 1.0
  %v4710 = vrcp.pop %v4702
  %v4711 = vmul.f32 %v4702, %v4710
  %v4712 = vsub.f32 1.0, %v4711
  %v4713 = vmul.f32 %v4710, %v4712
  %v4714 = vadd.f32 %v4710, %v4713
  %vm4715 = vweird.f32 %v4702
  %vm4716 = vweird.f32 %v4710
  %vm4717 = vmor %vm4715, %vm4716
  %v4718 = vsel %vm4717, %v4710, %v4714
  %v4719 = vand.u32 2147483647, %v4702
  %vm4720 = vcmp.eq.f32.partialorder %v4719, 8.507059e+37
  %v4721 = vand.u32 %v4702, 2147483648
  %v4722 = vor.u32 1.1754944e-38, %v4721
  %v4723 = vsel %vm4720, %v4722, %v4718
  %v4724 = vmul.f32 1.0, %v4723
  %v4725 = vrcp.pop %v4703
  %v4726 = vmul.f32 %v4703, %v4725
  %v4727 = vsub.f32 1.0, %v4726
  %v4728 = vmul.f32 %v4725, %v4727
  %v4729 = vadd.f32 %v4725, %v4728
  %vm4730 = vweird.f32 %v4703
  %vm4731 = vweird.f32 %v4725
  %vm4732 = vmor %vm4730, %vm4731
  %v4733 = vsel %vm4732, %v4725, %v4729
  %v4734 = vand.u32 2147483647, %v4703
  %vm4735 = vcmp.eq.f32.partialorder %v4734, 8.507059e+37
  %v4736 = vand.u32 %v4703, 2147483648
  %v4737 = vor.u32 1.1754944e-38, %v4736
  %v4738 = vsel %vm4735, %v4737, %v4733
  %v4739 = vmul.f32 1.0, %v4738
  %v4740 = vrcp.pop %v4704
  %v4741 = vmul.f32 %v4704, %v4740
  %v4742 = vsub.f32 1.0, %v4741
  %v4743 = vmul.f32 %v4740, %v4742
  %v4744 = vadd.f32 %v4740, %v4743
  %vm4745 = vweird.f32 %v4704
  %vm4746 = vweird.f32 %v4740
  %vm4747 = vmor %vm4745, %vm4746
  %v4748 = vsel %vm4747, %v4740, %v4744
  %v4749 = vand.u32 2147483647, %v4704
  %vm4750 = vcmp.eq.f32.partialorder %v4749, 8.507059e+37
  %v4751 = vand.u32 %v4704, 2147483648
  %v4752 = vor.u32 1.1754944e-38, %v4751
  %v4753 = vsel %vm4750, %v4752, %v4748
  %v4754 = vmul.f32 1.0, %v4753
  %v4755 = vrcp.pop %v4705
  %v4756 = vmul.f32 %v4705, %v4755
  %v4757 = vsub.f32 1.0, %v4756
  %v4758 = vmul.f32 %v4755, %v4757
  %v4759 = vadd.f32 %v4755, %v4758
  %vm4760 = vweird.f32 %v4705
  %vm4761 = vweird.f32 %v4755
  %vm4762 = vmor %vm4760, %vm4761
  %v4763 = vsel %vm4762, %v4755, %v4759
  %v4764 = vand.u32 2147483647, %v4705
  %vm4765 = vcmp.eq.f32.partialorder %v4764, 8.507059e+37
  %v4766 = vand.u32 %v4705, 2147483648
  %v4767 = vor.u32 1.1754944e-38, %v4766
  %v4768 = vsel %vm4765, %v4767, %v4763
  %v4769 = vmul.f32 1.0, %v4768
  %v4770 = vrcp.pop %v4706
  %v4771 = vmul.f32 %v4706, %v4770
  %v4772 = vsub.f32 1.0, %v4771
  %v4773 = vmul.f32 %v4770, %v4772
  %v4774 = vadd.f32 %v4770, %v4773
  %vm4775 = vweird.f32 %v4706
  %vm4776 = vweird.f32 %v4770
  %vm4777 = vmor %vm4775, %vm4776
  %v4778 = vsel %vm4777, %v4770, %v4774
  %v4779 = vand.u32 2147483647, %v4706
  %vm4780 = vcmp.eq.f32.partialorder %v4779, 8.507059e+37
  %v4781 = vand.u32 %v4706, 2147483648
  %v4782 = vor.u32 1.1754944e-38, %v4781
  %v4783 = vsel %vm4780, %v4782, %v4778
  %v4784 = vmul.f32 1.0, %v4783
  %v4785 = vrcp.pop %v4707
  %v4786 = vmul.f32 %v4707, %v4785
  %v4787 = vsub.f32 1.0, %v4786
  %v4788 = vmul.f32 %v4785, %v4787
  %v4789 = vadd.f32 %v4785, %v4788
  %vm4790 = vweird.f32 %v4707
  %vm4791 = vweird.f32 %v4785
  %vm4792 = vmor %vm4790, %vm4791
  %v4793 = vsel %vm4792, %v4785, %v4789
  %v4794 = vand.u32 2147483647, %v4707
  %vm4795 = vcmp.eq.f32.partialorder %v4794, 8.507059e+37
  %v4796 = vand.u32 %v4707, 2147483648
  %v4797 = vor.u32 1.1754944e-38, %v4796
  %v4798 = vsel %vm4795, %v4797, %v4793
  %v4799 = vmul.f32 1.0, %v4798
  %v4800 = vrcp.pop %v4708
  %v4801 = vmul.f32 %v4708, %v4800
  %v4802 = vsub.f32 1.0, %v4801
  %v4803 = vmul.f32 %v4800, %v4802
  %v4804 = vadd.f32 %v4800, %v4803
  %vm4805 = vweird.f32 %v4708
  %vm4806 = vweird.f32 %v4800
  %vm4807 = vmor %vm4805, %vm4806
  %v4808 = vsel %vm4807, %v4800, %v4804
  %v4809 = vand.u32 2147483647, %v4708
  %vm4810 = vcmp.eq.f32.partialorder %v4809, 8.507059e+37
  %v4811 = vand.u32 %v4708, 2147483648
  %v4812 = vor.u32 1.1754944e-38, %v4811
  %v4813 = vsel %vm4810, %v4812, %v4808
  %v4814 = vmul.f32 1.0, %v4813
  %v4815 = vrcp.pop %v4709
  %v4816 = vmul.f32 %v4709, %v4815
  %v4817 = vsub.f32 1.0, %v4816
  %v4818 = vmul.f32 %v4815, %v4817
  %v4819 = vadd.f32 %v4815, %v4818
  %vm4820 = vweird.f32 %v4709
  %vm4821 = vweird.f32 %v4815
  %vm4822 = vmor %vm4820, %vm4821
  %v4823 = vsel %vm4822, %v4815, %v4819
  %v4824 = vand.u32 2147483647, %v4709
  %vm4825 = vcmp.eq.f32.partialorder %v4824, 8.507059e+37
  %v4826 = vand.u32 %v4709, 2147483648
  %v4827 = vor.u32 1.1754944e-38, %v4826
  %v4828 = vsel %vm4825, %v4827, %v4823
  %v4829 = vmul.f32 1.0, %v4828
  %v4830 = vrot.slane %v4494, 2
  %v4831 = vrot.slane %v4495, 2
  %v4832 = vrot.slane %v4496, 2
  %v4833 = vrot.slane %v4497, 2
  %v4834 = vrot.slane %v4498, 2
  %v4835 = vrot.slane %v4499, 2
  %v4836 = vrot.slane %v4500, 2
  %v4837 = vrot.slane %v4501, 2
  %v4846 = vtanh.pop %v4830
  %v4847 = vtanh.pop %v4831
  %v4848 = vtanh.pop %v4832
  %v4849 = vtanh.pop %v4833
  %v4850 = vtanh.pop %v4834
  %v4851 = vtanh.pop %v4835
  %v4852 = vtanh.pop %v4836
  %v4853 = vtanh.pop %v4837
  %v4854 = vrot.slane %v4494, 3
  %v4855 = vrot.slane %v4495, 3
  %v4856 = vrot.slane %v4496, 3
  %v4857 = vrot.slane %v4497, 3
  %v4858 = vrot.slane %v4498, 3
  %v4859 = vrot.slane %v4499, 3
  %v4860 = vrot.slane %v4500, 3
  %v4861 = vrot.slane %v4501, 3
  %v4870 = vxor.u32 %v4854, 2147483648
  %v4871 = vxor.u32 %v4855, 2147483648
  %v4872 = vxor.u32 %v4856, 2147483648
  %v4873 = vxor.u32 %v4857, 2147483648
  %v4874 = vxor.u32 %v4858, 2147483648
  %v4875 = vxor.u32 %v4859, 2147483648
  %v4876 = vxor.u32 %v4860, 2147483648
  %v4877 = vxor.u32 %v4861, 2147483648
  %v4878 = vmul.f32 %v4870, 1.442695
  %v4879 = vpow.pop %v4878
  %v4880 = vmul.f32 %v4871, 1.442695
  %v4881 = vpow.pop %v4880
  %v4882 = vmul.f32 %v4872, 1.442695
  %v4883 = vpow.pop %v4882
  %v4884 = vmul.f32 %v4873, 1.442695
  %v4885 = vpow.pop %v4884
  %v4886 = vmul.f32 %v4874, 1.442695
  %v4887 = vpow.pop %v4886
  %v4888 = vmul.f32 %v4875, 1.442695
  %v4889 = vpow.pop %v4888
  %v4890 = vmul.f32 %v4876, 1.442695
  %v4891 = vpow.pop %v4890
  %v4892 = vmul.f32 %v4877, 1.442695
  %v4893 = vpow.pop %v4892
  %v4894 = vadd.f32 %v4879, 1.0
  %v4895 = vadd.f32 %v4881, 1.0
  %v4896 = vadd.f32 %v4883, 1.0
  %v4897 = vadd.f32 %v4885, 1.0
  %v4898 = vadd.f32 %v4887, 1.0
  %v4899 = vadd.f32 %v4889, 1.0
  %v4900 = vadd.f32 %v4891, 1.0
  %v4901 = vadd.f32 %v4893, 1.0
  %v4902 = vrcp.pop %v4894
  %v4903 = vmul.f32 %v4894, %v4902
  %v4904 = vsub.f32 1.0, %v4903
  %v4905 = vmul.f32 %v4902, %v4904
  %v4906 = vadd.f32 %v4902, %v4905
  %vm4907 = vweird.f32 %v4894
  %vm4908 = vweird.f32 %v4902
  %vm4909 = vmor %vm4907, %vm4908
  %v4910 = vsel %vm4909, %v4902, %v4906
  %v4911 = vand.u32 2147483647, %v4894
  %vm4912 = vcmp.eq.f32.partialorder %v4911, 8.507059e+37
  %v4913 = vand.u32 %v4894, 2147483648
  %v4914 = vor.u32 1.1754944e-38, %v4913
  %v4915 = vsel %vm4912, %v4914, %v4910
  %v4916 = vmul.f32 1.0, %v4915
  %v4917 = vrcp.pop %v4895
  %v4918 = vmul.f32 %v4895, %v4917
  %v4919 = vsub.f32 1.0, %v4918
  %v4920 = vmul.f32 %v4917, %v4919
  %v4921 = vadd.f32 %v4917, %v4920
  %vm4922 = vweird.f32 %v4895
  %vm4923 = vweird.f32 %v4917
  %vm4924 = vmor %vm4922, %vm4923
  %v4925 = vsel %vm4924, %v4917, %v4921
  %v4926 = vand.u32 2147483647, %v4895
  %vm4927 = vcmp.eq.f32.partialorder %v4926, 8.507059e+37
  %v4928 = vand.u32 %v4895, 2147483648
  %v4929 = vor.u32 1.1754944e-38, %v4928
  %v4930 = vsel %vm4927, %v4929, %v4925
  %v4931 = vmul.f32 1.0, %v4930
  %v4932 = vrcp.pop %v4896
  %v4933 = vmul.f32 %v4896, %v4932
  %v4934 = vsub.f32 1.0, %v4933
  %v4935 = vmul.f32 %v4932, %v4934
  %v4936 = vadd.f32 %v4932, %v4935
  %vm4937 = vweird.f32 %v4896
  %vm4938 = vweird.f32 %v4932
  %vm4939 = vmor %vm4937, %vm4938
  %v4940 = vsel %vm4939, %v4932, %v4936
  %v4941 = vand.u32 2147483647, %v4896
  %vm4942 = vcmp.eq.f32.partialorder %v4941, 8.507059e+37
  %v4943 = vand.u32 %v4896, 2147483648
  %v4944 = vor.u32 1.1754944e-38, %v4943
  %v4945 = vsel %vm4942, %v4944, %v4940
  %v4946 = vmul.f32 1.0, %v4945
  %v4947 = vrcp.pop %v4897
  %v4948 = vmul.f32 %v4897, %v4947
  %v4949 = vsub.f32 1.0, %v4948
  %v4950 = vmul.f32 %v4947, %v4949
  %v4951 = vadd.f32 %v4947, %v4950
  %vm4952 = vweird.f32 %v4897
  %vm4953 = vweird.f32 %v4947
  %vm4954 = vmor %vm4952, %vm4953
  %v4955 = vsel %vm4954, %v4947, %v4951
  %v4956 = vand.u32 2147483647, %v4897
  %vm4957 = vcmp.eq.f32.partialorder %v4956, 8.507059e+37
  %v4958 = vand.u32 %v4897, 2147483648
  %v4959 = vor.u32 1.1754944e-38, %v4958
  %v4960 = vsel %vm4957, %v4959, %v4955
  %v4961 = vmul.f32 1.0, %v4960
  %v4962 = vrcp.pop %v4898
  %v4963 = vmul.f32 %v4898, %v4962
  %v4964 = vsub.f32 1.0, %v4963
  %v4965 = vmul.f32 %v4962, %v4964
  %v4966 = vadd.f32 %v4962, %v4965
  %vm4967 = vweird.f32 %v4898
  %vm4968 = vweird.f32 %v4962
  %vm4969 = vmor %vm4967, %vm4968
  %v4970 = vsel %vm4969, %v4962, %v4966
  %v4971 = vand.u32 2147483647, %v4898
  %vm4972 = vcmp.eq.f32.partialorder %v4971, 8.507059e+37
  %v4973 = vand.u32 %v4898, 2147483648
  %v4974 = vor.u32 1.1754944e-38, %v4973
  %v4975 = vsel %vm4972, %v4974, %v4970
  %v4976 = vmul.f32 1.0, %v4975
  %v4977 = vrcp.pop %v4899
  %v4978 = vmul.f32 %v4899, %v4977
  %v4979 = vsub.f32 1.0, %v4978
  %v4980 = vmul.f32 %v4977, %v4979
  %v4981 = vadd.f32 %v4977, %v4980
  %vm4982 = vweird.f32 %v4899
  %vm4983 = vweird.f32 %v4977
  %vm4984 = vmor %vm4982, %vm4983
  %v4985 = vsel %vm4984, %v4977, %v4981
  %v4986 = vand.u32 2147483647, %v4899
  %vm4987 = vcmp.eq.f32.partialorder %v4986, 8.507059e+37
  %v4988 = vand.u32 %v4899, 2147483648
  %v4989 = vor.u32 1.1754944e-38, %v4988
  %v4990 = vsel %vm4987, %v4989, %v4985
  %v4991 = vmul.f32 1.0, %v4990
  %v4992 = vrcp.pop %v4900
  %v4993 = vmul.f32 %v4900, %v4992
  %v4994 = vsub.f32 1.0, %v4993
  %v4995 = vmul.f32 %v4992, %v4994
  %v4996 = vadd.f32 %v4992, %v4995
  %vm4997 = vweird.f32 %v4900
  %vm4998 = vweird.f32 %v4992
  %vm4999 = vmor %vm4997, %vm4998
  %v5000 = vsel %vm4999, %v4992, %v4996
  %v5001 = vand.u32 2147483647, %v4900
  %vm5002 = vcmp.eq.f32.partialorder %v5001, 8.507059e+37
  %v5003 = vand.u32 %v4900, 2147483648
  %v5004 = vor.u32 1.1754944e-38, %v5003
  %v5005 = vsel %vm5002, %v5004, %v5000
  %v5006 = vmul.f32 1.0, %v5005
  %v5007 = vrcp.pop %v4901
  %v5008 = vmul.f32 %v4901, %v5007
  %v5009 = vsub.f32 1.0, %v5008
  %v5010 = vmul.f32 %v5007, %v5009
  %v5011 = vadd.f32 %v5007, %v5010
  %vm5012 = vweird.f32 %v4901
  %vm5013 = vweird.f32 %v5007
  %vm5014 = vmor %vm5012, %vm5013
  %v5015 = vsel %vm5014, %v5007, %v5011
  %v5016 = vand.u32 2147483647, %v4901
  %vm5017 = vcmp.eq.f32.partialorder %v5016, 8.507059e+37
  %v5018 = vand.u32 %v4901, 2147483648
  %v5019 = vor.u32 1.1754944e-38, %v5018
  %v5020 = vsel %vm5017, %v5019, %v5015
  %v5021 = vmul.f32 1.0, %v5020
  %v5022 = vld [vmem:[#allocation3] sm:$0xff]
  %v5024 = vrot.slane %v5022, 1
  %v5025 = vrot.slane %v5022, 2
  %v5026 = vrot.slane %v5022, 3
  %v5027 = vrot.slane %v5022, 4
  %v5028 = vrot.slane %v5022, 5
  %v5029 = vrot.slane %v5022, 6
  %v5030 = vrot.slane %v5022, 7
  %v5038 = vmul.f32 %v4724, %v5022
  %v5039 = vmul.f32 %v4739, %v5024
  %v5040 = vmul.f32 %v4754, %v5025
  %v5041 = vmul.f32 %v4769, %v5026
  %v5042 = vmul.f32 %v4784, %v5027
  %v5043 = vmul.f32 %v4799, %v5028
  %v5044 = vmul.f32 %v4814, %v5029
  %v5045 = vmul.f32 %v4829, %v5030
  %v5046 = vmul.f32 %v4548, %v4846
  %v5047 = vmul.f32 %v4563, %v4847
  %v5048 = vmul.f32 %v4578, %v4848
  %v5049 = vmul.f32 %v4593, %v4849
  %v5050 = vmul.f32 %v4608, %v4850
  %v5051 = vmul.f32 %v4623, %v4851
  %v5052 = vmul.f32 %v4638, %v4852
  %v5053 = vmul.f32 %v4653, %v4853
  %v5054 = vadd.f32 %v5038, %v5046
  %v5055 = vadd.f32 %v5039, %v5047
  %v5056 = vadd.f32 %v5040, %v5048
  %v5057 = vadd.f32 %v5041, %v5049
  %v5058 = vadd.f32 %v5042, %v5050
  %v5059 = vadd.f32 %v5043, %v5051
  %v5060 = vadd.f32 %v5044, %v5052
  %v5061 = vadd.f32 %v5045, %v5053
  %v5062 = vtanh.pop %v5054
  %v5063 = vtanh.pop %v5055
  %v5064 = vtanh.pop %v5056
  %v5065 = vtanh.pop %v5057
  %v5066 = vtanh.pop %v5058
  %v5067 = vtanh.pop %v5059
  %v5068 = vtanh.pop %v5060
  %v5069 = vtanh.pop %v5061
  %v5070 = vmul.f32 %v4916, %v5062
  %v5071 = vmul.f32 %v4931, %v5063
  %v5072 = vmul.f32 %v4946, %v5064
  %v5073 = vmul.f32 %v4961, %v5065
  %v5074 = vmul.f32 %v4976, %v5066
  %v5075 = vmul.f32 %v4991, %v5067
  %v5076 = vmul.f32 %v5006, %v5068
  %v5077 = vmul.f32 %v5021, %v5069
  %5086 = vst [vmem:[#allocation1] ss:$9 sm:$0xff] %v5054
  %s5087 = scalar_lea.vmem [#allocation1], 1
  %5088 = vst [vmem:[%s5087] ss:$9 sm:$0xff] %v5055
  %s5089 = scalar_lea.vmem [#allocation1], 2
  %5090 = vst [vmem:[%s5089] ss:$9 sm:$0xff] %v5056
  %s5091 = scalar_lea.vmem [#allocation1], 3
  %5092 = vst [vmem:[%s5091] ss:$9 sm:$0xff] %v5057
  %s5093 = scalar_lea.vmem [#allocation1], 4
  %5094 = vst [vmem:[%s5093] ss:$9 sm:$0xff] %v5058
  %s5095 = scalar_lea.vmem [#allocation1], 5
  %5096 = vst [vmem:[%s5095] ss:$9 sm:$0xff] %v5059
  %s5097 = scalar_lea.vmem [#allocation1], 6
  %5098 = vst [vmem:[%s5097] ss:$9 sm:$0xff] %v5060
  %s5099 = scalar_lea.vmem [#allocation1], 7
  %5100 = vst [vmem:[%s5099] ss:$9 sm:$0xff] %v5061
  %v5101 = vld [vmem:[#allocation1] sm:$0xff]
  %5103 = vst [vmem:[#allocation3] sm:$0xff] %v5101
  %5112 = vst [vmem:[#allocation1] ss:$9 sm:$0xff] %v5070
  %s5113 = scalar_lea.vmem [#allocation1], 1
  %5114 = vst [vmem:[%s5113] ss:$9 sm:$0xff] %v5071
  %s5115 = scalar_lea.vmem [#allocation1], 2
  %5116 = vst [vmem:[%s5115] ss:$9 sm:$0xff] %v5072
  %s5117 = scalar_lea.vmem [#allocation1], 3
  %5118 = vst [vmem:[%s5117] ss:$9 sm:$0xff] %v5073
  %s5119 = scalar_lea.vmem [#allocation1], 4
  %5120 = vst [vmem:[%s5119] ss:$9 sm:$0xff] %v5074
  %s5121 = scalar_lea.vmem [#allocation1], 5
  %5122 = vst [vmem:[%s5121] ss:$9 sm:$0xff] %v5075
  %s5123 = scalar_lea.vmem [#allocation1], 6
  %5124 = vst [vmem:[%s5123] ss:$9 sm:$0xff] %v5076
  %s5125 = scalar_lea.vmem [#allocation1], 7
  %5126 = vst [vmem:[%s5125] ss:$9 sm:$0xff] %v5077
  %v5127 = vld [vmem:[#allocation1] sm:$0xff]
  %5129 = vst [vmem:[#allocation2] sm:$0xff] %v5127
  %5130 = vst [vmem:[%s2 + $0x5] sm:$0x1] %v5070
  %5131 = vst [vmem:[%s2 + $0xd] sm:$0x1] %v5071
  %5132 = vst [vmem:[%s2 + $0x15] sm:$0x1] %v5072
  %5133 = vst [vmem:[%s2 + $0x1d] sm:$0x1] %v5073
  %5134 = vst [vmem:[%s2 + $0x25] sm:$0x1] %v5074
  %5135 = vst [vmem:[%s2 + $0x2d] sm:$0x1] %v5075
  %5136 = vst [vmem:[%s2 + $0x35] sm:$0x1] %v5076
  %5137 = vst [vmem:[%s2 + $0x3d] sm:$0x1] %v5077
  %s5138 = scalar_lea.vmem %s0, 6
  %v5139 = vld [vmem:[%s5138] ss:$8 sm:$0xf]
  %s5140 = scalar_lea.vmem %s0, 38
  %v5141 = vld [vmem:[%s5140] ss:$8 sm:$0xf]
  %s5142 = scalar_lea.vmem %s0, 70
  %v5143 = vld [vmem:[%s5142] ss:$8 sm:$0xf]
  %s5144 = scalar_lea.vmem %s0, 102
  %v5145 = vld [vmem:[%s5144] ss:$8 sm:$0xf]
  %s5146 = scalar_lea.vmem %s0, 134
  %v5147 = vld [vmem:[%s5146] ss:$8 sm:$0xf]
  %s5148 = scalar_lea.vmem %s0, 166
  %v5149 = vld [vmem:[%s5148] ss:$8 sm:$0xf]
  %s5150 = scalar_lea.vmem %s0, 198
  %v5151 = vld [vmem:[%s5150] ss:$8 sm:$0xf]
  %s5152 = scalar_lea.vmem %s0, 230
  %v5153 = vld [vmem:[%s5152] ss:$8 sm:$0xf]
  %v5154 = vld [vmem:[#allocation2] sm:$0xff]
  %v5155 = vld [vmem:[%s1] sm:$0xff]
  %v5156 = vld [vmem:[%s1 + $0x8] sm:$0xff]
  %v5157 = vld [vmem:[%s1 + $0x10] sm:$0xff]
  %v5158 = vld [vmem:[%s1 + $0x18] sm:$0xff]
  %v5159 = vld [vmem:[%s1 + $0x20] sm:$0xff]
  %v5160 = vld [vmem:[%s1 + $0x28] sm:$0xff]
  %v5161 = vld [vmem:[%s1 + $0x30] sm:$0xff]
  %v5162 = vld [vmem:[%s1 + $0x38] sm:$0xff]
  %v5163 = vld [vmem:[%s1 + $0x40] sm:$0xff]
  %v5164 = vld [vmem:[%s1 + $0x48] sm:$0xff]
  %v5165 = vld [vmem:[%s1 + $0x50] sm:$0xff]
  %v5166 = vld [vmem:[%s1 + $0x58] sm:$0xff]
  %v5167 = vld [vmem:[%s1 + $0x60] sm:$0xff]
  %v5168 = vld [vmem:[%s1 + $0x68] sm:$0xff]
  %v5169 = vld [vmem:[%s1 + $0x70] sm:$0xff]
  %v5170 = vld [vmem:[%s1 + $0x78] sm:$0xff]
  %v5171 = vld [vmem:[%s1 + $0x80] sm:$0xff]
  %v5172 = vld [vmem:[%s1 + $0x88] sm:$0xff]
  %v5173 = vld [vmem:[%s1 + $0x90] sm:$0xff]
  %v5174 = vld [vmem:[%s1 + $0x98] sm:$0xff]
  %v5175 = vld [vmem:[%s1 + $0xa0] sm:$0xff]
  %v5176 = vld [vmem:[%s1 + $0xa8] sm:$0xff]
  %v5177 = vld [vmem:[%s1 + $0xb0] sm:$0xff]
  %v5178 = vld [vmem:[%s1 + $0xb8] sm:$0xff]
  %v5179 = vld [vmem:[%s1 + $0xc0] sm:$0xff]
  %v5180 = vld [vmem:[%s1 + $0xc8] sm:$0xff]
  %v5181 = vld [vmem:[%s1 + $0xd0] sm:$0xff]
  %v5182 = vld [vmem:[%s1 + $0xd8] sm:$0xff]
  %v5183 = vld [vmem:[%s1 + $0xe0] sm:$0xff]
  %v5184 = vld [vmem:[%s1 + $0xe8] sm:$0xff]
  %v5185 = vld [vmem:[%s1 + $0xf0] sm:$0xff]
  %v5186 = vld [vmem:[%s1 + $0xf8] sm:$0xff]
  %v5187 = vld [vmem:[%s1 + $0x100] sm:$0xff]
  %v5188 = vld [vmem:[%s1 + $0x108] sm:$0xff]
  %v5189 = vld [vmem:[%s1 + $0x110] sm:$0xff]
  %v5190 = vld [vmem:[%s1 + $0x118] sm:$0xff]
  %v5191 = vld [vmem:[%s1 + $0x120] sm:$0xff]
  %v5192 = vld [vmem:[%s1 + $0x128] sm:$0xff]
  %v5193 = vld [vmem:[%s1 + $0x130] sm:$0xff]
  %v5194 = vld [vmem:[%s1 + $0x138] sm:$0xff]
  %v5195 = vld [vmem:[%s1 + $0x140] sm:$0xff]
  %v5196 = vld [vmem:[%s1 + $0x148] sm:$0xff]
  %v5197 = vld [vmem:[%s1 + $0x150] sm:$0xff]
  %v5198 = vld [vmem:[%s1 + $0x158] sm:$0xff]
  %v5199 = vld [vmem:[%s1 + $0x160] sm:$0xff]
  %v5200 = vld [vmem:[%s1 + $0x168] sm:$0xff]
  %v5201 = vld [vmem:[%s1 + $0x170] sm:$0xff]
  %v5202 = vld [vmem:[%s1 + $0x178] sm:$0xff]
  %v5203 = vld [vmem:[%s1 + $0x180] sm:$0xff]
  %v5204 = vld [vmem:[%s1 + $0x188] sm:$0xff]
  %v5205 = vld [vmem:[%s1 + $0x190] sm:$0xff]
  %v5206 = vld [vmem:[%s1 + $0x198] sm:$0xff]
  %v5207 = vld [vmem:[%s1 + $0x1a0] sm:$0xff]
  %v5208 = vld [vmem:[%s1 + $0x1a8] sm:$0xff]
  %v5209 = vld [vmem:[%s1 + $0x1b0] sm:$0xff]
  %v5210 = vld [vmem:[%s1 + $0x1b8] sm:$0xff]
  %v5211 = vld [vmem:[%s1 + $0x1c0] sm:$0xff]
  %v5212 = vld [vmem:[%s1 + $0x1c8] sm:$0xff]
  %v5213 = vld [vmem:[%s1 + $0x1d0] sm:$0xff]
  %v5214 = vld [vmem:[%s1 + $0x1d8] sm:$0xff]
  %v5215 = vld [vmem:[%s1 + $0x1e0] sm:$0xff]
  %v5216 = vld [vmem:[%s1 + $0x1e8] sm:$0xff]
  %v5217 = vld [vmem:[%s1 + $0x1f0] sm:$0xff]
  %v5218 = vld [vmem:[%s1 + $0x1f8] sm:$0xff]
  %5219 = vmatpush.msra.mxu0 %v5215
  %5220 = vmatpush.msra.mxu0 %v5211
  %5221 = vmatpush.msra.mxu0 %v5207
  %5222 = vmatpush.msra.mxu0 %v5203
  %5223 = vmatpush.msra.mxu0 %v5199
  %5224 = vmatpush.msra.mxu0 %v5195
  %5225 = vmatpush.msra.mxu0 %v5191
  %5226 = vmatpush.msra.mxu0 %v5187
  %5227 = vmatpush.msra.mxu0 %v5183
  %5228 = vmatpush.msra.mxu0 %v5179
  %5229 = vmatpush.msra.mxu0 %v5175
  %5230 = vmatpush.msra.mxu0 %v5171
  %5231 = vmatpush.msra.mxu0 %v5167
  %5232 = vmatpush.msra.mxu0 %v5163
  %5233 = vmatpush.msra.mxu0 %v5159
  %5234 = vmatpush.msra.mxu0 %v5155
  %5235 = vmatmul.f32.gmra.mxu0 %v5154
  %v5236 = vpop.f32.mrf.mxu0
  %v5237 = vadd.f32 0.0, %v5236
  %5238 = vdwg.mxu0
  %5239 = vmatpush.msra.mxu0 %v5216
  %5240 = vmatpush.msra.mxu0 %v5212
  %5241 = vmatpush.msra.mxu0 %v5208
  %5242 = vmatpush.msra.mxu0 %v5204
  %5243 = vmatpush.msra.mxu0 %v5200
  %5244 = vmatpush.msra.mxu0 %v5196
  %5245 = vmatpush.msra.mxu0 %v5192
  %5246 = vmatpush.msra.mxu0 %v5188
  %5247 = vmatpush.msra.mxu0 %v5184
  %5248 = vmatpush.msra.mxu0 %v5180
  %5249 = vmatpush.msra.mxu0 %v5176
  %5250 = vmatpush.msra.mxu0 %v5172
  %5251 = vmatpush.msra.mxu0 %v5168
  %5252 = vmatpush.msra.mxu0 %v5164
  %5253 = vmatpush.msra.mxu0 %v5160
  %5254 = vmatpush.msra.mxu0 %v5156
  %5255 = vmatmul.f32.gmra.mxu0 %v5154
  %v5256 = vpop.f32.mrf.mxu0
  %v5257 = vadd.f32 0.0, %v5256
  %5258 = vdwg.mxu0
  %5259 = vmatpush.msra.mxu0 %v5217
  %5260 = vmatpush.msra.mxu0 %v5213
  %5261 = vmatpush.msra.mxu0 %v5209
  %5262 = vmatpush.msra.mxu0 %v5205
  %5263 = vmatpush.msra.mxu0 %v5201
  %5264 = vmatpush.msra.mxu0 %v5197
  %5265 = vmatpush.msra.mxu0 %v5193
  %5266 = vmatpush.msra.mxu0 %v5189
  %5267 = vmatpush.msra.mxu0 %v5185
  %5268 = vmatpush.msra.mxu0 %v5181
  %5269 = vmatpush.msra.mxu0 %v5177
  %5270 = vmatpush.msra.mxu0 %v5173
  %5271 = vmatpush.msra.mxu0 %v5169
  %5272 = vmatpush.msra.mxu0 %v5165
  %5273 = vmatpush.msra.mxu0 %v5161
  %5274 = vmatpush.msra.mxu0 %v5157
  %5275 = vmatmul.f32.gmra.mxu0 %v5154
  %v5276 = vpop.f32.mrf.mxu0
  %v5277 = vadd.f32 0.0, %v5276
  %5278 = vdwg.mxu0
  %5279 = vmatpush.msra.mxu0 %v5218
  %5280 = vmatpush.msra.mxu0 %v5214
  %5281 = vmatpush.msra.mxu0 %v5210
  %5282 = vmatpush.msra.mxu0 %v5206
  %5283 = vmatpush.msra.mxu0 %v5202
  %5284 = vmatpush.msra.mxu0 %v5198
  %5285 = vmatpush.msra.mxu0 %v5194
  %5286 = vmatpush.msra.mxu0 %v5190
  %5287 = vmatpush.msra.mxu0 %v5186
  %5288 = vmatpush.msra.mxu0 %v5182
  %5289 = vmatpush.msra.mxu0 %v5178
  %5290 = vmatpush.msra.mxu0 %v5174
  %5291 = vmatpush.msra.mxu0 %v5170
  %5292 = vmatpush.msra.mxu0 %v5166
  %5293 = vmatpush.msra.mxu0 %v5162
  %5294 = vmatpush.msra.mxu0 %v5158
  %5295 = vmatmul.f32.gmra.mxu0 %v5154
  %v5296 = vpop.f32.mrf.mxu0
  %v5297 = vadd.f32 0.0, %v5296
  %5298 = vdwg.mxu0
  %v5303 = vrot.slane %v5257, 7
  %v5304 = vrot.slane %v5277, 6
  %v5305 = vrot.slane %v5297, 5
  %v5306 = vsel %vm184, %v5237, %v5303
  %v5307 = vsel %vm186, %v5304, %v5305
  %v5308 = vsel %vm188, %v5306, %v5307
  %v5309 = vsel %vm190, %v5237, %v5303
  %v5310 = vsel %vm192, %v5304, %v5305
  %v5311 = vsel %vm194, %v5309, %v5310
  %v5312 = vrot.slane %v5311, 1
  %v5313 = vsel %vm186, %v5237, %v5303
  %v5314 = vsel %vm198, %v5304, %v5305
  %v5315 = vsel %vm200, %v5313, %v5314
  %v5316 = vrot.slane %v5315, 2
  %v5317 = vsel %vm192, %v5237, %v5303
  %v5318 = vsel %vm204, %v5304, %v5305
  %v5319 = vsel %vm206, %v5317, %v5318
  %v5320 = vrot.slane %v5319, 3
  %v5321 = vsel %vm198, %v5237, %v5303
  %v5322 = vsel %vm210, %v5304, %v5305
  %v5323 = vsel %vm212, %v5321, %v5322
  %v5324 = vrot.slane %v5323, 4
  %v5325 = vsel %vm204, %v5237, %v5303
  %v5326 = vsel %vm216, %v5305, %v5304
  %v5327 = vsel %vm218, %v5325, %v5326
  %v5328 = vrot.slane %v5327, 5
  %v5329 = vsel %vm210, %v5237, %v5303
  %v5330 = vsel %vm184, %v5304, %v5305
  %v5331 = vsel %vm223, %v5330, %v5329
  %v5332 = vrot.slane %v5331, 6
  %v5333 = vsel %vm216, %v5303, %v5237
  %v5334 = vsel %vm190, %v5304, %v5305
  %v5335 = vsel %vm228, %v5334, %v5333
  %v5336 = vrot.slane %v5335, 7
  %v5345 = vadd.f32 %v5139, %v5308
  %v5346 = vadd.f32 %v5141, %v5312
  %v5347 = vadd.f32 %v5143, %v5316
  %v5348 = vadd.f32 %v5145, %v5320
  %v5349 = vadd.f32 %v5147, %v5324
  %v5350 = vadd.f32 %v5149, %v5328
  %v5351 = vadd.f32 %v5151, %v5332
  %v5352 = vadd.f32 %v5153, %v5336
  %v5353 = vxor.u32 %v5345, 2147483648
  %v5354 = vxor.u32 %v5346, 2147483648
  %v5355 = vxor.u32 %v5347, 2147483648
  %v5356 = vxor.u32 %v5348, 2147483648
  %v5357 = vxor.u32 %v5349, 2147483648
  %v5358 = vxor.u32 %v5350, 2147483648
  %v5359 = vxor.u32 %v5351, 2147483648
  %v5360 = vxor.u32 %v5352, 2147483648
  %v5361 = vmul.f32 %v5353, 1.442695
  %v5362 = vpow.pop %v5361
  %v5363 = vmul.f32 %v5354, 1.442695
  %v5364 = vpow.pop %v5363
  %v5365 = vmul.f32 %v5355, 1.442695
  %v5366 = vpow.pop %v5365
  %v5367 = vmul.f32 %v5356, 1.442695
  %v5368 = vpow.pop %v5367
  %v5369 = vmul.f32 %v5357, 1.442695
  %v5370 = vpow.pop %v5369
  %v5371 = vmul.f32 %v5358, 1.442695
  %v5372 = vpow.pop %v5371
  %v5373 = vmul.f32 %v5359, 1.442695
  %v5374 = vpow.pop %v5373
  %v5375 = vmul.f32 %v5360, 1.442695
  %v5376 = vpow.pop %v5375
  %v5377 = vadd.f32 %v5362, 1.0
  %v5378 = vadd.f32 %v5364, 1.0
  %v5379 = vadd.f32 %v5366, 1.0
  %v5380 = vadd.f32 %v5368, 1.0
  %v5381 = vadd.f32 %v5370, 1.0
  %v5382 = vadd.f32 %v5372, 1.0
  %v5383 = vadd.f32 %v5374, 1.0
  %v5384 = vadd.f32 %v5376, 1.0
  %v5385 = vrcp.pop %v5377
  %v5386 = vmul.f32 %v5377, %v5385
  %v5387 = vsub.f32 1.0, %v5386
  %v5388 = vmul.f32 %v5385, %v5387
  %v5389 = vadd.f32 %v5385, %v5388
  %vm5390 = vweird.f32 %v5377
  %vm5391 = vweird.f32 %v5385
  %vm5392 = vmor %vm5390, %vm5391
  %v5393 = vsel %vm5392, %v5385, %v5389
  %v5394 = vand.u32 2147483647, %v5377
  %vm5395 = vcmp.eq.f32.partialorder %v5394, 8.507059e+37
  %v5396 = vand.u32 %v5377, 2147483648
  %v5397 = vor.u32 1.1754944e-38, %v5396
  %v5398 = vsel %vm5395, %v5397, %v5393
  %v5399 = vmul.f32 1.0, %v5398
  %v5400 = vrcp.pop %v5378
  %v5401 = vmul.f32 %v5378, %v5400
  %v5402 = vsub.f32 1.0, %v5401
  %v5403 = vmul.f32 %v5400, %v5402
  %v5404 = vadd.f32 %v5400, %v5403
  %vm5405 = vweird.f32 %v5378
  %vm5406 = vweird.f32 %v5400
  %vm5407 = vmor %vm5405, %vm5406
  %v5408 = vsel %vm5407, %v5400, %v5404
  %v5409 = vand.u32 2147483647, %v5378
  %vm5410 = vcmp.eq.f32.partialorder %v5409, 8.507059e+37
  %v5411 = vand.u32 %v5378, 2147483648
  %v5412 = vor.u32 1.1754944e-38, %v5411
  %v5413 = vsel %vm5410, %v5412, %v5408
  %v5414 = vmul.f32 1.0, %v5413
  %v5415 = vrcp.pop %v5379
  %v5416 = vmul.f32 %v5379, %v5415
  %v5417 = vsub.f32 1.0, %v5416
  %v5418 = vmul.f32 %v5415, %v5417
  %v5419 = vadd.f32 %v5415, %v5418
  %vm5420 = vweird.f32 %v5379
  %vm5421 = vweird.f32 %v5415
  %vm5422 = vmor %vm5420, %vm5421
  %v5423 = vsel %vm5422, %v5415, %v5419
  %v5424 = vand.u32 2147483647, %v5379
  %vm5425 = vcmp.eq.f32.partialorder %v5424, 8.507059e+37
  %v5426 = vand.u32 %v5379, 2147483648
  %v5427 = vor.u32 1.1754944e-38, %v5426
  %v5428 = vsel %vm5425, %v5427, %v5423
  %v5429 = vmul.f32 1.0, %v5428
  %v5430 = vrcp.pop %v5380
  %v5431 = vmul.f32 %v5380, %v5430
  %v5432 = vsub.f32 1.0, %v5431
  %v5433 = vmul.f32 %v5430, %v5432
  %v5434 = vadd.f32 %v5430, %v5433
  %vm5435 = vweird.f32 %v5380
  %vm5436 = vweird.f32 %v5430
  %vm5437 = vmor %vm5435, %vm5436
  %v5438 = vsel %vm5437, %v5430, %v5434
  %v5439 = vand.u32 2147483647, %v5380
  %vm5440 = vcmp.eq.f32.partialorder %v5439, 8.507059e+37
  %v5441 = vand.u32 %v5380, 2147483648
  %v5442 = vor.u32 1.1754944e-38, %v5441
  %v5443 = vsel %vm5440, %v5442, %v5438
  %v5444 = vmul.f32 1.0, %v5443
  %v5445 = vrcp.pop %v5381
  %v5446 = vmul.f32 %v5381, %v5445
  %v5447 = vsub.f32 1.0, %v5446
  %v5448 = vmul.f32 %v5445, %v5447
  %v5449 = vadd.f32 %v5445, %v5448
  %vm5450 = vweird.f32 %v5381
  %vm5451 = vweird.f32 %v5445
  %vm5452 = vmor %vm5450, %vm5451
  %v5453 = vsel %vm5452, %v5445, %v5449
  %v5454 = vand.u32 2147483647, %v5381
  %vm5455 = vcmp.eq.f32.partialorder %v5454, 8.507059e+37
  %v5456 = vand.u32 %v5381, 2147483648
  %v5457 = vor.u32 1.1754944e-38, %v5456
  %v5458 = vsel %vm5455, %v5457, %v5453
  %v5459 = vmul.f32 1.0, %v5458
  %v5460 = vrcp.pop %v5382
  %v5461 = vmul.f32 %v5382, %v5460
  %v5462 = vsub.f32 1.0, %v5461
  %v5463 = vmul.f32 %v5460, %v5462
  %v5464 = vadd.f32 %v5460, %v5463
  %vm5465 = vweird.f32 %v5382
  %vm5466 = vweird.f32 %v5460
  %vm5467 = vmor %vm5465, %vm5466
  %v5468 = vsel %vm5467, %v5460, %v5464
  %v5469 = vand.u32 2147483647, %v5382
  %vm5470 = vcmp.eq.f32.partialorder %v5469, 8.507059e+37
  %v5471 = vand.u32 %v5382, 2147483648
  %v5472 = vor.u32 1.1754944e-38, %v5471
  %v5473 = vsel %vm5470, %v5472, %v5468
  %v5474 = vmul.f32 1.0, %v5473
  %v5475 = vrcp.pop %v5383
  %v5476 = vmul.f32 %v5383, %v5475
  %v5477 = vsub.f32 1.0, %v5476
  %v5478 = vmul.f32 %v5475, %v5477
  %v5479 = vadd.f32 %v5475, %v5478
  %vm5480 = vweird.f32 %v5383
  %vm5481 = vweird.f32 %v5475
  %vm5482 = vmor %vm5480, %vm5481
  %v5483 = vsel %vm5482, %v5475, %v5479
  %v5484 = vand.u32 2147483647, %v5383
  %vm5485 = vcmp.eq.f32.partialorder %v5484, 8.507059e+37
  %v5486 = vand.u32 %v5383, 2147483648
  %v5487 = vor.u32 1.1754944e-38, %v5486
  %v5488 = vsel %vm5485, %v5487, %v5483
  %v5489 = vmul.f32 1.0, %v5488
  %v5490 = vrcp.pop %v5384
  %v5491 = vmul.f32 %v5384, %v5490
  %v5492 = vsub.f32 1.0, %v5491
  %v5493 = vmul.f32 %v5490, %v5492
  %v5494 = vadd.f32 %v5490, %v5493
  %vm5495 = vweird.f32 %v5384
  %vm5496 = vweird.f32 %v5490
  %vm5497 = vmor %vm5495, %vm5496
  %v5498 = vsel %vm5497, %v5490, %v5494
  %v5499 = vand.u32 2147483647, %v5384
  %vm5500 = vcmp.eq.f32.partialorder %v5499, 8.507059e+37
  %v5501 = vand.u32 %v5384, 2147483648
  %v5502 = vor.u32 1.1754944e-38, %v5501
  %v5503 = vsel %vm5500, %v5502, %v5498
  %v5504 = vmul.f32 1.0, %v5503
  %v5513 = vrot.slane %v5345, 1
  %v5514 = vrot.slane %v5346, 1
  %v5515 = vrot.slane %v5347, 1
  %v5516 = vrot.slane %v5348, 1
  %v5517 = vrot.slane %v5349, 1
  %v5518 = vrot.slane %v5350, 1
  %v5519 = vrot.slane %v5351, 1
  %v5520 = vrot.slane %v5352, 1
  %v5529 = vxor.u32 %v5513, 2147483648
  %v5530 = vxor.u32 %v5514, 2147483648
  %v5531 = vxor.u32 %v5515, 2147483648
  %v5532 = vxor.u32 %v5516, 2147483648
  %v5533 = vxor.u32 %v5517, 2147483648
  %v5534 = vxor.u32 %v5518, 2147483648
  %v5535 = vxor.u32 %v5519, 2147483648
  %v5536 = vxor.u32 %v5520, 2147483648
  %v5537 = vmul.f32 %v5529, 1.442695
  %v5538 = vpow.pop %v5537
  %v5539 = vmul.f32 %v5530, 1.442695
  %v5540 = vpow.pop %v5539
  %v5541 = vmul.f32 %v5531, 1.442695
  %v5542 = vpow.pop %v5541
  %v5543 = vmul.f32 %v5532, 1.442695
  %v5544 = vpow.pop %v5543
  %v5545 = vmul.f32 %v5533, 1.442695
  %v5546 = vpow.pop %v5545
  %v5547 = vmul.f32 %v5534, 1.442695
  %v5548 = vpow.pop %v5547
  %v5549 = vmul.f32 %v5535, 1.442695
  %v5550 = vpow.pop %v5549
  %v5551 = vmul.f32 %v5536, 1.442695
  %v5552 = vpow.pop %v5551
  %v5553 = vadd.f32 %v5538, 1.0
  %v5554 = vadd.f32 %v5540, 1.0
  %v5555 = vadd.f32 %v5542, 1.0
  %v5556 = vadd.f32 %v5544, 1.0
  %v5557 = vadd.f32 %v5546, 1.0
  %v5558 = vadd.f32 %v5548, 1.0
  %v5559 = vadd.f32 %v5550, 1.0
  %v5560 = vadd.f32 %v5552, 1.0
  %v5561 = vrcp.pop %v5553
  %v5562 = vmul.f32 %v5553, %v5561
  %v5563 = vsub.f32 1.0, %v5562
  %v5564 = vmul.f32 %v5561, %v5563
  %v5565 = vadd.f32 %v5561, %v5564
  %vm5566 = vweird.f32 %v5553
  %vm5567 = vweird.f32 %v5561
  %vm5568 = vmor %vm5566, %vm5567
  %v5569 = vsel %vm5568, %v5561, %v5565
  %v5570 = vand.u32 2147483647, %v5553
  %vm5571 = vcmp.eq.f32.partialorder %v5570, 8.507059e+37
  %v5572 = vand.u32 %v5553, 2147483648
  %v5573 = vor.u32 1.1754944e-38, %v5572
  %v5574 = vsel %vm5571, %v5573, %v5569
  %v5575 = vmul.f32 1.0, %v5574
  %v5576 = vrcp.pop %v5554
  %v5577 = vmul.f32 %v5554, %v5576
  %v5578 = vsub.f32 1.0, %v5577
  %v5579 = vmul.f32 %v5576, %v5578
  %v5580 = vadd.f32 %v5576, %v5579
  %vm5581 = vweird.f32 %v5554
  %vm5582 = vweird.f32 %v5576
  %vm5583 = vmor %vm5581, %vm5582
  %v5584 = vsel %vm5583, %v5576, %v5580
  %v5585 = vand.u32 2147483647, %v5554
  %vm5586 = vcmp.eq.f32.partialorder %v5585, 8.507059e+37
  %v5587 = vand.u32 %v5554, 2147483648
  %v5588 = vor.u32 1.1754944e-38, %v5587
  %v5589 = vsel %vm5586, %v5588, %v5584
  %v5590 = vmul.f32 1.0, %v5589
  %v5591 = vrcp.pop %v5555
  %v5592 = vmul.f32 %v5555, %v5591
  %v5593 = vsub.f32 1.0, %v5592
  %v5594 = vmul.f32 %v5591, %v5593
  %v5595 = vadd.f32 %v5591, %v5594
  %vm5596 = vweird.f32 %v5555
  %vm5597 = vweird.f32 %v5591
  %vm5598 = vmor %vm5596, %vm5597
  %v5599 = vsel %vm5598, %v5591, %v5595
  %v5600 = vand.u32 2147483647, %v5555
  %vm5601 = vcmp.eq.f32.partialorder %v5600, 8.507059e+37
  %v5602 = vand.u32 %v5555, 2147483648
  %v5603 = vor.u32 1.1754944e-38, %v5602
  %v5604 = vsel %vm5601, %v5603, %v5599
  %v5605 = vmul.f32 1.0, %v5604
  %v5606 = vrcp.pop %v5556
  %v5607 = vmul.f32 %v5556, %v5606
  %v5608 = vsub.f32 1.0, %v5607
  %v5609 = vmul.f32 %v5606, %v5608
  %v5610 = vadd.f32 %v5606, %v5609
  %vm5611 = vweird.f32 %v5556
  %vm5612 = vweird.f32 %v5606
  %vm5613 = vmor %vm5611, %vm5612
  %v5614 = vsel %vm5613, %v5606, %v5610
  %v5615 = vand.u32 2147483647, %v5556
  %vm5616 = vcmp.eq.f32.partialorder %v5615, 8.507059e+37
  %v5617 = vand.u32 %v5556, 2147483648
  %v5618 = vor.u32 1.1754944e-38, %v5617
  %v5619 = vsel %vm5616, %v5618, %v5614
  %v5620 = vmul.f32 1.0, %v5619
  %v5621 = vrcp.pop %v5557
  %v5622 = vmul.f32 %v5557, %v5621
  %v5623 = vsub.f32 1.0, %v5622
  %v5624 = vmul.f32 %v5621, %v5623
  %v5625 = vadd.f32 %v5621, %v5624
  %vm5626 = vweird.f32 %v5557
  %vm5627 = vweird.f32 %v5621
  %vm5628 = vmor %vm5626, %vm5627
  %v5629 = vsel %vm5628, %v5621, %v5625
  %v5630 = vand.u32 2147483647, %v5557
  %vm5631 = vcmp.eq.f32.partialorder %v5630, 8.507059e+37
  %v5632 = vand.u32 %v5557, 2147483648
  %v5633 = vor.u32 1.1754944e-38, %v5632
  %v5634 = vsel %vm5631, %v5633, %v5629
  %v5635 = vmul.f32 1.0, %v5634
  %v5636 = vrcp.pop %v5558
  %v5637 = vmul.f32 %v5558, %v5636
  %v5638 = vsub.f32 1.0, %v5637
  %v5639 = vmul.f32 %v5636, %v5638
  %v5640 = vadd.f32 %v5636, %v5639
  %vm5641 = vweird.f32 %v5558
  %vm5642 = vweird.f32 %v5636
  %vm5643 = vmor %vm5641, %vm5642
  %v5644 = vsel %vm5643, %v5636, %v5640
  %v5645 = vand.u32 2147483647, %v5558
  %vm5646 = vcmp.eq.f32.partialorder %v5645, 8.507059e+37
  %v5647 = vand.u32 %v5558, 2147483648
  %v5648 = vor.u32 1.1754944e-38, %v5647
  %v5649 = vsel %vm5646, %v5648, %v5644
  %v5650 = vmul.f32 1.0, %v5649
  %v5651 = vrcp.pop %v5559
  %v5652 = vmul.f32 %v5559, %v5651
  %v5653 = vsub.f32 1.0, %v5652
  %v5654 = vmul.f32 %v5651, %v5653
  %v5655 = vadd.f32 %v5651, %v5654
  %vm5656 = vweird.f32 %v5559
  %vm5657 = vweird.f32 %v5651
  %vm5658 = vmor %vm5656, %vm5657
  %v5659 = vsel %vm5658, %v5651, %v5655
  %v5660 = vand.u32 2147483647, %v5559
  %vm5661 = vcmp.eq.f32.partialorder %v5660, 8.507059e+37
  %v5662 = vand.u32 %v5559, 2147483648
  %v5663 = vor.u32 1.1754944e-38, %v5662
  %v5664 = vsel %vm5661, %v5663, %v5659
  %v5665 = vmul.f32 1.0, %v5664
  %v5666 = vrcp.pop %v5560
  %v5667 = vmul.f32 %v5560, %v5666
  %v5668 = vsub.f32 1.0, %v5667
  %v5669 = vmul.f32 %v5666, %v5668
  %v5670 = vadd.f32 %v5666, %v5669
  %vm5671 = vweird.f32 %v5560
  %vm5672 = vweird.f32 %v5666
  %vm5673 = vmor %vm5671, %vm5672
  %v5674 = vsel %vm5673, %v5666, %v5670
  %v5675 = vand.u32 2147483647, %v5560
  %vm5676 = vcmp.eq.f32.partialorder %v5675, 8.507059e+37
  %v5677 = vand.u32 %v5560, 2147483648
  %v5678 = vor.u32 1.1754944e-38, %v5677
  %v5679 = vsel %vm5676, %v5678, %v5674
  %v5680 = vmul.f32 1.0, %v5679
  %v5681 = vrot.slane %v5345, 2
  %v5682 = vrot.slane %v5346, 2
  %v5683 = vrot.slane %v5347, 2
  %v5684 = vrot.slane %v5348, 2
  %v5685 = vrot.slane %v5349, 2
  %v5686 = vrot.slane %v5350, 2
  %v5687 = vrot.slane %v5351, 2
  %v5688 = vrot.slane %v5352, 2
  %v5697 = vtanh.pop %v5681
  %v5698 = vtanh.pop %v5682
  %v5699 = vtanh.pop %v5683
  %v5700 = vtanh.pop %v5684
  %v5701 = vtanh.pop %v5685
  %v5702 = vtanh.pop %v5686
  %v5703 = vtanh.pop %v5687
  %v5704 = vtanh.pop %v5688
  %v5705 = vrot.slane %v5345, 3
  %v5706 = vrot.slane %v5346, 3
  %v5707 = vrot.slane %v5347, 3
  %v5708 = vrot.slane %v5348, 3
  %v5709 = vrot.slane %v5349, 3
  %v5710 = vrot.slane %v5350, 3
  %v5711 = vrot.slane %v5351, 3
  %v5712 = vrot.slane %v5352, 3
  %v5721 = vxor.u32 %v5705, 2147483648
  %v5722 = vxor.u32 %v5706, 2147483648
  %v5723 = vxor.u32 %v5707, 2147483648
  %v5724 = vxor.u32 %v5708, 2147483648
  %v5725 = vxor.u32 %v5709, 2147483648
  %v5726 = vxor.u32 %v5710, 2147483648
  %v5727 = vxor.u32 %v5711, 2147483648
  %v5728 = vxor.u32 %v5712, 2147483648
  %v5729 = vmul.f32 %v5721, 1.442695
  %v5730 = vpow.pop %v5729
  %v5731 = vmul.f32 %v5722, 1.442695
  %v5732 = vpow.pop %v5731
  %v5733 = vmul.f32 %v5723, 1.442695
  %v5734 = vpow.pop %v5733
  %v5735 = vmul.f32 %v5724, 1.442695
  %v5736 = vpow.pop %v5735
  %v5737 = vmul.f32 %v5725, 1.442695
  %v5738 = vpow.pop %v5737
  %v5739 = vmul.f32 %v5726, 1.442695
  %v5740 = vpow.pop %v5739
  %v5741 = vmul.f32 %v5727, 1.442695
  %v5742 = vpow.pop %v5741
  %v5743 = vmul.f32 %v5728, 1.442695
  %v5744 = vpow.pop %v5743
  %v5745 = vadd.f32 %v5730, 1.0
  %v5746 = vadd.f32 %v5732, 1.0
  %v5747 = vadd.f32 %v5734, 1.0
  %v5748 = vadd.f32 %v5736, 1.0
  %v5749 = vadd.f32 %v5738, 1.0
  %v5750 = vadd.f32 %v5740, 1.0
  %v5751 = vadd.f32 %v5742, 1.0
  %v5752 = vadd.f32 %v5744, 1.0
  %v5753 = vrcp.pop %v5745
  %v5754 = vmul.f32 %v5745, %v5753
  %v5755 = vsub.f32 1.0, %v5754
  %v5756 = vmul.f32 %v5753, %v5755
  %v5757 = vadd.f32 %v5753, %v5756
  %vm5758 = vweird.f32 %v5745
  %vm5759 = vweird.f32 %v5753
  %vm5760 = vmor %vm5758, %vm5759
  %v5761 = vsel %vm5760, %v5753, %v5757
  %v5762 = vand.u32 2147483647, %v5745
  %vm5763 = vcmp.eq.f32.partialorder %v5762, 8.507059e+37
  %v5764 = vand.u32 %v5745, 2147483648
  %v5765 = vor.u32 1.1754944e-38, %v5764
  %v5766 = vsel %vm5763, %v5765, %v5761
  %v5767 = vmul.f32 1.0, %v5766
  %v5768 = vrcp.pop %v5746
  %v5769 = vmul.f32 %v5746, %v5768
  %v5770 = vsub.f32 1.0, %v5769
  %v5771 = vmul.f32 %v5768, %v5770
  %v5772 = vadd.f32 %v5768, %v5771
  %vm5773 = vweird.f32 %v5746
  %vm5774 = vweird.f32 %v5768
  %vm5775 = vmor %vm5773, %vm5774
  %v5776 = vsel %vm5775, %v5768, %v5772
  %v5777 = vand.u32 2147483647, %v5746
  %vm5778 = vcmp.eq.f32.partialorder %v5777, 8.507059e+37
  %v5779 = vand.u32 %v5746, 2147483648
  %v5780 = vor.u32 1.1754944e-38, %v5779
  %v5781 = vsel %vm5778, %v5780, %v5776
  %v5782 = vmul.f32 1.0, %v5781
  %v5783 = vrcp.pop %v5747
  %v5784 = vmul.f32 %v5747, %v5783
  %v5785 = vsub.f32 1.0, %v5784
  %v5786 = vmul.f32 %v5783, %v5785
  %v5787 = vadd.f32 %v5783, %v5786
  %vm5788 = vweird.f32 %v5747
  %vm5789 = vweird.f32 %v5783
  %vm5790 = vmor %vm5788, %vm5789
  %v5791 = vsel %vm5790, %v5783, %v5787
  %v5792 = vand.u32 2147483647, %v5747
  %vm5793 = vcmp.eq.f32.partialorder %v5792, 8.507059e+37
  %v5794 = vand.u32 %v5747, 2147483648
  %v5795 = vor.u32 1.1754944e-38, %v5794
  %v5796 = vsel %vm5793, %v5795, %v5791
  %v5797 = vmul.f32 1.0, %v5796
  %v5798 = vrcp.pop %v5748
  %v5799 = vmul.f32 %v5748, %v5798
  %v5800 = vsub.f32 1.0, %v5799
  %v5801 = vmul.f32 %v5798, %v5800
  %v5802 = vadd.f32 %v5798, %v5801
  %vm5803 = vweird.f32 %v5748
  %vm5804 = vweird.f32 %v5798
  %vm5805 = vmor %vm5803, %vm5804
  %v5806 = vsel %vm5805, %v5798, %v5802
  %v5807 = vand.u32 2147483647, %v5748
  %vm5808 = vcmp.eq.f32.partialorder %v5807, 8.507059e+37
  %v5809 = vand.u32 %v5748, 2147483648
  %v5810 = vor.u32 1.1754944e-38, %v5809
  %v5811 = vsel %vm5808, %v5810, %v5806
  %v5812 = vmul.f32 1.0, %v5811
  %v5813 = vrcp.pop %v5749
  %v5814 = vmul.f32 %v5749, %v5813
  %v5815 = vsub.f32 1.0, %v5814
  %v5816 = vmul.f32 %v5813, %v5815
  %v5817 = vadd.f32 %v5813, %v5816
  %vm5818 = vweird.f32 %v5749
  %vm5819 = vweird.f32 %v5813
  %vm5820 = vmor %vm5818, %vm5819
  %v5821 = vsel %vm5820, %v5813, %v5817
  %v5822 = vand.u32 2147483647, %v5749
  %vm5823 = vcmp.eq.f32.partialorder %v5822, 8.507059e+37
  %v5824 = vand.u32 %v5749, 2147483648
  %v5825 = vor.u32 1.1754944e-38, %v5824
  %v5826 = vsel %vm5823, %v5825, %v5821
  %v5827 = vmul.f32 1.0, %v5826
  %v5828 = vrcp.pop %v5750
  %v5829 = vmul.f32 %v5750, %v5828
  %v5830 = vsub.f32 1.0, %v5829
  %v5831 = vmul.f32 %v5828, %v5830
  %v5832 = vadd.f32 %v5828, %v5831
  %vm5833 = vweird.f32 %v5750
  %vm5834 = vweird.f32 %v5828
  %vm5835 = vmor %vm5833, %vm5834
  %v5836 = vsel %vm5835, %v5828, %v5832
  %v5837 = vand.u32 2147483647, %v5750
  %vm5838 = vcmp.eq.f32.partialorder %v5837, 8.507059e+37
  %v5839 = vand.u32 %v5750, 2147483648
  %v5840 = vor.u32 1.1754944e-38, %v5839
  %v5841 = vsel %vm5838, %v5840, %v5836
  %v5842 = vmul.f32 1.0, %v5841
  %v5843 = vrcp.pop %v5751
  %v5844 = vmul.f32 %v5751, %v5843
  %v5845 = vsub.f32 1.0, %v5844
  %v5846 = vmul.f32 %v5843, %v5845
  %v5847 = vadd.f32 %v5843, %v5846
  %vm5848 = vweird.f32 %v5751
  %vm5849 = vweird.f32 %v5843
  %vm5850 = vmor %vm5848, %vm5849
  %v5851 = vsel %vm5850, %v5843, %v5847
  %v5852 = vand.u32 2147483647, %v5751
  %vm5853 = vcmp.eq.f32.partialorder %v5852, 8.507059e+37
  %v5854 = vand.u32 %v5751, 2147483648
  %v5855 = vor.u32 1.1754944e-38, %v5854
  %v5856 = vsel %vm5853, %v5855, %v5851
  %v5857 = vmul.f32 1.0, %v5856
  %v5858 = vrcp.pop %v5752
  %v5859 = vmul.f32 %v5752, %v5858
  %v5860 = vsub.f32 1.0, %v5859
  %v5861 = vmul.f32 %v5858, %v5860
  %v5862 = vadd.f32 %v5858, %v5861
  %vm5863 = vweird.f32 %v5752
  %vm5864 = vweird.f32 %v5858
  %vm5865 = vmor %vm5863, %vm5864
  %v5866 = vsel %vm5865, %v5858, %v5862
  %v5867 = vand.u32 2147483647, %v5752
  %vm5868 = vcmp.eq.f32.partialorder %v5867, 8.507059e+37
  %v5869 = vand.u32 %v5752, 2147483648
  %v5870 = vor.u32 1.1754944e-38, %v5869
  %v5871 = vsel %vm5868, %v5870, %v5866
  %v5872 = vmul.f32 1.0, %v5871
  %v5873 = vld [vmem:[#allocation3] sm:$0xff]
  %v5875 = vrot.slane %v5873, 1
  %v5876 = vrot.slane %v5873, 2
  %v5877 = vrot.slane %v5873, 3
  %v5878 = vrot.slane %v5873, 4
  %v5879 = vrot.slane %v5873, 5
  %v5880 = vrot.slane %v5873, 6
  %v5881 = vrot.slane %v5873, 7
  %v5889 = vmul.f32 %v5575, %v5873
  %v5890 = vmul.f32 %v5590, %v5875
  %v5891 = vmul.f32 %v5605, %v5876
  %v5892 = vmul.f32 %v5620, %v5877
  %v5893 = vmul.f32 %v5635, %v5878
  %v5894 = vmul.f32 %v5650, %v5879
  %v5895 = vmul.f32 %v5665, %v5880
  %v5896 = vmul.f32 %v5680, %v5881
  %v5897 = vmul.f32 %v5399, %v5697
  %v5898 = vmul.f32 %v5414, %v5698
  %v5899 = vmul.f32 %v5429, %v5699
  %v5900 = vmul.f32 %v5444, %v5700
  %v5901 = vmul.f32 %v5459, %v5701
  %v5902 = vmul.f32 %v5474, %v5702
  %v5903 = vmul.f32 %v5489, %v5703
  %v5904 = vmul.f32 %v5504, %v5704
  %v5905 = vadd.f32 %v5889, %v5897
  %v5906 = vadd.f32 %v5890, %v5898
  %v5907 = vadd.f32 %v5891, %v5899
  %v5908 = vadd.f32 %v5892, %v5900
  %v5909 = vadd.f32 %v5893, %v5901
  %v5910 = vadd.f32 %v5894, %v5902
  %v5911 = vadd.f32 %v5895, %v5903
  %v5912 = vadd.f32 %v5896, %v5904
  %v5913 = vtanh.pop %v5905
  %v5914 = vtanh.pop %v5906
  %v5915 = vtanh.pop %v5907
  %v5916 = vtanh.pop %v5908
  %v5917 = vtanh.pop %v5909
  %v5918 = vtanh.pop %v5910
  %v5919 = vtanh.pop %v5911
  %v5920 = vtanh.pop %v5912
  %v5921 = vmul.f32 %v5767, %v5913
  %v5922 = vmul.f32 %v5782, %v5914
  %v5923 = vmul.f32 %v5797, %v5915
  %v5924 = vmul.f32 %v5812, %v5916
  %v5925 = vmul.f32 %v5827, %v5917
  %v5926 = vmul.f32 %v5842, %v5918
  %v5927 = vmul.f32 %v5857, %v5919
  %v5928 = vmul.f32 %v5872, %v5920
  %5937 = vst [vmem:[#allocation1] ss:$9 sm:$0xff] %v5905
  %s5938 = scalar_lea.vmem [#allocation1], 1
  %5939 = vst [vmem:[%s5938] ss:$9 sm:$0xff] %v5906
  %s5940 = scalar_lea.vmem [#allocation1], 2
  %5941 = vst [vmem:[%s5940] ss:$9 sm:$0xff] %v5907
  %s5942 = scalar_lea.vmem [#allocation1], 3
  %5943 = vst [vmem:[%s5942] ss:$9 sm:$0xff] %v5908
  %s5944 = scalar_lea.vmem [#allocation1], 4
  %5945 = vst [vmem:[%s5944] ss:$9 sm:$0xff] %v5909
  %s5946 = scalar_lea.vmem [#allocation1], 5
  %5947 = vst [vmem:[%s5946] ss:$9 sm:$0xff] %v5910
  %s5948 = scalar_lea.vmem [#allocation1], 6
  %5949 = vst [vmem:[%s5948] ss:$9 sm:$0xff] %v5911
  %s5950 = scalar_lea.vmem [#allocation1], 7
  %5951 = vst [vmem:[%s5950] ss:$9 sm:$0xff] %v5912
  %v5952 = vld [vmem:[#allocation1] sm:$0xff]
  %5954 = vst [vmem:[#allocation3] sm:$0xff] %v5952
  %5963 = vst [vmem:[#allocation1] ss:$9 sm:$0xff] %v5921
  %s5964 = scalar_lea.vmem [#allocation1], 1
  %5965 = vst [vmem:[%s5964] ss:$9 sm:$0xff] %v5922
  %s5966 = scalar_lea.vmem [#allocation1], 2
  %5967 = vst [vmem:[%s5966] ss:$9 sm:$0xff] %v5923
  %s5968 = scalar_lea.vmem [#allocation1], 3
  %5969 = vst [vmem:[%s5968] ss:$9 sm:$0xff] %v5924
  %s5970 = scalar_lea.vmem [#allocation1], 4
  %5971 = vst [vmem:[%s5970] ss:$9 sm:$0xff] %v5925
  %s5972 = scalar_lea.vmem [#allocation1], 5
  %5973 = vst [vmem:[%s5972] ss:$9 sm:$0xff] %v5926
  %s5974 = scalar_lea.vmem [#allocation1], 6
  %5975 = vst [vmem:[%s5974] ss:$9 sm:$0xff] %v5927
  %s5976 = scalar_lea.vmem [#allocation1], 7
  %5977 = vst [vmem:[%s5976] ss:$9 sm:$0xff] %v5928
  %v5978 = vld [vmem:[#allocation1] sm:$0xff]
  %5980 = vst [vmem:[#allocation2] sm:$0xff] %v5978
  %5981 = vst [vmem:[%s2 + $0x6] sm:$0x1] %v5921
  %5982 = vst [vmem:[%s2 + $0xe] sm:$0x1] %v5922
  %5983 = vst [vmem:[%s2 + $0x16] sm:$0x1] %v5923
  %5984 = vst [vmem:[%s2 + $0x1e] sm:$0x1] %v5924
  %5985 = vst [vmem:[%s2 + $0x26] sm:$0x1] %v5925
  %5986 = vst [vmem:[%s2 + $0x2e] sm:$0x1] %v5926
  %5987 = vst [vmem:[%s2 + $0x36] sm:$0x1] %v5927
  %5988 = vst [vmem:[%s2 + $0x3e] sm:$0x1] %v5928
  %s5989 = scalar_lea.vmem %s0, 7
  %v5990 = vld [vmem:[%s5989] ss:$8 sm:$0xf]
  %s5991 = scalar_lea.vmem %s0, 39
  %v5992 = vld [vmem:[%s5991] ss:$8 sm:$0xf]
  %s5993 = scalar_lea.vmem %s0, 71
  %v5994 = vld [vmem:[%s5993] ss:$8 sm:$0xf]
  %s5995 = scalar_lea.vmem %s0, 103
  %v5996 = vld [vmem:[%s5995] ss:$8 sm:$0xf]
  %s5997 = scalar_lea.vmem %s0, 135
  %v5998 = vld [vmem:[%s5997] ss:$8 sm:$0xf]
  %s5999 = scalar_lea.vmem %s0, 167
  %v6000 = vld [vmem:[%s5999] ss:$8 sm:$0xf]
  %s6001 = scalar_lea.vmem %s0, 199
  %v6002 = vld [vmem:[%s6001] ss:$8 sm:$0xf]
  %s6003 = scalar_lea.vmem %s0, 231
  %v6004 = vld [vmem:[%s6003] ss:$8 sm:$0xf]
  %v6005 = vld [vmem:[#allocation2] sm:$0xff]
  %v6006 = vld [vmem:[%s1] sm:$0xff]
  %v6007 = vld [vmem:[%s1 + $0x8] sm:$0xff]
  %v6008 = vld [vmem:[%s1 + $0x10] sm:$0xff]
  %v6009 = vld [vmem:[%s1 + $0x18] sm:$0xff]
  %v6010 = vld [vmem:[%s1 + $0x20] sm:$0xff]
  %v6011 = vld [vmem:[%s1 + $0x28] sm:$0xff]
  %v6012 = vld [vmem:[%s1 + $0x30] sm:$0xff]
  %v6013 = vld [vmem:[%s1 + $0x38] sm:$0xff]
  %v6014 = vld [vmem:[%s1 + $0x40] sm:$0xff]
  %v6015 = vld [vmem:[%s1 + $0x48] sm:$0xff]
  %v6016 = vld [vmem:[%s1 + $0x50] sm:$0xff]
  %v6017 = vld [vmem:[%s1 + $0x58] sm:$0xff]
  %v6018 = vld [vmem:[%s1 + $0x60] sm:$0xff]
  %v6019 = vld [vmem:[%s1 + $0x68] sm:$0xff]
  %v6020 = vld [vmem:[%s1 + $0x70] sm:$0xff]
  %v6021 = vld [vmem:[%s1 + $0x78] sm:$0xff]
  %v6022 = vld [vmem:[%s1 + $0x80] sm:$0xff]
  %v6023 = vld [vmem:[%s1 + $0x88] sm:$0xff]
  %v6024 = vld [vmem:[%s1 + $0x90] sm:$0xff]
  %v6025 = vld [vmem:[%s1 + $0x98] sm:$0xff]
  %v6026 = vld [vmem:[%s1 + $0xa0] sm:$0xff]
  %v6027 = vld [vmem:[%s1 + $0xa8] sm:$0xff]
  %v6028 = vld [vmem:[%s1 + $0xb0] sm:$0xff]
  %v6029 = vld [vmem:[%s1 + $0xb8] sm:$0xff]
  %v6030 = vld [vmem:[%s1 + $0xc0] sm:$0xff]
  %v6031 = vld [vmem:[%s1 + $0xc8] sm:$0xff]
  %v6032 = vld [vmem:[%s1 + $0xd0] sm:$0xff]
  %v6033 = vld [vmem:[%s1 + $0xd8] sm:$0xff]
  %v6034 = vld [vmem:[%s1 + $0xe0] sm:$0xff]
  %v6035 = vld [vmem:[%s1 + $0xe8] sm:$0xff]
  %v6036 = vld [vmem:[%s1 + $0xf0] sm:$0xff]
  %v6037 = vld [vmem:[%s1 + $0xf8] sm:$0xff]
  %v6038 = vld [vmem:[%s1 + $0x100] sm:$0xff]
  %v6039 = vld [vmem:[%s1 + $0x108] sm:$0xff]
  %v6040 = vld [vmem:[%s1 + $0x110] sm:$0xff]
  %v6041 = vld [vmem:[%s1 + $0x118] sm:$0xff]
  %v6042 = vld [vmem:[%s1 + $0x120] sm:$0xff]
  %v6043 = vld [vmem:[%s1 + $0x128] sm:$0xff]
  %v6044 = vld [vmem:[%s1 + $0x130] sm:$0xff]
  %v6045 = vld [vmem:[%s1 + $0x138] sm:$0xff]
  %v6046 = vld [vmem:[%s1 + $0x140] sm:$0xff]
  %v6047 = vld [vmem:[%s1 + $0x148] sm:$0xff]
  %v6048 = vld [vmem:[%s1 + $0x150] sm:$0xff]
  %v6049 = vld [vmem:[%s1 + $0x158] sm:$0xff]
  %v6050 = vld [vmem:[%s1 + $0x160] sm:$0xff]
  %v6051 = vld [vmem:[%s1 + $0x168] sm:$0xff]
  %v6052 = vld [vmem:[%s1 + $0x170] sm:$0xff]
  %v6053 = vld [vmem:[%s1 + $0x178] sm:$0xff]
  %v6054 = vld [vmem:[%s1 + $0x180] sm:$0xff]
  %v6055 = vld [vmem:[%s1 + $0x188] sm:$0xff]
  %v6056 = vld [vmem:[%s1 + $0x190] sm:$0xff]
  %v6057 = vld [vmem:[%s1 + $0x198] sm:$0xff]
  %v6058 = vld [vmem:[%s1 + $0x1a0] sm:$0xff]
  %v6059 = vld [vmem:[%s1 + $0x1a8] sm:$0xff]
  %v6060 = vld [vmem:[%s1 + $0x1b0] sm:$0xff]
  %v6061 = vld [vmem:[%s1 + $0x1b8] sm:$0xff]
  %v6062 = vld [vmem:[%s1 + $0x1c0] sm:$0xff]
  %v6063 = vld [vmem:[%s1 + $0x1c8] sm:$0xff]
  %v6064 = vld [vmem:[%s1 + $0x1d0] sm:$0xff]
  %v6065 = vld [vmem:[%s1 + $0x1d8] sm:$0xff]
  %v6066 = vld [vmem:[%s1 + $0x1e0] sm:$0xff]
  %v6067 = vld [vmem:[%s1 + $0x1e8] sm:$0xff]
  %v6068 = vld [vmem:[%s1 + $0x1f0] sm:$0xff]
  %v6069 = vld [vmem:[%s1 + $0x1f8] sm:$0xff]
  %6070 = vmatpush.msra.mxu0 %v6066
  %6071 = vmatpush.msra.mxu0 %v6062
  %6072 = vmatpush.msra.mxu0 %v6058
  %6073 = vmatpush.msra.mxu0 %v6054
  %6074 = vmatpush.msra.mxu0 %v6050
  %6075 = vmatpush.msra.mxu0 %v6046
  %6076 = vmatpush.msra.mxu0 %v6042
  %6077 = vmatpush.msra.mxu0 %v6038
  %6078 = vmatpush.msra.mxu0 %v6034
  %6079 = vmatpush.msra.mxu0 %v6030
  %6080 = vmatpush.msra.mxu0 %v6026
  %6081 = vmatpush.msra.mxu0 %v6022
  %6082 = vmatpush.msra.mxu0 %v6018
  %6083 = vmatpush.msra.mxu0 %v6014
  %6084 = vmatpush.msra.mxu0 %v6010
  %6085 = vmatpush.msra.mxu0 %v6006
  %6086 = vmatmul.f32.gmra.mxu0 %v6005
  %v6087 = vpop.f32.mrf.mxu0
  %v6088 = vadd.f32 0.0, %v6087
  %6089 = vdwg.mxu0
  %6090 = vmatpush.msra.mxu0 %v6067
  %6091 = vmatpush.msra.mxu0 %v6063
  %6092 = vmatpush.msra.mxu0 %v6059
  %6093 = vmatpush.msra.mxu0 %v6055
  %6094 = vmatpush.msra.mxu0 %v6051
  %6095 = vmatpush.msra.mxu0 %v6047
  %6096 = vmatpush.msra.mxu0 %v6043
  %6097 = vmatpush.msra.mxu0 %v6039
  %6098 = vmatpush.msra.mxu0 %v6035
  %6099 = vmatpush.msra.mxu0 %v6031
  %6100 = vmatpush.msra.mxu0 %v6027
  %6101 = vmatpush.msra.mxu0 %v6023
  %6102 = vmatpush.msra.mxu0 %v6019
  %6103 = vmatpush.msra.mxu0 %v6015
  %6104 = vmatpush.msra.mxu0 %v6011
  %6105 = vmatpush.msra.mxu0 %v6007
  %6106 = vmatmul.f32.gmra.mxu0 %v6005
  %v6107 = vpop.f32.mrf.mxu0
  %v6108 = vadd.f32 0.0, %v6107
  %6109 = vdwg.mxu0
  %6110 = vmatpush.msra.mxu0 %v6068
  %6111 = vmatpush.msra.mxu0 %v6064
  %6112 = vmatpush.msra.mxu0 %v6060
  %6113 = vmatpush.msra.mxu0 %v6056
  %6114 = vmatpush.msra.mxu0 %v6052
  %6115 = vmatpush.msra.mxu0 %v6048
  %6116 = vmatpush.msra.mxu0 %v6044
  %6117 = vmatpush.msra.mxu0 %v6040
  %6118 = vmatpush.msra.mxu0 %v6036
  %6119 = vmatpush.msra.mxu0 %v6032
  %6120 = vmatpush.msra.mxu0 %v6028
  %6121 = vmatpush.msra.mxu0 %v6024
  %6122 = vmatpush.msra.mxu0 %v6020
  %6123 = vmatpush.msra.mxu0 %v6016
  %6124 = vmatpush.msra.mxu0 %v6012
  %6125 = vmatpush.msra.mxu0 %v6008
  %6126 = vmatmul.f32.gmra.mxu0 %v6005
  %v6127 = vpop.f32.mrf.mxu0
  %v6128 = vadd.f32 0.0, %v6127
  %6129 = vdwg.mxu0
  %6130 = vmatpush.msra.mxu0 %v6069
  %6131 = vmatpush.msra.mxu0 %v6065
  %6132 = vmatpush.msra.mxu0 %v6061
  %6133 = vmatpush.msra.mxu0 %v6057
  %6134 = vmatpush.msra.mxu0 %v6053
  %6135 = vmatpush.msra.mxu0 %v6049
  %6136 = vmatpush.msra.mxu0 %v6045
  %6137 = vmatpush.msra.mxu0 %v6041
  %6138 = vmatpush.msra.mxu0 %v6037
  %6139 = vmatpush.msra.mxu0 %v6033
  %6140 = vmatpush.msra.mxu0 %v6029
  %6141 = vmatpush.msra.mxu0 %v6025
  %6142 = vmatpush.msra.mxu0 %v6021
  %6143 = vmatpush.msra.mxu0 %v6017
  %6144 = vmatpush.msra.mxu0 %v6013
  %6145 = vmatpush.msra.mxu0 %v6009
  %6146 = vmatmul.f32.gmra.mxu0 %v6005
  %v6147 = vpop.f32.mrf.mxu0
  %v6148 = vadd.f32 0.0, %v6147
  %6149 = vdwg.mxu0
  %v6154 = vrot.slane %v6108, 7
  %v6155 = vrot.slane %v6128, 6
  %v6156 = vrot.slane %v6148, 5
  %v6157 = vsel %vm184, %v6088, %v6154
  %v6158 = vsel %vm186, %v6155, %v6156
  %v6159 = vsel %vm188, %v6157, %v6158
  %v6160 = vsel %vm190, %v6088, %v6154
  %v6161 = vsel %vm192, %v6155, %v6156
  %v6162 = vsel %vm194, %v6160, %v6161
  %v6163 = vrot.slane %v6162, 1
  %v6164 = vsel %vm186, %v6088, %v6154
  %v6165 = vsel %vm198, %v6155, %v6156
  %v6166 = vsel %vm200, %v6164, %v6165
  %v6167 = vrot.slane %v6166, 2
  %v6168 = vsel %vm192, %v6088, %v6154
  %v6169 = vsel %vm204, %v6155, %v6156
  %v6170 = vsel %vm206, %v6168, %v6169
  %v6171 = vrot.slane %v6170, 3
  %v6172 = vsel %vm198, %v6088, %v6154
  %v6173 = vsel %vm210, %v6155, %v6156
  %v6174 = vsel %vm212, %v6172, %v6173
  %v6175 = vrot.slane %v6174, 4
  %v6176 = vsel %vm204, %v6088, %v6154
  %v6177 = vsel %vm216, %v6156, %v6155
  %v6178 = vsel %vm218, %v6176, %v6177
  %v6179 = vrot.slane %v6178, 5
  %v6180 = vsel %vm210, %v6088, %v6154
  %v6181 = vsel %vm184, %v6155, %v6156
  %v6182 = vsel %vm223, %v6181, %v6180
  %v6183 = vrot.slane %v6182, 6
  %v6184 = vsel %vm216, %v6154, %v6088
  %v6185 = vsel %vm190, %v6155, %v6156
  %v6186 = vsel %vm228, %v6185, %v6184
  %v6187 = vrot.slane %v6186, 7
  %v6196 = vadd.f32 %v5990, %v6159
  %v6197 = vadd.f32 %v5992, %v6163
  %v6198 = vadd.f32 %v5994, %v6167
  %v6199 = vadd.f32 %v5996, %v6171
  %v6200 = vadd.f32 %v5998, %v6175
  %v6201 = vadd.f32 %v6000, %v6179
  %v6202 = vadd.f32 %v6002, %v6183
  %v6203 = vadd.f32 %v6004, %v6187
  %v6204 = vxor.u32 %v6196, 2147483648
  %v6205 = vxor.u32 %v6197, 2147483648
  %v6206 = vxor.u32 %v6198, 2147483648
  %v6207 = vxor.u32 %v6199, 2147483648
  %v6208 = vxor.u32 %v6200, 2147483648
  %v6209 = vxor.u32 %v6201, 2147483648
  %v6210 = vxor.u32 %v6202, 2147483648
  %v6211 = vxor.u32 %v6203, 2147483648
  %v6212 = vmul.f32 %v6204, 1.442695
  %v6213 = vpow.pop %v6212
  %v6214 = vmul.f32 %v6205, 1.442695
  %v6215 = vpow.pop %v6214
  %v6216 = vmul.f32 %v6206, 1.442695
  %v6217 = vpow.pop %v6216
  %v6218 = vmul.f32 %v6207, 1.442695
  %v6219 = vpow.pop %v6218
  %v6220 = vmul.f32 %v6208, 1.442695
  %v6221 = vpow.pop %v6220
  %v6222 = vmul.f32 %v6209, 1.442695
  %v6223 = vpow.pop %v6222
  %v6224 = vmul.f32 %v6210, 1.442695
  %v6225 = vpow.pop %v6224
  %v6226 = vmul.f32 %v6211, 1.442695
  %v6227 = vpow.pop %v6226
  %v6228 = vadd.f32 %v6213, 1.0
  %v6229 = vadd.f32 %v6215, 1.0
  %v6230 = vadd.f32 %v6217, 1.0
  %v6231 = vadd.f32 %v6219, 1.0
  %v6232 = vadd.f32 %v6221, 1.0
  %v6233 = vadd.f32 %v6223, 1.0
  %v6234 = vadd.f32 %v6225, 1.0
  %v6235 = vadd.f32 %v6227, 1.0
  %v6236 = vrcp.pop %v6228
  %v6237 = vmul.f32 %v6228, %v6236
  %v6238 = vsub.f32 1.0, %v6237
  %v6239 = vmul.f32 %v6236, %v6238
  %v6240 = vadd.f32 %v6236, %v6239
  %vm6241 = vweird.f32 %v6228
  %vm6242 = vweird.f32 %v6236
  %vm6243 = vmor %vm6241, %vm6242
  %v6244 = vsel %vm6243, %v6236, %v6240
  %v6245 = vand.u32 2147483647, %v6228
  %vm6246 = vcmp.eq.f32.partialorder %v6245, 8.507059e+37
  %v6247 = vand.u32 %v6228, 2147483648
  %v6248 = vor.u32 1.1754944e-38, %v6247
  %v6249 = vsel %vm6246, %v6248, %v6244
  %v6250 = vmul.f32 1.0, %v6249
  %v6251 = vrcp.pop %v6229
  %v6252 = vmul.f32 %v6229, %v6251
  %v6253 = vsub.f32 1.0, %v6252
  %v6254 = vmul.f32 %v6251, %v6253
  %v6255 = vadd.f32 %v6251, %v6254
  %vm6256 = vweird.f32 %v6229
  %vm6257 = vweird.f32 %v6251
  %vm6258 = vmor %vm6256, %vm6257
  %v6259 = vsel %vm6258, %v6251, %v6255
  %v6260 = vand.u32 2147483647, %v6229
  %vm6261 = vcmp.eq.f32.partialorder %v6260, 8.507059e+37
  %v6262 = vand.u32 %v6229, 2147483648
  %v6263 = vor.u32 1.1754944e-38, %v6262
  %v6264 = vsel %vm6261, %v6263, %v6259
  %v6265 = vmul.f32 1.0, %v6264
  %v6266 = vrcp.pop %v6230
  %v6267 = vmul.f32 %v6230, %v6266
  %v6268 = vsub.f32 1.0, %v6267
  %v6269 = vmul.f32 %v6266, %v6268
  %v6270 = vadd.f32 %v6266, %v6269
  %vm6271 = vweird.f32 %v6230
  %vm6272 = vweird.f32 %v6266
  %vm6273 = vmor %vm6271, %vm6272
  %v6274 = vsel %vm6273, %v6266, %v6270
  %v6275 = vand.u32 2147483647, %v6230
  %vm6276 = vcmp.eq.f32.partialorder %v6275, 8.507059e+37
  %v6277 = vand.u32 %v6230, 2147483648
  %v6278 = vor.u32 1.1754944e-38, %v6277
  %v6279 = vsel %vm6276, %v6278, %v6274
  %v6280 = vmul.f32 1.0, %v6279
  %v6281 = vrcp.pop %v6231
  %v6282 = vmul.f32 %v6231, %v6281
  %v6283 = vsub.f32 1.0, %v6282
  %v6284 = vmul.f32 %v6281, %v6283
  %v6285 = vadd.f32 %v6281, %v6284
  %vm6286 = vweird.f32 %v6231
  %vm6287 = vweird.f32 %v6281
  %vm6288 = vmor %vm6286, %vm6287
  %v6289 = vsel %vm6288, %v6281, %v6285
  %v6290 = vand.u32 2147483647, %v6231
  %vm6291 = vcmp.eq.f32.partialorder %v6290, 8.507059e+37
  %v6292 = vand.u32 %v6231, 2147483648
  %v6293 = vor.u32 1.1754944e-38, %v6292
  %v6294 = vsel %vm6291, %v6293, %v6289
  %v6295 = vmul.f32 1.0, %v6294
  %v6296 = vrcp.pop %v6232
  %v6297 = vmul.f32 %v6232, %v6296
  %v6298 = vsub.f32 1.0, %v6297
  %v6299 = vmul.f32 %v6296, %v6298
  %v6300 = vadd.f32 %v6296, %v6299
  %vm6301 = vweird.f32 %v6232
  %vm6302 = vweird.f32 %v6296
  %vm6303 = vmor %vm6301, %vm6302
  %v6304 = vsel %vm6303, %v6296, %v6300
  %v6305 = vand.u32 2147483647, %v6232
  %vm6306 = vcmp.eq.f32.partialorder %v6305, 8.507059e+37
  %v6307 = vand.u32 %v6232, 2147483648
  %v6308 = vor.u32 1.1754944e-38, %v6307
  %v6309 = vsel %vm6306, %v6308, %v6304
  %v6310 = vmul.f32 1.0, %v6309
  %v6311 = vrcp.pop %v6233
  %v6312 = vmul.f32 %v6233, %v6311
  %v6313 = vsub.f32 1.0, %v6312
  %v6314 = vmul.f32 %v6311, %v6313
  %v6315 = vadd.f32 %v6311, %v6314
  %vm6316 = vweird.f32 %v6233
  %vm6317 = vweird.f32 %v6311
  %vm6318 = vmor %vm6316, %vm6317
  %v6319 = vsel %vm6318, %v6311, %v6315
  %v6320 = vand.u32 2147483647, %v6233
  %vm6321 = vcmp.eq.f32.partialorder %v6320, 8.507059e+37
  %v6322 = vand.u32 %v6233, 2147483648
  %v6323 = vor.u32 1.1754944e-38, %v6322
  %v6324 = vsel %vm6321, %v6323, %v6319
  %v6325 = vmul.f32 1.0, %v6324
  %v6326 = vrcp.pop %v6234
  %v6327 = vmul.f32 %v6234, %v6326
  %v6328 = vsub.f32 1.0, %v6327
  %v6329 = vmul.f32 %v6326, %v6328
  %v6330 = vadd.f32 %v6326, %v6329
  %vm6331 = vweird.f32 %v6234
  %vm6332 = vweird.f32 %v6326
  %vm6333 = vmor %vm6331, %vm6332
  %v6334 = vsel %vm6333, %v6326, %v6330
  %v6335 = vand.u32 2147483647, %v6234
  %vm6336 = vcmp.eq.f32.partialorder %v6335, 8.507059e+37
  %v6337 = vand.u32 %v6234, 2147483648
  %v6338 = vor.u32 1.1754944e-38, %v6337
  %v6339 = vsel %vm6336, %v6338, %v6334
  %v6340 = vmul.f32 1.0, %v6339
  %v6341 = vrcp.pop %v6235
  %v6342 = vmul.f32 %v6235, %v6341
  %v6343 = vsub.f32 1.0, %v6342
  %v6344 = vmul.f32 %v6341, %v6343
  %v6345 = vadd.f32 %v6341, %v6344
  %vm6346 = vweird.f32 %v6235
  %vm6347 = vweird.f32 %v6341
  %vm6348 = vmor %vm6346, %vm6347
  %v6349 = vsel %vm6348, %v6341, %v6345
  %v6350 = vand.u32 2147483647, %v6235
  %vm6351 = vcmp.eq.f32.partialorder %v6350, 8.507059e+37
  %v6352 = vand.u32 %v6235, 2147483648
  %v6353 = vor.u32 1.1754944e-38, %v6352
  %v6354 = vsel %vm6351, %v6353, %v6349
  %v6355 = vmul.f32 1.0, %v6354
  %v6364 = vrot.slane %v6196, 1
  %v6365 = vrot.slane %v6197, 1
  %v6366 = vrot.slane %v6198, 1
  %v6367 = vrot.slane %v6199, 1
  %v6368 = vrot.slane %v6200, 1
  %v6369 = vrot.slane %v6201, 1
  %v6370 = vrot.slane %v6202, 1
  %v6371 = vrot.slane %v6203, 1
  %v6380 = vxor.u32 %v6364, 2147483648
  %v6381 = vxor.u32 %v6365, 2147483648
  %v6382 = vxor.u32 %v6366, 2147483648
  %v6383 = vxor.u32 %v6367, 2147483648
  %v6384 = vxor.u32 %v6368, 2147483648
  %v6385 = vxor.u32 %v6369, 2147483648
  %v6386 = vxor.u32 %v6370, 2147483648
  %v6387 = vxor.u32 %v6371, 2147483648
  %v6388 = vmul.f32 %v6380, 1.442695
  %v6389 = vpow.pop %v6388
  %v6390 = vmul.f32 %v6381, 1.442695
  %v6391 = vpow.pop %v6390
  %v6392 = vmul.f32 %v6382, 1.442695
  %v6393 = vpow.pop %v6392
  %v6394 = vmul.f32 %v6383, 1.442695
  %v6395 = vpow.pop %v6394
  %v6396 = vmul.f32 %v6384, 1.442695
  %v6397 = vpow.pop %v6396
  %v6398 = vmul.f32 %v6385, 1.442695
  %v6399 = vpow.pop %v6398
  %v6400 = vmul.f32 %v6386, 1.442695
  %v6401 = vpow.pop %v6400
  %v6402 = vmul.f32 %v6387, 1.442695
  %v6403 = vpow.pop %v6402
  %v6404 = vadd.f32 %v6389, 1.0
  %v6405 = vadd.f32 %v6391, 1.0
  %v6406 = vadd.f32 %v6393, 1.0
  %v6407 = vadd.f32 %v6395, 1.0
  %v6408 = vadd.f32 %v6397, 1.0
  %v6409 = vadd.f32 %v6399, 1.0
  %v6410 = vadd.f32 %v6401, 1.0
  %v6411 = vadd.f32 %v6403, 1.0
  %v6412 = vrcp.pop %v6404
  %v6413 = vmul.f32 %v6404, %v6412
  %v6414 = vsub.f32 1.0, %v6413
  %v6415 = vmul.f32 %v6412, %v6414
  %v6416 = vadd.f32 %v6412, %v6415
  %vm6417 = vweird.f32 %v6404
  %vm6418 = vweird.f32 %v6412
  %vm6419 = vmor %vm6417, %vm6418
  %v6420 = vsel %vm6419, %v6412, %v6416
  %v6421 = vand.u32 2147483647, %v6404
  %vm6422 = vcmp.eq.f32.partialorder %v6421, 8.507059e+37
  %v6423 = vand.u32 %v6404, 2147483648
  %v6424 = vor.u32 1.1754944e-38, %v6423
  %v6425 = vsel %vm6422, %v6424, %v6420
  %v6426 = vmul.f32 1.0, %v6425
  %v6427 = vrcp.pop %v6405
  %v6428 = vmul.f32 %v6405, %v6427
  %v6429 = vsub.f32 1.0, %v6428
  %v6430 = vmul.f32 %v6427, %v6429
  %v6431 = vadd.f32 %v6427, %v6430
  %vm6432 = vweird.f32 %v6405
  %vm6433 = vweird.f32 %v6427
  %vm6434 = vmor %vm6432, %vm6433
  %v6435 = vsel %vm6434, %v6427, %v6431
  %v6436 = vand.u32 2147483647, %v6405
  %vm6437 = vcmp.eq.f32.partialorder %v6436, 8.507059e+37
  %v6438 = vand.u32 %v6405, 2147483648
  %v6439 = vor.u32 1.1754944e-38, %v6438
  %v6440 = vsel %vm6437, %v6439, %v6435
  %v6441 = vmul.f32 1.0, %v6440
  %v6442 = vrcp.pop %v6406
  %v6443 = vmul.f32 %v6406, %v6442
  %v6444 = vsub.f32 1.0, %v6443
  %v6445 = vmul.f32 %v6442, %v6444
  %v6446 = vadd.f32 %v6442, %v6445
  %vm6447 = vweird.f32 %v6406
  %vm6448 = vweird.f32 %v6442
  %vm6449 = vmor %vm6447, %vm6448
  %v6450 = vsel %vm6449, %v6442, %v6446
  %v6451 = vand.u32 2147483647, %v6406
  %vm6452 = vcmp.eq.f32.partialorder %v6451, 8.507059e+37
  %v6453 = vand.u32 %v6406, 2147483648
  %v6454 = vor.u32 1.1754944e-38, %v6453
  %v6455 = vsel %vm6452, %v6454, %v6450
  %v6456 = vmul.f32 1.0, %v6455
  %v6457 = vrcp.pop %v6407
  %v6458 = vmul.f32 %v6407, %v6457
  %v6459 = vsub.f32 1.0, %v6458
  %v6460 = vmul.f32 %v6457, %v6459
  %v6461 = vadd.f32 %v6457, %v6460
  %vm6462 = vweird.f32 %v6407
  %vm6463 = vweird.f32 %v6457
  %vm6464 = vmor %vm6462, %vm6463
  %v6465 = vsel %vm6464, %v6457, %v6461
  %v6466 = vand.u32 2147483647, %v6407
  %vm6467 = vcmp.eq.f32.partialorder %v6466, 8.507059e+37
  %v6468 = vand.u32 %v6407, 2147483648
  %v6469 = vor.u32 1.1754944e-38, %v6468
  %v6470 = vsel %vm6467, %v6469, %v6465
  %v6471 = vmul.f32 1.0, %v6470
  %v6472 = vrcp.pop %v6408
  %v6473 = vmul.f32 %v6408, %v6472
  %v6474 = vsub.f32 1.0, %v6473
  %v6475 = vmul.f32 %v6472, %v6474
  %v6476 = vadd.f32 %v6472, %v6475
  %vm6477 = vweird.f32 %v6408
  %vm6478 = vweird.f32 %v6472
  %vm6479 = vmor %vm6477, %vm6478
  %v6480 = vsel %vm6479, %v6472, %v6476
  %v6481 = vand.u32 2147483647, %v6408
  %vm6482 = vcmp.eq.f32.partialorder %v6481, 8.507059e+37
  %v6483 = vand.u32 %v6408, 2147483648
  %v6484 = vor.u32 1.1754944e-38, %v6483
  %v6485 = vsel %vm6482, %v6484, %v6480
  %v6486 = vmul.f32 1.0, %v6485
  %v6487 = vrcp.pop %v6409
  %v6488 = vmul.f32 %v6409, %v6487
  %v6489 = vsub.f32 1.0, %v6488
  %v6490 = vmul.f32 %v6487, %v6489
  %v6491 = vadd.f32 %v6487, %v6490
  %vm6492 = vweird.f32 %v6409
  %vm6493 = vweird.f32 %v6487
  %vm6494 = vmor %vm6492, %vm6493
  %v6495 = vsel %vm6494, %v6487, %v6491
  %v6496 = vand.u32 2147483647, %v6409
  %vm6497 = vcmp.eq.f32.partialorder %v6496, 8.507059e+37
  %v6498 = vand.u32 %v6409, 2147483648
  %v6499 = vor.u32 1.1754944e-38, %v6498
  %v6500 = vsel %vm6497, %v6499, %v6495
  %v6501 = vmul.f32 1.0, %v6500
  %v6502 = vrcp.pop %v6410
  %v6503 = vmul.f32 %v6410, %v6502
  %v6504 = vsub.f32 1.0, %v6503
  %v6505 = vmul.f32 %v6502, %v6504
  %v6506 = vadd.f32 %v6502, %v6505
  %vm6507 = vweird.f32 %v6410
  %vm6508 = vweird.f32 %v6502
  %vm6509 = vmor %vm6507, %vm6508
  %v6510 = vsel %vm6509, %v6502, %v6506
  %v6511 = vand.u32 2147483647, %v6410
  %vm6512 = vcmp.eq.f32.partialorder %v6511, 8.507059e+37
  %v6513 = vand.u32 %v6410, 2147483648
  %v6514 = vor.u32 1.1754944e-38, %v6513
  %v6515 = vsel %vm6512, %v6514, %v6510
  %v6516 = vmul.f32 1.0, %v6515
  %v6517 = vrcp.pop %v6411
  %v6518 = vmul.f32 %v6411, %v6517
  %v6519 = vsub.f32 1.0, %v6518
  %v6520 = vmul.f32 %v6517, %v6519
  %v6521 = vadd.f32 %v6517, %v6520
  %vm6522 = vweird.f32 %v6411
  %vm6523 = vweird.f32 %v6517
  %vm6524 = vmor %vm6522, %vm6523
  %v6525 = vsel %vm6524, %v6517, %v6521
  %v6526 = vand.u32 2147483647, %v6411
  %vm6527 = vcmp.eq.f32.partialorder %v6526, 8.507059e+37
  %v6528 = vand.u32 %v6411, 2147483648
  %v6529 = vor.u32 1.1754944e-38, %v6528
  %v6530 = vsel %vm6527, %v6529, %v6525
  %v6531 = vmul.f32 1.0, %v6530
  %v6532 = vrot.slane %v6196, 2
  %v6533 = vrot.slane %v6197, 2
  %v6534 = vrot.slane %v6198, 2
  %v6535 = vrot.slane %v6199, 2
  %v6536 = vrot.slane %v6200, 2
  %v6537 = vrot.slane %v6201, 2
  %v6538 = vrot.slane %v6202, 2
  %v6539 = vrot.slane %v6203, 2
  %v6548 = vtanh.pop %v6532
  %v6549 = vtanh.pop %v6533
  %v6550 = vtanh.pop %v6534
  %v6551 = vtanh.pop %v6535
  %v6552 = vtanh.pop %v6536
  %v6553 = vtanh.pop %v6537
  %v6554 = vtanh.pop %v6538
  %v6555 = vtanh.pop %v6539
  %v6556 = vrot.slane %v6196, 3
  %v6557 = vrot.slane %v6197, 3
  %v6558 = vrot.slane %v6198, 3
  %v6559 = vrot.slane %v6199, 3
  %v6560 = vrot.slane %v6200, 3
  %v6561 = vrot.slane %v6201, 3
  %v6562 = vrot.slane %v6202, 3
  %v6563 = vrot.slane %v6203, 3
  %v6572 = vxor.u32 %v6556, 2147483648
  %v6573 = vxor.u32 %v6557, 2147483648
  %v6574 = vxor.u32 %v6558, 2147483648
  %v6575 = vxor.u32 %v6559, 2147483648
  %v6576 = vxor.u32 %v6560, 2147483648
  %v6577 = vxor.u32 %v6561, 2147483648
  %v6578 = vxor.u32 %v6562, 2147483648
  %v6579 = vxor.u32 %v6563, 2147483648
  %v6580 = vmul.f32 %v6572, 1.442695
  %v6581 = vpow.pop %v6580
  %v6582 = vmul.f32 %v6573, 1.442695
  %v6583 = vpow.pop %v6582
  %v6584 = vmul.f32 %v6574, 1.442695
  %v6585 = vpow.pop %v6584
  %v6586 = vmul.f32 %v6575, 1.442695
  %v6587 = vpow.pop %v6586
  %v6588 = vmul.f32 %v6576, 1.442695
  %v6589 = vpow.pop %v6588
  %v6590 = vmul.f32 %v6577, 1.442695
  %v6591 = vpow.pop %v6590
  %v6592 = vmul.f32 %v6578, 1.442695
  %v6593 = vpow.pop %v6592
  %v6594 = vmul.f32 %v6579, 1.442695
  %v6595 = vpow.pop %v6594
  %v6596 = vadd.f32 %v6581, 1.0
  %v6597 = vadd.f32 %v6583, 1.0
  %v6598 = vadd.f32 %v6585, 1.0
  %v6599 = vadd.f32 %v6587, 1.0
  %v6600 = vadd.f32 %v6589, 1.0
  %v6601 = vadd.f32 %v6591, 1.0
  %v6602 = vadd.f32 %v6593, 1.0
  %v6603 = vadd.f32 %v6595, 1.0
  %v6604 = vrcp.pop %v6596
  %v6605 = vmul.f32 %v6596, %v6604
  %v6606 = vsub.f32 1.0, %v6605
  %v6607 = vmul.f32 %v6604, %v6606
  %v6608 = vadd.f32 %v6604, %v6607
  %vm6609 = vweird.f32 %v6596
  %vm6610 = vweird.f32 %v6604
  %vm6611 = vmor %vm6609, %vm6610
  %v6612 = vsel %vm6611, %v6604, %v6608
  %v6613 = vand.u32 2147483647, %v6596
  %vm6614 = vcmp.eq.f32.partialorder %v6613, 8.507059e+37
  %v6615 = vand.u32 %v6596, 2147483648
  %v6616 = vor.u32 1.1754944e-38, %v6615
  %v6617 = vsel %vm6614, %v6616, %v6612
  %v6618 = vmul.f32 1.0, %v6617
  %v6619 = vrcp.pop %v6597
  %v6620 = vmul.f32 %v6597, %v6619
  %v6621 = vsub.f32 1.0, %v6620
  %v6622 = vmul.f32 %v6619, %v6621
  %v6623 = vadd.f32 %v6619, %v6622
  %vm6624 = vweird.f32 %v6597
  %vm6625 = vweird.f32 %v6619
  %vm6626 = vmor %vm6624, %vm6625
  %v6627 = vsel %vm6626, %v6619, %v6623
  %v6628 = vand.u32 2147483647, %v6597
  %vm6629 = vcmp.eq.f32.partialorder %v6628, 8.507059e+37
  %v6630 = vand.u32 %v6597, 2147483648
  %v6631 = vor.u32 1.1754944e-38, %v6630
  %v6632 = vsel %vm6629, %v6631, %v6627
  %v6633 = vmul.f32 1.0, %v6632
  %v6634 = vrcp.pop %v6598
  %v6635 = vmul.f32 %v6598, %v6634
  %v6636 = vsub.f32 1.0, %v6635
  %v6637 = vmul.f32 %v6634, %v6636
  %v6638 = vadd.f32 %v6634, %v6637
  %vm6639 = vweird.f32 %v6598
  %vm6640 = vweird.f32 %v6634
  %vm6641 = vmor %vm6639, %vm6640
  %v6642 = vsel %vm6641, %v6634, %v6638
  %v6643 = vand.u32 2147483647, %v6598
  %vm6644 = vcmp.eq.f32.partialorder %v6643, 8.507059e+37
  %v6645 = vand.u32 %v6598, 2147483648
  %v6646 = vor.u32 1.1754944e-38, %v6645
  %v6647 = vsel %vm6644, %v6646, %v6642
  %v6648 = vmul.f32 1.0, %v6647
  %v6649 = vrcp.pop %v6599
  %v6650 = vmul.f32 %v6599, %v6649
  %v6651 = vsub.f32 1.0, %v6650
  %v6652 = vmul.f32 %v6649, %v6651
  %v6653 = vadd.f32 %v6649, %v6652
  %vm6654 = vweird.f32 %v6599
  %vm6655 = vweird.f32 %v6649
  %vm6656 = vmor %vm6654, %vm6655
  %v6657 = vsel %vm6656, %v6649, %v6653
  %v6658 = vand.u32 2147483647, %v6599
  %vm6659 = vcmp.eq.f32.partialorder %v6658, 8.507059e+37
  %v6660 = vand.u32 %v6599, 2147483648
  %v6661 = vor.u32 1.1754944e-38, %v6660
  %v6662 = vsel %vm6659, %v6661, %v6657
  %v6663 = vmul.f32 1.0, %v6662
  %v6664 = vrcp.pop %v6600
  %v6665 = vmul.f32 %v6600, %v6664
  %v6666 = vsub.f32 1.0, %v6665
  %v6667 = vmul.f32 %v6664, %v6666
  %v6668 = vadd.f32 %v6664, %v6667
  %vm6669 = vweird.f32 %v6600
  %vm6670 = vweird.f32 %v6664
  %vm6671 = vmor %vm6669, %vm6670
  %v6672 = vsel %vm6671, %v6664, %v6668
  %v6673 = vand.u32 2147483647, %v6600
  %vm6674 = vcmp.eq.f32.partialorder %v6673, 8.507059e+37
  %v6675 = vand.u32 %v6600, 2147483648
  %v6676 = vor.u32 1.1754944e-38, %v6675
  %v6677 = vsel %vm6674, %v6676, %v6672
  %v6678 = vmul.f32 1.0, %v6677
  %v6679 = vrcp.pop %v6601
  %v6680 = vmul.f32 %v6601, %v6679
  %v6681 = vsub.f32 1.0, %v6680
  %v6682 = vmul.f32 %v6679, %v6681
  %v6683 = vadd.f32 %v6679, %v6682
  %vm6684 = vweird.f32 %v6601
  %vm6685 = vweird.f32 %v6679
  %vm6686 = vmor %vm6684, %vm6685
  %v6687 = vsel %vm6686, %v6679, %v6683
  %v6688 = vand.u32 2147483647, %v6601
  %vm6689 = vcmp.eq.f32.partialorder %v6688, 8.507059e+37
  %v6690 = vand.u32 %v6601, 2147483648
  %v6691 = vor.u32 1.1754944e-38, %v6690
  %v6692 = vsel %vm6689, %v6691, %v6687
  %v6693 = vmul.f32 1.0, %v6692
  %v6694 = vrcp.pop %v6602
  %v6695 = vmul.f32 %v6602, %v6694
  %v6696 = vsub.f32 1.0, %v6695
  %v6697 = vmul.f32 %v6694, %v6696
  %v6698 = vadd.f32 %v6694, %v6697
  %vm6699 = vweird.f32 %v6602
  %vm6700 = vweird.f32 %v6694
  %vm6701 = vmor %vm6699, %vm6700
  %v6702 = vsel %vm6701, %v6694, %v6698
  %v6703 = vand.u32 2147483647, %v6602
  %vm6704 = vcmp.eq.f32.partialorder %v6703, 8.507059e+37
  %v6705 = vand.u32 %v6602, 2147483648
  %v6706 = vor.u32 1.1754944e-38, %v6705
  %v6707 = vsel %vm6704, %v6706, %v6702
  %v6708 = vmul.f32 1.0, %v6707
  %v6709 = vrcp.pop %v6603
  %v6710 = vmul.f32 %v6603, %v6709
  %v6711 = vsub.f32 1.0, %v6710
  %v6712 = vmul.f32 %v6709, %v6711
  %v6713 = vadd.f32 %v6709, %v6712
  %vm6714 = vweird.f32 %v6603
  %vm6715 = vweird.f32 %v6709
  %vm6716 = vmor %vm6714, %vm6715
  %v6717 = vsel %vm6716, %v6709, %v6713
  %v6718 = vand.u32 2147483647, %v6603
  %vm6719 = vcmp.eq.f32.partialorder %v6718, 8.507059e+37
  %v6720 = vand.u32 %v6603, 2147483648
  %v6721 = vor.u32 1.1754944e-38, %v6720
  %v6722 = vsel %vm6719, %v6721, %v6717
  %v6723 = vmul.f32 1.0, %v6722
  %v6724 = vld [vmem:[#allocation3] sm:$0xff]
  %v6726 = vrot.slane %v6724, 1
  %v6727 = vrot.slane %v6724, 2
  %v6728 = vrot.slane %v6724, 3
  %v6729 = vrot.slane %v6724, 4
  %v6730 = vrot.slane %v6724, 5
  %v6731 = vrot.slane %v6724, 6
  %v6732 = vrot.slane %v6724, 7
  %v6740 = vmul.f32 %v6426, %v6724
  %v6741 = vmul.f32 %v6441, %v6726
  %v6742 = vmul.f32 %v6456, %v6727
  %v6743 = vmul.f32 %v6471, %v6728
  %v6744 = vmul.f32 %v6486, %v6729
  %v6745 = vmul.f32 %v6501, %v6730
  %v6746 = vmul.f32 %v6516, %v6731
  %v6747 = vmul.f32 %v6531, %v6732
  %v6748 = vmul.f32 %v6250, %v6548
  %v6749 = vmul.f32 %v6265, %v6549
  %v6750 = vmul.f32 %v6280, %v6550
  %v6751 = vmul.f32 %v6295, %v6551
  %v6752 = vmul.f32 %v6310, %v6552
  %v6753 = vmul.f32 %v6325, %v6553
  %v6754 = vmul.f32 %v6340, %v6554
  %v6755 = vmul.f32 %v6355, %v6555
  %v6756 = vadd.f32 %v6740, %v6748
  %v6757 = vadd.f32 %v6741, %v6749
  %v6758 = vadd.f32 %v6742, %v6750
  %v6759 = vadd.f32 %v6743, %v6751
  %v6760 = vadd.f32 %v6744, %v6752
  %v6761 = vadd.f32 %v6745, %v6753
  %v6762 = vadd.f32 %v6746, %v6754
  %v6763 = vadd.f32 %v6747, %v6755
  %v6764 = vtanh.pop %v6756
  %v6765 = vtanh.pop %v6757
  %v6766 = vtanh.pop %v6758
  %v6767 = vtanh.pop %v6759
  %v6768 = vtanh.pop %v6760
  %v6769 = vtanh.pop %v6761
  %v6770 = vtanh.pop %v6762
  %v6771 = vtanh.pop %v6763
  %v6772 = vmul.f32 %v6618, %v6764
  %v6773 = vmul.f32 %v6633, %v6765
  %v6774 = vmul.f32 %v6648, %v6766
  %v6775 = vmul.f32 %v6663, %v6767
  %v6776 = vmul.f32 %v6678, %v6768
  %v6777 = vmul.f32 %v6693, %v6769
  %v6778 = vmul.f32 %v6708, %v6770
  %v6779 = vmul.f32 %v6723, %v6771
  %6788 = vst [vmem:[#allocation1] ss:$9 sm:$0xff] %v6756
  %s6789 = scalar_lea.vmem [#allocation1], 1
  %6790 = vst [vmem:[%s6789] ss:$9 sm:$0xff] %v6757
  %s6791 = scalar_lea.vmem [#allocation1], 2
  %6792 = vst [vmem:[%s6791] ss:$9 sm:$0xff] %v6758
  %s6793 = scalar_lea.vmem [#allocation1], 3
  %6794 = vst [vmem:[%s6793] ss:$9 sm:$0xff] %v6759
  %s6795 = scalar_lea.vmem [#allocation1], 4
  %6796 = vst [vmem:[%s6795] ss:$9 sm:$0xff] %v6760
  %s6797 = scalar_lea.vmem [#allocation1], 5
  %6798 = vst [vmem:[%s6797] ss:$9 sm:$0xff] %v6761
  %s6799 = scalar_lea.vmem [#allocation1], 6
  %6800 = vst [vmem:[%s6799] ss:$9 sm:$0xff] %v6762
  %s6801 = scalar_lea.vmem [#allocation1], 7
  %6802 = vst [vmem:[%s6801] ss:$9 sm:$0xff] %v6763
  %v6803 = vld [vmem:[#allocation1] sm:$0xff]
  %6805 = vst [vmem:[#allocation3] sm:$0xff] %v6803
  %6814 = vst [vmem:[#allocation1] ss:$9 sm:$0xff] %v6772
  %s6815 = scalar_lea.vmem [#allocation1], 1
  %6816 = vst [vmem:[%s6815] ss:$9 sm:$0xff] %v6773
  %s6817 = scalar_lea.vmem [#allocation1], 2
  %6818 = vst [vmem:[%s6817] ss:$9 sm:$0xff] %v6774
  %s6819 = scalar_lea.vmem [#allocation1], 3
  %6820 = vst [vmem:[%s6819] ss:$9 sm:$0xff] %v6775
  %s6821 = scalar_lea.vmem [#allocation1], 4
  %6822 = vst [vmem:[%s6821] ss:$9 sm:$0xff] %v6776
  %s6823 = scalar_lea.vmem [#allocation1], 5
  %6824 = vst [vmem:[%s6823] ss:$9 sm:$0xff] %v6777
  %s6825 = scalar_lea.vmem [#allocation1], 6
  %6826 = vst [vmem:[%s6825] ss:$9 sm:$0xff] %v6778
  %s6827 = scalar_lea.vmem [#allocation1], 7
  %6828 = vst [vmem:[%s6827] ss:$9 sm:$0xff] %v6779
  %v6829 = vld [vmem:[#allocation1] sm:$0xff]
  %6831 = vst [vmem:[#allocation2] sm:$0xff] %v6829
  %6832 = vst [vmem:[%s2 + $0x7] sm:$0x1] %v6772
  %6833 = vst [vmem:[%s2 + $0xf] sm:$0x1] %v6773
  %6834 = vst [vmem:[%s2 + $0x17] sm:$0x1] %v6774
  %6835 = vst [vmem:[%s2 + $0x1f] sm:$0x1] %v6775
  %6836 = vst [vmem:[%s2 + $0x27] sm:$0x1] %v6776
  %6837 = vst [vmem:[%s2 + $0x2f] sm:$0x1] %v6777
  %6838 = vst [vmem:[%s2 + $0x37] sm:$0x1] %v6778
  %6839 = vst [vmem:[%s2 + $0x3f] sm:$0x1] %v6779
  // Predicated region
  $region14: #{decoder_rnn_forward.4} parent=0 // pred_check
    _
  $region15: #{decoder_rnn_forward.4} parent=0 // pred_check_branch
    %6841 = sbr.rel (0) target = $region17
  $region16: #{decoder_rnn_forward.4} parent=0 // pred_region
    _
  $region17: #{decoder_rnn_forward.4} parent=0 // pred_fallthru
    _
  // Predicated region
  $region18: #{decoder_rnn_forward.4} parent=0 // pred_check
    _
  $region19: #{decoder_rnn_forward.4} parent=0 // pred_check_branch
    %6843 = sbr.rel (0) target = $region21
  $region20: #{decoder_rnn_forward.4} parent=0 // pred_region
    _
  $region21: #{decoder_rnn_forward.4} parent=0 // pred_fallthru
    _

</llo_original>
